<compile_context>
chip_gen: v5e
topology: v5e:2x2
jax: 0.10.0
libtpu: 0.0.40
codegen_flags: <defaults>
</compile_context>

<pallas_src>
import functools

import jax
import jax.numpy as jnp
from jax.experimental import pallas as pl
from jax.experimental.pallas import tpu as pltpu


# ---------------------------------------------------------------------------
# Fused kernel: the whole TemporalFeatExtractor stack for ONE batch element.
#
# refs layout (per grid step n over the batch):
#   x_ref                      : (1, H, W, Cin)          NHWC input tile
#   w_ref[i], b_ref[i] (i < L) : (9*Cin_i, Cout_i + 1)   packed bf16 weights
#                                (feature conv = cols 0..Cout-1, gate conv = last col)
#                                (1, Cout_i + 1)         packed f32 bias
#   o_ref                      : (1, H*W, Cout_last)     output tile
#   pad_ref[i]                 : (H+2, W+2, Cin_i)       VMEM padded-activation scratch
# ---------------------------------------------------------------------------
def _fused_gated_stack_kernel(*refs, H, W, channels):
    n_layers = len(channels) - 1
    x_ref = refs[0]
    w_refs = [refs[1 + 2 * i] for i in range(n_layers)]
    b_refs = [refs[2 + 2 * i] for i in range(n_layers)]
    o_ref = refs[1 + 2 * n_layers]
    pad_refs = refs[2 + 2 * n_layers:]

    def gated_conv_relu(pad_ref, w_ref, b_ref, cout):
        cin = pad_ref.shape[-1]
        # im2col: one (H*W, 9*cin) patch matrix -> a single large-K MXU matmul.
        # Tap order k = dy*3 + dx with channel minor; matches wf.reshape(9*cin, cout)
        # of HWIO weights in the wrapper.
        cols = jnp.concatenate(
            [pad_ref[dy:dy + H, dx:dx + W, :]
             for dy in range(3) for dx in range(3)],
            axis=-1)                                  # (H, W, 9*cin)
        cols = cols.reshape(H * W, 9 * cin)
        y = jnp.dot(cols.astype(jnp.bfloat16), w_ref[...],
                    preferred_element_type=jnp.float32)   # (H*W, cout+1), f32 accum
        y = y + b_ref[...]                                 # packed (feature, gate) bias
        feat = y[:, :cout]
        gate = y[:, cout:cout + 1]                         # single-channel gate
        return jnp.maximum(feat * jax.nn.sigmoid(gate), 0.0)   # gated conv + fused ReLU

    # Zero the padded scratch buffers: borders stay zero => pad=1 semantics in-kernel.
    for p in pad_refs:
        p[...] = jnp.zeros_like(p)

    act = x_ref[0].astype(jnp.float32)              # (H, W, Cin)
    out = None
    for i in range(n_layers):
        pad_refs[i][1:H + 1, 1:W + 1, :] = act      # write interior; border = zero pad
        out = gated_conv_relu(pad_refs[i], w_refs[i], b_refs[i], channels[i + 1])
        if i + 1 < n_layers:
            act = out.reshape(H, W, channels[i + 1])

    o_ref[...] = out.reshape(1, H * W, channels[-1]).astype(o_ref.dtype)


# ---------------------------------------------------------------------------
# Wrapper: one pallas_call for the whole stack (grid over batch only).
# ---------------------------------------------------------------------------
def temporal_feat_extractor_forward(x_nchw, packed_params):
    """Equivalent of TemporalFeatExtractor.forward (NCHW in, NCHW out)."""
    x = jnp.transpose(x_nchw, (0, 2, 3, 1)).astype(jnp.float32)   # NCHW -> NHWC
    N, H, W, c_in = x.shape
    n_layers = len(packed_params)
    channels = (c_in,) + tuple(int(w.shape[1]) - 1 for w, _ in packed_params)
    c_out = channels[-1]

    in_specs = [pl.BlockSpec((1, H, W, c_in), lambda n: (n, 0, 0, 0))]
    args = [x]
    for w, b in packed_params:
        in_specs.append(pl.BlockSpec(w.shape, lambda n: (0, 0)))
        in_specs.append(pl.BlockSpec(b.shape, lambda n: (0, 0)))
        args += [w, b]

    scratch_shapes = [pltpu.VMEM((H + 2, W + 2, channels[i]), jnp.float32)
                      for i in range(n_layers)]

    flops = 2 * N * H * W * sum(int(w.shape[0]) * int(w.shape[1])
                                for w, _ in packed_params)
    bytes_accessed = (
        int(x.size) * 4
        + sum(int(a.size) * a.dtype.itemsize
              for w, b in packed_params for a in (w, b))
        + N * H * W * c_out * 4)

    kernel = functools.partial(_fused_gated_stack_kernel,
                               H=H, W=W, channels=channels)

    y = pl.pallas_call(
        kernel,
        out_shape=jax.ShapeDtypeStruct((N, H * W, c_out), jnp.float32),
        grid_spec=pltpu.PrefetchScalarGridSpec(
            num_scalar_prefetch=0,
            grid=(N,),
            in_specs=in_specs,
            out_specs=pl.BlockSpec((1, H * W, c_out), lambda n: (n, 0, 0)),
            scratch_shapes=scratch_shapes,
        ),
        compiler_params=pltpu.CompilerParams(
            dimension_semantics=("parallel",)),   # v7x: one batch element per TensorCore
        cost_estimate=pl.CostEstimate(
            flops=flops,
            transcendentals=n_layers * N * H * W,
            bytes_accessed=bytes_accessed),
    )(*args)

    y = y.reshape(N, H, W, c_out)
    return jnp.transpose(y, (0, 3, 1, 2))          # NHWC -> NCHW


# ---------------------------------------------------------------------------
# Parameters: native HWIO conv weights (f32, for the reference) + packed kernel form.
# ---------------------------------------------------------------------------
def init_params(key, in_channels, out_channels, layers=(32, 32)):
    """Per layer: (wf[3,3,cin,cout], bf[cout], wg[3,3,cin,1], bg[1]) in HWIO, f32."""
    params = []
    c1 = in_channels
    for c2 in tuple(layers) + (out_channels,):
        key, kf, kg, kbf, kbg = jax.random.split(key, 5)
        std = (2.0 / (9.0 * c1)) ** 0.5
        wf = jax.random.normal(kf, (3, 3, c1, c2), jnp.float32) * std
        wg = jax.random.normal(kg, (3, 3, c1, 1), jnp.float32) * std
        bf = jax.random.uniform(kbf, (c2,), jnp.float32, -0.1, 0.1)
        bg = jax.random.uniform(kbg, (1,), jnp.float32, -0.1, 0.1)
        params.append((wf, bf, wg, bg))
        c1 = c2
    return params


def pack_params(params):
    """Fold the gate conv into the feature conv: (9*cin, cout+1) bf16 + (1, cout+1) f32."""
    packed = []
    for wf, bf, wg, bg in params:
        cin, cout = wf.shape[2], wf.shape[3]
        w = jnp.concatenate([wf.reshape(9 * cin, cout),
                             wg.reshape(9 * cin, 1)], axis=-1).astype(jnp.bfloat16)
        b = jnp.concatenate([bf, bg]).reshape(1, cout + 1).astype(jnp.float32)
        packed.append((w, b))
    return packed


# ---------------------------------------------------------------------------
# Pure-JAX f32 reference (for parity checking the kernel).
# ---------------------------------------------------------------------------
def _gated_conv_relu_ref(x, wf, bf, wg, bg):
    dn = ('NHWC', 'HWIO', 'NHWC')
    feat = jax.lax.conv_general_dilated(
        x, wf, (1, 1), 'SAME', dimension_numbers=dn,
        precision=jax.lax.Precision.HIGHEST) + bf
    gate = jax.lax.conv_general_dilated(
        x, wg, (1, 1), 'SAME', dimension_numbers=dn,
        precision=jax.lax.Precision.HIGHEST) + bg
    return jnp.maximum(feat * jax.nn.sigmoid(gate), 0.0)


def temporal_feat_extractor_ref(x_nchw, params):
    x = jnp.transpose(x_nchw, (0, 2, 3, 1)).astype(jnp.float32)
    for wf, bf, wg, bg in params:
        x = _gated_conv_relu_ref(x, wf, bf, wg, bg)
    return jnp.transpose(x, (0, 3, 1, 2))


if __name__ == "__main__":
    key = jax.random.PRNGKey(0)
    kx, kp = jax.random.split(key)

    # Small shapes consistent with the module: batch=2, in_channels=4, spatial=16x16,
    # layers=[32, 32], out_channels=8.
    N, C_IN, H, W = 2, 4, 16, 16
    C_OUT = 8
    LAYERS = (32, 32)

    x = jax.random.normal(kx, (N, C_IN, H, W), jnp.float32)   # NCHW (PyTorch layout)
    params = init_params(kp, C_IN, C_OUT, LAYERS)
    packed = pack_params(params)

    fwd = jax.jit(temporal_feat_extractor_forward)
    y = jax.block_until_ready(fwd(x, packed))

    assert y.shape == (N, C_OUT, H, W), y.shape
    assert bool(jnp.all(jnp.isfinite(y)))
    assert bool(jnp.all(y >= 0.0))                 # final ReLU

    # Parity vs the pure-JAX f32 reference (kernel uses bf16 MXU operands -> loose tol).
    y_ref = jax.block_until_ready(jax.jit(temporal_feat_extractor_ref)(x, params))
    err = float(jnp.max(jnp.abs(y - y_ref)))
    scale = float(jnp.max(jnp.abs(y_ref))) + 1e-6
    assert err <= 0.08 * scale + 5e-3, (err, scale)

    print("KERNEL_OK")
</pallas_src>

<mosaic_0001>
module attributes {stable_mosaic.version = 11 : i64} {
  func.func @_fused_gated_stack_kernel(%arg0: i32, %arg1: memref<1x16x16x4xf32, #tpu.memory_space<vmem>>, %arg2: memref<36x33xbf16, #tpu.memory_space<vmem>>, %arg3: memref<1x33xf32, #tpu.memory_space<vmem>>, %arg4: memref<288x33xbf16, #tpu.memory_space<vmem>>, %arg5: memref<1x33xf32, #tpu.memory_space<vmem>>, %arg6: memref<288x9xbf16, #tpu.memory_space<vmem>>, %arg7: memref<1x9xf32, #tpu.memory_space<vmem>>, %arg8: memref<1x256x8xf32, #tpu.memory_space<vmem>>, %arg9: memref<18x18x4xf32, #tpu.memory_space<vmem>>, %arg10: memref<18x18x32xf32, #tpu.memory_space<vmem>>, %arg11: memref<18x18x32xf32, #tpu.memory_space<vmem>>) attributes {dimension_semantics = [#tpu.dimension_semantics<parallel>], iteration_bounds = array<i64: 2>, scalar_prefetch = 0 : i64, scratch_operands = 3 : i64, tpu.core_type = #tpu.core_type<tc>, window_params = [{transform_indices = @transform_0, window_bounds = array<i64: 1, 16, 16, 4>}, {pipeline_mode = #tpu.pipeline_mode<synchronous>, transform_indices = @transform_1, window_bounds = array<i64: 36, 33>}, {pipeline_mode = #tpu.pipeline_mode<synchronous>, transform_indices = @transform_2, window_bounds = array<i64: 1, 33>}, {pipeline_mode = #tpu.pipeline_mode<synchronous>, transform_indices = @transform_3, window_bounds = array<i64: 288, 33>}, {pipeline_mode = #tpu.pipeline_mode<synchronous>, transform_indices = @transform_4, window_bounds = array<i64: 1, 33>}, {pipeline_mode = #tpu.pipeline_mode<synchronous>, transform_indices = @transform_5, window_bounds = array<i64: 288, 9>}, {pipeline_mode = #tpu.pipeline_mode<synchronous>, transform_indices = @transform_6, window_bounds = array<i64: 1, 9>}, {transform_indices = @transform_7, window_bounds = array<i64: 1, 256, 8>}]} {
    %cst = arith.constant 0.000000e+00 : f32
    %0 = vector.broadcast %cst : f32 to vector<18x18x4xf32>
    %c0 = arith.constant 0 : index
    %c0_0 = arith.constant 0 : index
    %c0_1 = arith.constant 0 : index
    %1 = vector.load %arg9[%c0, %c0_0, %c0_1] : memref<18x18x4xf32, #tpu.memory_space<vmem>>, vector<18x18x4xf32>
    tpu.vector_store %arg9[%c0, %c0_0, %c0_1], %0 {strides = array<i32>} : memref<18x18x4xf32, #tpu.memory_space<vmem>>, vector<18x18x4xf32>,
    %cst_2 = arith.constant 0.000000e+00 : f32
    %2 = vector.broadcast %cst_2 : f32 to vector<18x18x32xf32>
    %c0_3 = arith.constant 0 : index
    %c0_4 = arith.constant 0 : index
    %c0_5 = arith.constant 0 : index
    %3 = vector.load %arg10[%c0_3, %c0_4, %c0_5] : memref<18x18x32xf32, #tpu.memory_space<vmem>>, vector<18x18x32xf32>
    tpu.vector_store %arg10[%c0_3, %c0_4, %c0_5], %2 {strides = array<i32>} : memref<18x18x32xf32, #tpu.memory_space<vmem>>, vector<18x18x32xf32>,
    %cst_6 = arith.constant 0.000000e+00 : f32
    %4 = vector.broadcast %cst_6 : f32 to vector<18x18x32xf32>
    %c0_7 = arith.constant 0 : index
    %c0_8 = arith.constant 0 : index
    %c0_9 = arith.constant 0 : index
    %5 = vector.load %arg11[%c0_7, %c0_8, %c0_9] : memref<18x18x32xf32, #tpu.memory_space<vmem>>, vector<18x18x32xf32>
    tpu.vector_store %arg11[%c0_7, %c0_8, %c0_9], %4 {strides = array<i32>} : memref<18x18x32xf32, #tpu.memory_space<vmem>>, vector<18x18x32xf32>,
    %c0_10 = arith.constant 0 : index
    %c0_11 = arith.constant 0 : index
    %c0_12 = arith.constant 0 : index
    %c0_13 = arith.constant 0 : index
    %6 = vector.load %arg1[%c0_10, %c0_11, %c0_12, %c0_13] : memref<1x16x16x4xf32, #tpu.memory_space<vmem>>, vector<1x16x16x4xf32>
    %7 = vector.shape_cast %6 : vector<1x16x16x4xf32> to vector<16x16x4xf32>
    %c1 = arith.constant 1 : index
    %c1_14 = arith.constant 1 : index
    %c0_15 = arith.constant 0 : index
    %8 = vector.load %arg9[%c1, %c1_14, %c0_15] : memref<18x18x4xf32, #tpu.memory_space<vmem>>, vector<16x16x4xf32>
    tpu.vector_store %arg9[%c1, %c1_14, %c0_15], %7 {strides = array<i32>} : memref<18x18x4xf32, #tpu.memory_space<vmem>>, vector<16x16x4xf32>,
    %c0_16 = arith.constant 0 : index
    %c0_17 = arith.constant 0 : index
    %c0_18 = arith.constant 0 : index
    %9 = vector.load %arg9[%c0_16, %c0_17, %c0_18] : memref<18x18x4xf32, #tpu.memory_space<vmem>>, vector<16x16x4xf32>
    %c0_19 = arith.constant 0 : index
    %c1_20 = arith.constant 1 : index
    %c0_21 = arith.constant 0 : index
    %10 = vector.load %arg9[%c0_19, %c1_20, %c0_21] : memref<18x18x4xf32, #tpu.memory_space<vmem>>, vector<16x16x4xf32>
    %c0_22 = arith.constant 0 : index
    %c2 = arith.constant 2 : index
    %c0_23 = arith.constant 0 : index
    %11 = vector.load %arg9[%c0_22, %c2, %c0_23] : memref<18x18x4xf32, #tpu.memory_space<vmem>>, vector<16x16x4xf32>
    %c1_24 = arith.constant 1 : index
    %c0_25 = arith.constant 0 : index
    %c0_26 = arith.constant 0 : index
    %12 = vector.load %arg9[%c1_24, %c0_25, %c0_26] : memref<18x18x4xf32, #tpu.memory_space<vmem>>, vector<16x16x4xf32>
    %c1_27 = arith.constant 1 : index
    %c1_28 = arith.constant 1 : index
    %c0_29 = arith.constant 0 : index
    %13 = vector.load %arg9[%c1_27, %c1_28, %c0_29] : memref<18x18x4xf32, #tpu.memory_space<vmem>>, vector<16x16x4xf32>
    %c1_30 = arith.constant 1 : index
    %c2_31 = arith.constant 2 : index
    %c0_32 = arith.constant 0 : index
    %14 = vector.load %arg9[%c1_30, %c2_31, %c0_32] : memref<18x18x4xf32, #tpu.memory_space<vmem>>, vector<16x16x4xf32>
    %c2_33 = arith.constant 2 : index
    %c0_34 = arith.constant 0 : index
    %c0_35 = arith.constant 0 : index
    %15 = vector.load %arg9[%c2_33, %c0_34, %c0_35] : memref<18x18x4xf32, #tpu.memory_space<vmem>>, vector<16x16x4xf32>
    %c2_36 = arith.constant 2 : index
    %c1_37 = arith.constant 1 : index
    %c0_38 = arith.constant 0 : index
    %16 = vector.load %arg9[%c2_36, %c1_37, %c0_38] : memref<18x18x4xf32, #tpu.memory_space<vmem>>, vector<16x16x4xf32>
    %c2_39 = arith.constant 2 : index
    %c2_40 = arith.constant 2 : index
    %c0_41 = arith.constant 0 : index
    %17 = vector.load %arg9[%c2_39, %c2_40, %c0_41] : memref<18x18x4xf32, #tpu.memory_space<vmem>>, vector<16x16x4xf32>
    %18 = tpu.concatenate %9, %10, %11, %12, %13, %14, %15, %16, %17 in 2 : vector<16x16x4xf32>, vector<16x16x4xf32>, vector<16x16x4xf32>, vector<16x16x4xf32>, vector<16x16x4xf32>, vector<16x16x4xf32>, vector<16x16x4xf32>, vector<16x16x4xf32>, vector<16x16x4xf32> -> vector<16x16x36xf32>
    %19 = vector.shape_cast %18 : vector<16x16x36xf32> to vector<256x36xf32>
    %20 = arith.truncf %19 : vector<256x36xf32> to vector<256x36xbf16>
    %c0_42 = arith.constant 0 : index
    %c0_43 = arith.constant 0 : index
    %21 = vector.load %arg2[%c0_42, %c0_43] : memref<36x33xbf16, #tpu.memory_space<vmem>>, vector<36x33xbf16>
    %cst_44 = arith.constant dense<0.000000e+00> : vector<256x33xf32>
    %22 = tpu.matmul %20, %21, %cst_44 {dimension_numbers = #tpu.dot_dimension_numbers<[1], [0], [0], [1], [0, 0, 1, 1], [], []>} : vector<256x36xbf16>, vector<36x33xbf16>, vector<256x33xf32> -> vector<256x33xf32>
    %c0_45 = arith.constant 0 : index
    %c0_46 = arith.constant 0 : index
    %23 = vector.load %arg3[%c0_45, %c0_46] : memref<1x33xf32, #tpu.memory_space<vmem>>, vector<1x33xf32>
    %24 = vector.broadcast %23 : vector<1x33xf32> to vector<256x33xf32>
    %25 = arith.addf %22, %24 : vector<256x33xf32>
    %26 = vector.extract_strided_slice %25 {offsets = [0, 0], sizes = [256, 32], strides = [1, 1]} : vector<256x33xf32> to vector<256x32xf32>
    %27 = vector.extract_strided_slice %25 {offsets = [0, 32], sizes = [256, 1], strides = [1, 1]} : vector<256x33xf32> to vector<256x1xf32>
    %28 = arith.negf %27 : vector<256x1xf32>
    %29 = math.exp %28 : vector<256x1xf32>
    %cst_47 = arith.constant 1.000000e+00 : f32
    %30 = vector.broadcast %cst_47 : f32 to vector<256x1xf32>
    %31 = arith.addf %30, %29 : vector<256x1xf32>
    %32 = arith.divf %30, %31 : vector<256x1xf32>
    %33 = vector.broadcast %32 : vector<256x1xf32> to vector<256x32xf32>
    %34 = arith.mulf %26, %33 : vector<256x32xf32>
    %cst_48 = arith.constant 0.000000e+00 : f32
    %35 = vector.broadcast %cst_48 : f32 to vector<256x32xf32>
    %36 = arith.maximumf %34, %35 : vector<256x32xf32>
    %37 = vector.shape_cast %36 : vector<256x32xf32> to vector<16x16x32xf32>
    %c1_49 = arith.constant 1 : index
    %c1_50 = arith.constant 1 : index
    %c0_51 = arith.constant 0 : index
    %38 = vector.load %arg10[%c1_49, %c1_50, %c0_51] : memref<18x18x32xf32, #tpu.memory_space<vmem>>, vector<16x16x32xf32>
    tpu.vector_store %arg10[%c1_49, %c1_50, %c0_51], %37 {strides = array<i32>} : memref<18x18x32xf32, #tpu.memory_space<vmem>>, vector<16x16x32xf32>,
    %c0_52 = arith.constant 0 : index
    %c0_53 = arith.constant 0 : index
    %c0_54 = arith.constant 0 : index
    %39 = vector.load %arg10[%c0_52, %c0_53, %c0_54] : memref<18x18x32xf32, #tpu.memory_space<vmem>>, vector<16x16x32xf32>
    %c0_55 = arith.constant 0 : index
    %c1_56 = arith.constant 1 : index
    %c0_57 = arith.constant 0 : index
    %40 = vector.load %arg10[%c0_55, %c1_56, %c0_57] : memref<18x18x32xf32, #tpu.memory_space<vmem>>, vector<16x16x32xf32>
    %c0_58 = arith.constant 0 : index
    %c2_59 = arith.constant 2 : index
    %c0_60 = arith.constant 0 : index
    %41 = vector.load %arg10[%c0_58, %c2_59, %c0_60] : memref<18x18x32xf32, #tpu.memory_space<vmem>>, vector<16x16x32xf32>
    %c1_61 = arith.constant 1 : index
    %c0_62 = arith.constant 0 : index
    %c0_63 = arith.constant 0 : index
    %42 = vector.load %arg10[%c1_61, %c0_62, %c0_63] : memref<18x18x32xf32, #tpu.memory_space<vmem>>, vector<16x16x32xf32>
    %c1_64 = arith.constant 1 : index
    %c1_65 = arith.constant 1 : index
    %c0_66 = arith.constant 0 : index
    %43 = vector.load %arg10[%c1_64, %c1_65, %c0_66] : memref<18x18x32xf32, #tpu.memory_space<vmem>>, vector<16x16x32xf32>
    %c1_67 = arith.constant 1 : index
    %c2_68 = arith.constant 2 : index
    %c0_69 = arith.constant 0 : index
    %44 = vector.load %arg10[%c1_67, %c2_68, %c0_69] : memref<18x18x32xf32, #tpu.memory_space<vmem>>, vector<16x16x32xf32>
    %c2_70 = arith.constant 2 : index
    %c0_71 = arith.constant 0 : index
    %c0_72 = arith.constant 0 : index
    %45 = vector.load %arg10[%c2_70, %c0_71, %c0_72] : memref<18x18x32xf32, #tpu.memory_space<vmem>>, vector<16x16x32xf32>
    %c2_73 = arith.constant 2 : index
    %c1_74 = arith.constant 1 : index
    %c0_75 = arith.constant 0 : index
    %46 = vector.load %arg10[%c2_73, %c1_74, %c0_75] : memref<18x18x32xf32, #tpu.memory_space<vmem>>, vector<16x16x32xf32>
    %c2_76 = arith.constant 2 : index
    %c2_77 = arith.constant 2 : index
    %c0_78 = arith.constant 0 : index
    %47 = vector.load %arg10[%c2_76, %c2_77, %c0_78] : memref<18x18x32xf32, #tpu.memory_space<vmem>>, vector<16x16x32xf32>
    %48 = tpu.concatenate %39, %40, %41, %42, %43, %44, %45, %46, %47 in 2 : vector<16x16x32xf32>, vector<16x16x32xf32>, vector<16x16x32xf32>, vector<16x16x32xf32>, vector<16x16x32xf32>, vector<16x16x32xf32>, vector<16x16x32xf32>, vector<16x16x32xf32>, vector<16x16x32xf32> -> vector<16x16x288xf32>
    %49 = vector.shape_cast %48 : vector<16x16x288xf32> to vector<256x288xf32>
    %50 = arith.truncf %49 : vector<256x288xf32> to vector<256x288xbf16>
    %c0_79 = arith.constant 0 : index
    %c0_80 = arith.constant 0 : index
    %51 = vector.load %arg4[%c0_79, %c0_80] : memref<288x33xbf16, #tpu.memory_space<vmem>>, vector<288x33xbf16>
    %cst_81 = arith.constant dense<0.000000e+00> : vector<256x33xf32>
    %52 = tpu.matmul %50, %51, %cst_81 {dimension_numbers = #tpu.dot_dimension_numbers<[1], [0], [0], [1], [0, 0, 1, 1], [], []>} : vector<256x288xbf16>, vector<288x33xbf16>, vector<256x33xf32> -> vector<256x33xf32>
    %c0_82 = arith.constant 0 : index
    %c0_83 = arith.constant 0 : index
    %53 = vector.load %arg5[%c0_82, %c0_83] : memref<1x33xf32, #tpu.memory_space<vmem>>, vector<1x33xf32>
    %54 = vector.broadcast %53 : vector<1x33xf32> to vector<256x33xf32>
    %55 = arith.addf %52, %54 : vector<256x33xf32>
    %56 = vector.extract_strided_slice %55 {offsets = [0, 0], sizes = [256, 32], strides = [1, 1]} : vector<256x33xf32> to vector<256x32xf32>
    %57 = vector.extract_strided_slice %55 {offsets = [0, 32], sizes = [256, 1], strides = [1, 1]} : vector<256x33xf32> to vector<256x1xf32>
    %58 = arith.negf %57 : vector<256x1xf32>
    %59 = math.exp %58 : vector<256x1xf32>
    %cst_84 = arith.constant 1.000000e+00 : f32
    %60 = vector.broadcast %cst_84 : f32 to vector<256x1xf32>
    %61 = arith.addf %60, %59 : vector<256x1xf32>
    %62 = arith.divf %60, %61 : vector<256x1xf32>
    %63 = vector.broadcast %62 : vector<256x1xf32> to vector<256x32xf32>
    %64 = arith.mulf %56, %63 : vector<256x32xf32>
    %cst_85 = arith.constant 0.000000e+00 : f32
    %65 = vector.broadcast %cst_85 : f32 to vector<256x32xf32>
    %66 = arith.maximumf %64, %65 : vector<256x32xf32>
    %67 = vector.shape_cast %66 : vector<256x32xf32> to vector<16x16x32xf32>
    %c1_86 = arith.constant 1 : index
    %c1_87 = arith.constant 1 : index
    %c0_88 = arith.constant 0 : index
    %68 = vector.load %arg11[%c1_86, %c1_87, %c0_88] : memref<18x18x32xf32, #tpu.memory_space<vmem>>, vector<16x16x32xf32>
    tpu.vector_store %arg11[%c1_86, %c1_87, %c0_88], %67 {strides = array<i32>} : memref<18x18x32xf32, #tpu.memory_space<vmem>>, vector<16x16x32xf32>,
    %c0_89 = arith.constant 0 : index
    %c0_90 = arith.constant 0 : index
    %c0_91 = arith.constant 0 : index
    %69 = vector.load %arg11[%c0_89, %c0_90, %c0_91] : memref<18x18x32xf32, #tpu.memory_space<vmem>>, vector<16x16x32xf32>
    %c0_92 = arith.constant 0 : index
    %c1_93 = arith.constant 1 : index
    %c0_94 = arith.constant 0 : index
    %70 = vector.load %arg11[%c0_92, %c1_93, %c0_94] : memref<18x18x32xf32, #tpu.memory_space<vmem>>, vector<16x16x32xf32>
    %c0_95 = arith.constant 0 : index
    %c2_96 = arith.constant 2 : index
    %c0_97 = arith.constant 0 : index
    %71 = vector.load %arg11[%c0_95, %c2_96, %c0_97] : memref<18x18x32xf32, #tpu.memory_space<vmem>>, vector<16x16x32xf32>
    %c1_98 = arith.constant 1 : index
    %c0_99 = arith.constant 0 : index
    %c0_100 = arith.constant 0 : index
    %72 = vector.load %arg11[%c1_98, %c0_99, %c0_100] : memref<18x18x32xf32, #tpu.memory_space<vmem>>, vector<16x16x32xf32>
    %c1_101 = arith.constant 1 : index
    %c1_102 = arith.constant 1 : index
    %c0_103 = arith.constant 0 : index
    %73 = vector.load %arg11[%c1_101, %c1_102, %c0_103] : memref<18x18x32xf32, #tpu.memory_space<vmem>>, vector<16x16x32xf32>
    %c1_104 = arith.constant 1 : index
    %c2_105 = arith.constant 2 : index
    %c0_106 = arith.constant 0 : index
    %74 = vector.load %arg11[%c1_104, %c2_105, %c0_106] : memref<18x18x32xf32, #tpu.memory_space<vmem>>, vector<16x16x32xf32>
    %c2_107 = arith.constant 2 : index
    %c0_108 = arith.constant 0 : index
    %c0_109 = arith.constant 0 : index
    %75 = vector.load %arg11[%c2_107, %c0_108, %c0_109] : memref<18x18x32xf32, #tpu.memory_space<vmem>>, vector<16x16x32xf32>
    %c2_110 = arith.constant 2 : index
    %c1_111 = arith.constant 1 : index
    %c0_112 = arith.constant 0 : index
    %76 = vector.load %arg11[%c2_110, %c1_111, %c0_112] : memref<18x18x32xf32, #tpu.memory_space<vmem>>, vector<16x16x32xf32>
    %c2_113 = arith.constant 2 : index
    %c2_114 = arith.constant 2 : index
    %c0_115 = arith.constant 0 : index
    %77 = vector.load %arg11[%c2_113, %c2_114, %c0_115] : memref<18x18x32xf32, #tpu.memory_space<vmem>>, vector<16x16x32xf32>
    %78 = tpu.concatenate %69, %70, %71, %72, %73, %74, %75, %76, %77 in 2 : vector<16x16x32xf32>, vector<16x16x32xf32>, vector<16x16x32xf32>, vector<16x16x32xf32>, vector<16x16x32xf32>, vector<16x16x32xf32>, vector<16x16x32xf32>, vector<16x16x32xf32>, vector<16x16x32xf32> -> vector<16x16x288xf32>
    %79 = vector.shape_cast %78 : vector<16x16x288xf32> to vector<256x288xf32>
    %80 = arith.truncf %79 : vector<256x288xf32> to vector<256x288xbf16>
    %c0_116 = arith.constant 0 : index
    %c0_117 = arith.constant 0 : index
    %81 = vector.load %arg6[%c0_116, %c0_117] : memref<288x9xbf16, #tpu.memory_space<vmem>>, vector<288x9xbf16>
    %cst_118 = arith.constant dense<0.000000e+00> : vector<256x9xf32>
    %82 = tpu.matmul %80, %81, %cst_118 {dimension_numbers = #tpu.dot_dimension_numbers<[1], [0], [0], [1], [0, 0, 1, 1], [], []>} : vector<256x288xbf16>, vector<288x9xbf16>, vector<256x9xf32> -> vector<256x9xf32>
    %c0_119 = arith.constant 0 : index
    %c0_120 = arith.constant 0 : index
    %83 = vector.load %arg7[%c0_119, %c0_120] : memref<1x9xf32, #tpu.memory_space<vmem>>, vector<1x9xf32>
    %84 = vector.broadcast %83 : vector<1x9xf32> to vector<256x9xf32>
    %85 = arith.addf %82, %84 : vector<256x9xf32>
    %86 = vector.extract_strided_slice %85 {offsets = [0, 0], sizes = [256, 8], strides = [1, 1]} : vector<256x9xf32> to vector<256x8xf32>
    %87 = vector.extract_strided_slice %85 {offsets = [0, 8], sizes = [256, 1], strides = [1, 1]} : vector<256x9xf32> to vector<256x1xf32>
    %88 = arith.negf %87 : vector<256x1xf32>
    %89 = math.exp %88 : vector<256x1xf32>
    %cst_121 = arith.constant 1.000000e+00 : f32
    %90 = vector.broadcast %cst_121 : f32 to vector<256x1xf32>
    %91 = arith.addf %90, %89 : vector<256x1xf32>
    %92 = arith.divf %90, %91 : vector<256x1xf32>
    %93 = vector.broadcast %92 : vector<256x1xf32> to vector<256x8xf32>
    %94 = arith.mulf %86, %93 : vector<256x8xf32>
    %cst_122 = arith.constant 0.000000e+00 : f32
    %95 = vector.broadcast %cst_122 : f32 to vector<256x8xf32>
    %96 = arith.maximumf %94, %95 : vector<256x8xf32>
    %97 = vector.shape_cast %96 : vector<256x8xf32> to vector<1x256x8xf32>
    %c0_123 = arith.constant 0 : index
    %c0_124 = arith.constant 0 : index
    %c0_125 = arith.constant 0 : index
    %98 = vector.load %arg8[%c0_123, %c0_124, %c0_125] : memref<1x256x8xf32, #tpu.memory_space<vmem>>, vector<1x256x8xf32>
    tpu.vector_store %arg8[%c0_123, %c0_124, %c0_125], %97 {strides = array<i32>} : memref<1x256x8xf32, #tpu.memory_space<vmem>>, vector<1x256x8xf32>,
    return
  }
  func.func @transform_0(%arg0: i32) -> (i32, i32, i32, i32) {
    %c0_i32 = arith.constant 0 : i32
    %c0_i32_0 = arith.constant 0 : i32
    %c0_i32_1 = arith.constant 0 : i32
    %c0_i32_2 = arith.constant 0 : i32
    return %arg0, %c0_i32, %c0_i32_0, %c0_i32_1 : i32, i32, i32, i32
  }
  func.func @transform_1(%arg0: i32) -> (i32, i32) {
    %c0_i32 = arith.constant 0 : i32
    %c0_i32_0 = arith.constant 0 : i32
    %c0_i32_1 = arith.constant 0 : i32
    return %c0_i32, %c0_i32_0 : i32, i32
  }
  func.func @transform_2(%arg0: i32) -> (i32, i32) {
    %c0_i32 = arith.constant 0 : i32
    %c0_i32_0 = arith.constant 0 : i32
    %c0_i32_1 = arith.constant 0 : i32
    return %c0_i32, %c0_i32_0 : i32, i32
  }
  func.func @transform_3(%arg0: i32) -> (i32, i32) {
    %c0_i32 = arith.constant 0 : i32
    %c0_i32_0 = arith.constant 0 : i32
    %c0_i32_1 = arith.constant 0 : i32
    return %c0_i32, %c0_i32_0 : i32, i32
  }
  func.func @transform_4(%arg0: i32) -> (i32, i32) {
    %c0_i32 = arith.constant 0 : i32
    %c0_i32_0 = arith.constant 0 : i32
    %c0_i32_1 = arith.constant 0 : i32
    return %c0_i32, %c0_i32_0 : i32, i32
  }
  func.func @transform_5(%arg0: i32) -> (i32, i32) {
    %c0_i32 = arith.constant 0 : i32
    %c0_i32_0 = arith.constant 0 : i32
    %c0_i32_1 = arith.constant 0 : i32
    return %c0_i32, %c0_i32_0 : i32, i32
  }
  func.func @transform_6(%arg0: i32) -> (i32, i32) {
    %c0_i32 = arith.constant 0 : i32
    %c0_i32_0 = arith.constant 0 : i32
    %c0_i32_1 = arith.constant 0 : i32
    return %c0_i32, %c0_i32_0 : i32, i32
  }
  func.func @transform_7(%arg0: i32) -> (i32, i32, i32) {
    %c0_i32 = arith.constant 0 : i32
    %c0_i32_0 = arith.constant 0 : i32
    %c0_i32_1 = arith.constant 0 : i32
    return %arg0, %c0_i32, %c0_i32_0 : i32, i32, i32
  }
}

</mosaic_0001>

<llo_original>
// kernel: temporal_feat_extractor_forward.1
$region0: #{temporal_feat_extractor_forward.1}
  #allocation0 [shape = 'u32[]', space=smem, size = 0x4, offset = 0x4, fixed_abs, tag = 'smem constant byte address 0x4 - core index']
  #allocation1 [shape = 'u32[72,128]{1,0:T(1,128)}', space=vmem, size = 0x9000, scoped, tag = 'internal scratch']
  #allocation2 [shape = 'f32[18,18,4]{2,1,0:T(8,128)}', space=vmem, size = 0x36000, scoped, tag = 'scratch operand']
  #allocation3 [shape = 'f32[18,18,32]{2,1,0:T(8,128)}', space=vmem, size = 0x36000, scoped, tag = 'scratch operand']
  #allocation4 [shape = 'f32[18,18,32]{2,1,0:T(8,128)}', space=vmem, size = 0x36000, scoped, tag = 'scratch operand']
  %s0 = inlined_call_operand.vmem [shape: f32[2,16,16,4], index: 0, kind: input, shape index: {}]
  %s1 = inlined_call_operand.vmem [shape: bf16[36,33], index: 1, kind: input, shape index: {}]
  %s2 = inlined_call_operand.vmem [shape: f32[1,33], index: 2, kind: input, shape index: {}]
  %s3 = inlined_call_operand.vmem [shape: bf16[288,33], index: 3, kind: input, shape index: {}]
  %s4 = inlined_call_operand.vmem [shape: f32[1,33], index: 4, kind: input, shape index: {}]
  %s5 = inlined_call_operand.vmem [shape: bf16[288,9], index: 5, kind: input, shape index: {}]
  %s6 = inlined_call_operand.vmem [shape: f32[1,9], index: 6, kind: input, shape index: {}]
  %s7 = inlined_call_operand.vmem [shape: f32[2,256,8], index: 7, kind: output, shape index: {}]
  %s8 = sld [smem:[#allocation0]]
  $region61: #{temporal_feat_extractor_forward.1} parent=0
    _
  %s10 = ssub.s32 1, %s8
  %s11 = scalar_select 0, %s10, %s8
  loop: start=0, step=1, limit=4
  $region2: #{temporal_feat_extractor_forward.1} parent=0 // loop_pre_header
    _
  $region3: #{temporal_feat_extractor_forward.1} parent=0 // loop_header
    %s13 = sphi 0, %s17
    %p14 = scmp.ge.s32.totalorder %s13, 4
    %s23 = sphi 0, %s25
    %s26 = sphi 0, %s23
    %s27 = sphi 0, %s26
    %s43 = sphi 0, %s27
    %s47 = sphi 0, %s47
    %s49 = sphi 0, %s47
    %s50 = sphi 0, %s49
    %s64 = sphi 0, %s50
    %s68 = sphi 0, %s68
    %s70 = sphi 0, %s68
    %s71 = sphi 0, %s70
    %s85 = sphi 0, %s71
    %s89 = sphi 0, %s89
    %s91 = sphi 0, %s89
    %s92 = sphi 0, %s91
    %s106 = sphi 0, %s92
    %s110 = sphi 0, %s110
    %s112 = sphi 0, %s110
    %s113 = sphi 0, %s112
    %s127 = sphi 0, %s113
    %s131 = sphi 0, %s131
    %s133 = sphi 0, %s131
    %s134 = sphi 0, %s133
    %s148 = sphi 0, %s134
    %s152 = sphi 0, %s152
    %s154 = sphi 0, %s152
    %s155 = sphi 0, %s154
    %s169 = sphi 0, %s155
    %s175 = sphi 0, %s177
    %s178 = sphi 0, %s175
    %s179 = sphi 0, %s178
    %s195 = sphi 0, %s179
  $region4: #{temporal_feat_extractor_forward.1} parent=0 // loop_header_branch
    %16 = sbr.rel (%p14) target = $region8
  $region5: #{temporal_feat_extractor_forward.1} parent=0 // loop_body
    %s18 = ssub.s32 %s13, 1
    %s19 = ssub.s32 %s13, 2
    %s20 = sadd.s32 %s13, 1
    %s21 = ssub.s32 %s13, %s20
    %p22 = scmp.eq.s32.totalorder %s21, 0
    %s24 = sadd.s32 %s23, 1
    %s25 = scalar_select %p22, %s23, %s24
    %p28 = pneg %p22
    %p29 = scmp.eq.s32.totalorder %s13, 1
    %p30 = por %p28, %p29
    %p31 = scmp.ne.s32.totalorder %s23, %s26
    %p32 = scmp.eq.s32.totalorder %s13, 0
    %p33 = por %p31, %p32
    %p34 = scmp.ne.s32.totalorder %s23, %s26
    %p35 = scmp.eq.s32.totalorder %s18, 1
    %p36 = por %p34, %p35
    %p37 = scmp.ne.s32.totalorder %s26, %s27
    %p38 = scmp.eq.s32.totalorder %s18, 0
    %p39 = por %p37, %p38
    %p40 = scmp.ne.s32.totalorder %s26, %s27
    %p41 = scmp.eq.s32.totalorder %s19, 1
    %p42 = por %p40, %p41
    %p44 = scmp.ne.s32.totalorder %s27, %s43
    %p45 = scmp.eq.s32.totalorder %s19, 0
    %p46 = por %p44, %p45
    %s48 = sadd.s32 %s47, 1
    %p51 = scmp.eq.s32.totalorder %s13, 1
    %p52 = scmp.ne.s32.totalorder %s47, %s49
    %p53 = scmp.eq.s32.totalorder %s13, 0
    %p54 = por %p52, %p53
    %p55 = scmp.ne.s32.totalorder %s47, %s49
    %p56 = scmp.eq.s32.totalorder %s18, 1
    %p57 = por %p55, %p56
    %p58 = scmp.ne.s32.totalorder %s49, %s50
    %p59 = scmp.eq.s32.totalorder %s18, 0
    %p60 = por %p58, %p59
    %p61 = scmp.ne.s32.totalorder %s49, %s50
    %p62 = scmp.eq.s32.totalorder %s19, 1
    %p63 = por %p61, %p62
    %p65 = scmp.ne.s32.totalorder %s50, %s64
    %p66 = scmp.eq.s32.totalorder %s19, 0
    %p67 = por %p65, %p66
    %s69 = sadd.s32 %s68, 1
    %p72 = scmp.eq.s32.totalorder %s13, 1
    %p73 = scmp.ne.s32.totalorder %s68, %s70
    %p74 = scmp.eq.s32.totalorder %s13, 0
    %p75 = por %p73, %p74
    %p76 = scmp.ne.s32.totalorder %s68, %s70
    %p77 = scmp.eq.s32.totalorder %s18, 1
    %p78 = por %p76, %p77
    %p79 = scmp.ne.s32.totalorder %s70, %s71
    %p80 = scmp.eq.s32.totalorder %s18, 0
    %p81 = por %p79, %p80
    %p82 = scmp.ne.s32.totalorder %s70, %s71
    %p83 = scmp.eq.s32.totalorder %s19, 1
    %p84 = por %p82, %p83
    %p86 = scmp.ne.s32.totalorder %s71, %s85
    %p87 = scmp.eq.s32.totalorder %s19, 0
    %p88 = por %p86, %p87
    %s90 = sadd.s32 %s89, 1
    %p93 = scmp.eq.s32.totalorder %s13, 1
    %p94 = scmp.ne.s32.totalorder %s89, %s91
    %p95 = scmp.eq.s32.totalorder %s13, 0
    %p96 = por %p94, %p95
    %p97 = scmp.ne.s32.totalorder %s89, %s91
    %p98 = scmp.eq.s32.totalorder %s18, 1
    %p99 = por %p97, %p98
    %p100 = scmp.ne.s32.totalorder %s91, %s92
    %p101 = scmp.eq.s32.totalorder %s18, 0
    %p102 = por %p100, %p101
    %p103 = scmp.ne.s32.totalorder %s91, %s92
    %p104 = scmp.eq.s32.totalorder %s19, 1
    %p105 = por %p103, %p104
    %p107 = scmp.ne.s32.totalorder %s92, %s106
    %p108 = scmp.eq.s32.totalorder %s19, 0
    %p109 = por %p107, %p108
    %s111 = sadd.s32 %s110, 1
    %p114 = scmp.eq.s32.totalorder %s13, 1
    %p115 = scmp.ne.s32.totalorder %s110, %s112
    %p116 = scmp.eq.s32.totalorder %s13, 0
    %p117 = por %p115, %p116
    %p118 = scmp.ne.s32.totalorder %s110, %s112
    %p119 = scmp.eq.s32.totalorder %s18, 1
    %p120 = por %p118, %p119
    %p121 = scmp.ne.s32.totalorder %s112, %s113
    %p122 = scmp.eq.s32.totalorder %s18, 0
    %p123 = por %p121, %p122
    %p124 = scmp.ne.s32.totalorder %s112, %s113
    %p125 = scmp.eq.s32.totalorder %s19, 1
    %p126 = por %p124, %p125
    %p128 = scmp.ne.s32.totalorder %s113, %s127
    %p129 = scmp.eq.s32.totalorder %s19, 0
    %p130 = por %p128, %p129
    %s132 = sadd.s32 %s131, 1
    %p135 = scmp.eq.s32.totalorder %s13, 1
    %p136 = scmp.ne.s32.totalorder %s131, %s133
    %p137 = scmp.eq.s32.totalorder %s13, 0
    %p138 = por %p136, %p137
    %p139 = scmp.ne.s32.totalorder %s131, %s133
    %p140 = scmp.eq.s32.totalorder %s18, 1
    %p141 = por %p139, %p140
    %p142 = scmp.ne.s32.totalorder %s133, %s134
    %p143 = scmp.eq.s32.totalorder %s18, 0
    %p144 = por %p142, %p143
    %p145 = scmp.ne.s32.totalorder %s133, %s134
    %p146 = scmp.eq.s32.totalorder %s19, 1
    %p147 = por %p145, %p146
    %p149 = scmp.ne.s32.totalorder %s134, %s148
    %p150 = scmp.eq.s32.totalorder %s19, 0
    %p151 = por %p149, %p150
    %s153 = sadd.s32 %s152, 1
    %p156 = scmp.eq.s32.totalorder %s13, 1
    %p157 = scmp.ne.s32.totalorder %s152, %s154
    %p158 = scmp.eq.s32.totalorder %s13, 0
    %p159 = por %p157, %p158
    %p160 = scmp.ne.s32.totalorder %s152, %s154
    %p161 = scmp.eq.s32.totalorder %s18, 1
    %p162 = por %p160, %p161
    %p163 = scmp.ne.s32.totalorder %s154, %s155
    %p164 = scmp.eq.s32.totalorder %s18, 0
    %p165 = por %p163, %p164
    %p166 = scmp.ne.s32.totalorder %s154, %s155
    %p167 = scmp.eq.s32.totalorder %s19, 1
    %p168 = por %p166, %p167
    %p170 = scmp.ne.s32.totalorder %s155, %s169
    %p171 = scmp.eq.s32.totalorder %s19, 0
    %p172 = por %p170, %p171
    %s173 = ssub.s32 %s13, %s20
    %p174 = scmp.eq.s32.totalorder %s173, 0
    %s176 = sadd.s32 %s175, 1
    %s177 = scalar_select %p174, %s175, %s176
    %p180 = pneg %p174
    %p181 = scmp.eq.s32.totalorder %s13, 1
    %p182 = por %p180, %p181
    %p183 = scmp.ne.s32.totalorder %s175, %s178
    %p184 = scmp.eq.s32.totalorder %s13, 0
    %p185 = por %p183, %p184
    %p186 = scmp.ne.s32.totalorder %s175, %s178
    %p187 = scmp.eq.s32.totalorder %s18, 1
    %p188 = por %p186, %p187
    %p189 = scmp.ne.s32.totalorder %s178, %s179
    %p190 = scmp.eq.s32.totalorder %s18, 0
    %p191 = por %p189, %p190
    %p192 = scmp.ne.s32.totalorder %s178, %s179
    %p193 = scmp.eq.s32.totalorder %s19, 1
    %p194 = por %p192, %p193
    %p196 = scmp.ne.s32.totalorder %s179, %s195
    %p197 = scmp.eq.s32.totalorder %s19, 0
    %p198 = por %p196, %p197
    %p199 = scmp.le.s32.totalorder 1, %s13
    %p200 = scmp.lt.s32.totalorder %s13, 3
    %p201 = pnand %p199, %p200
    %p202 = pneg %p201
    // Predicated region
    $region9: #{temporal_feat_extractor_forward.1} parent=5 // pred_check
      _
    $region10: #{temporal_feat_extractor_forward.1} parent=5 // pred_check_branch
      %204 = sbr.rel (%p201) target = $region12
    $region11: #{temporal_feat_extractor_forward.1} parent=5 // pred_region
      %s205 = ssub.s32 %s13, 1
      // Predicated region
      $region13: #{temporal_feat_extractor_forward.1} parent=11 // pred_check
        %p206 = pneg %p60
      $region14: #{temporal_feat_extractor_forward.1} parent=11 // pred_check_branch
        %208 = sbr.rel (%p206) target = $region16
      $region15: #{temporal_feat_extractor_forward.1} parent=11 // pred_region
        _
      $region16: #{temporal_feat_extractor_forward.1} parent=11 // pred_fallthru
        _
      // Predicated region
      $region17: #{temporal_feat_extractor_forward.1} parent=11 // pred_check
        %p209 = pneg %p81
      $region18: #{temporal_feat_extractor_forward.1} parent=11 // pred_check_branch
        %211 = sbr.rel (%p209) target = $region20
      $region19: #{temporal_feat_extractor_forward.1} parent=11 // pred_region
        _
      $region20: #{temporal_feat_extractor_forward.1} parent=11 // pred_fallthru
        _
      // Predicated region
      $region21: #{temporal_feat_extractor_forward.1} parent=11 // pred_check
        %p212 = pneg %p102
      $region22: #{temporal_feat_extractor_forward.1} parent=11 // pred_check_branch
        %214 = sbr.rel (%p212) target = $region24
      $region23: #{temporal_feat_extractor_forward.1} parent=11 // pred_region
        _
      $region24: #{temporal_feat_extractor_forward.1} parent=11 // pred_fallthru
        _
      // Predicated region
      $region25: #{temporal_feat_extractor_forward.1} parent=11 // pred_check
        %p215 = pneg %p123
      $region26: #{temporal_feat_extractor_forward.1} parent=11 // pred_check_branch
        %217 = sbr.rel (%p215) target = $region28
      $region27: #{temporal_feat_extractor_forward.1} parent=11 // pred_region
        _
      $region28: #{temporal_feat_extractor_forward.1} parent=11 // pred_fallthru
        _
      // Predicated region
      $region29: #{temporal_feat_extractor_forward.1} parent=11 // pred_check
        %p218 = pneg %p144
      $region30: #{temporal_feat_extractor_forward.1} parent=11 // pred_check_branch
        %220 = sbr.rel (%p218) target = $region32
      $region31: #{temporal_feat_extractor_forward.1} parent=11 // pred_region
        _
      $region32: #{temporal_feat_extractor_forward.1} parent=11 // pred_fallthru
        _
      // Predicated region
      $region33: #{temporal_feat_extractor_forward.1} parent=11 // pred_check
        %p221 = pneg %p165
      $region34: #{temporal_feat_extractor_forward.1} parent=11 // pred_check_branch
        %223 = sbr.rel (%p221) target = $region36
      $region35: #{temporal_feat_extractor_forward.1} parent=11 // pred_region
        _
      $region36: #{temporal_feat_extractor_forward.1} parent=11 // pred_fallthru
        _
    $region12: #{temporal_feat_extractor_forward.1} parent=5 // pred_fallthru
      _
    %p224 = scmp.lt.s32.totalorder %s13, 2
    // Predicated region
    $region37: #{temporal_feat_extractor_forward.1} parent=5 // pred_check
      %p225 = pneg %p224
    $region38: #{temporal_feat_extractor_forward.1} parent=5 // pred_check_branch
      %227 = sbr.rel (%p225) target = $region40
    $region39: #{temporal_feat_extractor_forward.1} parent=5 // pred_region
      // Predicated region
      $region41: #{temporal_feat_extractor_forward.1} parent=39 // pred_check
        %p228 = pneg %p33
      $region42: #{temporal_feat_extractor_forward.1} parent=39 // pred_check_branch
        %230 = sbr.rel (%p228) target = $region44
      $region43: #{temporal_feat_extractor_forward.1} parent=39 // pred_region
        %p231 = scmp.lt.s32.totalorder %s13, 1
        %s232 = scalar_select %p231, %s13, 1
        %s233 = smul.addr %s232, 32
        %s234 = smul.addr %s233, 8
        %s235 = scalar_lea.vmem %s0, %s234
      $region44: #{temporal_feat_extractor_forward.1} parent=39 // pred_fallthru
        _
    $region40: #{temporal_feat_extractor_forward.1} parent=5 // pred_fallthru
      _
    %p236 = scmp.le.s32.totalorder 1, %s13
    %p237 = scmp.lt.s32.totalorder %s13, 3
    %p238 = pnand %p236, %p237
    %p239 = pneg %p238
    // Predicated region
    $region45: #{temporal_feat_extractor_forward.1} parent=5 // pred_check
      _
    $region46: #{temporal_feat_extractor_forward.1} parent=5 // pred_check_branch
      %241 = sbr.rel (%p238) target = $region48
    $region47: #{temporal_feat_extractor_forward.1} parent=5 // pred_region
      %s242 = ssub.s32 %s13, 1
      %p243 = scmp.lt.s32.totalorder %s18, 1
      %s244 = scalar_select %p243, %s18, 1
      %s245 = smul.addr %s244, 32
      %s246 = smul.addr %s245, 8
      %s247 = scalar_lea.vmem %s0, %s246
      %p248 = pneg %p39
      %p249 = pneg %p36
      %p250 = pneg %p60
      %p251 = pneg %p57
      %p252 = pneg %p81
      %p253 = pneg %p78
      %p254 = pneg %p102
      %p255 = pneg %p99
      %p256 = pneg %p123
      %p257 = pneg %p120
      %p258 = pneg %p144
      %p259 = pneg %p141
      %p260 = pneg %p165
      %p261 = pneg %p162
      %p262 = pneg %p191
      %p263 = pneg %p188
      %p264 = scmp.lt.s32.totalorder %s18, 1
      %s265 = scalar_select %p264, %s18, 1
      %s266 = smul.addr %s265, 32
      %s267 = smul.addr %s266, 8
      %s268 = scalar_lea.vmem %s7, %s267
      %p269 = scmp.lt.s32.totalorder %s18, 1
      %s270 = scalar_select %p269, %s18, 1
      %s271 = smul.addr %s270, 32
      %s272 = smul.addr %s271, 8
      %s273 = scalar_lea.vmem %s0, %s272
      %p274 = scmp.lt.s32.totalorder %s18, 1
      %s275 = scalar_select %p274, %s18, 1
      %s276 = smul.addr %s275, 32
      %s277 = smul.addr %s276, 8
      %s278 = scalar_lea.vmem %s7, %s277
      %vm280 = vcmask 31744
      %281 = vst.msk [vmem:[#allocation2] sm:$0xff] %vm280, 0.0
      %282 = vst.msk [vmem:[#allocation2 + $0x8] sm:$0xff] %vm280, 0.0
      %vm283 = vcmask 25600
      %284 = vst.msk [vmem:[#allocation2 + $0x10] sm:$0x3] %vm283, 0.0
      %285 = vst.msk [vmem:[#allocation2 + $0x18] sm:$0xff] %vm280, 0.0
      %286 = vst.msk [vmem:[#allocation2 + $0x20] sm:$0xff] %vm280, 0.0
      %287 = vst.msk [vmem:[#allocation2 + $0x28] sm:$0x3] %vm283, 0.0
      %288 = vst.msk [vmem:[#allocation2 + $0x30] sm:$0xff] %vm280, 0.0
      %289 = vst.msk [vmem:[#allocation2 + $0x38] sm:$0xff] %vm280, 0.0
      %290 = vst.msk [vmem:[#allocation2 + $0x40] sm:$0x3] %vm283, 0.0
      %291 = vst.msk [vmem:[#allocation2 + $0x48] sm:$0xff] %vm280, 0.0
      %292 = vst.msk [vmem:[#allocation2 + $0x50] sm:$0xff] %vm280, 0.0
      %293 = vst.msk [vmem:[#allocation2 + $0x58] sm:$0x3] %vm283, 0.0
      %294 = vst.msk [vmem:[#allocation2 + $0x60] sm:$0xff] %vm280, 0.0
      %295 = vst.msk [vmem:[#allocation2 + $0x68] sm:$0xff] %vm280, 0.0
      %296 = vst.msk [vmem:[#allocation2 + $0x70] sm:$0x3] %vm283, 0.0
      %297 = vst.msk [vmem:[#allocation2 + $0x78] sm:$0xff] %vm280, 0.0
      %298 = vst.msk [vmem:[#allocation2 + $0x80] sm:$0xff] %vm280, 0.0
      %299 = vst.msk [vmem:[#allocation2 + $0x88] sm:$0x3] %vm283, 0.0
      %300 = vst.msk [vmem:[#allocation2 + $0x90] sm:$0xff] %vm280, 0.0
      %301 = vst.msk [vmem:[#allocation2 + $0x98] sm:$0xff] %vm280, 0.0
      %302 = vst.msk [vmem:[#allocation2 + $0xa0] sm:$0x3] %vm283, 0.0
      %303 = vst.msk [vmem:[#allocation2 + $0xa8] sm:$0xff] %vm280, 0.0
      %304 = vst.msk [vmem:[#allocation2 + $0xb0] sm:$0xff] %vm280, 0.0
      %305 = vst.msk [vmem:[#allocation2 + $0xb8] sm:$0x3] %vm283, 0.0
      %306 = vst.msk [vmem:[#allocation2 + $0xc0] sm:$0xff] %vm280, 0.0
      %307 = vst.msk [vmem:[#allocation2 + $0xc8] sm:$0xff] %vm280, 0.0
      %308 = vst.msk [vmem:[#allocation2 + $0xd0] sm:$0x3] %vm283, 0.0
      %309 = vst.msk [vmem:[#allocation2 + $0xd8] sm:$0xff] %vm280, 0.0
      %310 = vst.msk [vmem:[#allocation2 + $0xe0] sm:$0xff] %vm280, 0.0
      %311 = vst.msk [vmem:[#allocation2 + $0xe8] sm:$0x3] %vm283, 0.0
      %312 = vst.msk [vmem:[#allocation2 + $0xf0] sm:$0xff] %vm280, 0.0
      %313 = vst.msk [vmem:[#allocation2 + $0xf8] sm:$0xff] %vm280, 0.0
      %314 = vst.msk [vmem:[#allocation2 + $0x100] sm:$0x3] %vm283, 0.0
      %315 = vst.msk [vmem:[#allocation2 + $0x108] sm:$0xff] %vm280, 0.0
      %316 = vst.msk [vmem:[#allocation2 + $0x110] sm:$0xff] %vm280, 0.0
      %317 = vst.msk [vmem:[#allocation2 + $0x118] sm:$0x3] %vm283, 0.0
      %318 = vst.msk [vmem:[#allocation2 + $0x120] sm:$0xff] %vm280, 0.0
      %319 = vst.msk [vmem:[#allocation2 + $0x128] sm:$0xff] %vm280, 0.0
      %320 = vst.msk [vmem:[#allocation2 + $0x130] sm:$0x3] %vm283, 0.0
      %321 = vst.msk [vmem:[#allocation2 + $0x138] sm:$0xff] %vm280, 0.0
      %322 = vst.msk [vmem:[#allocation2 + $0x140] sm:$0xff] %vm280, 0.0
      %323 = vst.msk [vmem:[#allocation2 + $0x148] sm:$0x3] %vm283, 0.0
      %324 = vst.msk [vmem:[#allocation2 + $0x150] sm:$0xff] %vm280, 0.0
      %325 = vst.msk [vmem:[#allocation2 + $0x158] sm:$0xff] %vm280, 0.0
      %326 = vst.msk [vmem:[#allocation2 + $0x160] sm:$0x3] %vm283, 0.0
      %327 = vst.msk [vmem:[#allocation2 + $0x168] sm:$0xff] %vm280, 0.0
      %328 = vst.msk [vmem:[#allocation2 + $0x170] sm:$0xff] %vm280, 0.0
      %329 = vst.msk [vmem:[#allocation2 + $0x178] sm:$0x3] %vm283, 0.0
      %330 = vst.msk [vmem:[#allocation2 + $0x180] sm:$0xff] %vm280, 0.0
      %331 = vst.msk [vmem:[#allocation2 + $0x188] sm:$0xff] %vm280, 0.0
      %332 = vst.msk [vmem:[#allocation2 + $0x190] sm:$0x3] %vm283, 0.0
      %333 = vst.msk [vmem:[#allocation2 + $0x198] sm:$0xff] %vm280, 0.0
      %334 = vst.msk [vmem:[#allocation2 + $0x1a0] sm:$0xff] %vm280, 0.0
      %335 = vst.msk [vmem:[#allocation2 + $0x1a8] sm:$0x3] %vm283, 0.0
      %vm336 = vcmask 261120
      %337 = vst.msk [vmem:[#allocation3] sm:$0xff] %vm336, 0.0
      %338 = vst.msk [vmem:[#allocation3 + $0x8] sm:$0xff] %vm336, 0.0
      %vm339 = vcmask 254976
      %340 = vst.msk [vmem:[#allocation3 + $0x10] sm:$0x3] %vm339, 0.0
      %341 = vst.msk [vmem:[#allocation3 + $0x18] sm:$0xff] %vm336, 0.0
      %342 = vst.msk [vmem:[#allocation3 + $0x20] sm:$0xff] %vm336, 0.0
      %343 = vst.msk [vmem:[#allocation3 + $0x28] sm:$0x3] %vm339, 0.0
      %344 = vst.msk [vmem:[#allocation3 + $0x30] sm:$0xff] %vm336, 0.0
      %345 = vst.msk [vmem:[#allocation3 + $0x38] sm:$0xff] %vm336, 0.0
      %346 = vst.msk [vmem:[#allocation3 + $0x40] sm:$0x3] %vm339, 0.0
      %347 = vst.msk [vmem:[#allocation3 + $0x48] sm:$0xff] %vm336, 0.0
      %348 = vst.msk [vmem:[#allocation3 + $0x50] sm:$0xff] %vm336, 0.0
      %349 = vst.msk [vmem:[#allocation3 + $0x58] sm:$0x3] %vm339, 0.0
      %350 = vst.msk [vmem:[#allocation3 + $0x60] sm:$0xff] %vm336, 0.0
      %351 = vst.msk [vmem:[#allocation3 + $0x68] sm:$0xff] %vm336, 0.0
      %352 = vst.msk [vmem:[#allocation3 + $0x70] sm:$0x3] %vm339, 0.0
      %353 = vst.msk [vmem:[#allocation3 + $0x78] sm:$0xff] %vm336, 0.0
      %354 = vst.msk [vmem:[#allocation3 + $0x80] sm:$0xff] %vm336, 0.0
      %355 = vst.msk [vmem:[#allocation3 + $0x88] sm:$0x3] %vm339, 0.0
      %356 = vst.msk [vmem:[#allocation3 + $0x90] sm:$0xff] %vm336, 0.0
      %357 = vst.msk [vmem:[#allocation3 + $0x98] sm:$0xff] %vm336, 0.0
      %358 = vst.msk [vmem:[#allocation3 + $0xa0] sm:$0x3] %vm339, 0.0
      %359 = vst.msk [vmem:[#allocation3 + $0xa8] sm:$0xff] %vm336, 0.0
      %360 = vst.msk [vmem:[#allocation3 + $0xb0] sm:$0xff] %vm336, 0.0
      %361 = vst.msk [vmem:[#allocation3 + $0xb8] sm:$0x3] %vm339, 0.0
      %362 = vst.msk [vmem:[#allocation3 + $0xc0] sm:$0xff] %vm336, 0.0
      %363 = vst.msk [vmem:[#allocation3 + $0xc8] sm:$0xff] %vm336, 0.0
      %364 = vst.msk [vmem:[#allocation3 + $0xd0] sm:$0x3] %vm339, 0.0
      %365 = vst.msk [vmem:[#allocation3 + $0xd8] sm:$0xff] %vm336, 0.0
      %366 = vst.msk [vmem:[#allocation3 + $0xe0] sm:$0xff] %vm336, 0.0
      %367 = vst.msk [vmem:[#allocation3 + $0xe8] sm:$0x3] %vm339, 0.0
      %368 = vst.msk [vmem:[#allocation3 + $0xf0] sm:$0xff] %vm336, 0.0
      %369 = vst.msk [vmem:[#allocation3 + $0xf8] sm:$0xff] %vm336, 0.0
      %370 = vst.msk [vmem:[#allocation3 + $0x100] sm:$0x3] %vm339, 0.0
      %371 = vst.msk [vmem:[#allocation3 + $0x108] sm:$0xff] %vm336, 0.0
      %372 = vst.msk [vmem:[#allocation3 + $0x110] sm:$0xff] %vm336, 0.0
      %373 = vst.msk [vmem:[#allocation3 + $0x118] sm:$0x3] %vm339, 0.0
      %374 = vst.msk [vmem:[#allocation3 + $0x120] sm:$0xff] %vm336, 0.0
      %375 = vst.msk [vmem:[#allocation3 + $0x128] sm:$0xff] %vm336, 0.0
      %376 = vst.msk [vmem:[#allocation3 + $0x130] sm:$0x3] %vm339, 0.0
      %377 = vst.msk [vmem:[#allocation3 + $0x138] sm:$0xff] %vm336, 0.0
      %378 = vst.msk [vmem:[#allocation3 + $0x140] sm:$0xff] %vm336, 0.0
      %379 = vst.msk [vmem:[#allocation3 + $0x148] sm:$0x3] %vm339, 0.0
      %380 = vst.msk [vmem:[#allocation3 + $0x150] sm:$0xff] %vm336, 0.0
      %381 = vst.msk [vmem:[#allocation3 + $0x158] sm:$0xff] %vm336, 0.0
      %382 = vst.msk [vmem:[#allocation3 + $0x160] sm:$0x3] %vm339, 0.0
      %383 = vst.msk [vmem:[#allocation3 + $0x168] sm:$0xff] %vm336, 0.0
      %384 = vst.msk [vmem:[#allocation3 + $0x170] sm:$0xff] %vm336, 0.0
      %385 = vst.msk [vmem:[#allocation3 + $0x178] sm:$0x3] %vm339, 0.0
      %386 = vst.msk [vmem:[#allocation3 + $0x180] sm:$0xff] %vm336, 0.0
      %387 = vst.msk [vmem:[#allocation3 + $0x188] sm:$0xff] %vm336, 0.0
      %388 = vst.msk [vmem:[#allocation3 + $0x190] sm:$0x3] %vm339, 0.0
      %389 = vst.msk [vmem:[#allocation3 + $0x198] sm:$0xff] %vm336, 0.0
      %390 = vst.msk [vmem:[#allocation3 + $0x1a0] sm:$0xff] %vm336, 0.0
      %391 = vst.msk [vmem:[#allocation3 + $0x1a8] sm:$0x3] %vm339, 0.0
      %392 = vst.msk [vmem:[#allocation4] sm:$0xff] %vm336, 0.0
      %393 = vst.msk [vmem:[#allocation4 + $0x8] sm:$0xff] %vm336, 0.0
      %394 = vst.msk [vmem:[#allocation4 + $0x10] sm:$0x3] %vm339, 0.0
      %395 = vst.msk [vmem:[#allocation4 + $0x18] sm:$0xff] %vm336, 0.0
      %396 = vst.msk [vmem:[#allocation4 + $0x20] sm:$0xff] %vm336, 0.0
      %397 = vst.msk [vmem:[#allocation4 + $0x28] sm:$0x3] %vm339, 0.0
      %398 = vst.msk [vmem:[#allocation4 + $0x30] sm:$0xff] %vm336, 0.0
      %399 = vst.msk [vmem:[#allocation4 + $0x38] sm:$0xff] %vm336, 0.0
      %400 = vst.msk [vmem:[#allocation4 + $0x40] sm:$0x3] %vm339, 0.0
      %401 = vst.msk [vmem:[#allocation4 + $0x48] sm:$0xff] %vm336, 0.0
      %402 = vst.msk [vmem:[#allocation4 + $0x50] sm:$0xff] %vm336, 0.0
      %403 = vst.msk [vmem:[#allocation4 + $0x58] sm:$0x3] %vm339, 0.0
      %404 = vst.msk [vmem:[#allocation4 + $0x60] sm:$0xff] %vm336, 0.0
      %405 = vst.msk [vmem:[#allocation4 + $0x68] sm:$0xff] %vm336, 0.0
      %406 = vst.msk [vmem:[#allocation4 + $0x70] sm:$0x3] %vm339, 0.0
      %407 = vst.msk [vmem:[#allocation4 + $0x78] sm:$0xff] %vm336, 0.0
      %408 = vst.msk [vmem:[#allocation4 + $0x80] sm:$0xff] %vm336, 0.0
      %409 = vst.msk [vmem:[#allocation4 + $0x88] sm:$0x3] %vm339, 0.0
      %410 = vst.msk [vmem:[#allocation4 + $0x90] sm:$0xff] %vm336, 0.0
      %411 = vst.msk [vmem:[#allocation4 + $0x98] sm:$0xff] %vm336, 0.0
      %412 = vst.msk [vmem:[#allocation4 + $0xa0] sm:$0x3] %vm339, 0.0
      %413 = vst.msk [vmem:[#allocation4 + $0xa8] sm:$0xff] %vm336, 0.0
      %414 = vst.msk [vmem:[#allocation4 + $0xb0] sm:$0xff] %vm336, 0.0
      %415 = vst.msk [vmem:[#allocation4 + $0xb8] sm:$0x3] %vm339, 0.0
      %416 = vst.msk [vmem:[#allocation4 + $0xc0] sm:$0xff] %vm336, 0.0
      %417 = vst.msk [vmem:[#allocation4 + $0xc8] sm:$0xff] %vm336, 0.0
      %418 = vst.msk [vmem:[#allocation4 + $0xd0] sm:$0x3] %vm339, 0.0
      %419 = vst.msk [vmem:[#allocation4 + $0xd8] sm:$0xff] %vm336, 0.0
      %420 = vst.msk [vmem:[#allocation4 + $0xe0] sm:$0xff] %vm336, 0.0
      %421 = vst.msk [vmem:[#allocation4 + $0xe8] sm:$0x3] %vm339, 0.0
      %422 = vst.msk [vmem:[#allocation4 + $0xf0] sm:$0xff] %vm336, 0.0
      %423 = vst.msk [vmem:[#allocation4 + $0xf8] sm:$0xff] %vm336, 0.0
      %424 = vst.msk [vmem:[#allocation4 + $0x100] sm:$0x3] %vm339, 0.0
      %425 = vst.msk [vmem:[#allocation4 + $0x108] sm:$0xff] %vm336, 0.0
      %426 = vst.msk [vmem:[#allocation4 + $0x110] sm:$0xff] %vm336, 0.0
      %427 = vst.msk [vmem:[#allocation4 + $0x118] sm:$0x3] %vm339, 0.0
      %428 = vst.msk [vmem:[#allocation4 + $0x120] sm:$0xff] %vm336, 0.0
      %429 = vst.msk [vmem:[#allocation4 + $0x128] sm:$0xff] %vm336, 0.0
      %430 = vst.msk [vmem:[#allocation4 + $0x130] sm:$0x3] %vm339, 0.0
      %431 = vst.msk [vmem:[#allocation4 + $0x138] sm:$0xff] %vm336, 0.0
      %432 = vst.msk [vmem:[#allocation4 + $0x140] sm:$0xff] %vm336, 0.0
      %433 = vst.msk [vmem:[#allocation4 + $0x148] sm:$0x3] %vm339, 0.0
      %434 = vst.msk [vmem:[#allocation4 + $0x150] sm:$0xff] %vm336, 0.0
      %435 = vst.msk [vmem:[#allocation4 + $0x158] sm:$0xff] %vm336, 0.0
      %436 = vst.msk [vmem:[#allocation4 + $0x160] sm:$0x3] %vm339, 0.0
      %437 = vst.msk [vmem:[#allocation4 + $0x168] sm:$0xff] %vm336, 0.0
      %438 = vst.msk [vmem:[#allocation4 + $0x170] sm:$0xff] %vm336, 0.0
      %439 = vst.msk [vmem:[#allocation4 + $0x178] sm:$0x3] %vm339, 0.0
      %440 = vst.msk [vmem:[#allocation4 + $0x180] sm:$0xff] %vm336, 0.0
      %441 = vst.msk [vmem:[#allocation4 + $0x188] sm:$0xff] %vm336, 0.0
      %442 = vst.msk [vmem:[#allocation4 + $0x190] sm:$0x3] %vm339, 0.0
      %443 = vst.msk [vmem:[#allocation4 + $0x198] sm:$0xff] %vm336, 0.0
      %444 = vst.msk [vmem:[#allocation4 + $0x1a0] sm:$0xff] %vm336, 0.0
      %445 = vst.msk [vmem:[#allocation4 + $0x1a8] sm:$0x3] %vm339, 0.0
      %v446 = vld [vmem:[%s273] sm:$0xff]
      %v447 = vld [vmem:[%s273 + $0x8] sm:$0xff]
      %v448 = vld [vmem:[%s273 + $0x10] sm:$0xff]
      %v449 = vld [vmem:[%s273 + $0x18] sm:$0xff]
      %v450 = vld [vmem:[%s273 + $0x20] sm:$0xff]
      %v451 = vld [vmem:[%s273 + $0x28] sm:$0xff]
      %v452 = vld [vmem:[%s273 + $0x30] sm:$0xff]
      %v453 = vld [vmem:[%s273 + $0x38] sm:$0xff]
      %v454 = vld [vmem:[%s273 + $0x40] sm:$0xff]
      %v455 = vld [vmem:[%s273 + $0x48] sm:$0xff]
      %v456 = vld [vmem:[%s273 + $0x50] sm:$0xff]
      %v457 = vld [vmem:[%s273 + $0x58] sm:$0xff]
      %v458 = vld [vmem:[%s273 + $0x60] sm:$0xff]
      %v459 = vld [vmem:[%s273 + $0x68] sm:$0xff]
      %v460 = vld [vmem:[%s273 + $0x70] sm:$0xff]
      %v461 = vld [vmem:[%s273 + $0x78] sm:$0xff]
      %v462 = vld [vmem:[%s273 + $0x80] sm:$0xff]
      %v463 = vld [vmem:[%s273 + $0x88] sm:$0xff]
      %v464 = vld [vmem:[%s273 + $0x90] sm:$0xff]
      %v465 = vld [vmem:[%s273 + $0x98] sm:$0xff]
      %v466 = vld [vmem:[%s273 + $0xa0] sm:$0xff]
      %v467 = vld [vmem:[%s273 + $0xa8] sm:$0xff]
      %v468 = vld [vmem:[%s273 + $0xb0] sm:$0xff]
      %v469 = vld [vmem:[%s273 + $0xb8] sm:$0xff]
      %v470 = vld [vmem:[%s273 + $0xc0] sm:$0xff]
      %v471 = vld [vmem:[%s273 + $0xc8] sm:$0xff]
      %v472 = vld [vmem:[%s273 + $0xd0] sm:$0xff]
      %v473 = vld [vmem:[%s273 + $0xd8] sm:$0xff]
      %v474 = vld [vmem:[%s273 + $0xe0] sm:$0xff]
      %v475 = vld [vmem:[%s273 + $0xe8] sm:$0xff]
      %v476 = vld [vmem:[%s273 + $0xf0] sm:$0xff]
      %v477 = vld [vmem:[%s273 + $0xf8] sm:$0xff]
      %s478 = scalar_lea.vmem [#allocation2], 24
      %479 = vst.msk [vmem:[%s478 + $0x1] sm:$0xff] %vm280, %v446
      %480 = vst.msk [vmem:[%s478 + $0x9] sm:$0xff] %vm280, %v447
      %481 = vst.msk [vmem:[%s478 + $0x19] sm:$0xff] %vm280, %v448
      %482 = vst.msk [vmem:[%s478 + $0x21] sm:$0xff] %vm280, %v449
      %483 = vst.msk [vmem:[%s478 + $0x31] sm:$0xff] %vm280, %v450
      %484 = vst.msk [vmem:[%s478 + $0x39] sm:$0xff] %vm280, %v451
      %485 = vst.msk [vmem:[%s478 + $0x49] sm:$0xff] %vm280, %v452
      %486 = vst.msk [vmem:[%s478 + $0x51] sm:$0xff] %vm280, %v453
      %487 = vst.msk [vmem:[%s478 + $0x61] sm:$0xff] %vm280, %v454
      %488 = vst.msk [vmem:[%s478 + $0x69] sm:$0xff] %vm280, %v455
      %489 = vst.msk [vmem:[%s478 + $0x79] sm:$0xff] %vm280, %v456
      %490 = vst.msk [vmem:[%s478 + $0x81] sm:$0xff] %vm280, %v457
      %491 = vst.msk [vmem:[%s478 + $0x91] sm:$0xff] %vm280, %v458
      %492 = vst.msk [vmem:[%s478 + $0x99] sm:$0xff] %vm280, %v459
      %493 = vst.msk [vmem:[%s478 + $0xa9] sm:$0xff] %vm280, %v460
      %494 = vst.msk [vmem:[%s478 + $0xb1] sm:$0xff] %vm280, %v461
      %495 = vst.msk [vmem:[%s478 + $0xc1] sm:$0xff] %vm280, %v462
      %496 = vst.msk [vmem:[%s478 + $0xc9] sm:$0xff] %vm280, %v463
      %497 = vst.msk [vmem:[%s478 + $0xd9] sm:$0xff] %vm280, %v464
      %498 = vst.msk [vmem:[%s478 + $0xe1] sm:$0xff] %vm280, %v465
      %499 = vst.msk [vmem:[%s478 + $0xf1] sm:$0xff] %vm280, %v466
      %500 = vst.msk [vmem:[%s478 + $0xf9] sm:$0xff] %vm280, %v467
      %501 = vst.msk [vmem:[%s478 + $0x109] sm:$0xff] %vm280, %v468
      %502 = vst.msk [vmem:[%s478 + $0x111] sm:$0xff] %vm280, %v469
      %503 = vst.msk [vmem:[%s478 + $0x121] sm:$0xff] %vm280, %v470
      %504 = vst.msk [vmem:[%s478 + $0x129] sm:$0xff] %vm280, %v471
      %505 = vst.msk [vmem:[%s478 + $0x139] sm:$0xff] %vm280, %v472
      %506 = vst.msk [vmem:[%s478 + $0x141] sm:$0xff] %vm280, %v473
      %507 = vst.msk [vmem:[%s478 + $0x151] sm:$0xff] %vm280, %v474
      %508 = vst.msk [vmem:[%s478 + $0x159] sm:$0xff] %vm280, %v475
      %509 = vst.msk [vmem:[%s478 + $0x169] sm:$0xff] %vm280, %v476
      %510 = vst.msk [vmem:[%s478 + $0x171] sm:$0xff] %vm280, %v477
      %v511 = vld [vmem:[#allocation2] sm:$0xff]
      %v512 = vld [vmem:[#allocation2 + $0x8] sm:$0xff]
      %v513 = vld [vmem:[#allocation2 + $0x18] sm:$0xff]
      %v514 = vld [vmem:[#allocation2 + $0x20] sm:$0xff]
      %v515 = vld [vmem:[#allocation2 + $0x30] sm:$0xff]
      %v516 = vld [vmem:[#allocation2 + $0x38] sm:$0xff]
      %v517 = vld [vmem:[#allocation2 + $0x48] sm:$0xff]
      %v518 = vld [vmem:[#allocation2 + $0x50] sm:$0xff]
      %v519 = vld [vmem:[#allocation2 + $0x60] sm:$0xff]
      %v520 = vld [vmem:[#allocation2 + $0x68] sm:$0xff]
      %v521 = vld [vmem:[#allocation2 + $0x78] sm:$0xff]
      %v522 = vld [vmem:[#allocation2 + $0x80] sm:$0xff]
      %v523 = vld [vmem:[#allocation2 + $0x90] sm:$0xff]
      %v524 = vld [vmem:[#allocation2 + $0x98] sm:$0xff]
      %v525 = vld [vmem:[#allocation2 + $0xa8] sm:$0xff]
      %v526 = vld [vmem:[#allocation2 + $0xb0] sm:$0xff]
      %v527 = vld [vmem:[#allocation2 + $0xc0] sm:$0xff]
      %v528 = vld [vmem:[#allocation2 + $0xc8] sm:$0xff]
      %v529 = vld [vmem:[#allocation2 + $0xd8] sm:$0xff]
      %v530 = vld [vmem:[#allocation2 + $0xe0] sm:$0xff]
      %v531 = vld [vmem:[#allocation2 + $0xf0] sm:$0xff]
      %v532 = vld [vmem:[#allocation2 + $0xf8] sm:$0xff]
      %v533 = vld [vmem:[#allocation2 + $0x108] sm:$0xff]
      %v534 = vld [vmem:[#allocation2 + $0x110] sm:$0xff]
      %v535 = vld [vmem:[#allocation2 + $0x120] sm:$0xff]
      %v536 = vld [vmem:[#allocation2 + $0x128] sm:$0xff]
      %v537 = vld [vmem:[#allocation2 + $0x138] sm:$0xff]
      %v538 = vld [vmem:[#allocation2 + $0x140] sm:$0xff]
      %v539 = vld [vmem:[#allocation2 + $0x150] sm:$0xff]
      %v540 = vld [vmem:[#allocation2 + $0x158] sm:$0xff]
      %v541 = vld [vmem:[#allocation2 + $0x168] sm:$0xff]
      %v542 = vld [vmem:[#allocation2 + $0x170] sm:$0xff]
      %v543 = vld [vmem:[#allocation2 + $0x1] sm:$0xff]
      %v544 = vld [vmem:[#allocation2 + $0x9] sm:$0xff]
      %v545 = vld [vmem:[#allocation2 + $0x19] sm:$0xff]
      %v546 = vld [vmem:[#allocation2 + $0x21] sm:$0xff]
      %v547 = vld [vmem:[#allocation2 + $0x31] sm:$0xff]
      %v548 = vld [vmem:[#allocation2 + $0x39] sm:$0xff]
      %v549 = vld [vmem:[#allocation2 + $0x49] sm:$0xff]
      %v550 = vld [vmem:[#allocation2 + $0x51] sm:$0xff]
      %v551 = vld [vmem:[#allocation2 + $0x61] sm:$0xff]
      %v552 = vld [vmem:[#allocation2 + $0x69] sm:$0xff]
      %v553 = vld [vmem:[#allocation2 + $0x79] sm:$0xff]
      %v554 = vld [vmem:[#allocation2 + $0x81] sm:$0xff]
      %v555 = vld [vmem:[#allocation2 + $0x91] sm:$0xff]
      %v556 = vld [vmem:[#allocation2 + $0x99] sm:$0xff]
      %v557 = vld [vmem:[#allocation2 + $0xa9] sm:$0xff]
      %v558 = vld [vmem:[#allocation2 + $0xb1] sm:$0xff]
      %v559 = vld [vmem:[#allocation2 + $0xc1] sm:$0xff]
      %v560 = vld [vmem:[#allocation2 + $0xc9] sm:$0xff]
      %v561 = vld [vmem:[#allocation2 + $0xd9] sm:$0xff]
      %v562 = vld [vmem:[#allocation2 + $0xe1] sm:$0xff]
      %v563 = vld [vmem:[#allocation2 + $0xf1] sm:$0xff]
      %v564 = vld [vmem:[#allocation2 + $0xf9] sm:$0xff]
      %v565 = vld [vmem:[#allocation2 + $0x109] sm:$0xff]
      %v566 = vld [vmem:[#allocation2 + $0x111] sm:$0xff]
      %v567 = vld [vmem:[#allocation2 + $0x121] sm:$0xff]
      %v568 = vld [vmem:[#allocation2 + $0x129] sm:$0xff]
      %v569 = vld [vmem:[#allocation2 + $0x139] sm:$0xff]
      %v570 = vld [vmem:[#allocation2 + $0x141] sm:$0xff]
      %v571 = vld [vmem:[#allocation2 + $0x151] sm:$0xff]
      %v572 = vld [vmem:[#allocation2 + $0x159] sm:$0xff]
      %v573 = vld [vmem:[#allocation2 + $0x169] sm:$0xff]
      %v574 = vld [vmem:[#allocation2 + $0x171] sm:$0xff]
      %v575 = vld [vmem:[#allocation2 + $0x2] sm:$0xff]
      %v576 = vld [vmem:[#allocation2 + $0xa] sm:$0xff]
      %v577 = vld [vmem:[#allocation2 + $0x1a] sm:$0xff]
      %v578 = vld [vmem:[#allocation2 + $0x22] sm:$0xff]
      %v579 = vld [vmem:[#allocation2 + $0x32] sm:$0xff]
      %v580 = vld [vmem:[#allocation2 + $0x3a] sm:$0xff]
      %v581 = vld [vmem:[#allocation2 + $0x4a] sm:$0xff]
      %v582 = vld [vmem:[#allocation2 + $0x52] sm:$0xff]
      %v583 = vld [vmem:[#allocation2 + $0x62] sm:$0xff]
      %v584 = vld [vmem:[#allocation2 + $0x6a] sm:$0xff]
      %v585 = vld [vmem:[#allocation2 + $0x7a] sm:$0xff]
      %v586 = vld [vmem:[#allocation2 + $0x82] sm:$0xff]
      %v587 = vld [vmem:[#allocation2 + $0x92] sm:$0xff]
      %v588 = vld [vmem:[#allocation2 + $0x9a] sm:$0xff]
      %v589 = vld [vmem:[#allocation2 + $0xaa] sm:$0xff]
      %v590 = vld [vmem:[#allocation2 + $0xb2] sm:$0xff]
      %v591 = vld [vmem:[#allocation2 + $0xc2] sm:$0xff]
      %v592 = vld [vmem:[#allocation2 + $0xca] sm:$0xff]
      %v593 = vld [vmem:[#allocation2 + $0xda] sm:$0xff]
      %v594 = vld [vmem:[#allocation2 + $0xe2] sm:$0xff]
      %v595 = vld [vmem:[#allocation2 + $0xf2] sm:$0xff]
      %v596 = vld [vmem:[#allocation2 + $0xfa] sm:$0xff]
      %v597 = vld [vmem:[#allocation2 + $0x10a] sm:$0xff]
      %v598 = vld [vmem:[#allocation2 + $0x112] sm:$0xff]
      %v599 = vld [vmem:[#allocation2 + $0x122] sm:$0xff]
      %v600 = vld [vmem:[#allocation2 + $0x12a] sm:$0xff]
      %v601 = vld [vmem:[#allocation2 + $0x13a] sm:$0xff]
      %v602 = vld [vmem:[#allocation2 + $0x142] sm:$0xff]
      %v603 = vld [vmem:[#allocation2 + $0x152] sm:$0xff]
      %v604 = vld [vmem:[#allocation2 + $0x15a] sm:$0xff]
      %v605 = vld [vmem:[#allocation2 + $0x16a] sm:$0xff]
      %v606 = vld [vmem:[#allocation2 + $0x172] sm:$0xff]
      %v607 = vld [vmem:[%s478] sm:$0xff]
      %v608 = vld [vmem:[%s478 + $0x8] sm:$0xff]
      %v609 = vld [vmem:[%s478 + $0x18] sm:$0xff]
      %v610 = vld [vmem:[%s478 + $0x20] sm:$0xff]
      %v611 = vld [vmem:[%s478 + $0x30] sm:$0xff]
      %v612 = vld [vmem:[%s478 + $0x38] sm:$0xff]
      %v613 = vld [vmem:[%s478 + $0x48] sm:$0xff]
      %v614 = vld [vmem:[%s478 + $0x50] sm:$0xff]
      %v615 = vld [vmem:[%s478 + $0x60] sm:$0xff]
      %v616 = vld [vmem:[%s478 + $0x68] sm:$0xff]
      %v617 = vld [vmem:[%s478 + $0x78] sm:$0xff]
      %v618 = vld [vmem:[%s478 + $0x80] sm:$0xff]
      %v619 = vld [vmem:[%s478 + $0x90] sm:$0xff]
      %v620 = vld [vmem:[%s478 + $0x98] sm:$0xff]
      %v621 = vld [vmem:[%s478 + $0xa8] sm:$0xff]
      %v622 = vld [vmem:[%s478 + $0xb0] sm:$0xff]
      %v623 = vld [vmem:[%s478 + $0xc0] sm:$0xff]
      %v624 = vld [vmem:[%s478 + $0xc8] sm:$0xff]
      %v625 = vld [vmem:[%s478 + $0xd8] sm:$0xff]
      %v626 = vld [vmem:[%s478 + $0xe0] sm:$0xff]
      %v627 = vld [vmem:[%s478 + $0xf0] sm:$0xff]
      %v628 = vld [vmem:[%s478 + $0xf8] sm:$0xff]
      %v629 = vld [vmem:[%s478 + $0x108] sm:$0xff]
      %v630 = vld [vmem:[%s478 + $0x110] sm:$0xff]
      %v631 = vld [vmem:[%s478 + $0x120] sm:$0xff]
      %v632 = vld [vmem:[%s478 + $0x128] sm:$0xff]
      %v633 = vld [vmem:[%s478 + $0x138] sm:$0xff]
      %v634 = vld [vmem:[%s478 + $0x140] sm:$0xff]
      %v635 = vld [vmem:[%s478 + $0x150] sm:$0xff]
      %v636 = vld [vmem:[%s478 + $0x158] sm:$0xff]
      %v637 = vld [vmem:[%s478 + $0x168] sm:$0xff]
      %v638 = vld [vmem:[%s478 + $0x170] sm:$0xff]
      %v639 = vld [vmem:[%s478 + $0x1] sm:$0xff]
      %v640 = vld [vmem:[%s478 + $0x9] sm:$0xff]
      %v641 = vld [vmem:[%s478 + $0x19] sm:$0xff]
      %v642 = vld [vmem:[%s478 + $0x21] sm:$0xff]
      %v643 = vld [vmem:[%s478 + $0x31] sm:$0xff]
      %v644 = vld [vmem:[%s478 + $0x39] sm:$0xff]
      %v645 = vld [vmem:[%s478 + $0x49] sm:$0xff]
      %v646 = vld [vmem:[%s478 + $0x51] sm:$0xff]
      %v647 = vld [vmem:[%s478 + $0x61] sm:$0xff]
      %v648 = vld [vmem:[%s478 + $0x69] sm:$0xff]
      %v649 = vld [vmem:[%s478 + $0x79] sm:$0xff]
      %v650 = vld [vmem:[%s478 + $0x81] sm:$0xff]
      %v651 = vld [vmem:[%s478 + $0x91] sm:$0xff]
      %v652 = vld [vmem:[%s478 + $0x99] sm:$0xff]
      %v653 = vld [vmem:[%s478 + $0xa9] sm:$0xff]
      %v654 = vld [vmem:[%s478 + $0xb1] sm:$0xff]
      %v655 = vld [vmem:[%s478 + $0xc1] sm:$0xff]
      %v656 = vld [vmem:[%s478 + $0xc9] sm:$0xff]
      %v657 = vld [vmem:[%s478 + $0xd9] sm:$0xff]
      %v658 = vld [vmem:[%s478 + $0xe1] sm:$0xff]
      %v659 = vld [vmem:[%s478 + $0xf1] sm:$0xff]
      %v660 = vld [vmem:[%s478 + $0xf9] sm:$0xff]
      %v661 = vld [vmem:[%s478 + $0x109] sm:$0xff]
      %v662 = vld [vmem:[%s478 + $0x111] sm:$0xff]
      %v663 = vld [vmem:[%s478 + $0x121] sm:$0xff]
      %v664 = vld [vmem:[%s478 + $0x129] sm:$0xff]
      %v665 = vld [vmem:[%s478 + $0x139] sm:$0xff]
      %v666 = vld [vmem:[%s478 + $0x141] sm:$0xff]
      %v667 = vld [vmem:[%s478 + $0x151] sm:$0xff]
      %v668 = vld [vmem:[%s478 + $0x159] sm:$0xff]
      %v669 = vld [vmem:[%s478 + $0x169] sm:$0xff]
      %v670 = vld [vmem:[%s478 + $0x171] sm:$0xff]
      %v671 = vld [vmem:[%s478 + $0x2] sm:$0xff]
      %v672 = vld [vmem:[%s478 + $0xa] sm:$0xff]
      %v673 = vld [vmem:[%s478 + $0x1a] sm:$0xff]
      %v674 = vld [vmem:[%s478 + $0x22] sm:$0xff]
      %v675 = vld [vmem:[%s478 + $0x32] sm:$0xff]
      %v676 = vld [vmem:[%s478 + $0x3a] sm:$0xff]
      %v677 = vld [vmem:[%s478 + $0x4a] sm:$0xff]
      %v678 = vld [vmem:[%s478 + $0x52] sm:$0xff]
      %v679 = vld [vmem:[%s478 + $0x62] sm:$0xff]
      %v680 = vld [vmem:[%s478 + $0x6a] sm:$0xff]
      %v681 = vld [vmem:[%s478 + $0x7a] sm:$0xff]
      %v682 = vld [vmem:[%s478 + $0x82] sm:$0xff]
      %v683 = vld [vmem:[%s478 + $0x92] sm:$0xff]
      %v684 = vld [vmem:[%s478 + $0x9a] sm:$0xff]
      %v685 = vld [vmem:[%s478 + $0xaa] sm:$0xff]
      %v686 = vld [vmem:[%s478 + $0xb2] sm:$0xff]
      %v687 = vld [vmem:[%s478 + $0xc2] sm:$0xff]
      %v688 = vld [vmem:[%s478 + $0xca] sm:$0xff]
      %v689 = vld [vmem:[%s478 + $0xda] sm:$0xff]
      %v690 = vld [vmem:[%s478 + $0xe2] sm:$0xff]
      %v691 = vld [vmem:[%s478 + $0xf2] sm:$0xff]
      %v692 = vld [vmem:[%s478 + $0xfa] sm:$0xff]
      %v693 = vld [vmem:[%s478 + $0x10a] sm:$0xff]
      %v694 = vld [vmem:[%s478 + $0x112] sm:$0xff]
      %v695 = vld [vmem:[%s478 + $0x122] sm:$0xff]
      %v696 = vld [vmem:[%s478 + $0x12a] sm:$0xff]
      %v697 = vld [vmem:[%s478 + $0x13a] sm:$0xff]
      %v698 = vld [vmem:[%s478 + $0x142] sm:$0xff]
      %v699 = vld [vmem:[%s478 + $0x152] sm:$0xff]
      %v700 = vld [vmem:[%s478 + $0x15a] sm:$0xff]
      %v701 = vld [vmem:[%s478 + $0x16a] sm:$0xff]
      %v702 = vld [vmem:[%s478 + $0x172] sm:$0xff]
      %s703 = scalar_lea.vmem [#allocation2], 48
      %v704 = vld [vmem:[%s703] sm:$0xff]
      %v705 = vld [vmem:[%s703 + $0x8] sm:$0xff]
      %v706 = vld [vmem:[%s703 + $0x18] sm:$0xff]
      %v707 = vld [vmem:[%s703 + $0x20] sm:$0xff]
      %v708 = vld [vmem:[%s703 + $0x30] sm:$0xff]
      %v709 = vld [vmem:[%s703 + $0x38] sm:$0xff]
      %v710 = vld [vmem:[%s703 + $0x48] sm:$0xff]
      %v711 = vld [vmem:[%s703 + $0x50] sm:$0xff]
      %v712 = vld [vmem:[%s703 + $0x60] sm:$0xff]
      %v713 = vld [vmem:[%s703 + $0x68] sm:$0xff]
      %v714 = vld [vmem:[%s703 + $0x78] sm:$0xff]
      %v715 = vld [vmem:[%s703 + $0x80] sm:$0xff]
      %v716 = vld [vmem:[%s703 + $0x90] sm:$0xff]
      %v717 = vld [vmem:[%s703 + $0x98] sm:$0xff]
      %v718 = vld [vmem:[%s703 + $0xa8] sm:$0xff]
      %v719 = vld [vmem:[%s703 + $0xb0] sm:$0xff]
      %v720 = vld [vmem:[%s703 + $0xc0] sm:$0xff]
      %v721 = vld [vmem:[%s703 + $0xc8] sm:$0xff]
      %v722 = vld [vmem:[%s703 + $0xd8] sm:$0xff]
      %v723 = vld [vmem:[%s703 + $0xe0] sm:$0xff]
      %v724 = vld [vmem:[%s703 + $0xf0] sm:$0xff]
      %v725 = vld [vmem:[%s703 + $0xf8] sm:$0xff]
      %v726 = vld [vmem:[%s703 + $0x108] sm:$0xff]
      %v727 = vld [vmem:[%s703 + $0x110] sm:$0xff]
      %v728 = vld [vmem:[%s703 + $0x120] sm:$0xff]
      %v729 = vld [vmem:[%s703 + $0x128] sm:$0xff]
      %v730 = vld [vmem:[%s703 + $0x138] sm:$0xff]
      %v731 = vld [vmem:[%s703 + $0x140] sm:$0xff]
      %v732 = vld [vmem:[%s703 + $0x150] sm:$0xff]
      %v733 = vld [vmem:[%s703 + $0x158] sm:$0xff]
      %v734 = vld [vmem:[%s703 + $0x168] sm:$0xff]
      %v735 = vld [vmem:[%s703 + $0x170] sm:$0xff]
      %v736 = vld [vmem:[%s703 + $0x1] sm:$0xff]
      %v737 = vld [vmem:[%s703 + $0x9] sm:$0xff]
      %v738 = vld [vmem:[%s703 + $0x19] sm:$0xff]
      %v739 = vld [vmem:[%s703 + $0x21] sm:$0xff]
      %v740 = vld [vmem:[%s703 + $0x31] sm:$0xff]
      %v741 = vld [vmem:[%s703 + $0x39] sm:$0xff]
      %v742 = vld [vmem:[%s703 + $0x49] sm:$0xff]
      %v743 = vld [vmem:[%s703 + $0x51] sm:$0xff]
      %v744 = vld [vmem:[%s703 + $0x61] sm:$0xff]
      %v745 = vld [vmem:[%s703 + $0x69] sm:$0xff]
      %v746 = vld [vmem:[%s703 + $0x79] sm:$0xff]
      %v747 = vld [vmem:[%s703 + $0x81] sm:$0xff]
      %v748 = vld [vmem:[%s703 + $0x91] sm:$0xff]
      %v749 = vld [vmem:[%s703 + $0x99] sm:$0xff]
      %v750 = vld [vmem:[%s703 + $0xa9] sm:$0xff]
      %v751 = vld [vmem:[%s703 + $0xb1] sm:$0xff]
      %v752 = vld [vmem:[%s703 + $0xc1] sm:$0xff]
      %v753 = vld [vmem:[%s703 + $0xc9] sm:$0xff]
      %v754 = vld [vmem:[%s703 + $0xd9] sm:$0xff]
      %v755 = vld [vmem:[%s703 + $0xe1] sm:$0xff]
      %v756 = vld [vmem:[%s703 + $0xf1] sm:$0xff]
      %v757 = vld [vmem:[%s703 + $0xf9] sm:$0xff]
      %v758 = vld [vmem:[%s703 + $0x109] sm:$0xff]
      %v759 = vld [vmem:[%s703 + $0x111] sm:$0xff]
      %v760 = vld [vmem:[%s703 + $0x121] sm:$0xff]
      %v761 = vld [vmem:[%s703 + $0x129] sm:$0xff]
      %v762 = vld [vmem:[%s703 + $0x139] sm:$0xff]
      %v763 = vld [vmem:[%s703 + $0x141] sm:$0xff]
      %v764 = vld [vmem:[%s703 + $0x151] sm:$0xff]
      %v765 = vld [vmem:[%s703 + $0x159] sm:$0xff]
      %v766 = vld [vmem:[%s703 + $0x169] sm:$0xff]
      %v767 = vld [vmem:[%s703 + $0x171] sm:$0xff]
      %v768 = vld [vmem:[%s703 + $0x2] sm:$0xff]
      %v769 = vld [vmem:[%s703 + $0xa] sm:$0xff]
      %v770 = vld [vmem:[%s703 + $0x1a] sm:$0xff]
      %v771 = vld [vmem:[%s703 + $0x22] sm:$0xff]
      %v772 = vld [vmem:[%s703 + $0x32] sm:$0xff]
      %v773 = vld [vmem:[%s703 + $0x3a] sm:$0xff]
      %v774 = vld [vmem:[%s703 + $0x4a] sm:$0xff]
      %v775 = vld [vmem:[%s703 + $0x52] sm:$0xff]
      %v776 = vld [vmem:[%s703 + $0x62] sm:$0xff]
      %v777 = vld [vmem:[%s703 + $0x6a] sm:$0xff]
      %v778 = vld [vmem:[%s703 + $0x7a] sm:$0xff]
      %v779 = vld [vmem:[%s703 + $0x82] sm:$0xff]
      %v780 = vld [vmem:[%s703 + $0x92] sm:$0xff]
      %v781 = vld [vmem:[%s703 + $0x9a] sm:$0xff]
      %v782 = vld [vmem:[%s703 + $0xaa] sm:$0xff]
      %v783 = vld [vmem:[%s703 + $0xb2] sm:$0xff]
      %v784 = vld [vmem:[%s703 + $0xc2] sm:$0xff]
      %v785 = vld [vmem:[%s703 + $0xca] sm:$0xff]
      %v786 = vld [vmem:[%s703 + $0xda] sm:$0xff]
      %v787 = vld [vmem:[%s703 + $0xe2] sm:$0xff]
      %v788 = vld [vmem:[%s703 + $0xf2] sm:$0xff]
      %v789 = vld [vmem:[%s703 + $0xfa] sm:$0xff]
      %v790 = vld [vmem:[%s703 + $0x10a] sm:$0xff]
      %v791 = vld [vmem:[%s703 + $0x112] sm:$0xff]
      %v792 = vld [vmem:[%s703 + $0x122] sm:$0xff]
      %v793 = vld [vmem:[%s703 + $0x12a] sm:$0xff]
      %v794 = vld [vmem:[%s703 + $0x13a] sm:$0xff]
      %v795 = vld [vmem:[%s703 + $0x142] sm:$0xff]
      %v796 = vld [vmem:[%s703 + $0x152] sm:$0xff]
      %v797 = vld [vmem:[%s703 + $0x15a] sm:$0xff]
      %v798 = vld [vmem:[%s703 + $0x16a] sm:$0xff]
      %v799 = vld [vmem:[%s703 + $0x172] sm:$0xff]
      %832 = vrot.lane.b32.xlu0 %v543, 4
      %v833 = vpop.permute.xlu0 %832
      %834 = vrot.lane.b32.xlu0 %v544, 4
      %v835 = vpop.permute.xlu0 %834
      %836 = vrot.lane.b32.xlu0 %v545, 4
      %v837 = vpop.permute.xlu0 %836
      %838 = vrot.lane.b32.xlu0 %v546, 4
      %v839 = vpop.permute.xlu0 %838
      %840 = vrot.lane.b32.xlu0 %v547, 4
      %v841 = vpop.permute.xlu0 %840
      %842 = vrot.lane.b32.xlu0 %v548, 4
      %v843 = vpop.permute.xlu0 %842
      %844 = vrot.lane.b32.xlu0 %v549, 4
      %v845 = vpop.permute.xlu0 %844
      %846 = vrot.lane.b32.xlu0 %v550, 4
      %v847 = vpop.permute.xlu0 %846
      %848 = vrot.lane.b32.xlu0 %v551, 4
      %v849 = vpop.permute.xlu0 %848
      %850 = vrot.lane.b32.xlu0 %v552, 4
      %v851 = vpop.permute.xlu0 %850
      %852 = vrot.lane.b32.xlu0 %v553, 4
      %v853 = vpop.permute.xlu0 %852
      %854 = vrot.lane.b32.xlu0 %v554, 4
      %v855 = vpop.permute.xlu0 %854
      %856 = vrot.lane.b32.xlu0 %v555, 4
      %v857 = vpop.permute.xlu0 %856
      %858 = vrot.lane.b32.xlu0 %v556, 4
      %v859 = vpop.permute.xlu0 %858
      %860 = vrot.lane.b32.xlu0 %v557, 4
      %v861 = vpop.permute.xlu0 %860
      %862 = vrot.lane.b32.xlu0 %v558, 4
      %v863 = vpop.permute.xlu0 %862
      %864 = vrot.lane.b32.xlu0 %v559, 4
      %v865 = vpop.permute.xlu0 %864
      %866 = vrot.lane.b32.xlu0 %v560, 4
      %v867 = vpop.permute.xlu0 %866
      %868 = vrot.lane.b32.xlu0 %v561, 4
      %v869 = vpop.permute.xlu0 %868
      %870 = vrot.lane.b32.xlu0 %v562, 4
      %v871 = vpop.permute.xlu0 %870
      %872 = vrot.lane.b32.xlu0 %v563, 4
      %v873 = vpop.permute.xlu0 %872
      %874 = vrot.lane.b32.xlu0 %v564, 4
      %v875 = vpop.permute.xlu0 %874
      %876 = vrot.lane.b32.xlu0 %v565, 4
      %v877 = vpop.permute.xlu0 %876
      %878 = vrot.lane.b32.xlu0 %v566, 4
      %v879 = vpop.permute.xlu0 %878
      %880 = vrot.lane.b32.xlu0 %v567, 4
      %v881 = vpop.permute.xlu0 %880
      %882 = vrot.lane.b32.xlu0 %v568, 4
      %v883 = vpop.permute.xlu0 %882
      %884 = vrot.lane.b32.xlu0 %v569, 4
      %v885 = vpop.permute.xlu0 %884
      %886 = vrot.lane.b32.xlu0 %v570, 4
      %v887 = vpop.permute.xlu0 %886
      %888 = vrot.lane.b32.xlu0 %v571, 4
      %v889 = vpop.permute.xlu0 %888
      %890 = vrot.lane.b32.xlu0 %v572, 4
      %v891 = vpop.permute.xlu0 %890
      %892 = vrot.lane.b32.xlu0 %v573, 4
      %v893 = vpop.permute.xlu0 %892
      %894 = vrot.lane.b32.xlu0 %v574, 4
      %v895 = vpop.permute.xlu0 %894
      %960 = vrot.lane.b32.xlu0 %v575, 8
      %v961 = vpop.permute.xlu0 %960
      %962 = vrot.lane.b32.xlu0 %v576, 8
      %v963 = vpop.permute.xlu0 %962
      %964 = vrot.lane.b32.xlu0 %v577, 8
      %v965 = vpop.permute.xlu0 %964
      %966 = vrot.lane.b32.xlu0 %v578, 8
      %v967 = vpop.permute.xlu0 %966
      %968 = vrot.lane.b32.xlu0 %v579, 8
      %v969 = vpop.permute.xlu0 %968
      %970 = vrot.lane.b32.xlu0 %v580, 8
      %v971 = vpop.permute.xlu0 %970
      %972 = vrot.lane.b32.xlu0 %v581, 8
      %v973 = vpop.permute.xlu0 %972
      %974 = vrot.lane.b32.xlu0 %v582, 8
      %v975 = vpop.permute.xlu0 %974
      %976 = vrot.lane.b32.xlu0 %v583, 8
      %v977 = vpop.permute.xlu0 %976
      %978 = vrot.lane.b32.xlu0 %v584, 8
      %v979 = vpop.permute.xlu0 %978
      %980 = vrot.lane.b32.xlu0 %v585, 8
      %v981 = vpop.permute.xlu0 %980
      %982 = vrot.lane.b32.xlu0 %v586, 8
      %v983 = vpop.permute.xlu0 %982
      %984 = vrot.lane.b32.xlu0 %v587, 8
      %v985 = vpop.permute.xlu0 %984
      %986 = vrot.lane.b32.xlu0 %v588, 8
      %v987 = vpop.permute.xlu0 %986
      %988 = vrot.lane.b32.xlu0 %v589, 8
      %v989 = vpop.permute.xlu0 %988
      %990 = vrot.lane.b32.xlu0 %v590, 8
      %v991 = vpop.permute.xlu0 %990
      %992 = vrot.lane.b32.xlu0 %v591, 8
      %v993 = vpop.permute.xlu0 %992
      %994 = vrot.lane.b32.xlu0 %v592, 8
      %v995 = vpop.permute.xlu0 %994
      %996 = vrot.lane.b32.xlu0 %v593, 8
      %v997 = vpop.permute.xlu0 %996
      %998 = vrot.lane.b32.xlu0 %v594, 8
      %v999 = vpop.permute.xlu0 %998
      %1000 = vrot.lane.b32.xlu0 %v595, 8
      %v1001 = vpop.permute.xlu0 %1000
      %1002 = vrot.lane.b32.xlu0 %v596, 8
      %v1003 = vpop.permute.xlu0 %1002
      %1004 = vrot.lane.b32.xlu0 %v597, 8
      %v1005 = vpop.permute.xlu0 %1004
      %1006 = vrot.lane.b32.xlu0 %v598, 8
      %v1007 = vpop.permute.xlu0 %1006
      %1008 = vrot.lane.b32.xlu0 %v599, 8
      %v1009 = vpop.permute.xlu0 %1008
      %1010 = vrot.lane.b32.xlu0 %v600, 8
      %v1011 = vpop.permute.xlu0 %1010
      %1012 = vrot.lane.b32.xlu0 %v601, 8
      %v1013 = vpop.permute.xlu0 %1012
      %1014 = vrot.lane.b32.xlu0 %v602, 8
      %v1015 = vpop.permute.xlu0 %1014
      %1016 = vrot.lane.b32.xlu0 %v603, 8
      %v1017 = vpop.permute.xlu0 %1016
      %1018 = vrot.lane.b32.xlu0 %v604, 8
      %v1019 = vpop.permute.xlu0 %1018
      %1020 = vrot.lane.b32.xlu0 %v605, 8
      %v1021 = vpop.permute.xlu0 %1020
      %1022 = vrot.lane.b32.xlu0 %v606, 8
      %v1023 = vpop.permute.xlu0 %1022
      %1088 = vrot.lane.b32.xlu0 %v607, 12
      %v1089 = vpop.permute.xlu0 %1088
      %1090 = vrot.lane.b32.xlu0 %v608, 12
      %v1091 = vpop.permute.xlu0 %1090
      %1092 = vrot.lane.b32.xlu0 %v609, 12
      %v1093 = vpop.permute.xlu0 %1092
      %1094 = vrot.lane.b32.xlu0 %v610, 12
      %v1095 = vpop.permute.xlu0 %1094
      %1096 = vrot.lane.b32.xlu0 %v611, 12
      %v1097 = vpop.permute.xlu0 %1096
      %1098 = vrot.lane.b32.xlu0 %v612, 12
      %v1099 = vpop.permute.xlu0 %1098
      %1100 = vrot.lane.b32.xlu0 %v613, 12
      %v1101 = vpop.permute.xlu0 %1100
      %1102 = vrot.lane.b32.xlu0 %v614, 12
      %v1103 = vpop.permute.xlu0 %1102
      %1104 = vrot.lane.b32.xlu0 %v615, 12
      %v1105 = vpop.permute.xlu0 %1104
      %1106 = vrot.lane.b32.xlu0 %v616, 12
      %v1107 = vpop.permute.xlu0 %1106
      %1108 = vrot.lane.b32.xlu0 %v617, 12
      %v1109 = vpop.permute.xlu0 %1108
      %1110 = vrot.lane.b32.xlu0 %v618, 12
      %v1111 = vpop.permute.xlu0 %1110
      %1112 = vrot.lane.b32.xlu0 %v619, 12
      %v1113 = vpop.permute.xlu0 %1112
      %1114 = vrot.lane.b32.xlu0 %v620, 12
      %v1115 = vpop.permute.xlu0 %1114
      %1116 = vrot.lane.b32.xlu0 %v621, 12
      %v1117 = vpop.permute.xlu0 %1116
      %1118 = vrot.lane.b32.xlu0 %v622, 12
      %v1119 = vpop.permute.xlu0 %1118
      %1120 = vrot.lane.b32.xlu0 %v623, 12
      %v1121 = vpop.permute.xlu0 %1120
      %1122 = vrot.lane.b32.xlu0 %v624, 12
      %v1123 = vpop.permute.xlu0 %1122
      %1124 = vrot.lane.b32.xlu0 %v625, 12
      %v1125 = vpop.permute.xlu0 %1124
      %1126 = vrot.lane.b32.xlu0 %v626, 12
      %v1127 = vpop.permute.xlu0 %1126
      %1128 = vrot.lane.b32.xlu0 %v627, 12
      %v1129 = vpop.permute.xlu0 %1128
      %1130 = vrot.lane.b32.xlu0 %v628, 12
      %v1131 = vpop.permute.xlu0 %1130
      %1132 = vrot.lane.b32.xlu0 %v629, 12
      %v1133 = vpop.permute.xlu0 %1132
      %1134 = vrot.lane.b32.xlu0 %v630, 12
      %v1135 = vpop.permute.xlu0 %1134
      %1136 = vrot.lane.b32.xlu0 %v631, 12
      %v1137 = vpop.permute.xlu0 %1136
      %1138 = vrot.lane.b32.xlu0 %v632, 12
      %v1139 = vpop.permute.xlu0 %1138
      %1140 = vrot.lane.b32.xlu0 %v633, 12
      %v1141 = vpop.permute.xlu0 %1140
      %1142 = vrot.lane.b32.xlu0 %v634, 12
      %v1143 = vpop.permute.xlu0 %1142
      %1144 = vrot.lane.b32.xlu0 %v635, 12
      %v1145 = vpop.permute.xlu0 %1144
      %1146 = vrot.lane.b32.xlu0 %v636, 12
      %v1147 = vpop.permute.xlu0 %1146
      %1148 = vrot.lane.b32.xlu0 %v637, 12
      %v1149 = vpop.permute.xlu0 %1148
      %1150 = vrot.lane.b32.xlu0 %v638, 12
      %v1151 = vpop.permute.xlu0 %1150
      %1216 = vrot.lane.b32.xlu0 %v639, 16
      %v1217 = vpop.permute.xlu0 %1216
      %1218 = vrot.lane.b32.xlu0 %v640, 16
      %v1219 = vpop.permute.xlu0 %1218
      %1220 = vrot.lane.b32.xlu0 %v641, 16
      %v1221 = vpop.permute.xlu0 %1220
      %1222 = vrot.lane.b32.xlu0 %v642, 16
      %v1223 = vpop.permute.xlu0 %1222
      %1224 = vrot.lane.b32.xlu0 %v643, 16
      %v1225 = vpop.permute.xlu0 %1224
      %1226 = vrot.lane.b32.xlu0 %v644, 16
      %v1227 = vpop.permute.xlu0 %1226
      %1228 = vrot.lane.b32.xlu0 %v645, 16
      %v1229 = vpop.permute.xlu0 %1228
      %1230 = vrot.lane.b32.xlu0 %v646, 16
      %v1231 = vpop.permute.xlu0 %1230
      %1232 = vrot.lane.b32.xlu0 %v647, 16
      %v1233 = vpop.permute.xlu0 %1232
      %1234 = vrot.lane.b32.xlu0 %v648, 16
      %v1235 = vpop.permute.xlu0 %1234
      %1236 = vrot.lane.b32.xlu0 %v649, 16
      %v1237 = vpop.permute.xlu0 %1236
      %1238 = vrot.lane.b32.xlu0 %v650, 16
      %v1239 = vpop.permute.xlu0 %1238
      %1240 = vrot.lane.b32.xlu0 %v651, 16
      %v1241 = vpop.permute.xlu0 %1240
      %1242 = vrot.lane.b32.xlu0 %v652, 16
      %v1243 = vpop.permute.xlu0 %1242
      %1244 = vrot.lane.b32.xlu0 %v653, 16
      %v1245 = vpop.permute.xlu0 %1244
      %1246 = vrot.lane.b32.xlu0 %v654, 16
      %v1247 = vpop.permute.xlu0 %1246
      %1248 = vrot.lane.b32.xlu0 %v655, 16
      %v1249 = vpop.permute.xlu0 %1248
      %1250 = vrot.lane.b32.xlu0 %v656, 16
      %v1251 = vpop.permute.xlu0 %1250
      %1252 = vrot.lane.b32.xlu0 %v657, 16
      %v1253 = vpop.permute.xlu0 %1252
      %1254 = vrot.lane.b32.xlu0 %v658, 16
      %v1255 = vpop.permute.xlu0 %1254
      %1256 = vrot.lane.b32.xlu0 %v659, 16
      %v1257 = vpop.permute.xlu0 %1256
      %1258 = vrot.lane.b32.xlu0 %v660, 16
      %v1259 = vpop.permute.xlu0 %1258
      %1260 = vrot.lane.b32.xlu0 %v661, 16
      %v1261 = vpop.permute.xlu0 %1260
      %1262 = vrot.lane.b32.xlu0 %v662, 16
      %v1263 = vpop.permute.xlu0 %1262
      %1264 = vrot.lane.b32.xlu0 %v663, 16
      %v1265 = vpop.permute.xlu0 %1264
      %1266 = vrot.lane.b32.xlu0 %v664, 16
      %v1267 = vpop.permute.xlu0 %1266
      %1268 = vrot.lane.b32.xlu0 %v665, 16
      %v1269 = vpop.permute.xlu0 %1268
      %1270 = vrot.lane.b32.xlu0 %v666, 16
      %v1271 = vpop.permute.xlu0 %1270
      %1272 = vrot.lane.b32.xlu0 %v667, 16
      %v1273 = vpop.permute.xlu0 %1272
      %1274 = vrot.lane.b32.xlu0 %v668, 16
      %v1275 = vpop.permute.xlu0 %1274
      %1276 = vrot.lane.b32.xlu0 %v669, 16
      %v1277 = vpop.permute.xlu0 %1276
      %1278 = vrot.lane.b32.xlu0 %v670, 16
      %v1279 = vpop.permute.xlu0 %1278
      %1344 = vrot.lane.b32.xlu0 %v671, 20
      %v1345 = vpop.permute.xlu0 %1344
      %1346 = vrot.lane.b32.xlu0 %v672, 20
      %v1347 = vpop.permute.xlu0 %1346
      %1348 = vrot.lane.b32.xlu0 %v673, 20
      %v1349 = vpop.permute.xlu0 %1348
      %1350 = vrot.lane.b32.xlu0 %v674, 20
      %v1351 = vpop.permute.xlu0 %1350
      %1352 = vrot.lane.b32.xlu0 %v675, 20
      %v1353 = vpop.permute.xlu0 %1352
      %1354 = vrot.lane.b32.xlu0 %v676, 20
      %v1355 = vpop.permute.xlu0 %1354
      %1356 = vrot.lane.b32.xlu0 %v677, 20
      %v1357 = vpop.permute.xlu0 %1356
      %1358 = vrot.lane.b32.xlu0 %v678, 20
      %v1359 = vpop.permute.xlu0 %1358
      %1360 = vrot.lane.b32.xlu0 %v679, 20
      %v1361 = vpop.permute.xlu0 %1360
      %1362 = vrot.lane.b32.xlu0 %v680, 20
      %v1363 = vpop.permute.xlu0 %1362
      %1364 = vrot.lane.b32.xlu0 %v681, 20
      %v1365 = vpop.permute.xlu0 %1364
      %1366 = vrot.lane.b32.xlu0 %v682, 20
      %v1367 = vpop.permute.xlu0 %1366
      %1368 = vrot.lane.b32.xlu0 %v683, 20
      %v1369 = vpop.permute.xlu0 %1368
      %1370 = vrot.lane.b32.xlu0 %v684, 20
      %v1371 = vpop.permute.xlu0 %1370
      %1372 = vrot.lane.b32.xlu0 %v685, 20
      %v1373 = vpop.permute.xlu0 %1372
      %1374 = vrot.lane.b32.xlu0 %v686, 20
      %v1375 = vpop.permute.xlu0 %1374
      %1376 = vrot.lane.b32.xlu0 %v687, 20
      %v1377 = vpop.permute.xlu0 %1376
      %1378 = vrot.lane.b32.xlu0 %v688, 20
      %v1379 = vpop.permute.xlu0 %1378
      %1380 = vrot.lane.b32.xlu0 %v689, 20
      %v1381 = vpop.permute.xlu0 %1380
      %1382 = vrot.lane.b32.xlu0 %v690, 20
      %v1383 = vpop.permute.xlu0 %1382
      %1384 = vrot.lane.b32.xlu0 %v691, 20
      %v1385 = vpop.permute.xlu0 %1384
      %1386 = vrot.lane.b32.xlu0 %v692, 20
      %v1387 = vpop.permute.xlu0 %1386
      %1388 = vrot.lane.b32.xlu0 %v693, 20
      %v1389 = vpop.permute.xlu0 %1388
      %1390 = vrot.lane.b32.xlu0 %v694, 20
      %v1391 = vpop.permute.xlu0 %1390
      %1392 = vrot.lane.b32.xlu0 %v695, 20
      %v1393 = vpop.permute.xlu0 %1392
      %1394 = vrot.lane.b32.xlu0 %v696, 20
      %v1395 = vpop.permute.xlu0 %1394
      %1396 = vrot.lane.b32.xlu0 %v697, 20
      %v1397 = vpop.permute.xlu0 %1396
      %1398 = vrot.lane.b32.xlu0 %v698, 20
      %v1399 = vpop.permute.xlu0 %1398
      %1400 = vrot.lane.b32.xlu0 %v699, 20
      %v1401 = vpop.permute.xlu0 %1400
      %1402 = vrot.lane.b32.xlu0 %v700, 20
      %v1403 = vpop.permute.xlu0 %1402
      %1404 = vrot.lane.b32.xlu0 %v701, 20
      %v1405 = vpop.permute.xlu0 %1404
      %1406 = vrot.lane.b32.xlu0 %v702, 20
      %v1407 = vpop.permute.xlu0 %1406
      %1472 = vrot.lane.b32.xlu0 %v704, 24
      %v1473 = vpop.permute.xlu0 %1472
      %1474 = vrot.lane.b32.xlu0 %v705, 24
      %v1475 = vpop.permute.xlu0 %1474
      %1476 = vrot.lane.b32.xlu0 %v706, 24
      %v1477 = vpop.permute.xlu0 %1476
      %1478 = vrot.lane.b32.xlu0 %v707, 24
      %v1479 = vpop.permute.xlu0 %1478
      %1480 = vrot.lane.b32.xlu0 %v708, 24
      %v1481 = vpop.permute.xlu0 %1480
      %1482 = vrot.lane.b32.xlu0 %v709, 24
      %v1483 = vpop.permute.xlu0 %1482
      %1484 = vrot.lane.b32.xlu0 %v710, 24
      %v1485 = vpop.permute.xlu0 %1484
      %1486 = vrot.lane.b32.xlu0 %v711, 24
      %v1487 = vpop.permute.xlu0 %1486
      %1488 = vrot.lane.b32.xlu0 %v712, 24
      %v1489 = vpop.permute.xlu0 %1488
      %1490 = vrot.lane.b32.xlu0 %v713, 24
      %v1491 = vpop.permute.xlu0 %1490
      %1492 = vrot.lane.b32.xlu0 %v714, 24
      %v1493 = vpop.permute.xlu0 %1492
      %1494 = vrot.lane.b32.xlu0 %v715, 24
      %v1495 = vpop.permute.xlu0 %1494
      %1496 = vrot.lane.b32.xlu0 %v716, 24
      %v1497 = vpop.permute.xlu0 %1496
      %1498 = vrot.lane.b32.xlu0 %v717, 24
      %v1499 = vpop.permute.xlu0 %1498
      %1500 = vrot.lane.b32.xlu0 %v718, 24
      %v1501 = vpop.permute.xlu0 %1500
      %1502 = vrot.lane.b32.xlu0 %v719, 24
      %v1503 = vpop.permute.xlu0 %1502
      %1504 = vrot.lane.b32.xlu0 %v720, 24
      %v1505 = vpop.permute.xlu0 %1504
      %1506 = vrot.lane.b32.xlu0 %v721, 24
      %v1507 = vpop.permute.xlu0 %1506
      %1508 = vrot.lane.b32.xlu0 %v722, 24
      %v1509 = vpop.permute.xlu0 %1508
      %1510 = vrot.lane.b32.xlu0 %v723, 24
      %v1511 = vpop.permute.xlu0 %1510
      %1512 = vrot.lane.b32.xlu0 %v724, 24
      %v1513 = vpop.permute.xlu0 %1512
      %1514 = vrot.lane.b32.xlu0 %v725, 24
      %v1515 = vpop.permute.xlu0 %1514
      %1516 = vrot.lane.b32.xlu0 %v726, 24
      %v1517 = vpop.permute.xlu0 %1516
      %1518 = vrot.lane.b32.xlu0 %v727, 24
      %v1519 = vpop.permute.xlu0 %1518
      %1520 = vrot.lane.b32.xlu0 %v728, 24
      %v1521 = vpop.permute.xlu0 %1520
      %1522 = vrot.lane.b32.xlu0 %v729, 24
      %v1523 = vpop.permute.xlu0 %1522
      %1524 = vrot.lane.b32.xlu0 %v730, 24
      %v1525 = vpop.permute.xlu0 %1524
      %1526 = vrot.lane.b32.xlu0 %v731, 24
      %v1527 = vpop.permute.xlu0 %1526
      %1528 = vrot.lane.b32.xlu0 %v732, 24
      %v1529 = vpop.permute.xlu0 %1528
      %1530 = vrot.lane.b32.xlu0 %v733, 24
      %v1531 = vpop.permute.xlu0 %1530
      %1532 = vrot.lane.b32.xlu0 %v734, 24
      %v1533 = vpop.permute.xlu0 %1532
      %1534 = vrot.lane.b32.xlu0 %v735, 24
      %v1535 = vpop.permute.xlu0 %1534
      %1600 = vrot.lane.b32.xlu0 %v736, 28
      %v1601 = vpop.permute.xlu0 %1600
      %1602 = vrot.lane.b32.xlu0 %v737, 28
      %v1603 = vpop.permute.xlu0 %1602
      %1604 = vrot.lane.b32.xlu0 %v738, 28
      %v1605 = vpop.permute.xlu0 %1604
      %1606 = vrot.lane.b32.xlu0 %v739, 28
      %v1607 = vpop.permute.xlu0 %1606
      %1608 = vrot.lane.b32.xlu0 %v740, 28
      %v1609 = vpop.permute.xlu0 %1608
      %1610 = vrot.lane.b32.xlu0 %v741, 28
      %v1611 = vpop.permute.xlu0 %1610
      %1612 = vrot.lane.b32.xlu0 %v742, 28
      %v1613 = vpop.permute.xlu0 %1612
      %1614 = vrot.lane.b32.xlu0 %v743, 28
      %v1615 = vpop.permute.xlu0 %1614
      %1616 = vrot.lane.b32.xlu0 %v744, 28
      %v1617 = vpop.permute.xlu0 %1616
      %1618 = vrot.lane.b32.xlu0 %v745, 28
      %v1619 = vpop.permute.xlu0 %1618
      %1620 = vrot.lane.b32.xlu0 %v746, 28
      %v1621 = vpop.permute.xlu0 %1620
      %1622 = vrot.lane.b32.xlu0 %v747, 28
      %v1623 = vpop.permute.xlu0 %1622
      %1624 = vrot.lane.b32.xlu0 %v748, 28
      %v1625 = vpop.permute.xlu0 %1624
      %1626 = vrot.lane.b32.xlu0 %v749, 28
      %v1627 = vpop.permute.xlu0 %1626
      %1628 = vrot.lane.b32.xlu0 %v750, 28
      %v1629 = vpop.permute.xlu0 %1628
      %1630 = vrot.lane.b32.xlu0 %v751, 28
      %v1631 = vpop.permute.xlu0 %1630
      %1632 = vrot.lane.b32.xlu0 %v752, 28
      %v1633 = vpop.permute.xlu0 %1632
      %1634 = vrot.lane.b32.xlu0 %v753, 28
      %v1635 = vpop.permute.xlu0 %1634
      %1636 = vrot.lane.b32.xlu0 %v754, 28
      %v1637 = vpop.permute.xlu0 %1636
      %1638 = vrot.lane.b32.xlu0 %v755, 28
      %v1639 = vpop.permute.xlu0 %1638
      %1640 = vrot.lane.b32.xlu0 %v756, 28
      %v1641 = vpop.permute.xlu0 %1640
      %1642 = vrot.lane.b32.xlu0 %v757, 28
      %v1643 = vpop.permute.xlu0 %1642
      %1644 = vrot.lane.b32.xlu0 %v758, 28
      %v1645 = vpop.permute.xlu0 %1644
      %1646 = vrot.lane.b32.xlu0 %v759, 28
      %v1647 = vpop.permute.xlu0 %1646
      %1648 = vrot.lane.b32.xlu0 %v760, 28
      %v1649 = vpop.permute.xlu0 %1648
      %1650 = vrot.lane.b32.xlu0 %v761, 28
      %v1651 = vpop.permute.xlu0 %1650
      %1652 = vrot.lane.b32.xlu0 %v762, 28
      %v1653 = vpop.permute.xlu0 %1652
      %1654 = vrot.lane.b32.xlu0 %v763, 28
      %v1655 = vpop.permute.xlu0 %1654
      %1656 = vrot.lane.b32.xlu0 %v764, 28
      %v1657 = vpop.permute.xlu0 %1656
      %1658 = vrot.lane.b32.xlu0 %v765, 28
      %v1659 = vpop.permute.xlu0 %1658
      %1660 = vrot.lane.b32.xlu0 %v766, 28
      %v1661 = vpop.permute.xlu0 %1660
      %1662 = vrot.lane.b32.xlu0 %v767, 28
      %v1663 = vpop.permute.xlu0 %1662
      %1728 = vrot.lane.b32.xlu0 %v768, 32
      %v1729 = vpop.permute.xlu0 %1728
      %1730 = vrot.lane.b32.xlu0 %v769, 32
      %v1731 = vpop.permute.xlu0 %1730
      %1732 = vrot.lane.b32.xlu0 %v770, 32
      %v1733 = vpop.permute.xlu0 %1732
      %1734 = vrot.lane.b32.xlu0 %v771, 32
      %v1735 = vpop.permute.xlu0 %1734
      %1736 = vrot.lane.b32.xlu0 %v772, 32
      %v1737 = vpop.permute.xlu0 %1736
      %1738 = vrot.lane.b32.xlu0 %v773, 32
      %v1739 = vpop.permute.xlu0 %1738
      %1740 = vrot.lane.b32.xlu0 %v774, 32
      %v1741 = vpop.permute.xlu0 %1740
      %1742 = vrot.lane.b32.xlu0 %v775, 32
      %v1743 = vpop.permute.xlu0 %1742
      %1744 = vrot.lane.b32.xlu0 %v776, 32
      %v1745 = vpop.permute.xlu0 %1744
      %1746 = vrot.lane.b32.xlu0 %v777, 32
      %v1747 = vpop.permute.xlu0 %1746
      %1748 = vrot.lane.b32.xlu0 %v778, 32
      %v1749 = vpop.permute.xlu0 %1748
      %1750 = vrot.lane.b32.xlu0 %v779, 32
      %v1751 = vpop.permute.xlu0 %1750
      %1752 = vrot.lane.b32.xlu0 %v780, 32
      %v1753 = vpop.permute.xlu0 %1752
      %1754 = vrot.lane.b32.xlu0 %v781, 32
      %v1755 = vpop.permute.xlu0 %1754
      %1756 = vrot.lane.b32.xlu0 %v782, 32
      %v1757 = vpop.permute.xlu0 %1756
      %1758 = vrot.lane.b32.xlu0 %v783, 32
      %v1759 = vpop.permute.xlu0 %1758
      %1760 = vrot.lane.b32.xlu0 %v784, 32
      %v1761 = vpop.permute.xlu0 %1760
      %1762 = vrot.lane.b32.xlu0 %v785, 32
      %v1763 = vpop.permute.xlu0 %1762
      %1764 = vrot.lane.b32.xlu0 %v786, 32
      %v1765 = vpop.permute.xlu0 %1764
      %1766 = vrot.lane.b32.xlu0 %v787, 32
      %v1767 = vpop.permute.xlu0 %1766
      %1768 = vrot.lane.b32.xlu0 %v788, 32
      %v1769 = vpop.permute.xlu0 %1768
      %1770 = vrot.lane.b32.xlu0 %v789, 32
      %v1771 = vpop.permute.xlu0 %1770
      %1772 = vrot.lane.b32.xlu0 %v790, 32
      %v1773 = vpop.permute.xlu0 %1772
      %1774 = vrot.lane.b32.xlu0 %v791, 32
      %v1775 = vpop.permute.xlu0 %1774
      %1776 = vrot.lane.b32.xlu0 %v792, 32
      %v1777 = vpop.permute.xlu0 %1776
      %1778 = vrot.lane.b32.xlu0 %v793, 32
      %v1779 = vpop.permute.xlu0 %1778
      %1780 = vrot.lane.b32.xlu0 %v794, 32
      %v1781 = vpop.permute.xlu0 %1780
      %1782 = vrot.lane.b32.xlu0 %v795, 32
      %v1783 = vpop.permute.xlu0 %1782
      %1784 = vrot.lane.b32.xlu0 %v796, 32
      %v1785 = vpop.permute.xlu0 %1784
      %1786 = vrot.lane.b32.xlu0 %v797, 32
      %v1787 = vpop.permute.xlu0 %1786
      %1788 = vrot.lane.b32.xlu0 %v798, 32
      %v1789 = vpop.permute.xlu0 %1788
      %1790 = vrot.lane.b32.xlu0 %v799, 32
      %v1791 = vpop.permute.xlu0 %1790
      %v1824 = vsel %vm280, %v511, %v833
      %v1825 = vsel %vm280, %v512, %v835
      %v1826 = vsel %vm280, %v513, %v837
      %v1827 = vsel %vm280, %v514, %v839
      %v1828 = vsel %vm280, %v515, %v841
      %v1829 = vsel %vm280, %v516, %v843
      %v1830 = vsel %vm280, %v517, %v845
      %v1831 = vsel %vm280, %v518, %v847
      %v1832 = vsel %vm280, %v519, %v849
      %v1833 = vsel %vm280, %v520, %v851
      %v1834 = vsel %vm280, %v521, %v853
      %v1835 = vsel %vm280, %v522, %v855
      %v1836 = vsel %vm280, %v523, %v857
      %v1837 = vsel %vm280, %v524, %v859
      %v1838 = vsel %vm280, %v525, %v861
      %v1839 = vsel %vm280, %v526, %v863
      %v1840 = vsel %vm280, %v527, %v865
      %v1841 = vsel %vm280, %v528, %v867
      %v1842 = vsel %vm280, %v529, %v869
      %v1843 = vsel %vm280, %v530, %v871
      %v1844 = vsel %vm280, %v531, %v873
      %v1845 = vsel %vm280, %v532, %v875
      %v1846 = vsel %vm280, %v533, %v877
      %v1847 = vsel %vm280, %v534, %v879
      %v1848 = vsel %vm280, %v535, %v881
      %v1849 = vsel %vm280, %v536, %v883
      %v1850 = vsel %vm280, %v537, %v885
      %v1851 = vsel %vm280, %v538, %v887
      %v1852 = vsel %vm280, %v539, %v889
      %v1853 = vsel %vm280, %v540, %v891
      %v1854 = vsel %vm280, %v541, %v893
      %v1855 = vsel %vm280, %v542, %v895
      %vm1856 = vcmask 64512
      %v1857 = vsel %vm1856, %v1824, %v961
      %v1858 = vsel %vm1856, %v1825, %v963
      %v1859 = vsel %vm1856, %v1826, %v965
      %v1860 = vsel %vm1856, %v1827, %v967
      %v1861 = vsel %vm1856, %v1828, %v969
      %v1862 = vsel %vm1856, %v1829, %v971
      %v1863 = vsel %vm1856, %v1830, %v973
      %v1864 = vsel %vm1856, %v1831, %v975
      %v1865 = vsel %vm1856, %v1832, %v977
      %v1866 = vsel %vm1856, %v1833, %v979
      %v1867 = vsel %vm1856, %v1834, %v981
      %v1868 = vsel %vm1856, %v1835, %v983
      %v1869 = vsel %vm1856, %v1836, %v985
      %v1870 = vsel %vm1856, %v1837, %v987
      %v1871 = vsel %vm1856, %v1838, %v989
      %v1872 = vsel %vm1856, %v1839, %v991
      %v1873 = vsel %vm1856, %v1840, %v993
      %v1874 = vsel %vm1856, %v1841, %v995
      %v1875 = vsel %vm1856, %v1842, %v997
      %v1876 = vsel %vm1856, %v1843, %v999
      %v1877 = vsel %vm1856, %v1844, %v1001
      %v1878 = vsel %vm1856, %v1845, %v1003
      %v1879 = vsel %vm1856, %v1846, %v1005
      %v1880 = vsel %vm1856, %v1847, %v1007
      %v1881 = vsel %vm1856, %v1848, %v1009
      %v1882 = vsel %vm1856, %v1849, %v1011
      %v1883 = vsel %vm1856, %v1850, %v1013
      %v1884 = vsel %vm1856, %v1851, %v1015
      %v1885 = vsel %vm1856, %v1852, %v1017
      %v1886 = vsel %vm1856, %v1853, %v1019
      %v1887 = vsel %vm1856, %v1854, %v1021
      %v1888 = vsel %vm1856, %v1855, %v1023
      %vm1889 = vcmask 97280
      %v1890 = vsel %vm1889, %v1857, %v1089
      %v1891 = vsel %vm1889, %v1858, %v1091
      %v1892 = vsel %vm1889, %v1859, %v1093
      %v1893 = vsel %vm1889, %v1860, %v1095
      %v1894 = vsel %vm1889, %v1861, %v1097
      %v1895 = vsel %vm1889, %v1862, %v1099
      %v1896 = vsel %vm1889, %v1863, %v1101
      %v1897 = vsel %vm1889, %v1864, %v1103
      %v1898 = vsel %vm1889, %v1865, %v1105
      %v1899 = vsel %vm1889, %v1866, %v1107
      %v1900 = vsel %vm1889, %v1867, %v1109
      %v1901 = vsel %vm1889, %v1868, %v1111
      %v1902 = vsel %vm1889, %v1869, %v1113
      %v1903 = vsel %vm1889, %v1870, %v1115
      %v1904 = vsel %vm1889, %v1871, %v1117
      %v1905 = vsel %vm1889, %v1872, %v1119
      %v1906 = vsel %vm1889, %v1873, %v1121
      %v1907 = vsel %vm1889, %v1874, %v1123
      %v1908 = vsel %vm1889, %v1875, %v1125
      %v1909 = vsel %vm1889, %v1876, %v1127
      %v1910 = vsel %vm1889, %v1877, %v1129
      %v1911 = vsel %vm1889, %v1878, %v1131
      %v1912 = vsel %vm1889, %v1879, %v1133
      %v1913 = vsel %vm1889, %v1880, %v1135
      %v1914 = vsel %vm1889, %v1881, %v1137
      %v1915 = vsel %vm1889, %v1882, %v1139
      %v1916 = vsel %vm1889, %v1883, %v1141
      %v1917 = vsel %vm1889, %v1884, %v1143
      %v1918 = vsel %vm1889, %v1885, %v1145
      %v1919 = vsel %vm1889, %v1886, %v1147
      %v1920 = vsel %vm1889, %v1887, %v1149
      %v1921 = vsel %vm1889, %v1888, %v1151
      %vm1922 = vcmask 130048
      %v1923 = vsel %vm1922, %v1890, %v1217
      %v1924 = vsel %vm1922, %v1891, %v1219
      %v1925 = vsel %vm1922, %v1892, %v1221
      %v1926 = vsel %vm1922, %v1893, %v1223
      %v1927 = vsel %vm1922, %v1894, %v1225
      %v1928 = vsel %vm1922, %v1895, %v1227
      %v1929 = vsel %vm1922, %v1896, %v1229
      %v1930 = vsel %vm1922, %v1897, %v1231
      %v1931 = vsel %vm1922, %v1898, %v1233
      %v1932 = vsel %vm1922, %v1899, %v1235
      %v1933 = vsel %vm1922, %v1900, %v1237
      %v1934 = vsel %vm1922, %v1901, %v1239
      %v1935 = vsel %vm1922, %v1902, %v1241
      %v1936 = vsel %vm1922, %v1903, %v1243
      %v1937 = vsel %vm1922, %v1904, %v1245
      %v1938 = vsel %vm1922, %v1905, %v1247
      %v1939 = vsel %vm1922, %v1906, %v1249
      %v1940 = vsel %vm1922, %v1907, %v1251
      %v1941 = vsel %vm1922, %v1908, %v1253
      %v1942 = vsel %vm1922, %v1909, %v1255
      %v1943 = vsel %vm1922, %v1910, %v1257
      %v1944 = vsel %vm1922, %v1911, %v1259
      %v1945 = vsel %vm1922, %v1912, %v1261
      %v1946 = vsel %vm1922, %v1913, %v1263
      %v1947 = vsel %vm1922, %v1914, %v1265
      %v1948 = vsel %vm1922, %v1915, %v1267
      %v1949 = vsel %vm1922, %v1916, %v1269
      %v1950 = vsel %vm1922, %v1917, %v1271
      %v1951 = vsel %vm1922, %v1918, %v1273
      %v1952 = vsel %vm1922, %v1919, %v1275
      %v1953 = vsel %vm1922, %v1920, %v1277
      %v1954 = vsel %vm1922, %v1921, %v1279
      %vm1955 = vcmask 162816
      %v1956 = vsel %vm1955, %v1923, %v1345
      %v1957 = vsel %vm1955, %v1924, %v1347
      %v1958 = vsel %vm1955, %v1925, %v1349
      %v1959 = vsel %vm1955, %v1926, %v1351
      %v1960 = vsel %vm1955, %v1927, %v1353
      %v1961 = vsel %vm1955, %v1928, %v1355
      %v1962 = vsel %vm1955, %v1929, %v1357
      %v1963 = vsel %vm1955, %v1930, %v1359
      %v1964 = vsel %vm1955, %v1931, %v1361
      %v1965 = vsel %vm1955, %v1932, %v1363
      %v1966 = vsel %vm1955, %v1933, %v1365
      %v1967 = vsel %vm1955, %v1934, %v1367
      %v1968 = vsel %vm1955, %v1935, %v1369
      %v1969 = vsel %vm1955, %v1936, %v1371
      %v1970 = vsel %vm1955, %v1937, %v1373
      %v1971 = vsel %vm1955, %v1938, %v1375
      %v1972 = vsel %vm1955, %v1939, %v1377
      %v1973 = vsel %vm1955, %v1940, %v1379
      %v1974 = vsel %vm1955, %v1941, %v1381
      %v1975 = vsel %vm1955, %v1942, %v1383
      %v1976 = vsel %vm1955, %v1943, %v1385
      %v1977 = vsel %vm1955, %v1944, %v1387
      %v1978 = vsel %vm1955, %v1945, %v1389
      %v1979 = vsel %vm1955, %v1946, %v1391
      %v1980 = vsel %vm1955, %v1947, %v1393
      %v1981 = vsel %vm1955, %v1948, %v1395
      %v1982 = vsel %vm1955, %v1949, %v1397
      %v1983 = vsel %vm1955, %v1950, %v1399
      %v1984 = vsel %vm1955, %v1951, %v1401
      %v1985 = vsel %vm1955, %v1952, %v1403
      %v1986 = vsel %vm1955, %v1953, %v1405
      %v1987 = vsel %vm1955, %v1954, %v1407
      %vm1988 = vcmask 195584
      %v1989 = vsel %vm1988, %v1956, %v1473
      %v1990 = vsel %vm1988, %v1957, %v1475
      %v1991 = vsel %vm1988, %v1958, %v1477
      %v1992 = vsel %vm1988, %v1959, %v1479
      %v1993 = vsel %vm1988, %v1960, %v1481
      %v1994 = vsel %vm1988, %v1961, %v1483
      %v1995 = vsel %vm1988, %v1962, %v1485
      %v1996 = vsel %vm1988, %v1963, %v1487
      %v1997 = vsel %vm1988, %v1964, %v1489
      %v1998 = vsel %vm1988, %v1965, %v1491
      %v1999 = vsel %vm1988, %v1966, %v1493
      %v2000 = vsel %vm1988, %v1967, %v1495
      %v2001 = vsel %vm1988, %v1968, %v1497
      %v2002 = vsel %vm1988, %v1969, %v1499
      %v2003 = vsel %vm1988, %v1970, %v1501
      %v2004 = vsel %vm1988, %v1971, %v1503
      %v2005 = vsel %vm1988, %v1972, %v1505
      %v2006 = vsel %vm1988, %v1973, %v1507
      %v2007 = vsel %vm1988, %v1974, %v1509
      %v2008 = vsel %vm1988, %v1975, %v1511
      %v2009 = vsel %vm1988, %v1976, %v1513
      %v2010 = vsel %vm1988, %v1977, %v1515
      %v2011 = vsel %vm1988, %v1978, %v1517
      %v2012 = vsel %vm1988, %v1979, %v1519
      %v2013 = vsel %vm1988, %v1980, %v1521
      %v2014 = vsel %vm1988, %v1981, %v1523
      %v2015 = vsel %vm1988, %v1982, %v1525
      %v2016 = vsel %vm1988, %v1983, %v1527
      %v2017 = vsel %vm1988, %v1984, %v1529
      %v2018 = vsel %vm1988, %v1985, %v1531
      %v2019 = vsel %vm1988, %v1986, %v1533
      %v2020 = vsel %vm1988, %v1987, %v1535
      %vm2021 = vcmask 228352
      %v2022 = vsel %vm2021, %v1989, %v1601
      %v2023 = vsel %vm2021, %v1990, %v1603
      %v2024 = vsel %vm2021, %v1991, %v1605
      %v2025 = vsel %vm2021, %v1992, %v1607
      %v2026 = vsel %vm2021, %v1993, %v1609
      %v2027 = vsel %vm2021, %v1994, %v1611
      %v2028 = vsel %vm2021, %v1995, %v1613
      %v2029 = vsel %vm2021, %v1996, %v1615
      %v2030 = vsel %vm2021, %v1997, %v1617
      %v2031 = vsel %vm2021, %v1998, %v1619
      %v2032 = vsel %vm2021, %v1999, %v1621
      %v2033 = vsel %vm2021, %v2000, %v1623
      %v2034 = vsel %vm2021, %v2001, %v1625
      %v2035 = vsel %vm2021, %v2002, %v1627
      %v2036 = vsel %vm2021, %v2003, %v1629
      %v2037 = vsel %vm2021, %v2004, %v1631
      %v2038 = vsel %vm2021, %v2005, %v1633
      %v2039 = vsel %vm2021, %v2006, %v1635
      %v2040 = vsel %vm2021, %v2007, %v1637
      %v2041 = vsel %vm2021, %v2008, %v1639
      %v2042 = vsel %vm2021, %v2009, %v1641
      %v2043 = vsel %vm2021, %v2010, %v1643
      %v2044 = vsel %vm2021, %v2011, %v1645
      %v2045 = vsel %vm2021, %v2012, %v1647
      %v2046 = vsel %vm2021, %v2013, %v1649
      %v2047 = vsel %vm2021, %v2014, %v1651
      %v2048 = vsel %vm2021, %v2015, %v1653
      %v2049 = vsel %vm2021, %v2016, %v1655
      %v2050 = vsel %vm2021, %v2017, %v1657
      %v2051 = vsel %vm2021, %v2018, %v1659
      %v2052 = vsel %vm2021, %v2019, %v1661
      %v2053 = vsel %vm2021, %v2020, %v1663
      %v2054 = vsel %vm336, %v2022, %v1729
      %v2055 = vsel %vm336, %v2023, %v1731
      %v2056 = vsel %vm336, %v2024, %v1733
      %v2057 = vsel %vm336, %v2025, %v1735
      %v2058 = vsel %vm336, %v2026, %v1737
      %v2059 = vsel %vm336, %v2027, %v1739
      %v2060 = vsel %vm336, %v2028, %v1741
      %v2061 = vsel %vm336, %v2029, %v1743
      %v2062 = vsel %vm336, %v2030, %v1745
      %v2063 = vsel %vm336, %v2031, %v1747
      %v2064 = vsel %vm336, %v2032, %v1749
      %v2065 = vsel %vm336, %v2033, %v1751
      %v2066 = vsel %vm336, %v2034, %v1753
      %v2067 = vsel %vm336, %v2035, %v1755
      %v2068 = vsel %vm336, %v2036, %v1757
      %v2069 = vsel %vm336, %v2037, %v1759
      %v2070 = vsel %vm336, %v2038, %v1761
      %v2071 = vsel %vm336, %v2039, %v1763
      %v2072 = vsel %vm336, %v2040, %v1765
      %v2073 = vsel %vm336, %v2041, %v1767
      %v2074 = vsel %vm336, %v2042, %v1769
      %v2075 = vsel %vm336, %v2043, %v1771
      %v2076 = vsel %vm336, %v2044, %v1773
      %v2077 = vsel %vm336, %v2045, %v1775
      %v2078 = vsel %vm336, %v2046, %v1777
      %v2079 = vsel %vm336, %v2047, %v1779
      %v2080 = vsel %vm336, %v2048, %v1781
      %v2081 = vsel %vm336, %v2049, %v1783
      %v2082 = vsel %vm336, %v2050, %v1785
      %v2083 = vsel %vm336, %v2051, %v1787
      %v2084 = vsel %vm336, %v2052, %v1789
      %v2085 = vsel %vm336, %v2053, %v1791
      %v2086 = vpack.c.bf16 %v2055, %v2054
      %v2087 = vpack.c.bf16 %v2057, %v2056
      %v2088 = vpack.c.bf16 %v2059, %v2058
      %v2089 = vpack.c.bf16 %v2061, %v2060
      %v2090 = vpack.c.bf16 %v2063, %v2062
      %v2091 = vpack.c.bf16 %v2065, %v2064
      %v2092 = vpack.c.bf16 %v2067, %v2066
      %v2093 = vpack.c.bf16 %v2069, %v2068
      %v2094 = vpack.c.bf16 %v2071, %v2070
      %v2095 = vpack.c.bf16 %v2073, %v2072
      %v2096 = vpack.c.bf16 %v2075, %v2074
      %v2097 = vpack.c.bf16 %v2077, %v2076
      %v2098 = vpack.c.bf16 %v2079, %v2078
      %v2099 = vpack.c.bf16 %v2081, %v2080
      %v2100 = vpack.c.bf16 %v2083, %v2082
      %v2101 = vpack.c.bf16 %v2085, %v2084
      %v2102 = vld [vmem:[%s1] sm:$0xf]
      %v2103 = vld [vmem:[%s1 + $0x4] sm:$0xf]
      %v2104 = vld [vmem:[%s1 + $0x8] sm:$0xf]
      %v2105 = vld [vmem:[%s1 + $0xc] sm:$0xf]
      %v2106 = vld [vmem:[%s1 + $0x10] sm:$0x3]
      %v2107 = vld [vmem:[%s2] sm:$0x1]
      %v2109 = vperm.slane %v2107, 0
      %v2116 = vunpack.c.l.b16 %v2102
      %v2117 = vunpack.c.l.b16 %v2103
      %v2118 = vunpack.c.l.b16 %v2104
      %v2119 = vunpack.c.l.b16 %v2105
      %v2120 = vunpack.c.l.b16 %v2106
      %v2121 = vpack.c.b16 %v2117, %v2116
      %v2122 = vpack.c.b16 %v2119, %v2118
      %v2123 = vpack.c.b16 %v2120, %v2120
      %vm2126 = vcmask 293888
      %v2128 = vsel %vm2126, %v2086, 0
      %v2131 = vsel %vm2126, %v2087, 0
      %v2134 = vsel %vm2126, %v2088, 0
      %v2137 = vsel %vm2126, %v2089, 0
      %v2140 = vsel %vm2126, %v2090, 0
      %v2143 = vsel %vm2126, %v2091, 0
      %v2146 = vsel %vm2126, %v2092, 0
      %v2149 = vsel %vm2126, %v2093, 0
      %v2152 = vsel %vm2126, %v2094, 0
      %v2155 = vsel %vm2126, %v2095, 0
      %v2158 = vsel %vm2126, %v2096, 0
      %v2161 = vsel %vm2126, %v2097, 0
      %v2164 = vsel %vm2126, %v2098, 0
      %v2167 = vsel %vm2126, %v2099, 0
      %v2170 = vsel %vm2126, %v2100, 0
      %v2173 = vsel %vm2126, %v2101, 0
      %vm2175 = vcmask 1041408
      %v2177 = vsel %vm2175, %v2123, 0
      %2179 = vmatpush.bf16.msra.mxu0 0
      %2180 = vmatpush.bf16.msra.mxu0 0
      %2181 = vmatpush.bf16.msra.mxu0 0
      %2182 = vmatpush.bf16.msra.mxu0 0
      %2183 = vmatpush.bf16.msra.mxu0 0
      %2184 = vmatpush.bf16.msra.mxu0 %v2177
      %2185 = vmatpush.bf16.msra.mxu0 %v2122
      %2186 = vmatpush.bf16.msra.mxu0 %v2121
      %2187 = vmatmul.bf16.gmra.mxu0 %v2128
      %v2188 = vpop.f32.mrf.mxu0
      %v2189 = vadd.f32 %v2109, %v2188
      %v2190 = vpop.f32.mrf.mxu0
      %v2191 = vadd.f32 %v2109, %v2190
      %2192 = vmatmul.bf16.gmra.mxu0 %v2131
      %v2193 = vpop.f32.mrf.mxu0
      %v2194 = vadd.f32 %v2109, %v2193
      %v2195 = vpop.f32.mrf.mxu0
      %v2196 = vadd.f32 %v2109, %v2195
      %2197 = vmatmul.bf16.gmra.mxu0 %v2134
      %v2198 = vpop.f32.mrf.mxu0
      %v2199 = vadd.f32 %v2109, %v2198
      %v2200 = vpop.f32.mrf.mxu0
      %v2201 = vadd.f32 %v2109, %v2200
      %2202 = vmatmul.bf16.gmra.mxu0 %v2137
      %v2203 = vpop.f32.mrf.mxu0
      %v2204 = vadd.f32 %v2109, %v2203
      %v2205 = vpop.f32.mrf.mxu0
      %v2206 = vadd.f32 %v2109, %v2205
      %2207 = vmatmul.bf16.gmra.mxu0 %v2140
      %v2208 = vpop.f32.mrf.mxu0
      %v2209 = vadd.f32 %v2109, %v2208
      %v2210 = vpop.f32.mrf.mxu0
      %v2211 = vadd.f32 %v2109, %v2210
      %2212 = vmatmul.bf16.gmra.mxu0 %v2143
      %v2213 = vpop.f32.mrf.mxu0
      %v2214 = vadd.f32 %v2109, %v2213
      %v2215 = vpop.f32.mrf.mxu0
      %v2216 = vadd.f32 %v2109, %v2215
      %2217 = vmatmul.bf16.gmra.mxu0 %v2146
      %v2218 = vpop.f32.mrf.mxu0
      %v2219 = vadd.f32 %v2109, %v2218
      %v2220 = vpop.f32.mrf.mxu0
      %v2221 = vadd.f32 %v2109, %v2220
      %2222 = vmatmul.bf16.gmra.mxu0 %v2149
      %v2223 = vpop.f32.mrf.mxu0
      %v2224 = vadd.f32 %v2109, %v2223
      %v2225 = vpop.f32.mrf.mxu0
      %v2226 = vadd.f32 %v2109, %v2225
      %2227 = vmatmul.bf16.gmra.mxu0 %v2152
      %v2228 = vpop.f32.mrf.mxu0
      %v2229 = vadd.f32 %v2109, %v2228
      %v2230 = vpop.f32.mrf.mxu0
      %v2231 = vadd.f32 %v2109, %v2230
      %2232 = vmatmul.bf16.gmra.mxu0 %v2155
      %v2233 = vpop.f32.mrf.mxu0
      %v2234 = vadd.f32 %v2109, %v2233
      %v2235 = vpop.f32.mrf.mxu0
      %v2236 = vadd.f32 %v2109, %v2235
      %2237 = vmatmul.bf16.gmra.mxu0 %v2158
      %v2238 = vpop.f32.mrf.mxu0
      %v2239 = vadd.f32 %v2109, %v2238
      %v2240 = vpop.f32.mrf.mxu0
      %v2241 = vadd.f32 %v2109, %v2240
      %2242 = vmatmul.bf16.gmra.mxu0 %v2161
      %v2243 = vpop.f32.mrf.mxu0
      %v2244 = vadd.f32 %v2109, %v2243
      %v2245 = vpop.f32.mrf.mxu0
      %v2246 = vadd.f32 %v2109, %v2245
      %2247 = vmatmul.bf16.gmra.mxu0 %v2164
      %v2248 = vpop.f32.mrf.mxu0
      %v2249 = vadd.f32 %v2109, %v2248
      %v2250 = vpop.f32.mrf.mxu0
      %v2251 = vadd.f32 %v2109, %v2250
      %2252 = vmatmul.bf16.gmra.mxu0 %v2167
      %v2253 = vpop.f32.mrf.mxu0
      %v2254 = vadd.f32 %v2109, %v2253
      %v2255 = vpop.f32.mrf.mxu0
      %v2256 = vadd.f32 %v2109, %v2255
      %2257 = vmatmul.bf16.gmra.mxu0 %v2170
      %v2258 = vpop.f32.mrf.mxu0
      %v2259 = vadd.f32 %v2109, %v2258
      %v2260 = vpop.f32.mrf.mxu0
      %v2261 = vadd.f32 %v2109, %v2260
      %2262 = vmatmul.bf16.gmra.mxu0 %v2173
      %v2263 = vpop.f32.mrf.mxu0
      %v2264 = vadd.f32 %v2109, %v2263
      %v2265 = vpop.f32.mrf.mxu0
      %v2266 = vadd.f32 %v2109, %v2265
      %2267 = vdwg.mxu0
      %v2268 = vxor.u32 %v2189, 2147483648
      %v2269 = vxor.u32 %v2191, 2147483648
      %v2270 = vxor.u32 %v2194, 2147483648
      %v2271 = vxor.u32 %v2196, 2147483648
      %v2272 = vxor.u32 %v2199, 2147483648
      %v2273 = vxor.u32 %v2201, 2147483648
      %v2274 = vxor.u32 %v2204, 2147483648
      %v2275 = vxor.u32 %v2206, 2147483648
      %v2276 = vxor.u32 %v2209, 2147483648
      %v2277 = vxor.u32 %v2211, 2147483648
      %v2278 = vxor.u32 %v2214, 2147483648
      %v2279 = vxor.u32 %v2216, 2147483648
      %v2280 = vxor.u32 %v2219, 2147483648
      %v2281 = vxor.u32 %v2221, 2147483648
      %v2282 = vxor.u32 %v2224, 2147483648
      %v2283 = vxor.u32 %v2226, 2147483648
      %v2284 = vxor.u32 %v2229, 2147483648
      %v2285 = vxor.u32 %v2231, 2147483648
      %v2286 = vxor.u32 %v2234, 2147483648
      %v2287 = vxor.u32 %v2236, 2147483648
      %v2288 = vxor.u32 %v2239, 2147483648
      %v2289 = vxor.u32 %v2241, 2147483648
      %v2290 = vxor.u32 %v2244, 2147483648
      %v2291 = vxor.u32 %v2246, 2147483648
      %v2292 = vxor.u32 %v2249, 2147483648
      %v2293 = vxor.u32 %v2251, 2147483648
      %v2294 = vxor.u32 %v2254, 2147483648
      %v2295 = vxor.u32 %v2256, 2147483648
      %v2296 = vxor.u32 %v2259, 2147483648
      %v2297 = vxor.u32 %v2261, 2147483648
      %v2298 = vxor.u32 %v2264, 2147483648
      %v2299 = vxor.u32 %v2266, 2147483648
      %v2300 = vmul.f32 %v2268, 1.442695
      %v2301 = vpow.pop %v2300
      %v2302 = vmul.f32 %v2269, 1.442695
      %v2303 = vpow.pop %v2302
      %v2304 = vmul.f32 %v2270, 1.442695
      %v2305 = vpow.pop %v2304
      %v2306 = vmul.f32 %v2271, 1.442695
      %v2307 = vpow.pop %v2306
      %v2308 = vmul.f32 %v2272, 1.442695
      %v2309 = vpow.pop %v2308
      %v2310 = vmul.f32 %v2273, 1.442695
      %v2311 = vpow.pop %v2310
      %v2312 = vmul.f32 %v2274, 1.442695
      %v2313 = vpow.pop %v2312
      %v2314 = vmul.f32 %v2275, 1.442695
      %v2315 = vpow.pop %v2314
      %v2316 = vmul.f32 %v2276, 1.442695
      %v2317 = vpow.pop %v2316
      %v2318 = vmul.f32 %v2277, 1.442695
      %v2319 = vpow.pop %v2318
      %v2320 = vmul.f32 %v2278, 1.442695
      %v2321 = vpow.pop %v2320
      %v2322 = vmul.f32 %v2279, 1.442695
      %v2323 = vpow.pop %v2322
      %v2324 = vmul.f32 %v2280, 1.442695
      %v2325 = vpow.pop %v2324
      %v2326 = vmul.f32 %v2281, 1.442695
      %v2327 = vpow.pop %v2326
      %v2328 = vmul.f32 %v2282, 1.442695
      %v2329 = vpow.pop %v2328
      %v2330 = vmul.f32 %v2283, 1.442695
      %v2331 = vpow.pop %v2330
      %v2332 = vmul.f32 %v2284, 1.442695
      %v2333 = vpow.pop %v2332
      %v2334 = vmul.f32 %v2285, 1.442695
      %v2335 = vpow.pop %v2334
      %v2336 = vmul.f32 %v2286, 1.442695
      %v2337 = vpow.pop %v2336
      %v2338 = vmul.f32 %v2287, 1.442695
      %v2339 = vpow.pop %v2338
      %v2340 = vmul.f32 %v2288, 1.442695
      %v2341 = vpow.pop %v2340
      %v2342 = vmul.f32 %v2289, 1.442695
      %v2343 = vpow.pop %v2342
      %v2344 = vmul.f32 %v2290, 1.442695
      %v2345 = vpow.pop %v2344
      %v2346 = vmul.f32 %v2291, 1.442695
      %v2347 = vpow.pop %v2346
      %v2348 = vmul.f32 %v2292, 1.442695
      %v2349 = vpow.pop %v2348
      %v2350 = vmul.f32 %v2293, 1.442695
      %v2351 = vpow.pop %v2350
      %v2352 = vmul.f32 %v2294, 1.442695
      %v2353 = vpow.pop %v2352
      %v2354 = vmul.f32 %v2295, 1.442695
      %v2355 = vpow.pop %v2354
      %v2356 = vmul.f32 %v2296, 1.442695
      %v2357 = vpow.pop %v2356
      %v2358 = vmul.f32 %v2297, 1.442695
      %v2359 = vpow.pop %v2358
      %v2360 = vmul.f32 %v2298, 1.442695
      %v2361 = vpow.pop %v2360
      %v2362 = vmul.f32 %v2299, 1.442695
      %v2363 = vpow.pop %v2362
      %v2364 = vadd.f32 %v2301, 1.0
      %v2365 = vadd.f32 %v2303, 1.0
      %v2366 = vadd.f32 %v2305, 1.0
      %v2367 = vadd.f32 %v2307, 1.0
      %v2368 = vadd.f32 %v2309, 1.0
      %v2369 = vadd.f32 %v2311, 1.0
      %v2370 = vadd.f32 %v2313, 1.0
      %v2371 = vadd.f32 %v2315, 1.0
      %v2372 = vadd.f32 %v2317, 1.0
      %v2373 = vadd.f32 %v2319, 1.0
      %v2374 = vadd.f32 %v2321, 1.0
      %v2375 = vadd.f32 %v2323, 1.0
      %v2376 = vadd.f32 %v2325, 1.0
      %v2377 = vadd.f32 %v2327, 1.0
      %v2378 = vadd.f32 %v2329, 1.0
      %v2379 = vadd.f32 %v2331, 1.0
      %v2380 = vadd.f32 %v2333, 1.0
      %v2381 = vadd.f32 %v2335, 1.0
      %v2382 = vadd.f32 %v2337, 1.0
      %v2383 = vadd.f32 %v2339, 1.0
      %v2384 = vadd.f32 %v2341, 1.0
      %v2385 = vadd.f32 %v2343, 1.0
      %v2386 = vadd.f32 %v2345, 1.0
      %v2387 = vadd.f32 %v2347, 1.0
      %v2388 = vadd.f32 %v2349, 1.0
      %v2389 = vadd.f32 %v2351, 1.0
      %v2390 = vadd.f32 %v2353, 1.0
      %v2391 = vadd.f32 %v2355, 1.0
      %v2392 = vadd.f32 %v2357, 1.0
      %v2393 = vadd.f32 %v2359, 1.0
      %v2394 = vadd.f32 %v2361, 1.0
      %v2395 = vadd.f32 %v2363, 1.0
      %v2396 = vrcp.pop %v2364
      %v2397 = vmul.f32 %v2364, %v2396
      %v2398 = vsub.f32 1.0, %v2397
      %v2399 = vmul.f32 %v2396, %v2398
      %v2400 = vadd.f32 %v2396, %v2399
      %vm2401 = vweird.f32 %v2364
      %vm2402 = vweird.f32 %v2396
      %vm2403 = vmor %vm2401, %vm2402
      %v2404 = vsel %vm2403, %v2396, %v2400
      %v2405 = vand.u32 2147483647, %v2364
      %vm2406 = vcmp.eq.f32.partialorder %v2405, 8.507059e+37
      %v2407 = vand.u32 %v2364, 2147483648
      %v2408 = vor.u32 1.1754944e-38, %v2407
      %v2409 = vsel %vm2406, %v2408, %v2404
      %v2410 = vmul.f32 1.0, %v2409
      %v2411 = vrcp.pop %v2365
      %v2412 = vmul.f32 %v2365, %v2411
      %v2413 = vsub.f32 1.0, %v2412
      %v2414 = vmul.f32 %v2411, %v2413
      %v2415 = vadd.f32 %v2411, %v2414
      %vm2416 = vweird.f32 %v2365
      %vm2417 = vweird.f32 %v2411
      %vm2418 = vmor %vm2416, %vm2417
      %v2419 = vsel %vm2418, %v2411, %v2415
      %v2420 = vand.u32 2147483647, %v2365
      %vm2421 = vcmp.eq.f32.partialorder %v2420, 8.507059e+37
      %v2422 = vand.u32 %v2365, 2147483648
      %v2423 = vor.u32 1.1754944e-38, %v2422
      %v2424 = vsel %vm2421, %v2423, %v2419
      %v2425 = vmul.f32 1.0, %v2424
      %v2426 = vrcp.pop %v2366
      %v2427 = vmul.f32 %v2366, %v2426
      %v2428 = vsub.f32 1.0, %v2427
      %v2429 = vmul.f32 %v2426, %v2428
      %v2430 = vadd.f32 %v2426, %v2429
      %vm2431 = vweird.f32 %v2366
      %vm2432 = vweird.f32 %v2426
      %vm2433 = vmor %vm2431, %vm2432
      %v2434 = vsel %vm2433, %v2426, %v2430
      %v2435 = vand.u32 2147483647, %v2366
      %vm2436 = vcmp.eq.f32.partialorder %v2435, 8.507059e+37
      %v2437 = vand.u32 %v2366, 2147483648
      %v2438 = vor.u32 1.1754944e-38, %v2437
      %v2439 = vsel %vm2436, %v2438, %v2434
      %v2440 = vmul.f32 1.0, %v2439
      %v2441 = vrcp.pop %v2367
      %v2442 = vmul.f32 %v2367, %v2441
      %v2443 = vsub.f32 1.0, %v2442
      %v2444 = vmul.f32 %v2441, %v2443
      %v2445 = vadd.f32 %v2441, %v2444
      %vm2446 = vweird.f32 %v2367
      %vm2447 = vweird.f32 %v2441
      %vm2448 = vmor %vm2446, %vm2447
      %v2449 = vsel %vm2448, %v2441, %v2445
      %v2450 = vand.u32 2147483647, %v2367
      %vm2451 = vcmp.eq.f32.partialorder %v2450, 8.507059e+37
      %v2452 = vand.u32 %v2367, 2147483648
      %v2453 = vor.u32 1.1754944e-38, %v2452
      %v2454 = vsel %vm2451, %v2453, %v2449
      %v2455 = vmul.f32 1.0, %v2454
      %v2456 = vrcp.pop %v2368
      %v2457 = vmul.f32 %v2368, %v2456
      %v2458 = vsub.f32 1.0, %v2457
      %v2459 = vmul.f32 %v2456, %v2458
      %v2460 = vadd.f32 %v2456, %v2459
      %vm2461 = vweird.f32 %v2368
      %vm2462 = vweird.f32 %v2456
      %vm2463 = vmor %vm2461, %vm2462
      %v2464 = vsel %vm2463, %v2456, %v2460
      %v2465 = vand.u32 2147483647, %v2368
      %vm2466 = vcmp.eq.f32.partialorder %v2465, 8.507059e+37
      %v2467 = vand.u32 %v2368, 2147483648
      %v2468 = vor.u32 1.1754944e-38, %v2467
      %v2469 = vsel %vm2466, %v2468, %v2464
      %v2470 = vmul.f32 1.0, %v2469
      %v2471 = vrcp.pop %v2369
      %v2472 = vmul.f32 %v2369, %v2471
      %v2473 = vsub.f32 1.0, %v2472
      %v2474 = vmul.f32 %v2471, %v2473
      %v2475 = vadd.f32 %v2471, %v2474
      %vm2476 = vweird.f32 %v2369
      %vm2477 = vweird.f32 %v2471
      %vm2478 = vmor %vm2476, %vm2477
      %v2479 = vsel %vm2478, %v2471, %v2475
      %v2480 = vand.u32 2147483647, %v2369
      %vm2481 = vcmp.eq.f32.partialorder %v2480, 8.507059e+37
      %v2482 = vand.u32 %v2369, 2147483648
      %v2483 = vor.u32 1.1754944e-38, %v2482
      %v2484 = vsel %vm2481, %v2483, %v2479
      %v2485 = vmul.f32 1.0, %v2484
      %v2486 = vrcp.pop %v2370
      %v2487 = vmul.f32 %v2370, %v2486
      %v2488 = vsub.f32 1.0, %v2487
      %v2489 = vmul.f32 %v2486, %v2488
      %v2490 = vadd.f32 %v2486, %v2489
      %vm2491 = vweird.f32 %v2370
      %vm2492 = vweird.f32 %v2486
      %vm2493 = vmor %vm2491, %vm2492
      %v2494 = vsel %vm2493, %v2486, %v2490
      %v2495 = vand.u32 2147483647, %v2370
      %vm2496 = vcmp.eq.f32.partialorder %v2495, 8.507059e+37
      %v2497 = vand.u32 %v2370, 2147483648
      %v2498 = vor.u32 1.1754944e-38, %v2497
      %v2499 = vsel %vm2496, %v2498, %v2494
      %v2500 = vmul.f32 1.0, %v2499
      %v2501 = vrcp.pop %v2371
      %v2502 = vmul.f32 %v2371, %v2501
      %v2503 = vsub.f32 1.0, %v2502
      %v2504 = vmul.f32 %v2501, %v2503
      %v2505 = vadd.f32 %v2501, %v2504
      %vm2506 = vweird.f32 %v2371
      %vm2507 = vweird.f32 %v2501
      %vm2508 = vmor %vm2506, %vm2507
      %v2509 = vsel %vm2508, %v2501, %v2505
      %v2510 = vand.u32 2147483647, %v2371
      %vm2511 = vcmp.eq.f32.partialorder %v2510, 8.507059e+37
      %v2512 = vand.u32 %v2371, 2147483648
      %v2513 = vor.u32 1.1754944e-38, %v2512
      %v2514 = vsel %vm2511, %v2513, %v2509
      %v2515 = vmul.f32 1.0, %v2514
      %v2516 = vrcp.pop %v2372
      %v2517 = vmul.f32 %v2372, %v2516
      %v2518 = vsub.f32 1.0, %v2517
      %v2519 = vmul.f32 %v2516, %v2518
      %v2520 = vadd.f32 %v2516, %v2519
      %vm2521 = vweird.f32 %v2372
      %vm2522 = vweird.f32 %v2516
      %vm2523 = vmor %vm2521, %vm2522
      %v2524 = vsel %vm2523, %v2516, %v2520
      %v2525 = vand.u32 2147483647, %v2372
      %vm2526 = vcmp.eq.f32.partialorder %v2525, 8.507059e+37
      %v2527 = vand.u32 %v2372, 2147483648
      %v2528 = vor.u32 1.1754944e-38, %v2527
      %v2529 = vsel %vm2526, %v2528, %v2524
      %v2530 = vmul.f32 1.0, %v2529
      %v2531 = vrcp.pop %v2373
      %v2532 = vmul.f32 %v2373, %v2531
      %v2533 = vsub.f32 1.0, %v2532
      %v2534 = vmul.f32 %v2531, %v2533
      %v2535 = vadd.f32 %v2531, %v2534
      %vm2536 = vweird.f32 %v2373
      %vm2537 = vweird.f32 %v2531
      %vm2538 = vmor %vm2536, %vm2537
      %v2539 = vsel %vm2538, %v2531, %v2535
      %v2540 = vand.u32 2147483647, %v2373
      %vm2541 = vcmp.eq.f32.partialorder %v2540, 8.507059e+37
      %v2542 = vand.u32 %v2373, 2147483648
      %v2543 = vor.u32 1.1754944e-38, %v2542
      %v2544 = vsel %vm2541, %v2543, %v2539
      %v2545 = vmul.f32 1.0, %v2544
      %v2546 = vrcp.pop %v2374
      %v2547 = vmul.f32 %v2374, %v2546
      %v2548 = vsub.f32 1.0, %v2547
      %v2549 = vmul.f32 %v2546, %v2548
      %v2550 = vadd.f32 %v2546, %v2549
      %vm2551 = vweird.f32 %v2374
      %vm2552 = vweird.f32 %v2546
      %vm2553 = vmor %vm2551, %vm2552
      %v2554 = vsel %vm2553, %v2546, %v2550
      %v2555 = vand.u32 2147483647, %v2374
      %vm2556 = vcmp.eq.f32.partialorder %v2555, 8.507059e+37
      %v2557 = vand.u32 %v2374, 2147483648
      %v2558 = vor.u32 1.1754944e-38, %v2557
      %v2559 = vsel %vm2556, %v2558, %v2554
      %v2560 = vmul.f32 1.0, %v2559
      %v2561 = vrcp.pop %v2375
      %v2562 = vmul.f32 %v2375, %v2561
      %v2563 = vsub.f32 1.0, %v2562
      %v2564 = vmul.f32 %v2561, %v2563
      %v2565 = vadd.f32 %v2561, %v2564
      %vm2566 = vweird.f32 %v2375
      %vm2567 = vweird.f32 %v2561
      %vm2568 = vmor %vm2566, %vm2567
      %v2569 = vsel %vm2568, %v2561, %v2565
      %v2570 = vand.u32 2147483647, %v2375
      %vm2571 = vcmp.eq.f32.partialorder %v2570, 8.507059e+37
      %v2572 = vand.u32 %v2375, 2147483648
      %v2573 = vor.u32 1.1754944e-38, %v2572
      %v2574 = vsel %vm2571, %v2573, %v2569
      %v2575 = vmul.f32 1.0, %v2574
      %v2576 = vrcp.pop %v2376
      %v2577 = vmul.f32 %v2376, %v2576
      %v2578 = vsub.f32 1.0, %v2577
      %v2579 = vmul.f32 %v2576, %v2578
      %v2580 = vadd.f32 %v2576, %v2579
      %vm2581 = vweird.f32 %v2376
      %vm2582 = vweird.f32 %v2576
      %vm2583 = vmor %vm2581, %vm2582
      %v2584 = vsel %vm2583, %v2576, %v2580
      %v2585 = vand.u32 2147483647, %v2376
      %vm2586 = vcmp.eq.f32.partialorder %v2585, 8.507059e+37
      %v2587 = vand.u32 %v2376, 2147483648
      %v2588 = vor.u32 1.1754944e-38, %v2587
      %v2589 = vsel %vm2586, %v2588, %v2584
      %v2590 = vmul.f32 1.0, %v2589
      %v2591 = vrcp.pop %v2377
      %v2592 = vmul.f32 %v2377, %v2591
      %v2593 = vsub.f32 1.0, %v2592
      %v2594 = vmul.f32 %v2591, %v2593
      %v2595 = vadd.f32 %v2591, %v2594
      %vm2596 = vweird.f32 %v2377
      %vm2597 = vweird.f32 %v2591
      %vm2598 = vmor %vm2596, %vm2597
      %v2599 = vsel %vm2598, %v2591, %v2595
      %v2600 = vand.u32 2147483647, %v2377
      %vm2601 = vcmp.eq.f32.partialorder %v2600, 8.507059e+37
      %v2602 = vand.u32 %v2377, 2147483648
      %v2603 = vor.u32 1.1754944e-38, %v2602
      %v2604 = vsel %vm2601, %v2603, %v2599
      %v2605 = vmul.f32 1.0, %v2604
      %v2606 = vrcp.pop %v2378
      %v2607 = vmul.f32 %v2378, %v2606
      %v2608 = vsub.f32 1.0, %v2607
      %v2609 = vmul.f32 %v2606, %v2608
      %v2610 = vadd.f32 %v2606, %v2609
      %vm2611 = vweird.f32 %v2378
      %vm2612 = vweird.f32 %v2606
      %vm2613 = vmor %vm2611, %vm2612
      %v2614 = vsel %vm2613, %v2606, %v2610
      %v2615 = vand.u32 2147483647, %v2378
      %vm2616 = vcmp.eq.f32.partialorder %v2615, 8.507059e+37
      %v2617 = vand.u32 %v2378, 2147483648
      %v2618 = vor.u32 1.1754944e-38, %v2617
      %v2619 = vsel %vm2616, %v2618, %v2614
      %v2620 = vmul.f32 1.0, %v2619
      %v2621 = vrcp.pop %v2379
      %v2622 = vmul.f32 %v2379, %v2621
      %v2623 = vsub.f32 1.0, %v2622
      %v2624 = vmul.f32 %v2621, %v2623
      %v2625 = vadd.f32 %v2621, %v2624
      %vm2626 = vweird.f32 %v2379
      %vm2627 = vweird.f32 %v2621
      %vm2628 = vmor %vm2626, %vm2627
      %v2629 = vsel %vm2628, %v2621, %v2625
      %v2630 = vand.u32 2147483647, %v2379
      %vm2631 = vcmp.eq.f32.partialorder %v2630, 8.507059e+37
      %v2632 = vand.u32 %v2379, 2147483648
      %v2633 = vor.u32 1.1754944e-38, %v2632
      %v2634 = vsel %vm2631, %v2633, %v2629
      %v2635 = vmul.f32 1.0, %v2634
      %v2636 = vrcp.pop %v2380
      %v2637 = vmul.f32 %v2380, %v2636
      %v2638 = vsub.f32 1.0, %v2637
      %v2639 = vmul.f32 %v2636, %v2638
      %v2640 = vadd.f32 %v2636, %v2639
      %vm2641 = vweird.f32 %v2380
      %vm2642 = vweird.f32 %v2636
      %vm2643 = vmor %vm2641, %vm2642
      %v2644 = vsel %vm2643, %v2636, %v2640
      %v2645 = vand.u32 2147483647, %v2380
      %vm2646 = vcmp.eq.f32.partialorder %v2645, 8.507059e+37
      %v2647 = vand.u32 %v2380, 2147483648
      %v2648 = vor.u32 1.1754944e-38, %v2647
      %v2649 = vsel %vm2646, %v2648, %v2644
      %v2650 = vmul.f32 1.0, %v2649
      %v2651 = vrcp.pop %v2381
      %v2652 = vmul.f32 %v2381, %v2651
      %v2653 = vsub.f32 1.0, %v2652
      %v2654 = vmul.f32 %v2651, %v2653
      %v2655 = vadd.f32 %v2651, %v2654
      %vm2656 = vweird.f32 %v2381
      %vm2657 = vweird.f32 %v2651
      %vm2658 = vmor %vm2656, %vm2657
      %v2659 = vsel %vm2658, %v2651, %v2655
      %v2660 = vand.u32 2147483647, %v2381
      %vm2661 = vcmp.eq.f32.partialorder %v2660, 8.507059e+37
      %v2662 = vand.u32 %v2381, 2147483648
      %v2663 = vor.u32 1.1754944e-38, %v2662
      %v2664 = vsel %vm2661, %v2663, %v2659
      %v2665 = vmul.f32 1.0, %v2664
      %v2666 = vrcp.pop %v2382
      %v2667 = vmul.f32 %v2382, %v2666
      %v2668 = vsub.f32 1.0, %v2667
      %v2669 = vmul.f32 %v2666, %v2668
      %v2670 = vadd.f32 %v2666, %v2669
      %vm2671 = vweird.f32 %v2382
      %vm2672 = vweird.f32 %v2666
      %vm2673 = vmor %vm2671, %vm2672
      %v2674 = vsel %vm2673, %v2666, %v2670
      %v2675 = vand.u32 2147483647, %v2382
      %vm2676 = vcmp.eq.f32.partialorder %v2675, 8.507059e+37
      %v2677 = vand.u32 %v2382, 2147483648
      %v2678 = vor.u32 1.1754944e-38, %v2677
      %v2679 = vsel %vm2676, %v2678, %v2674
      %v2680 = vmul.f32 1.0, %v2679
      %v2681 = vrcp.pop %v2383
      %v2682 = vmul.f32 %v2383, %v2681
      %v2683 = vsub.f32 1.0, %v2682
      %v2684 = vmul.f32 %v2681, %v2683
      %v2685 = vadd.f32 %v2681, %v2684
      %vm2686 = vweird.f32 %v2383
      %vm2687 = vweird.f32 %v2681
      %vm2688 = vmor %vm2686, %vm2687
      %v2689 = vsel %vm2688, %v2681, %v2685
      %v2690 = vand.u32 2147483647, %v2383
      %vm2691 = vcmp.eq.f32.partialorder %v2690, 8.507059e+37
      %v2692 = vand.u32 %v2383, 2147483648
      %v2693 = vor.u32 1.1754944e-38, %v2692
      %v2694 = vsel %vm2691, %v2693, %v2689
      %v2695 = vmul.f32 1.0, %v2694
      %v2696 = vrcp.pop %v2384
      %v2697 = vmul.f32 %v2384, %v2696
      %v2698 = vsub.f32 1.0, %v2697
      %v2699 = vmul.f32 %v2696, %v2698
      %v2700 = vadd.f32 %v2696, %v2699
      %vm2701 = vweird.f32 %v2384
      %vm2702 = vweird.f32 %v2696
      %vm2703 = vmor %vm2701, %vm2702
      %v2704 = vsel %vm2703, %v2696, %v2700
      %v2705 = vand.u32 2147483647, %v2384
      %vm2706 = vcmp.eq.f32.partialorder %v2705, 8.507059e+37
      %v2707 = vand.u32 %v2384, 2147483648
      %v2708 = vor.u32 1.1754944e-38, %v2707
      %v2709 = vsel %vm2706, %v2708, %v2704
      %v2710 = vmul.f32 1.0, %v2709
      %v2711 = vrcp.pop %v2385
      %v2712 = vmul.f32 %v2385, %v2711
      %v2713 = vsub.f32 1.0, %v2712
      %v2714 = vmul.f32 %v2711, %v2713
      %v2715 = vadd.f32 %v2711, %v2714
      %vm2716 = vweird.f32 %v2385
      %vm2717 = vweird.f32 %v2711
      %vm2718 = vmor %vm2716, %vm2717
      %v2719 = vsel %vm2718, %v2711, %v2715
      %v2720 = vand.u32 2147483647, %v2385
      %vm2721 = vcmp.eq.f32.partialorder %v2720, 8.507059e+37
      %v2722 = vand.u32 %v2385, 2147483648
      %v2723 = vor.u32 1.1754944e-38, %v2722
      %v2724 = vsel %vm2721, %v2723, %v2719
      %v2725 = vmul.f32 1.0, %v2724
      %v2726 = vrcp.pop %v2386
      %v2727 = vmul.f32 %v2386, %v2726
      %v2728 = vsub.f32 1.0, %v2727
      %v2729 = vmul.f32 %v2726, %v2728
      %v2730 = vadd.f32 %v2726, %v2729
      %vm2731 = vweird.f32 %v2386
      %vm2732 = vweird.f32 %v2726
      %vm2733 = vmor %vm2731, %vm2732
      %v2734 = vsel %vm2733, %v2726, %v2730
      %v2735 = vand.u32 2147483647, %v2386
      %vm2736 = vcmp.eq.f32.partialorder %v2735, 8.507059e+37
      %v2737 = vand.u32 %v2386, 2147483648
      %v2738 = vor.u32 1.1754944e-38, %v2737
      %v2739 = vsel %vm2736, %v2738, %v2734
      %v2740 = vmul.f32 1.0, %v2739
      %v2741 = vrcp.pop %v2387
      %v2742 = vmul.f32 %v2387, %v2741
      %v2743 = vsub.f32 1.0, %v2742
      %v2744 = vmul.f32 %v2741, %v2743
      %v2745 = vadd.f32 %v2741, %v2744
      %vm2746 = vweird.f32 %v2387
      %vm2747 = vweird.f32 %v2741
      %vm2748 = vmor %vm2746, %vm2747
      %v2749 = vsel %vm2748, %v2741, %v2745
      %v2750 = vand.u32 2147483647, %v2387
      %vm2751 = vcmp.eq.f32.partialorder %v2750, 8.507059e+37
      %v2752 = vand.u32 %v2387, 2147483648
      %v2753 = vor.u32 1.1754944e-38, %v2752
      %v2754 = vsel %vm2751, %v2753, %v2749
      %v2755 = vmul.f32 1.0, %v2754
      %v2756 = vrcp.pop %v2388
      %v2757 = vmul.f32 %v2388, %v2756
      %v2758 = vsub.f32 1.0, %v2757
      %v2759 = vmul.f32 %v2756, %v2758
      %v2760 = vadd.f32 %v2756, %v2759
      %vm2761 = vweird.f32 %v2388
      %vm2762 = vweird.f32 %v2756
      %vm2763 = vmor %vm2761, %vm2762
      %v2764 = vsel %vm2763, %v2756, %v2760
      %v2765 = vand.u32 2147483647, %v2388
      %vm2766 = vcmp.eq.f32.partialorder %v2765, 8.507059e+37
      %v2767 = vand.u32 %v2388, 2147483648
      %v2768 = vor.u32 1.1754944e-38, %v2767
      %v2769 = vsel %vm2766, %v2768, %v2764
      %v2770 = vmul.f32 1.0, %v2769
      %v2771 = vrcp.pop %v2389
      %v2772 = vmul.f32 %v2389, %v2771
      %v2773 = vsub.f32 1.0, %v2772
      %v2774 = vmul.f32 %v2771, %v2773
      %v2775 = vadd.f32 %v2771, %v2774
      %vm2776 = vweird.f32 %v2389
      %vm2777 = vweird.f32 %v2771
      %vm2778 = vmor %vm2776, %vm2777
      %v2779 = vsel %vm2778, %v2771, %v2775
      %v2780 = vand.u32 2147483647, %v2389
      %vm2781 = vcmp.eq.f32.partialorder %v2780, 8.507059e+37
      %v2782 = vand.u32 %v2389, 2147483648
      %v2783 = vor.u32 1.1754944e-38, %v2782
      %v2784 = vsel %vm2781, %v2783, %v2779
      %v2785 = vmul.f32 1.0, %v2784
      %v2786 = vrcp.pop %v2390
      %v2787 = vmul.f32 %v2390, %v2786
      %v2788 = vsub.f32 1.0, %v2787
      %v2789 = vmul.f32 %v2786, %v2788
      %v2790 = vadd.f32 %v2786, %v2789
      %vm2791 = vweird.f32 %v2390
      %vm2792 = vweird.f32 %v2786
      %vm2793 = vmor %vm2791, %vm2792
      %v2794 = vsel %vm2793, %v2786, %v2790
      %v2795 = vand.u32 2147483647, %v2390
      %vm2796 = vcmp.eq.f32.partialorder %v2795, 8.507059e+37
      %v2797 = vand.u32 %v2390, 2147483648
      %v2798 = vor.u32 1.1754944e-38, %v2797
      %v2799 = vsel %vm2796, %v2798, %v2794
      %v2800 = vmul.f32 1.0, %v2799
      %v2801 = vrcp.pop %v2391
      %v2802 = vmul.f32 %v2391, %v2801
      %v2803 = vsub.f32 1.0, %v2802
      %v2804 = vmul.f32 %v2801, %v2803
      %v2805 = vadd.f32 %v2801, %v2804
      %vm2806 = vweird.f32 %v2391
      %vm2807 = vweird.f32 %v2801
      %vm2808 = vmor %vm2806, %vm2807
      %v2809 = vsel %vm2808, %v2801, %v2805
      %v2810 = vand.u32 2147483647, %v2391
      %vm2811 = vcmp.eq.f32.partialorder %v2810, 8.507059e+37
      %v2812 = vand.u32 %v2391, 2147483648
      %v2813 = vor.u32 1.1754944e-38, %v2812
      %v2814 = vsel %vm2811, %v2813, %v2809
      %v2815 = vmul.f32 1.0, %v2814
      %v2816 = vrcp.pop %v2392
      %v2817 = vmul.f32 %v2392, %v2816
      %v2818 = vsub.f32 1.0, %v2817
      %v2819 = vmul.f32 %v2816, %v2818
      %v2820 = vadd.f32 %v2816, %v2819
      %vm2821 = vweird.f32 %v2392
      %vm2822 = vweird.f32 %v2816
      %vm2823 = vmor %vm2821, %vm2822
      %v2824 = vsel %vm2823, %v2816, %v2820
      %v2825 = vand.u32 2147483647, %v2392
      %vm2826 = vcmp.eq.f32.partialorder %v2825, 8.507059e+37
      %v2827 = vand.u32 %v2392, 2147483648
      %v2828 = vor.u32 1.1754944e-38, %v2827
      %v2829 = vsel %vm2826, %v2828, %v2824
      %v2830 = vmul.f32 1.0, %v2829
      %v2831 = vrcp.pop %v2393
      %v2832 = vmul.f32 %v2393, %v2831
      %v2833 = vsub.f32 1.0, %v2832
      %v2834 = vmul.f32 %v2831, %v2833
      %v2835 = vadd.f32 %v2831, %v2834
      %vm2836 = vweird.f32 %v2393
      %vm2837 = vweird.f32 %v2831
      %vm2838 = vmor %vm2836, %vm2837
      %v2839 = vsel %vm2838, %v2831, %v2835
      %v2840 = vand.u32 2147483647, %v2393
      %vm2841 = vcmp.eq.f32.partialorder %v2840, 8.507059e+37
      %v2842 = vand.u32 %v2393, 2147483648
      %v2843 = vor.u32 1.1754944e-38, %v2842
      %v2844 = vsel %vm2841, %v2843, %v2839
      %v2845 = vmul.f32 1.0, %v2844
      %v2846 = vrcp.pop %v2394
      %v2847 = vmul.f32 %v2394, %v2846
      %v2848 = vsub.f32 1.0, %v2847
      %v2849 = vmul.f32 %v2846, %v2848
      %v2850 = vadd.f32 %v2846, %v2849
      %vm2851 = vweird.f32 %v2394
      %vm2852 = vweird.f32 %v2846
      %vm2853 = vmor %vm2851, %vm2852
      %v2854 = vsel %vm2853, %v2846, %v2850
      %v2855 = vand.u32 2147483647, %v2394
      %vm2856 = vcmp.eq.f32.partialorder %v2855, 8.507059e+37
      %v2857 = vand.u32 %v2394, 2147483648
      %v2858 = vor.u32 1.1754944e-38, %v2857
      %v2859 = vsel %vm2856, %v2858, %v2854
      %v2860 = vmul.f32 1.0, %v2859
      %v2861 = vrcp.pop %v2395
      %v2862 = vmul.f32 %v2395, %v2861
      %v2863 = vsub.f32 1.0, %v2862
      %v2864 = vmul.f32 %v2861, %v2863
      %v2865 = vadd.f32 %v2861, %v2864
      %vm2866 = vweird.f32 %v2395
      %vm2867 = vweird.f32 %v2861
      %vm2868 = vmor %vm2866, %vm2867
      %v2869 = vsel %vm2868, %v2861, %v2865
      %v2870 = vand.u32 2147483647, %v2395
      %vm2871 = vcmp.eq.f32.partialorder %v2870, 8.507059e+37
      %v2872 = vand.u32 %v2395, 2147483648
      %v2873 = vor.u32 1.1754944e-38, %v2872
      %v2874 = vsel %vm2871, %v2873, %v2869
      %v2875 = vmul.f32 1.0, %v2874
      %2877 = vset.pattern.permute.xlu0 32
      %2878 = vperm.xlu0 %2877, %v2410
      %v2879 = vpop.permute.xlu0 %2878
      %2882 = vset.pattern.permute.xlu0 32
      %2883 = vperm.xlu0 %2882, %v2425
      %v2884 = vpop.permute.xlu0 %2883
      %2887 = vset.pattern.permute.xlu0 32
      %2888 = vperm.xlu0 %2887, %v2440
      %v2889 = vpop.permute.xlu0 %2888
      %2892 = vset.pattern.permute.xlu0 32
      %2893 = vperm.xlu0 %2892, %v2455
      %v2894 = vpop.permute.xlu0 %2893
      %2897 = vset.pattern.permute.xlu0 32
      %2898 = vperm.xlu0 %2897, %v2470
      %v2899 = vpop.permute.xlu0 %2898
      %2902 = vset.pattern.permute.xlu0 32
      %2903 = vperm.xlu0 %2902, %v2485
      %v2904 = vpop.permute.xlu0 %2903
      %2907 = vset.pattern.permute.xlu0 32
      %2908 = vperm.xlu0 %2907, %v2500
      %v2909 = vpop.permute.xlu0 %2908
      %2912 = vset.pattern.permute.xlu0 32
      %2913 = vperm.xlu0 %2912, %v2515
      %v2914 = vpop.permute.xlu0 %2913
      %2917 = vset.pattern.permute.xlu0 32
      %2918 = vperm.xlu0 %2917, %v2530
      %v2919 = vpop.permute.xlu0 %2918
      %2922 = vset.pattern.permute.xlu0 32
      %2923 = vperm.xlu0 %2922, %v2545
      %v2924 = vpop.permute.xlu0 %2923
      %2927 = vset.pattern.permute.xlu0 32
      %2928 = vperm.xlu0 %2927, %v2560
      %v2929 = vpop.permute.xlu0 %2928
      %2932 = vset.pattern.permute.xlu0 32
      %2933 = vperm.xlu0 %2932, %v2575
      %v2934 = vpop.permute.xlu0 %2933
      %2937 = vset.pattern.permute.xlu0 32
      %2938 = vperm.xlu0 %2937, %v2590
      %v2939 = vpop.permute.xlu0 %2938
      %2942 = vset.pattern.permute.xlu0 32
      %2943 = vperm.xlu0 %2942, %v2605
      %v2944 = vpop.permute.xlu0 %2943
      %2947 = vset.pattern.permute.xlu0 32
      %2948 = vperm.xlu0 %2947, %v2620
      %v2949 = vpop.permute.xlu0 %2948
      %2952 = vset.pattern.permute.xlu0 32
      %2953 = vperm.xlu0 %2952, %v2635
      %v2954 = vpop.permute.xlu0 %2953
      %2957 = vset.pattern.permute.xlu0 32
      %2958 = vperm.xlu0 %2957, %v2650
      %v2959 = vpop.permute.xlu0 %2958
      %2962 = vset.pattern.permute.xlu0 32
      %2963 = vperm.xlu0 %2962, %v2665
      %v2964 = vpop.permute.xlu0 %2963
      %2967 = vset.pattern.permute.xlu0 32
      %2968 = vperm.xlu0 %2967, %v2680
      %v2969 = vpop.permute.xlu0 %2968
      %2972 = vset.pattern.permute.xlu0 32
      %2973 = vperm.xlu0 %2972, %v2695
      %v2974 = vpop.permute.xlu0 %2973
      %2977 = vset.pattern.permute.xlu0 32
      %2978 = vperm.xlu0 %2977, %v2710
      %v2979 = vpop.permute.xlu0 %2978
      %2982 = vset.pattern.permute.xlu0 32
      %2983 = vperm.xlu0 %2982, %v2725
      %v2984 = vpop.permute.xlu0 %2983
      %2987 = vset.pattern.permute.xlu0 32
      %2988 = vperm.xlu0 %2987, %v2740
      %v2989 = vpop.permute.xlu0 %2988
      %2992 = vset.pattern.permute.xlu0 32
      %2993 = vperm.xlu0 %2992, %v2755
      %v2994 = vpop.permute.xlu0 %2993
      %2997 = vset.pattern.permute.xlu0 32
      %2998 = vperm.xlu0 %2997, %v2770
      %v2999 = vpop.permute.xlu0 %2998
      %3002 = vset.pattern.permute.xlu0 32
      %3003 = vperm.xlu0 %3002, %v2785
      %v3004 = vpop.permute.xlu0 %3003
      %3007 = vset.pattern.permute.xlu0 32
      %3008 = vperm.xlu0 %3007, %v2800
      %v3009 = vpop.permute.xlu0 %3008
      %3012 = vset.pattern.permute.xlu0 32
      %3013 = vperm.xlu0 %3012, %v2815
      %v3014 = vpop.permute.xlu0 %3013
      %3017 = vset.pattern.permute.xlu0 32
      %3018 = vperm.xlu0 %3017, %v2830
      %v3019 = vpop.permute.xlu0 %3018
      %3022 = vset.pattern.permute.xlu0 32
      %3023 = vperm.xlu0 %3022, %v2845
      %v3024 = vpop.permute.xlu0 %3023
      %3027 = vset.pattern.permute.xlu0 32
      %3028 = vperm.xlu0 %3027, %v2860
      %v3029 = vpop.permute.xlu0 %3028
      %3032 = vset.pattern.permute.xlu0 32
      %3033 = vperm.xlu0 %3032, %v2875
      %v3034 = vpop.permute.xlu0 %3033
      %v3036 = vmul.f32 %v2189, %v2879
      %v3037 = vmul.f32 %v2191, %v2884
      %v3038 = vmul.f32 %v2194, %v2889
      %v3039 = vmul.f32 %v2196, %v2894
      %v3040 = vmul.f32 %v2199, %v2899
      %v3041 = vmul.f32 %v2201, %v2904
      %v3042 = vmul.f32 %v2204, %v2909
      %v3043 = vmul.f32 %v2206, %v2914
      %v3044 = vmul.f32 %v2209, %v2919
      %v3045 = vmul.f32 %v2211, %v2924
      %v3046 = vmul.f32 %v2214, %v2929
      %v3047 = vmul.f32 %v2216, %v2934
      %v3048 = vmul.f32 %v2219, %v2939
      %v3049 = vmul.f32 %v2221, %v2944
      %v3050 = vmul.f32 %v2224, %v2949
      %v3051 = vmul.f32 %v2226, %v2954
      %v3052 = vmul.f32 %v2229, %v2959
      %v3053 = vmul.f32 %v2231, %v2964
      %v3054 = vmul.f32 %v2234, %v2969
      %v3055 = vmul.f32 %v2236, %v2974
      %v3056 = vmul.f32 %v2239, %v2979
      %v3057 = vmul.f32 %v2241, %v2984
      %v3058 = vmul.f32 %v2244, %v2989
      %v3059 = vmul.f32 %v2246, %v2994
      %v3060 = vmul.f32 %v2249, %v2999
      %v3061 = vmul.f32 %v2251, %v3004
      %v3062 = vmul.f32 %v2254, %v3009
      %v3063 = vmul.f32 %v2256, %v3014
      %v3064 = vmul.f32 %v2259, %v3019
      %v3065 = vmul.f32 %v2261, %v3024
      %v3066 = vmul.f32 %v2264, %v3029
      %v3067 = vmul.f32 %v2266, %v3034
      %v3068 = vmax.f32 %v3036, 0.0
      %v3069 = vmax.f32 %v3037, 0.0
      %v3070 = vmax.f32 %v3038, 0.0
      %v3071 = vmax.f32 %v3039, 0.0
      %v3072 = vmax.f32 %v3040, 0.0
      %v3073 = vmax.f32 %v3041, 0.0
      %v3074 = vmax.f32 %v3042, 0.0
      %v3075 = vmax.f32 %v3043, 0.0
      %v3076 = vmax.f32 %v3044, 0.0
      %v3077 = vmax.f32 %v3045, 0.0
      %v3078 = vmax.f32 %v3046, 0.0
      %v3079 = vmax.f32 %v3047, 0.0
      %v3080 = vmax.f32 %v3048, 0.0
      %v3081 = vmax.f32 %v3049, 0.0
      %v3082 = vmax.f32 %v3050, 0.0
      %v3083 = vmax.f32 %v3051, 0.0
      %v3084 = vmax.f32 %v3052, 0.0
      %v3085 = vmax.f32 %v3053, 0.0
      %v3086 = vmax.f32 %v3054, 0.0
      %v3087 = vmax.f32 %v3055, 0.0
      %v3088 = vmax.f32 %v3056, 0.0
      %v3089 = vmax.f32 %v3057, 0.0
      %v3090 = vmax.f32 %v3058, 0.0
      %v3091 = vmax.f32 %v3059, 0.0
      %v3092 = vmax.f32 %v3060, 0.0
      %v3093 = vmax.f32 %v3061, 0.0
      %v3094 = vmax.f32 %v3062, 0.0
      %v3095 = vmax.f32 %v3063, 0.0
      %v3096 = vmax.f32 %v3064, 0.0
      %v3097 = vmax.f32 %v3065, 0.0
      %v3098 = vmax.f32 %v3066, 0.0
      %v3099 = vmax.f32 %v3067, 0.0
      %s3100 = scalar_lea.vmem [#allocation3], 24
      %3101 = vst.msk [vmem:[%s3100 + $0x1] sm:$0xff] %vm336, %v3068
      %3102 = vst.msk [vmem:[%s3100 + $0x9] sm:$0xff] %vm336, %v3069
      %3103 = vst.msk [vmem:[%s3100 + $0x19] sm:$0xff] %vm336, %v3070
      %3104 = vst.msk [vmem:[%s3100 + $0x21] sm:$0xff] %vm336, %v3071
      %3105 = vst.msk [vmem:[%s3100 + $0x31] sm:$0xff] %vm336, %v3072
      %3106 = vst.msk [vmem:[%s3100 + $0x39] sm:$0xff] %vm336, %v3073
      %3107 = vst.msk [vmem:[%s3100 + $0x49] sm:$0xff] %vm336, %v3074
      %3108 = vst.msk [vmem:[%s3100 + $0x51] sm:$0xff] %vm336, %v3075
      %3109 = vst.msk [vmem:[%s3100 + $0x61] sm:$0xff] %vm336, %v3076
      %3110 = vst.msk [vmem:[%s3100 + $0x69] sm:$0xff] %vm336, %v3077
      %3111 = vst.msk [vmem:[%s3100 + $0x79] sm:$0xff] %vm336, %v3078
      %3112 = vst.msk [vmem:[%s3100 + $0x81] sm:$0xff] %vm336, %v3079
      %3113 = vst.msk [vmem:[%s3100 + $0x91] sm:$0xff] %vm336, %v3080
      %3114 = vst.msk [vmem:[%s3100 + $0x99] sm:$0xff] %vm336, %v3081
      %3115 = vst.msk [vmem:[%s3100 + $0xa9] sm:$0xff] %vm336, %v3082
      %3116 = vst.msk [vmem:[%s3100 + $0xb1] sm:$0xff] %vm336, %v3083
      %3117 = vst.msk [vmem:[%s3100 + $0xc1] sm:$0xff] %vm336, %v3084
      %3118 = vst.msk [vmem:[%s3100 + $0xc9] sm:$0xff] %vm336, %v3085
      %3119 = vst.msk [vmem:[%s3100 + $0xd9] sm:$0xff] %vm336, %v3086
      %3120 = vst.msk [vmem:[%s3100 + $0xe1] sm:$0xff] %vm336, %v3087
      %3121 = vst.msk [vmem:[%s3100 + $0xf1] sm:$0xff] %vm336, %v3088
      %3122 = vst.msk [vmem:[%s3100 + $0xf9] sm:$0xff] %vm336, %v3089
      %3123 = vst.msk [vmem:[%s3100 + $0x109] sm:$0xff] %vm336, %v3090
      %3124 = vst.msk [vmem:[%s3100 + $0x111] sm:$0xff] %vm336, %v3091
      %3125 = vst.msk [vmem:[%s3100 + $0x121] sm:$0xff] %vm336, %v3092
      %3126 = vst.msk [vmem:[%s3100 + $0x129] sm:$0xff] %vm336, %v3093
      %3127 = vst.msk [vmem:[%s3100 + $0x139] sm:$0xff] %vm336, %v3094
      %3128 = vst.msk [vmem:[%s3100 + $0x141] sm:$0xff] %vm336, %v3095
      %3129 = vst.msk [vmem:[%s3100 + $0x151] sm:$0xff] %vm336, %v3096
      %3130 = vst.msk [vmem:[%s3100 + $0x159] sm:$0xff] %vm336, %v3097
      %3131 = vst.msk [vmem:[%s3100 + $0x169] sm:$0xff] %vm336, %v3098
      %3132 = vst.msk [vmem:[%s3100 + $0x171] sm:$0xff] %vm336, %v3099
      %v3133 = vld [vmem:[#allocation3] sm:$0xff]
      %v3134 = vld [vmem:[#allocation3 + $0x8] sm:$0xff]
      %v3135 = vld [vmem:[#allocation3 + $0x18] sm:$0xff]
      %v3136 = vld [vmem:[#allocation3 + $0x20] sm:$0xff]
      %v3137 = vld [vmem:[#allocation3 + $0x30] sm:$0xff]
      %v3138 = vld [vmem:[#allocation3 + $0x38] sm:$0xff]
      %v3139 = vld [vmem:[#allocation3 + $0x48] sm:$0xff]
      %v3140 = vld [vmem:[#allocation3 + $0x50] sm:$0xff]
      %v3141 = vld [vmem:[#allocation3 + $0x60] sm:$0xff]
      %v3142 = vld [vmem:[#allocation3 + $0x68] sm:$0xff]
      %v3143 = vld [vmem:[#allocation3 + $0x78] sm:$0xff]
      %v3144 = vld [vmem:[#allocation3 + $0x80] sm:$0xff]
      %v3145 = vld [vmem:[#allocation3 + $0x90] sm:$0xff]
      %v3146 = vld [vmem:[#allocation3 + $0x98] sm:$0xff]
      %v3147 = vld [vmem:[#allocation3 + $0xa8] sm:$0xff]
      %v3148 = vld [vmem:[#allocation3 + $0xb0] sm:$0xff]
      %v3149 = vld [vmem:[#allocation3 + $0xc0] sm:$0xff]
      %v3150 = vld [vmem:[#allocation3 + $0xc8] sm:$0xff]
      %v3151 = vld [vmem:[#allocation3 + $0xd8] sm:$0xff]
      %v3152 = vld [vmem:[#allocation3 + $0xe0] sm:$0xff]
      %v3153 = vld [vmem:[#allocation3 + $0xf0] sm:$0xff]
      %v3154 = vld [vmem:[#allocation3 + $0xf8] sm:$0xff]
      %v3155 = vld [vmem:[#allocation3 + $0x108] sm:$0xff]
      %v3156 = vld [vmem:[#allocation3 + $0x110] sm:$0xff]
      %v3157 = vld [vmem:[#allocation3 + $0x120] sm:$0xff]
      %v3158 = vld [vmem:[#allocation3 + $0x128] sm:$0xff]
      %v3159 = vld [vmem:[#allocation3 + $0x138] sm:$0xff]
      %v3160 = vld [vmem:[#allocation3 + $0x140] sm:$0xff]
      %v3161 = vld [vmem:[#allocation3 + $0x150] sm:$0xff]
      %v3162 = vld [vmem:[#allocation3 + $0x158] sm:$0xff]
      %v3163 = vld [vmem:[#allocation3 + $0x168] sm:$0xff]
      %v3164 = vld [vmem:[#allocation3 + $0x170] sm:$0xff]
      %v3165 = vld [vmem:[#allocation3 + $0x1] sm:$0xff]
      %v3166 = vld [vmem:[#allocation3 + $0x9] sm:$0xff]
      %v3167 = vld [vmem:[#allocation3 + $0x19] sm:$0xff]
      %v3168 = vld [vmem:[#allocation3 + $0x21] sm:$0xff]
      %v3169 = vld [vmem:[#allocation3 + $0x31] sm:$0xff]
      %v3170 = vld [vmem:[#allocation3 + $0x39] sm:$0xff]
      %v3171 = vld [vmem:[#allocation3 + $0x49] sm:$0xff]
      %v3172 = vld [vmem:[#allocation3 + $0x51] sm:$0xff]
      %v3173 = vld [vmem:[#allocation3 + $0x61] sm:$0xff]
      %v3174 = vld [vmem:[#allocation3 + $0x69] sm:$0xff]
      %v3175 = vld [vmem:[#allocation3 + $0x79] sm:$0xff]
      %v3176 = vld [vmem:[#allocation3 + $0x81] sm:$0xff]
      %v3177 = vld [vmem:[#allocation3 + $0x91] sm:$0xff]
      %v3178 = vld [vmem:[#allocation3 + $0x99] sm:$0xff]
      %v3179 = vld [vmem:[#allocation3 + $0xa9] sm:$0xff]
      %v3180 = vld [vmem:[#allocation3 + $0xb1] sm:$0xff]
      %v3181 = vld [vmem:[#allocation3 + $0xc1] sm:$0xff]
      %v3182 = vld [vmem:[#allocation3 + $0xc9] sm:$0xff]
      %v3183 = vld [vmem:[#allocation3 + $0xd9] sm:$0xff]
      %v3184 = vld [vmem:[#allocation3 + $0xe1] sm:$0xff]
      %v3185 = vld [vmem:[#allocation3 + $0xf1] sm:$0xff]
      %v3186 = vld [vmem:[#allocation3 + $0xf9] sm:$0xff]
      %v3187 = vld [vmem:[#allocation3 + $0x109] sm:$0xff]
      %v3188 = vld [vmem:[#allocation3 + $0x111] sm:$0xff]
      %v3189 = vld [vmem:[#allocation3 + $0x121] sm:$0xff]
      %v3190 = vld [vmem:[#allocation3 + $0x129] sm:$0xff]
      %v3191 = vld [vmem:[#allocation3 + $0x139] sm:$0xff]
      %v3192 = vld [vmem:[#allocation3 + $0x141] sm:$0xff]
      %v3193 = vld [vmem:[#allocation3 + $0x151] sm:$0xff]
      %v3194 = vld [vmem:[#allocation3 + $0x159] sm:$0xff]
      %v3195 = vld [vmem:[#allocation3 + $0x169] sm:$0xff]
      %v3196 = vld [vmem:[#allocation3 + $0x171] sm:$0xff]
      %v3197 = vld [vmem:[#allocation3 + $0x2] sm:$0xff]
      %v3198 = vld [vmem:[#allocation3 + $0xa] sm:$0xff]
      %v3199 = vld [vmem:[#allocation3 + $0x1a] sm:$0xff]
      %v3200 = vld [vmem:[#allocation3 + $0x22] sm:$0xff]
      %v3201 = vld [vmem:[#allocation3 + $0x32] sm:$0xff]
      %v3202 = vld [vmem:[#allocation3 + $0x3a] sm:$0xff]
      %v3203 = vld [vmem:[#allocation3 + $0x4a] sm:$0xff]
      %v3204 = vld [vmem:[#allocation3 + $0x52] sm:$0xff]
      %v3205 = vld [vmem:[#allocation3 + $0x62] sm:$0xff]
      %v3206 = vld [vmem:[#allocation3 + $0x6a] sm:$0xff]
      %v3207 = vld [vmem:[#allocation3 + $0x7a] sm:$0xff]
      %v3208 = vld [vmem:[#allocation3 + $0x82] sm:$0xff]
      %v3209 = vld [vmem:[#allocation3 + $0x92] sm:$0xff]
      %v3210 = vld [vmem:[#allocation3 + $0x9a] sm:$0xff]
      %v3211 = vld [vmem:[#allocation3 + $0xaa] sm:$0xff]
      %v3212 = vld [vmem:[#allocation3 + $0xb2] sm:$0xff]
      %v3213 = vld [vmem:[#allocation3 + $0xc2] sm:$0xff]
      %v3214 = vld [vmem:[#allocation3 + $0xca] sm:$0xff]
      %v3215 = vld [vmem:[#allocation3 + $0xda] sm:$0xff]
      %v3216 = vld [vmem:[#allocation3 + $0xe2] sm:$0xff]
      %v3217 = vld [vmem:[#allocation3 + $0xf2] sm:$0xff]
      %v3218 = vld [vmem:[#allocation3 + $0xfa] sm:$0xff]
      %v3219 = vld [vmem:[#allocation3 + $0x10a] sm:$0xff]
      %v3220 = vld [vmem:[#allocation3 + $0x112] sm:$0xff]
      %v3221 = vld [vmem:[#allocation3 + $0x122] sm:$0xff]
      %v3222 = vld [vmem:[#allocation3 + $0x12a] sm:$0xff]
      %v3223 = vld [vmem:[#allocation3 + $0x13a] sm:$0xff]
      %v3224 = vld [vmem:[#allocation3 + $0x142] sm:$0xff]
      %v3225 = vld [vmem:[#allocation3 + $0x152] sm:$0xff]
      %v3226 = vld [vmem:[#allocation3 + $0x15a] sm:$0xff]
      %v3227 = vld [vmem:[#allocation3 + $0x16a] sm:$0xff]
      %v3228 = vld [vmem:[#allocation3 + $0x172] sm:$0xff]
      %v3229 = vld [vmem:[%s3100] sm:$0xff]
      %v3230 = vld [vmem:[%s3100 + $0x8] sm:$0xff]
      %v3231 = vld [vmem:[%s3100 + $0x18] sm:$0xff]
      %v3232 = vld [vmem:[%s3100 + $0x20] sm:$0xff]
      %v3233 = vld [vmem:[%s3100 + $0x30] sm:$0xff]
      %v3234 = vld [vmem:[%s3100 + $0x38] sm:$0xff]
      %v3235 = vld [vmem:[%s3100 + $0x48] sm:$0xff]
      %v3236 = vld [vmem:[%s3100 + $0x50] sm:$0xff]
      %v3237 = vld [vmem:[%s3100 + $0x60] sm:$0xff]
      %v3238 = vld [vmem:[%s3100 + $0x68] sm:$0xff]
      %v3239 = vld [vmem:[%s3100 + $0x78] sm:$0xff]
      %v3240 = vld [vmem:[%s3100 + $0x80] sm:$0xff]
      %v3241 = vld [vmem:[%s3100 + $0x90] sm:$0xff]
      %v3242 = vld [vmem:[%s3100 + $0x98] sm:$0xff]
      %v3243 = vld [vmem:[%s3100 + $0xa8] sm:$0xff]
      %v3244 = vld [vmem:[%s3100 + $0xb0] sm:$0xff]
      %v3245 = vld [vmem:[%s3100 + $0xc0] sm:$0xff]
      %v3246 = vld [vmem:[%s3100 + $0xc8] sm:$0xff]
      %v3247 = vld [vmem:[%s3100 + $0xd8] sm:$0xff]
      %v3248 = vld [vmem:[%s3100 + $0xe0] sm:$0xff]
      %v3249 = vld [vmem:[%s3100 + $0xf0] sm:$0xff]
      %v3250 = vld [vmem:[%s3100 + $0xf8] sm:$0xff]
      %v3251 = vld [vmem:[%s3100 + $0x108] sm:$0xff]
      %v3252 = vld [vmem:[%s3100 + $0x110] sm:$0xff]
      %v3253 = vld [vmem:[%s3100 + $0x120] sm:$0xff]
      %v3254 = vld [vmem:[%s3100 + $0x128] sm:$0xff]
      %v3255 = vld [vmem:[%s3100 + $0x138] sm:$0xff]
      %v3256 = vld [vmem:[%s3100 + $0x140] sm:$0xff]
      %v3257 = vld [vmem:[%s3100 + $0x150] sm:$0xff]
      %v3258 = vld [vmem:[%s3100 + $0x158] sm:$0xff]
      %v3259 = vld [vmem:[%s3100 + $0x168] sm:$0xff]
      %v3260 = vld [vmem:[%s3100 + $0x170] sm:$0xff]
      %v3261 = vld [vmem:[%s3100 + $0x1] sm:$0xff]
      %v3262 = vld [vmem:[%s3100 + $0x9] sm:$0xff]
      %v3263 = vld [vmem:[%s3100 + $0x19] sm:$0xff]
      %v3264 = vld [vmem:[%s3100 + $0x21] sm:$0xff]
      %v3265 = vld [vmem:[%s3100 + $0x31] sm:$0xff]
      %v3266 = vld [vmem:[%s3100 + $0x39] sm:$0xff]
      %v3267 = vld [vmem:[%s3100 + $0x49] sm:$0xff]
      %v3268 = vld [vmem:[%s3100 + $0x51] sm:$0xff]
      %v3269 = vld [vmem:[%s3100 + $0x61] sm:$0xff]
      %v3270 = vld [vmem:[%s3100 + $0x69] sm:$0xff]
      %v3271 = vld [vmem:[%s3100 + $0x79] sm:$0xff]
      %v3272 = vld [vmem:[%s3100 + $0x81] sm:$0xff]
      %v3273 = vld [vmem:[%s3100 + $0x91] sm:$0xff]
      %v3274 = vld [vmem:[%s3100 + $0x99] sm:$0xff]
      %v3275 = vld [vmem:[%s3100 + $0xa9] sm:$0xff]
      %v3276 = vld [vmem:[%s3100 + $0xb1] sm:$0xff]
      %v3277 = vld [vmem:[%s3100 + $0xc1] sm:$0xff]
      %v3278 = vld [vmem:[%s3100 + $0xc9] sm:$0xff]
      %v3279 = vld [vmem:[%s3100 + $0xd9] sm:$0xff]
      %v3280 = vld [vmem:[%s3100 + $0xe1] sm:$0xff]
      %v3281 = vld [vmem:[%s3100 + $0xf1] sm:$0xff]
      %v3282 = vld [vmem:[%s3100 + $0xf9] sm:$0xff]
      %v3283 = vld [vmem:[%s3100 + $0x109] sm:$0xff]
      %v3284 = vld [vmem:[%s3100 + $0x111] sm:$0xff]
      %v3285 = vld [vmem:[%s3100 + $0x121] sm:$0xff]
      %v3286 = vld [vmem:[%s3100 + $0x129] sm:$0xff]
      %v3287 = vld [vmem:[%s3100 + $0x139] sm:$0xff]
      %v3288 = vld [vmem:[%s3100 + $0x141] sm:$0xff]
      %v3289 = vld [vmem:[%s3100 + $0x151] sm:$0xff]
      %v3290 = vld [vmem:[%s3100 + $0x159] sm:$0xff]
      %v3291 = vld [vmem:[%s3100 + $0x169] sm:$0xff]
      %v3292 = vld [vmem:[%s3100 + $0x171] sm:$0xff]
      %v3293 = vld [vmem:[%s3100 + $0x2] sm:$0xff]
      %v3294 = vld [vmem:[%s3100 + $0xa] sm:$0xff]
      %v3295 = vld [vmem:[%s3100 + $0x1a] sm:$0xff]
      %v3296 = vld [vmem:[%s3100 + $0x22] sm:$0xff]
      %v3297 = vld [vmem:[%s3100 + $0x32] sm:$0xff]
      %v3298 = vld [vmem:[%s3100 + $0x3a] sm:$0xff]
      %v3299 = vld [vmem:[%s3100 + $0x4a] sm:$0xff]
      %v3300 = vld [vmem:[%s3100 + $0x52] sm:$0xff]
      %v3301 = vld [vmem:[%s3100 + $0x62] sm:$0xff]
      %v3302 = vld [vmem:[%s3100 + $0x6a] sm:$0xff]
      %v3303 = vld [vmem:[%s3100 + $0x7a] sm:$0xff]
      %v3304 = vld [vmem:[%s3100 + $0x82] sm:$0xff]
      %v3305 = vld [vmem:[%s3100 + $0x92] sm:$0xff]
      %v3306 = vld [vmem:[%s3100 + $0x9a] sm:$0xff]
      %v3307 = vld [vmem:[%s3100 + $0xaa] sm:$0xff]
      %v3308 = vld [vmem:[%s3100 + $0xb2] sm:$0xff]
      %v3309 = vld [vmem:[%s3100 + $0xc2] sm:$0xff]
      %v3310 = vld [vmem:[%s3100 + $0xca] sm:$0xff]
      %v3311 = vld [vmem:[%s3100 + $0xda] sm:$0xff]
      %v3312 = vld [vmem:[%s3100 + $0xe2] sm:$0xff]
      %v3313 = vld [vmem:[%s3100 + $0xf2] sm:$0xff]
      %v3314 = vld [vmem:[%s3100 + $0xfa] sm:$0xff]
      %v3315 = vld [vmem:[%s3100 + $0x10a] sm:$0xff]
      %v3316 = vld [vmem:[%s3100 + $0x112] sm:$0xff]
      %v3317 = vld [vmem:[%s3100 + $0x122] sm:$0xff]
      %v3318 = vld [vmem:[%s3100 + $0x12a] sm:$0xff]
      %v3319 = vld [vmem:[%s3100 + $0x13a] sm:$0xff]
      %v3320 = vld [vmem:[%s3100 + $0x142] sm:$0xff]
      %v3321 = vld [vmem:[%s3100 + $0x152] sm:$0xff]
      %v3322 = vld [vmem:[%s3100 + $0x15a] sm:$0xff]
      %v3323 = vld [vmem:[%s3100 + $0x16a] sm:$0xff]
      %v3324 = vld [vmem:[%s3100 + $0x172] sm:$0xff]
      %s3325 = scalar_lea.vmem [#allocation3], 48
      %v3326 = vld [vmem:[%s3325] sm:$0xff]
      %v3327 = vld [vmem:[%s3325 + $0x8] sm:$0xff]
      %v3328 = vld [vmem:[%s3325 + $0x18] sm:$0xff]
      %v3329 = vld [vmem:[%s3325 + $0x20] sm:$0xff]
      %v3330 = vld [vmem:[%s3325 + $0x30] sm:$0xff]
      %v3331 = vld [vmem:[%s3325 + $0x38] sm:$0xff]
      %v3332 = vld [vmem:[%s3325 + $0x48] sm:$0xff]
      %v3333 = vld [vmem:[%s3325 + $0x50] sm:$0xff]
      %v3334 = vld [vmem:[%s3325 + $0x60] sm:$0xff]
      %v3335 = vld [vmem:[%s3325 + $0x68] sm:$0xff]
      %v3336 = vld [vmem:[%s3325 + $0x78] sm:$0xff]
      %v3337 = vld [vmem:[%s3325 + $0x80] sm:$0xff]
      %v3338 = vld [vmem:[%s3325 + $0x90] sm:$0xff]
      %v3339 = vld [vmem:[%s3325 + $0x98] sm:$0xff]
      %v3340 = vld [vmem:[%s3325 + $0xa8] sm:$0xff]
      %v3341 = vld [vmem:[%s3325 + $0xb0] sm:$0xff]
      %v3342 = vld [vmem:[%s3325 + $0xc0] sm:$0xff]
      %v3343 = vld [vmem:[%s3325 + $0xc8] sm:$0xff]
      %v3344 = vld [vmem:[%s3325 + $0xd8] sm:$0xff]
      %v3345 = vld [vmem:[%s3325 + $0xe0] sm:$0xff]
      %v3346 = vld [vmem:[%s3325 + $0xf0] sm:$0xff]
      %v3347 = vld [vmem:[%s3325 + $0xf8] sm:$0xff]
      %v3348 = vld [vmem:[%s3325 + $0x108] sm:$0xff]
      %v3349 = vld [vmem:[%s3325 + $0x110] sm:$0xff]
      %v3350 = vld [vmem:[%s3325 + $0x120] sm:$0xff]
      %v3351 = vld [vmem:[%s3325 + $0x128] sm:$0xff]
      %v3352 = vld [vmem:[%s3325 + $0x138] sm:$0xff]
      %v3353 = vld [vmem:[%s3325 + $0x140] sm:$0xff]
      %v3354 = vld [vmem:[%s3325 + $0x150] sm:$0xff]
      %v3355 = vld [vmem:[%s3325 + $0x158] sm:$0xff]
      %v3356 = vld [vmem:[%s3325 + $0x168] sm:$0xff]
      %v3357 = vld [vmem:[%s3325 + $0x170] sm:$0xff]
      %v3358 = vld [vmem:[%s3325 + $0x1] sm:$0xff]
      %v3359 = vld [vmem:[%s3325 + $0x9] sm:$0xff]
      %v3360 = vld [vmem:[%s3325 + $0x19] sm:$0xff]
      %v3361 = vld [vmem:[%s3325 + $0x21] sm:$0xff]
      %v3362 = vld [vmem:[%s3325 + $0x31] sm:$0xff]
      %v3363 = vld [vmem:[%s3325 + $0x39] sm:$0xff]
      %v3364 = vld [vmem:[%s3325 + $0x49] sm:$0xff]
      %v3365 = vld [vmem:[%s3325 + $0x51] sm:$0xff]
      %v3366 = vld [vmem:[%s3325 + $0x61] sm:$0xff]
      %v3367 = vld [vmem:[%s3325 + $0x69] sm:$0xff]
      %v3368 = vld [vmem:[%s3325 + $0x79] sm:$0xff]
      %v3369 = vld [vmem:[%s3325 + $0x81] sm:$0xff]
      %v3370 = vld [vmem:[%s3325 + $0x91] sm:$0xff]
      %v3371 = vld [vmem:[%s3325 + $0x99] sm:$0xff]
      %v3372 = vld [vmem:[%s3325 + $0xa9] sm:$0xff]
      %v3373 = vld [vmem:[%s3325 + $0xb1] sm:$0xff]
      %v3374 = vld [vmem:[%s3325 + $0xc1] sm:$0xff]
      %v3375 = vld [vmem:[%s3325 + $0xc9] sm:$0xff]
      %v3376 = vld [vmem:[%s3325 + $0xd9] sm:$0xff]
      %v3377 = vld [vmem:[%s3325 + $0xe1] sm:$0xff]
      %v3378 = vld [vmem:[%s3325 + $0xf1] sm:$0xff]
      %v3379 = vld [vmem:[%s3325 + $0xf9] sm:$0xff]
      %v3380 = vld [vmem:[%s3325 + $0x109] sm:$0xff]
      %v3381 = vld [vmem:[%s3325 + $0x111] sm:$0xff]
      %v3382 = vld [vmem:[%s3325 + $0x121] sm:$0xff]
      %v3383 = vld [vmem:[%s3325 + $0x129] sm:$0xff]
      %v3384 = vld [vmem:[%s3325 + $0x139] sm:$0xff]
      %v3385 = vld [vmem:[%s3325 + $0x141] sm:$0xff]
      %v3386 = vld [vmem:[%s3325 + $0x151] sm:$0xff]
      %v3387 = vld [vmem:[%s3325 + $0x159] sm:$0xff]
      %v3388 = vld [vmem:[%s3325 + $0x169] sm:$0xff]
      %v3389 = vld [vmem:[%s3325 + $0x171] sm:$0xff]
      %v3390 = vld [vmem:[%s3325 + $0x2] sm:$0xff]
      %v3391 = vld [vmem:[%s3325 + $0xa] sm:$0xff]
      %v3392 = vld [vmem:[%s3325 + $0x1a] sm:$0xff]
      %v3393 = vld [vmem:[%s3325 + $0x22] sm:$0xff]
      %v3394 = vld [vmem:[%s3325 + $0x32] sm:$0xff]
      %v3395 = vld [vmem:[%s3325 + $0x3a] sm:$0xff]
      %v3396 = vld [vmem:[%s3325 + $0x4a] sm:$0xff]
      %v3397 = vld [vmem:[%s3325 + $0x52] sm:$0xff]
      %v3398 = vld [vmem:[%s3325 + $0x62] sm:$0xff]
      %v3399 = vld [vmem:[%s3325 + $0x6a] sm:$0xff]
      %v3400 = vld [vmem:[%s3325 + $0x7a] sm:$0xff]
      %v3401 = vld [vmem:[%s3325 + $0x82] sm:$0xff]
      %v3402 = vld [vmem:[%s3325 + $0x92] sm:$0xff]
      %v3403 = vld [vmem:[%s3325 + $0x9a] sm:$0xff]
      %v3404 = vld [vmem:[%s3325 + $0xaa] sm:$0xff]
      %v3405 = vld [vmem:[%s3325 + $0xb2] sm:$0xff]
      %v3406 = vld [vmem:[%s3325 + $0xc2] sm:$0xff]
      %v3407 = vld [vmem:[%s3325 + $0xca] sm:$0xff]
      %v3408 = vld [vmem:[%s3325 + $0xda] sm:$0xff]
      %v3409 = vld [vmem:[%s3325 + $0xe2] sm:$0xff]
      %v3410 = vld [vmem:[%s3325 + $0xf2] sm:$0xff]
      %v3411 = vld [vmem:[%s3325 + $0xfa] sm:$0xff]
      %v3412 = vld [vmem:[%s3325 + $0x10a] sm:$0xff]
      %v3413 = vld [vmem:[%s3325 + $0x112] sm:$0xff]
      %v3414 = vld [vmem:[%s3325 + $0x122] sm:$0xff]
      %v3415 = vld [vmem:[%s3325 + $0x12a] sm:$0xff]
      %v3416 = vld [vmem:[%s3325 + $0x13a] sm:$0xff]
      %v3417 = vld [vmem:[%s3325 + $0x142] sm:$0xff]
      %v3418 = vld [vmem:[%s3325 + $0x152] sm:$0xff]
      %v3419 = vld [vmem:[%s3325 + $0x15a] sm:$0xff]
      %v3420 = vld [vmem:[%s3325 + $0x16a] sm:$0xff]
      %v3421 = vld [vmem:[%s3325 + $0x172] sm:$0xff]
      %3454 = vrot.lane.b32.xlu0 %v3165, 32
      %v3455 = vpop.permute.xlu0 %3454
      %3456 = vrot.lane.b32.xlu0 %v3166, 32
      %v3457 = vpop.permute.xlu0 %3456
      %3458 = vrot.lane.b32.xlu0 %v3167, 32
      %v3459 = vpop.permute.xlu0 %3458
      %3460 = vrot.lane.b32.xlu0 %v3168, 32
      %v3461 = vpop.permute.xlu0 %3460
      %3462 = vrot.lane.b32.xlu0 %v3169, 32
      %v3463 = vpop.permute.xlu0 %3462
      %3464 = vrot.lane.b32.xlu0 %v3170, 32
      %v3465 = vpop.permute.xlu0 %3464
      %3466 = vrot.lane.b32.xlu0 %v3171, 32
      %v3467 = vpop.permute.xlu0 %3466
      %3468 = vrot.lane.b32.xlu0 %v3172, 32
      %v3469 = vpop.permute.xlu0 %3468
      %3470 = vrot.lane.b32.xlu0 %v3173, 32
      %v3471 = vpop.permute.xlu0 %3470
      %3472 = vrot.lane.b32.xlu0 %v3174, 32
      %v3473 = vpop.permute.xlu0 %3472
      %3474 = vrot.lane.b32.xlu0 %v3175, 32
      %v3475 = vpop.permute.xlu0 %3474
      %3476 = vrot.lane.b32.xlu0 %v3176, 32
      %v3477 = vpop.permute.xlu0 %3476
      %3478 = vrot.lane.b32.xlu0 %v3177, 32
      %v3479 = vpop.permute.xlu0 %3478
      %3480 = vrot.lane.b32.xlu0 %v3178, 32
      %v3481 = vpop.permute.xlu0 %3480
      %3482 = vrot.lane.b32.xlu0 %v3179, 32
      %v3483 = vpop.permute.xlu0 %3482
      %3484 = vrot.lane.b32.xlu0 %v3180, 32
      %v3485 = vpop.permute.xlu0 %3484
      %3486 = vrot.lane.b32.xlu0 %v3181, 32
      %v3487 = vpop.permute.xlu0 %3486
      %3488 = vrot.lane.b32.xlu0 %v3182, 32
      %v3489 = vpop.permute.xlu0 %3488
      %3490 = vrot.lane.b32.xlu0 %v3183, 32
      %v3491 = vpop.permute.xlu0 %3490
      %3492 = vrot.lane.b32.xlu0 %v3184, 32
      %v3493 = vpop.permute.xlu0 %3492
      %3494 = vrot.lane.b32.xlu0 %v3185, 32
      %v3495 = vpop.permute.xlu0 %3494
      %3496 = vrot.lane.b32.xlu0 %v3186, 32
      %v3497 = vpop.permute.xlu0 %3496
      %3498 = vrot.lane.b32.xlu0 %v3187, 32
      %v3499 = vpop.permute.xlu0 %3498
      %3500 = vrot.lane.b32.xlu0 %v3188, 32
      %v3501 = vpop.permute.xlu0 %3500
      %3502 = vrot.lane.b32.xlu0 %v3189, 32
      %v3503 = vpop.permute.xlu0 %3502
      %3504 = vrot.lane.b32.xlu0 %v3190, 32
      %v3505 = vpop.permute.xlu0 %3504
      %3506 = vrot.lane.b32.xlu0 %v3191, 32
      %v3507 = vpop.permute.xlu0 %3506
      %3508 = vrot.lane.b32.xlu0 %v3192, 32
      %v3509 = vpop.permute.xlu0 %3508
      %3510 = vrot.lane.b32.xlu0 %v3193, 32
      %v3511 = vpop.permute.xlu0 %3510
      %3512 = vrot.lane.b32.xlu0 %v3194, 32
      %v3513 = vpop.permute.xlu0 %3512
      %3514 = vrot.lane.b32.xlu0 %v3195, 32
      %v3515 = vpop.permute.xlu0 %3514
      %3516 = vrot.lane.b32.xlu0 %v3196, 32
      %v3517 = vpop.permute.xlu0 %3516
      %3582 = vrot.lane.b32.xlu0 %v3197, 64
      %v3583 = vpop.permute.xlu0 %3582
      %3584 = vrot.lane.b32.xlu0 %v3198, 64
      %v3585 = vpop.permute.xlu0 %3584
      %3586 = vrot.lane.b32.xlu0 %v3199, 64
      %v3587 = vpop.permute.xlu0 %3586
      %3588 = vrot.lane.b32.xlu0 %v3200, 64
      %v3589 = vpop.permute.xlu0 %3588
      %3590 = vrot.lane.b32.xlu0 %v3201, 64
      %v3591 = vpop.permute.xlu0 %3590
      %3592 = vrot.lane.b32.xlu0 %v3202, 64
      %v3593 = vpop.permute.xlu0 %3592
      %3594 = vrot.lane.b32.xlu0 %v3203, 64
      %v3595 = vpop.permute.xlu0 %3594
      %3596 = vrot.lane.b32.xlu0 %v3204, 64
      %v3597 = vpop.permute.xlu0 %3596
      %3598 = vrot.lane.b32.xlu0 %v3205, 64
      %v3599 = vpop.permute.xlu0 %3598
      %3600 = vrot.lane.b32.xlu0 %v3206, 64
      %v3601 = vpop.permute.xlu0 %3600
      %3602 = vrot.lane.b32.xlu0 %v3207, 64
      %v3603 = vpop.permute.xlu0 %3602
      %3604 = vrot.lane.b32.xlu0 %v3208, 64
      %v3605 = vpop.permute.xlu0 %3604
      %3606 = vrot.lane.b32.xlu0 %v3209, 64
      %v3607 = vpop.permute.xlu0 %3606
      %3608 = vrot.lane.b32.xlu0 %v3210, 64
      %v3609 = vpop.permute.xlu0 %3608
      %3610 = vrot.lane.b32.xlu0 %v3211, 64
      %v3611 = vpop.permute.xlu0 %3610
      %3612 = vrot.lane.b32.xlu0 %v3212, 64
      %v3613 = vpop.permute.xlu0 %3612
      %3614 = vrot.lane.b32.xlu0 %v3213, 64
      %v3615 = vpop.permute.xlu0 %3614
      %3616 = vrot.lane.b32.xlu0 %v3214, 64
      %v3617 = vpop.permute.xlu0 %3616
      %3618 = vrot.lane.b32.xlu0 %v3215, 64
      %v3619 = vpop.permute.xlu0 %3618
      %3620 = vrot.lane.b32.xlu0 %v3216, 64
      %v3621 = vpop.permute.xlu0 %3620
      %3622 = vrot.lane.b32.xlu0 %v3217, 64
      %v3623 = vpop.permute.xlu0 %3622
      %3624 = vrot.lane.b32.xlu0 %v3218, 64
      %v3625 = vpop.permute.xlu0 %3624
      %3626 = vrot.lane.b32.xlu0 %v3219, 64
      %v3627 = vpop.permute.xlu0 %3626
      %3628 = vrot.lane.b32.xlu0 %v3220, 64
      %v3629 = vpop.permute.xlu0 %3628
      %3630 = vrot.lane.b32.xlu0 %v3221, 64
      %v3631 = vpop.permute.xlu0 %3630
      %3632 = vrot.lane.b32.xlu0 %v3222, 64
      %v3633 = vpop.permute.xlu0 %3632
      %3634 = vrot.lane.b32.xlu0 %v3223, 64
      %v3635 = vpop.permute.xlu0 %3634
      %3636 = vrot.lane.b32.xlu0 %v3224, 64
      %v3637 = vpop.permute.xlu0 %3636
      %3638 = vrot.lane.b32.xlu0 %v3225, 64
      %v3639 = vpop.permute.xlu0 %3638
      %3640 = vrot.lane.b32.xlu0 %v3226, 64
      %v3641 = vpop.permute.xlu0 %3640
      %3642 = vrot.lane.b32.xlu0 %v3227, 64
      %v3643 = vpop.permute.xlu0 %3642
      %3644 = vrot.lane.b32.xlu0 %v3228, 64
      %v3645 = vpop.permute.xlu0 %3644
      %3710 = vrot.lane.b32.xlu0 %v3229, 96
      %v3711 = vpop.permute.xlu0 %3710
      %3712 = vrot.lane.b32.xlu0 %v3230, 96
      %v3713 = vpop.permute.xlu0 %3712
      %3714 = vrot.lane.b32.xlu0 %v3231, 96
      %v3715 = vpop.permute.xlu0 %3714
      %3716 = vrot.lane.b32.xlu0 %v3232, 96
      %v3717 = vpop.permute.xlu0 %3716
      %3718 = vrot.lane.b32.xlu0 %v3233, 96
      %v3719 = vpop.permute.xlu0 %3718
      %3720 = vrot.lane.b32.xlu0 %v3234, 96
      %v3721 = vpop.permute.xlu0 %3720
      %3722 = vrot.lane.b32.xlu0 %v3235, 96
      %v3723 = vpop.permute.xlu0 %3722
      %3724 = vrot.lane.b32.xlu0 %v3236, 96
      %v3725 = vpop.permute.xlu0 %3724
      %3726 = vrot.lane.b32.xlu0 %v3237, 96
      %v3727 = vpop.permute.xlu0 %3726
      %3728 = vrot.lane.b32.xlu0 %v3238, 96
      %v3729 = vpop.permute.xlu0 %3728
      %3730 = vrot.lane.b32.xlu0 %v3239, 96
      %v3731 = vpop.permute.xlu0 %3730
      %3732 = vrot.lane.b32.xlu0 %v3240, 96
      %v3733 = vpop.permute.xlu0 %3732
      %3734 = vrot.lane.b32.xlu0 %v3241, 96
      %v3735 = vpop.permute.xlu0 %3734
      %3736 = vrot.lane.b32.xlu0 %v3242, 96
      %v3737 = vpop.permute.xlu0 %3736
      %3738 = vrot.lane.b32.xlu0 %v3243, 96
      %v3739 = vpop.permute.xlu0 %3738
      %3740 = vrot.lane.b32.xlu0 %v3244, 96
      %v3741 = vpop.permute.xlu0 %3740
      %3742 = vrot.lane.b32.xlu0 %v3245, 96
      %v3743 = vpop.permute.xlu0 %3742
      %3744 = vrot.lane.b32.xlu0 %v3246, 96
      %v3745 = vpop.permute.xlu0 %3744
      %3746 = vrot.lane.b32.xlu0 %v3247, 96
      %v3747 = vpop.permute.xlu0 %3746
      %3748 = vrot.lane.b32.xlu0 %v3248, 96
      %v3749 = vpop.permute.xlu0 %3748
      %3750 = vrot.lane.b32.xlu0 %v3249, 96
      %v3751 = vpop.permute.xlu0 %3750
      %3752 = vrot.lane.b32.xlu0 %v3250, 96
      %v3753 = vpop.permute.xlu0 %3752
      %3754 = vrot.lane.b32.xlu0 %v3251, 96
      %v3755 = vpop.permute.xlu0 %3754
      %3756 = vrot.lane.b32.xlu0 %v3252, 96
      %v3757 = vpop.permute.xlu0 %3756
      %3758 = vrot.lane.b32.xlu0 %v3253, 96
      %v3759 = vpop.permute.xlu0 %3758
      %3760 = vrot.lane.b32.xlu0 %v3254, 96
      %v3761 = vpop.permute.xlu0 %3760
      %3762 = vrot.lane.b32.xlu0 %v3255, 96
      %v3763 = vpop.permute.xlu0 %3762
      %3764 = vrot.lane.b32.xlu0 %v3256, 96
      %v3765 = vpop.permute.xlu0 %3764
      %3766 = vrot.lane.b32.xlu0 %v3257, 96
      %v3767 = vpop.permute.xlu0 %3766
      %3768 = vrot.lane.b32.xlu0 %v3258, 96
      %v3769 = vpop.permute.xlu0 %3768
      %3770 = vrot.lane.b32.xlu0 %v3259, 96
      %v3771 = vpop.permute.xlu0 %3770
      %3772 = vrot.lane.b32.xlu0 %v3260, 96
      %v3773 = vpop.permute.xlu0 %3772
      %3838 = vrot.lane.b32.xlu0 %v3293, 32
      %v3839 = vpop.permute.xlu0 %3838
      %3840 = vrot.lane.b32.xlu0 %v3294, 32
      %v3841 = vpop.permute.xlu0 %3840
      %3842 = vrot.lane.b32.xlu0 %v3295, 32
      %v3843 = vpop.permute.xlu0 %3842
      %3844 = vrot.lane.b32.xlu0 %v3296, 32
      %v3845 = vpop.permute.xlu0 %3844
      %3846 = vrot.lane.b32.xlu0 %v3297, 32
      %v3847 = vpop.permute.xlu0 %3846
      %3848 = vrot.lane.b32.xlu0 %v3298, 32
      %v3849 = vpop.permute.xlu0 %3848
      %3850 = vrot.lane.b32.xlu0 %v3299, 32
      %v3851 = vpop.permute.xlu0 %3850
      %3852 = vrot.lane.b32.xlu0 %v3300, 32
      %v3853 = vpop.permute.xlu0 %3852
      %3854 = vrot.lane.b32.xlu0 %v3301, 32
      %v3855 = vpop.permute.xlu0 %3854
      %3856 = vrot.lane.b32.xlu0 %v3302, 32
      %v3857 = vpop.permute.xlu0 %3856
      %3858 = vrot.lane.b32.xlu0 %v3303, 32
      %v3859 = vpop.permute.xlu0 %3858
      %3860 = vrot.lane.b32.xlu0 %v3304, 32
      %v3861 = vpop.permute.xlu0 %3860
      %3862 = vrot.lane.b32.xlu0 %v3305, 32
      %v3863 = vpop.permute.xlu0 %3862
      %3864 = vrot.lane.b32.xlu0 %v3306, 32
      %v3865 = vpop.permute.xlu0 %3864
      %3866 = vrot.lane.b32.xlu0 %v3307, 32
      %v3867 = vpop.permute.xlu0 %3866
      %3868 = vrot.lane.b32.xlu0 %v3308, 32
      %v3869 = vpop.permute.xlu0 %3868
      %3870 = vrot.lane.b32.xlu0 %v3309, 32
      %v3871 = vpop.permute.xlu0 %3870
      %3872 = vrot.lane.b32.xlu0 %v3310, 32
      %v3873 = vpop.permute.xlu0 %3872
      %3874 = vrot.lane.b32.xlu0 %v3311, 32
      %v3875 = vpop.permute.xlu0 %3874
      %3876 = vrot.lane.b32.xlu0 %v3312, 32
      %v3877 = vpop.permute.xlu0 %3876
      %3878 = vrot.lane.b32.xlu0 %v3313, 32
      %v3879 = vpop.permute.xlu0 %3878
      %3880 = vrot.lane.b32.xlu0 %v3314, 32
      %v3881 = vpop.permute.xlu0 %3880
      %3882 = vrot.lane.b32.xlu0 %v3315, 32
      %v3883 = vpop.permute.xlu0 %3882
      %3884 = vrot.lane.b32.xlu0 %v3316, 32
      %v3885 = vpop.permute.xlu0 %3884
      %3886 = vrot.lane.b32.xlu0 %v3317, 32
      %v3887 = vpop.permute.xlu0 %3886
      %3888 = vrot.lane.b32.xlu0 %v3318, 32
      %v3889 = vpop.permute.xlu0 %3888
      %3890 = vrot.lane.b32.xlu0 %v3319, 32
      %v3891 = vpop.permute.xlu0 %3890
      %3892 = vrot.lane.b32.xlu0 %v3320, 32
      %v3893 = vpop.permute.xlu0 %3892
      %3894 = vrot.lane.b32.xlu0 %v3321, 32
      %v3895 = vpop.permute.xlu0 %3894
      %3896 = vrot.lane.b32.xlu0 %v3322, 32
      %v3897 = vpop.permute.xlu0 %3896
      %3898 = vrot.lane.b32.xlu0 %v3323, 32
      %v3899 = vpop.permute.xlu0 %3898
      %3900 = vrot.lane.b32.xlu0 %v3324, 32
      %v3901 = vpop.permute.xlu0 %3900
      %3966 = vrot.lane.b32.xlu0 %v3326, 64
      %v3967 = vpop.permute.xlu0 %3966
      %3968 = vrot.lane.b32.xlu0 %v3327, 64
      %v3969 = vpop.permute.xlu0 %3968
      %3970 = vrot.lane.b32.xlu0 %v3328, 64
      %v3971 = vpop.permute.xlu0 %3970
      %3972 = vrot.lane.b32.xlu0 %v3329, 64
      %v3973 = vpop.permute.xlu0 %3972
      %3974 = vrot.lane.b32.xlu0 %v3330, 64
      %v3975 = vpop.permute.xlu0 %3974
      %3976 = vrot.lane.b32.xlu0 %v3331, 64
      %v3977 = vpop.permute.xlu0 %3976
      %3978 = vrot.lane.b32.xlu0 %v3332, 64
      %v3979 = vpop.permute.xlu0 %3978
      %3980 = vrot.lane.b32.xlu0 %v3333, 64
      %v3981 = vpop.permute.xlu0 %3980
      %3982 = vrot.lane.b32.xlu0 %v3334, 64
      %v3983 = vpop.permute.xlu0 %3982
      %3984 = vrot.lane.b32.xlu0 %v3335, 64
      %v3985 = vpop.permute.xlu0 %3984
      %3986 = vrot.lane.b32.xlu0 %v3336, 64
      %v3987 = vpop.permute.xlu0 %3986
      %3988 = vrot.lane.b32.xlu0 %v3337, 64
      %v3989 = vpop.permute.xlu0 %3988
      %3990 = vrot.lane.b32.xlu0 %v3338, 64
      %v3991 = vpop.permute.xlu0 %3990
      %3992 = vrot.lane.b32.xlu0 %v3339, 64
      %v3993 = vpop.permute.xlu0 %3992
      %3994 = vrot.lane.b32.xlu0 %v3340, 64
      %v3995 = vpop.permute.xlu0 %3994
      %3996 = vrot.lane.b32.xlu0 %v3341, 64
      %v3997 = vpop.permute.xlu0 %3996
      %3998 = vrot.lane.b32.xlu0 %v3342, 64
      %v3999 = vpop.permute.xlu0 %3998
      %4000 = vrot.lane.b32.xlu0 %v3343, 64
      %v4001 = vpop.permute.xlu0 %4000
      %4002 = vrot.lane.b32.xlu0 %v3344, 64
      %v4003 = vpop.permute.xlu0 %4002
      %4004 = vrot.lane.b32.xlu0 %v3345, 64
      %v4005 = vpop.permute.xlu0 %4004
      %4006 = vrot.lane.b32.xlu0 %v3346, 64
      %v4007 = vpop.permute.xlu0 %4006
      %4008 = vrot.lane.b32.xlu0 %v3347, 64
      %v4009 = vpop.permute.xlu0 %4008
      %4010 = vrot.lane.b32.xlu0 %v3348, 64
      %v4011 = vpop.permute.xlu0 %4010
      %4012 = vrot.lane.b32.xlu0 %v3349, 64
      %v4013 = vpop.permute.xlu0 %4012
      %4014 = vrot.lane.b32.xlu0 %v3350, 64
      %v4015 = vpop.permute.xlu0 %4014
      %4016 = vrot.lane.b32.xlu0 %v3351, 64
      %v4017 = vpop.permute.xlu0 %4016
      %4018 = vrot.lane.b32.xlu0 %v3352, 64
      %v4019 = vpop.permute.xlu0 %4018
      %4020 = vrot.lane.b32.xlu0 %v3353, 64
      %v4021 = vpop.permute.xlu0 %4020
      %4022 = vrot.lane.b32.xlu0 %v3354, 64
      %v4023 = vpop.permute.xlu0 %4022
      %4024 = vrot.lane.b32.xlu0 %v3355, 64
      %v4025 = vpop.permute.xlu0 %4024
      %4026 = vrot.lane.b32.xlu0 %v3356, 64
      %v4027 = vpop.permute.xlu0 %4026
      %4028 = vrot.lane.b32.xlu0 %v3357, 64
      %v4029 = vpop.permute.xlu0 %4028
      %4094 = vrot.lane.b32.xlu0 %v3358, 96
      %v4095 = vpop.permute.xlu0 %4094
      %4096 = vrot.lane.b32.xlu0 %v3359, 96
      %v4097 = vpop.permute.xlu0 %4096
      %4098 = vrot.lane.b32.xlu0 %v3360, 96
      %v4099 = vpop.permute.xlu0 %4098
      %4100 = vrot.lane.b32.xlu0 %v3361, 96
      %v4101 = vpop.permute.xlu0 %4100
      %4102 = vrot.lane.b32.xlu0 %v3362, 96
      %v4103 = vpop.permute.xlu0 %4102
      %4104 = vrot.lane.b32.xlu0 %v3363, 96
      %v4105 = vpop.permute.xlu0 %4104
      %4106 = vrot.lane.b32.xlu0 %v3364, 96
      %v4107 = vpop.permute.xlu0 %4106
      %4108 = vrot.lane.b32.xlu0 %v3365, 96
      %v4109 = vpop.permute.xlu0 %4108
      %4110 = vrot.lane.b32.xlu0 %v3366, 96
      %v4111 = vpop.permute.xlu0 %4110
      %4112 = vrot.lane.b32.xlu0 %v3367, 96
      %v4113 = vpop.permute.xlu0 %4112
      %4114 = vrot.lane.b32.xlu0 %v3368, 96
      %v4115 = vpop.permute.xlu0 %4114
      %4116 = vrot.lane.b32.xlu0 %v3369, 96
      %v4117 = vpop.permute.xlu0 %4116
      %4118 = vrot.lane.b32.xlu0 %v3370, 96
      %v4119 = vpop.permute.xlu0 %4118
      %4120 = vrot.lane.b32.xlu0 %v3371, 96
      %v4121 = vpop.permute.xlu0 %4120
      %4122 = vrot.lane.b32.xlu0 %v3372, 96
      %v4123 = vpop.permute.xlu0 %4122
      %4124 = vrot.lane.b32.xlu0 %v3373, 96
      %v4125 = vpop.permute.xlu0 %4124
      %4126 = vrot.lane.b32.xlu0 %v3374, 96
      %v4127 = vpop.permute.xlu0 %4126
      %4128 = vrot.lane.b32.xlu0 %v3375, 96
      %v4129 = vpop.permute.xlu0 %4128
      %4130 = vrot.lane.b32.xlu0 %v3376, 96
      %v4131 = vpop.permute.xlu0 %4130
      %4132 = vrot.lane.b32.xlu0 %v3377, 96
      %v4133 = vpop.permute.xlu0 %4132
      %4134 = vrot.lane.b32.xlu0 %v3378, 96
      %v4135 = vpop.permute.xlu0 %4134
      %4136 = vrot.lane.b32.xlu0 %v3379, 96
      %v4137 = vpop.permute.xlu0 %4136
      %4138 = vrot.lane.b32.xlu0 %v3380, 96
      %v4139 = vpop.permute.xlu0 %4138
      %4140 = vrot.lane.b32.xlu0 %v3381, 96
      %v4141 = vpop.permute.xlu0 %4140
      %4142 = vrot.lane.b32.xlu0 %v3382, 96
      %v4143 = vpop.permute.xlu0 %4142
      %4144 = vrot.lane.b32.xlu0 %v3383, 96
      %v4145 = vpop.permute.xlu0 %4144
      %4146 = vrot.lane.b32.xlu0 %v3384, 96
      %v4147 = vpop.permute.xlu0 %4146
      %4148 = vrot.lane.b32.xlu0 %v3385, 96
      %v4149 = vpop.permute.xlu0 %4148
      %4150 = vrot.lane.b32.xlu0 %v3386, 96
      %v4151 = vpop.permute.xlu0 %4150
      %4152 = vrot.lane.b32.xlu0 %v3387, 96
      %v4153 = vpop.permute.xlu0 %4152
      %4154 = vrot.lane.b32.xlu0 %v3388, 96
      %v4155 = vpop.permute.xlu0 %4154
      %4156 = vrot.lane.b32.xlu0 %v3389, 96
      %v4157 = vpop.permute.xlu0 %4156
      %v4190 = vsel %vm336, %v3133, %v3455
      %v4191 = vsel %vm336, %v3134, %v3457
      %v4192 = vsel %vm336, %v3135, %v3459
      %v4193 = vsel %vm336, %v3136, %v3461
      %v4194 = vsel %vm336, %v3137, %v3463
      %v4195 = vsel %vm336, %v3138, %v3465
      %v4196 = vsel %vm336, %v3139, %v3467
      %v4197 = vsel %vm336, %v3140, %v3469
      %v4198 = vsel %vm336, %v3141, %v3471
      %v4199 = vsel %vm336, %v3142, %v3473
      %v4200 = vsel %vm336, %v3143, %v3475
      %v4201 = vsel %vm336, %v3144, %v3477
      %v4202 = vsel %vm336, %v3145, %v3479
      %v4203 = vsel %vm336, %v3146, %v3481
      %v4204 = vsel %vm336, %v3147, %v3483
      %v4205 = vsel %vm336, %v3148, %v3485
      %v4206 = vsel %vm336, %v3149, %v3487
      %v4207 = vsel %vm336, %v3150, %v3489
      %v4208 = vsel %vm336, %v3151, %v3491
      %v4209 = vsel %vm336, %v3152, %v3493
      %v4210 = vsel %vm336, %v3153, %v3495
      %v4211 = vsel %vm336, %v3154, %v3497
      %v4212 = vsel %vm336, %v3155, %v3499
      %v4213 = vsel %vm336, %v3156, %v3501
      %v4214 = vsel %vm336, %v3157, %v3503
      %v4215 = vsel %vm336, %v3158, %v3505
      %v4216 = vsel %vm336, %v3159, %v3507
      %v4217 = vsel %vm336, %v3160, %v3509
      %v4218 = vsel %vm336, %v3161, %v3511
      %v4219 = vsel %vm336, %v3162, %v3513
      %v4220 = vsel %vm336, %v3163, %v3515
      %v4221 = vsel %vm336, %v3164, %v3517
      %vm4222 = vcmask 523264
      %v4223 = vsel %vm4222, %v4190, %v3583
      %v4224 = vsel %vm4222, %v4191, %v3585
      %v4225 = vsel %vm4222, %v4192, %v3587
      %v4226 = vsel %vm4222, %v4193, %v3589
      %v4227 = vsel %vm4222, %v4194, %v3591
      %v4228 = vsel %vm4222, %v4195, %v3593
      %v4229 = vsel %vm4222, %v4196, %v3595
      %v4230 = vsel %vm4222, %v4197, %v3597
      %v4231 = vsel %vm4222, %v4198, %v3599
      %v4232 = vsel %vm4222, %v4199, %v3601
      %v4233 = vsel %vm4222, %v4200, %v3603
      %v4234 = vsel %vm4222, %v4201, %v3605
      %v4235 = vsel %vm4222, %v4202, %v3607
      %v4236 = vsel %vm4222, %v4203, %v3609
      %v4237 = vsel %vm4222, %v4204, %v3611
      %v4238 = vsel %vm4222, %v4205, %v3613
      %v4239 = vsel %vm4222, %v4206, %v3615
      %v4240 = vsel %vm4222, %v4207, %v3617
      %v4241 = vsel %vm4222, %v4208, %v3619
      %v4242 = vsel %vm4222, %v4209, %v3621
      %v4243 = vsel %vm4222, %v4210, %v3623
      %v4244 = vsel %vm4222, %v4211, %v3625
      %v4245 = vsel %vm4222, %v4212, %v3627
      %v4246 = vsel %vm4222, %v4213, %v3629
      %v4247 = vsel %vm4222, %v4214, %v3631
      %v4248 = vsel %vm4222, %v4215, %v3633
      %v4249 = vsel %vm4222, %v4216, %v3635
      %v4250 = vsel %vm4222, %v4217, %v3637
      %v4251 = vsel %vm4222, %v4218, %v3639
      %v4252 = vsel %vm4222, %v4219, %v3641
      %v4253 = vsel %vm4222, %v4220, %v3643
      %v4254 = vsel %vm4222, %v4221, %v3645
      %vm4255 = vcmask 785408
      %v4256 = vsel %vm4255, %v4223, %v3711
      %v4257 = vsel %vm4255, %v4224, %v3713
      %v4258 = vsel %vm4255, %v4225, %v3715
      %v4259 = vsel %vm4255, %v4226, %v3717
      %v4260 = vsel %vm4255, %v4227, %v3719
      %v4261 = vsel %vm4255, %v4228, %v3721
      %v4262 = vsel %vm4255, %v4229, %v3723
      %v4263 = vsel %vm4255, %v4230, %v3725
      %v4264 = vsel %vm4255, %v4231, %v3727
      %v4265 = vsel %vm4255, %v4232, %v3729
      %v4266 = vsel %vm4255, %v4233, %v3731
      %v4267 = vsel %vm4255, %v4234, %v3733
      %v4268 = vsel %vm4255, %v4235, %v3735
      %v4269 = vsel %vm4255, %v4236, %v3737
      %v4270 = vsel %vm4255, %v4237, %v3739
      %v4271 = vsel %vm4255, %v4238, %v3741
      %v4272 = vsel %vm4255, %v4239, %v3743
      %v4273 = vsel %vm4255, %v4240, %v3745
      %v4274 = vsel %vm4255, %v4241, %v3747
      %v4275 = vsel %vm4255, %v4242, %v3749
      %v4276 = vsel %vm4255, %v4243, %v3751
      %v4277 = vsel %vm4255, %v4244, %v3753
      %v4278 = vsel %vm4255, %v4245, %v3755
      %v4279 = vsel %vm4255, %v4246, %v3757
      %v4280 = vsel %vm4255, %v4247, %v3759
      %v4281 = vsel %vm4255, %v4248, %v3761
      %v4282 = vsel %vm4255, %v4249, %v3763
      %v4283 = vsel %vm4255, %v4250, %v3765
      %v4284 = vsel %vm4255, %v4251, %v3767
      %v4285 = vsel %vm4255, %v4252, %v3769
      %v4286 = vsel %vm4255, %v4253, %v3771
      %v4287 = vsel %vm4255, %v4254, %v3773
      %v4288 = vsel %vm336, %v3261, %v3839
      %v4289 = vsel %vm336, %v3262, %v3841
      %v4290 = vsel %vm336, %v3263, %v3843
      %v4291 = vsel %vm336, %v3264, %v3845
      %v4292 = vsel %vm336, %v3265, %v3847
      %v4293 = vsel %vm336, %v3266, %v3849
      %v4294 = vsel %vm336, %v3267, %v3851
      %v4295 = vsel %vm336, %v3268, %v3853
      %v4296 = vsel %vm336, %v3269, %v3855
      %v4297 = vsel %vm336, %v3270, %v3857
      %v4298 = vsel %vm336, %v3271, %v3859
      %v4299 = vsel %vm336, %v3272, %v3861
      %v4300 = vsel %vm336, %v3273, %v3863
      %v4301 = vsel %vm336, %v3274, %v3865
      %v4302 = vsel %vm336, %v3275, %v3867
      %v4303 = vsel %vm336, %v3276, %v3869
      %v4304 = vsel %vm336, %v3277, %v3871
      %v4305 = vsel %vm336, %v3278, %v3873
      %v4306 = vsel %vm336, %v3279, %v3875
      %v4307 = vsel %vm336, %v3280, %v3877
      %v4308 = vsel %vm336, %v3281, %v3879
      %v4309 = vsel %vm336, %v3282, %v3881
      %v4310 = vsel %vm336, %v3283, %v3883
      %v4311 = vsel %vm336, %v3284, %v3885
      %v4312 = vsel %vm336, %v3285, %v3887
      %v4313 = vsel %vm336, %v3286, %v3889
      %v4314 = vsel %vm336, %v3287, %v3891
      %v4315 = vsel %vm336, %v3288, %v3893
      %v4316 = vsel %vm336, %v3289, %v3895
      %v4317 = vsel %vm336, %v3290, %v3897
      %v4318 = vsel %vm336, %v3291, %v3899
      %v4319 = vsel %vm336, %v3292, %v3901
      %v4320 = vsel %vm4222, %v4288, %v3967
      %v4321 = vsel %vm4222, %v4289, %v3969
      %v4322 = vsel %vm4222, %v4290, %v3971
      %v4323 = vsel %vm4222, %v4291, %v3973
      %v4324 = vsel %vm4222, %v4292, %v3975
      %v4325 = vsel %vm4222, %v4293, %v3977
      %v4326 = vsel %vm4222, %v4294, %v3979
      %v4327 = vsel %vm4222, %v4295, %v3981
      %v4328 = vsel %vm4222, %v4296, %v3983
      %v4329 = vsel %vm4222, %v4297, %v3985
      %v4330 = vsel %vm4222, %v4298, %v3987
      %v4331 = vsel %vm4222, %v4299, %v3989
      %v4332 = vsel %vm4222, %v4300, %v3991
      %v4333 = vsel %vm4222, %v4301, %v3993
      %v4334 = vsel %vm4222, %v4302, %v3995
      %v4335 = vsel %vm4222, %v4303, %v3997
      %v4336 = vsel %vm4222, %v4304, %v3999
      %v4337 = vsel %vm4222, %v4305, %v4001
      %v4338 = vsel %vm4222, %v4306, %v4003
      %v4339 = vsel %vm4222, %v4307, %v4005
      %v4340 = vsel %vm4222, %v4308, %v4007
      %v4341 = vsel %vm4222, %v4309, %v4009
      %v4342 = vsel %vm4222, %v4310, %v4011
      %v4343 = vsel %vm4222, %v4311, %v4013
      %v4344 = vsel %vm4222, %v4312, %v4015
      %v4345 = vsel %vm4222, %v4313, %v4017
      %v4346 = vsel %vm4222, %v4314, %v4019
      %v4347 = vsel %vm4222, %v4315, %v4021
      %v4348 = vsel %vm4222, %v4316, %v4023
      %v4349 = vsel %vm4222, %v4317, %v4025
      %v4350 = vsel %vm4222, %v4318, %v4027
      %v4351 = vsel %vm4222, %v4319, %v4029
      %v4352 = vsel %vm4255, %v4320, %v4095
      %v4353 = vsel %vm4255, %v4321, %v4097
      %v4354 = vsel %vm4255, %v4322, %v4099
      %v4355 = vsel %vm4255, %v4323, %v4101
      %v4356 = vsel %vm4255, %v4324, %v4103
      %v4357 = vsel %vm4255, %v4325, %v4105
      %v4358 = vsel %vm4255, %v4326, %v4107
      %v4359 = vsel %vm4255, %v4327, %v4109
      %v4360 = vsel %vm4255, %v4328, %v4111
      %v4361 = vsel %vm4255, %v4329, %v4113
      %v4362 = vsel %vm4255, %v4330, %v4115
      %v4363 = vsel %vm4255, %v4331, %v4117
      %v4364 = vsel %vm4255, %v4332, %v4119
      %v4365 = vsel %vm4255, %v4333, %v4121
      %v4366 = vsel %vm4255, %v4334, %v4123
      %v4367 = vsel %vm4255, %v4335, %v4125
      %v4368 = vsel %vm4255, %v4336, %v4127
      %v4369 = vsel %vm4255, %v4337, %v4129
      %v4370 = vsel %vm4255, %v4338, %v4131
      %v4371 = vsel %vm4255, %v4339, %v4133
      %v4372 = vsel %vm4255, %v4340, %v4135
      %v4373 = vsel %vm4255, %v4341, %v4137
      %v4374 = vsel %vm4255, %v4342, %v4139
      %v4375 = vsel %vm4255, %v4343, %v4141
      %v4376 = vsel %vm4255, %v4344, %v4143
      %v4377 = vsel %vm4255, %v4345, %v4145
      %v4378 = vsel %vm4255, %v4346, %v4147
      %v4379 = vsel %vm4255, %v4347, %v4149
      %v4380 = vsel %vm4255, %v4348, %v4151
      %v4381 = vsel %vm4255, %v4349, %v4153
      %v4382 = vsel %vm4255, %v4350, %v4155
      %v4383 = vsel %vm4255, %v4351, %v4157
      %v4384 = vpack.c.bf16 %v4257, %v4256
      %v4385 = vpack.c.bf16 %v4353, %v4352
      %v4386 = vpack.c.bf16 %v3391, %v3390
      %v4387 = vpack.c.bf16 %v4259, %v4258
      %v4388 = vpack.c.bf16 %v4355, %v4354
      %v4389 = vpack.c.bf16 %v3393, %v3392
      %v4390 = vpack.c.bf16 %v4261, %v4260
      %v4391 = vpack.c.bf16 %v4357, %v4356
      %v4392 = vpack.c.bf16 %v3395, %v3394
      %v4393 = vpack.c.bf16 %v4263, %v4262
      %v4394 = vpack.c.bf16 %v4359, %v4358
      %v4395 = vpack.c.bf16 %v3397, %v3396
      %v4396 = vpack.c.bf16 %v4265, %v4264
      %v4397 = vpack.c.bf16 %v4361, %v4360
      %v4398 = vpack.c.bf16 %v3399, %v3398
      %v4399 = vpack.c.bf16 %v4267, %v4266
      %v4400 = vpack.c.bf16 %v4363, %v4362
      %v4401 = vpack.c.bf16 %v3401, %v3400
      %v4402 = vpack.c.bf16 %v4269, %v4268
      %v4403 = vpack.c.bf16 %v4365, %v4364
      %v4404 = vpack.c.bf16 %v3403, %v3402
      %v4405 = vpack.c.bf16 %v4271, %v4270
      %v4406 = vpack.c.bf16 %v4367, %v4366
      %v4407 = vpack.c.bf16 %v3405, %v3404
      %v4408 = vpack.c.bf16 %v4273, %v4272
      %v4409 = vpack.c.bf16 %v4369, %v4368
      %v4410 = vpack.c.bf16 %v3407, %v3406
      %v4411 = vpack.c.bf16 %v4275, %v4274
      %v4412 = vpack.c.bf16 %v4371, %v4370
      %v4413 = vpack.c.bf16 %v3409, %v3408
      %v4414 = vpack.c.bf16 %v4277, %v4276
      %v4415 = vpack.c.bf16 %v4373, %v4372
      %v4416 = vpack.c.bf16 %v3411, %v3410
      %v4417 = vpack.c.bf16 %v4279, %v4278
      %v4418 = vpack.c.bf16 %v4375, %v4374
      %v4419 = vpack.c.bf16 %v3413, %v3412
      %v4420 = vpack.c.bf16 %v4281, %v4280
      %v4421 = vpack.c.bf16 %v4377, %v4376
      %v4422 = vpack.c.bf16 %v3415, %v3414
      %v4423 = vpack.c.bf16 %v4283, %v4282
      %v4424 = vpack.c.bf16 %v4379, %v4378
      %v4425 = vpack.c.bf16 %v3417, %v3416
      %v4426 = vpack.c.bf16 %v4285, %v4284
      %v4427 = vpack.c.bf16 %v4381, %v4380
      %v4428 = vpack.c.bf16 %v3419, %v3418
      %v4429 = vpack.c.bf16 %v4287, %v4286
      %v4430 = vpack.c.bf16 %v4383, %v4382
      %v4431 = vpack.c.bf16 %v3421, %v3420
      %v4432 = vld [vmem:[%s3] sm:$0xf]
      %v4433 = vld [vmem:[%s3 + $0x4] sm:$0xf]
      %v4434 = vld [vmem:[%s3 + $0x8] sm:$0xf]
      %v4435 = vld [vmem:[%s3 + $0xc] sm:$0xf]
      %v4436 = vld [vmem:[%s3 + $0x10] sm:$0xf]
      %v4437 = vld [vmem:[%s3 + $0x14] sm:$0xf]
      %v4438 = vld [vmem:[%s3 + $0x18] sm:$0xf]
      %v4439 = vld [vmem:[%s3 + $0x1c] sm:$0xf]
      %v4440 = vld [vmem:[%s3 + $0x20] sm:$0xf]
      %v4441 = vld [vmem:[%s3 + $0x24] sm:$0xf]
      %v4442 = vld [vmem:[%s3 + $0x28] sm:$0xf]
      %v4443 = vld [vmem:[%s3 + $0x2c] sm:$0xf]
      %v4444 = vld [vmem:[%s3 + $0x30] sm:$0xf]
      %v4445 = vld [vmem:[%s3 + $0x34] sm:$0xf]
      %v4446 = vld [vmem:[%s3 + $0x38] sm:$0xf]
      %v4447 = vld [vmem:[%s3 + $0x3c] sm:$0xf]
      %v4448 = vld [vmem:[%s3 + $0x40] sm:$0xf]
      %v4449 = vld [vmem:[%s3 + $0x44] sm:$0xf]
      %v4450 = vld [vmem:[%s3 + $0x48] sm:$0xf]
      %v4451 = vld [vmem:[%s3 + $0x4c] sm:$0xf]
      %v4452 = vld [vmem:[%s3 + $0x50] sm:$0xf]
      %v4453 = vld [vmem:[%s3 + $0x54] sm:$0xf]
      %v4454 = vld [vmem:[%s3 + $0x58] sm:$0xf]
      %v4455 = vld [vmem:[%s3 + $0x5c] sm:$0xf]
      %v4456 = vld [vmem:[%s3 + $0x60] sm:$0xf]
      %v4457 = vld [vmem:[%s3 + $0x64] sm:$0xf]
      %v4458 = vld [vmem:[%s3 + $0x68] sm:$0xf]
      %v4459 = vld [vmem:[%s3 + $0x6c] sm:$0xf]
      %v4460 = vld [vmem:[%s3 + $0x70] sm:$0xf]
      %v4461 = vld [vmem:[%s3 + $0x74] sm:$0xf]
      %v4462 = vld [vmem:[%s3 + $0x78] sm:$0xf]
      %v4463 = vld [vmem:[%s3 + $0x7c] sm:$0xf]
      %v4464 = vld [vmem:[%s3 + $0x80] sm:$0xf]
      %v4465 = vld [vmem:[%s3 + $0x84] sm:$0xf]
      %v4466 = vld [vmem:[%s3 + $0x88] sm:$0xf]
      %v4467 = vld [vmem:[%s3 + $0x8c] sm:$0xf]
      %v4468 = vld [vmem:[%s4] sm:$0x1]
      %v4470 = vperm.slane %v4468, 0
      %v4508 = vunpack.c.l.b16 %v4432
      %v4509 = vunpack.c.l.b16 %v4433
      %v4510 = vunpack.c.l.b16 %v4434
      %v4511 = vunpack.c.l.b16 %v4435
      %v4512 = vunpack.c.l.b16 %v4436
      %v4513 = vunpack.c.l.b16 %v4437
      %v4514 = vunpack.c.l.b16 %v4438
      %v4515 = vunpack.c.l.b16 %v4439
      %v4516 = vunpack.c.l.b16 %v4440
      %v4517 = vunpack.c.l.b16 %v4441
      %v4518 = vunpack.c.l.b16 %v4442
      %v4519 = vunpack.c.l.b16 %v4443
      %v4520 = vunpack.c.l.b16 %v4444
      %v4521 = vunpack.c.l.b16 %v4445
      %v4522 = vunpack.c.l.b16 %v4446
      %v4523 = vunpack.c.l.b16 %v4447
      %v4524 = vunpack.c.l.b16 %v4448
      %v4525 = vunpack.c.l.b16 %v4449
      %v4526 = vunpack.c.l.b16 %v4450
      %v4527 = vunpack.c.l.b16 %v4451
      %v4528 = vunpack.c.l.b16 %v4452
      %v4529 = vunpack.c.l.b16 %v4453
      %v4530 = vunpack.c.l.b16 %v4454
      %v4531 = vunpack.c.l.b16 %v4455
      %v4532 = vunpack.c.l.b16 %v4456
      %v4533 = vunpack.c.l.b16 %v4457
      %v4534 = vunpack.c.l.b16 %v4458
      %v4535 = vunpack.c.l.b16 %v4459
      %v4536 = vunpack.c.l.b16 %v4460
      %v4537 = vunpack.c.l.b16 %v4461
      %v4538 = vunpack.c.l.b16 %v4462
      %v4539 = vunpack.c.l.b16 %v4463
      %v4540 = vunpack.c.l.b16 %v4464
      %v4541 = vunpack.c.l.b16 %v4465
      %v4542 = vunpack.c.l.b16 %v4466
      %v4543 = vunpack.c.l.b16 %v4467
      %v4544 = vpack.c.b16 %v4509, %v4508
      %v4545 = vpack.c.b16 %v4511, %v4510
      %v4546 = vpack.c.b16 %v4513, %v4512
      %v4547 = vpack.c.b16 %v4515, %v4514
      %v4548 = vpack.c.b16 %v4517, %v4516
      %v4549 = vpack.c.b16 %v4519, %v4518
      %v4550 = vpack.c.b16 %v4521, %v4520
      %v4551 = vpack.c.b16 %v4523, %v4522
      %v4552 = vpack.c.b16 %v4525, %v4524
      %v4553 = vpack.c.b16 %v4527, %v4526
      %v4554 = vpack.c.b16 %v4529, %v4528
      %v4555 = vpack.c.b16 %v4531, %v4530
      %v4556 = vpack.c.b16 %v4533, %v4532
      %v4557 = vpack.c.b16 %v4535, %v4534
      %v4558 = vpack.c.b16 %v4537, %v4536
      %v4559 = vpack.c.b16 %v4539, %v4538
      %v4560 = vpack.c.b16 %v4541, %v4540
      %v4561 = vpack.c.b16 %v4543, %v4542
      %v4581 = vsel %vm336, %v4386, 0
      %v4584 = vsel %vm336, %v4389, 0
      %v4587 = vsel %vm336, %v4392, 0
      %v4590 = vsel %vm336, %v4395, 0
      %v4593 = vsel %vm336, %v4398, 0
      %v4596 = vsel %vm336, %v4401, 0
      %v4599 = vsel %vm336, %v4404, 0
      %v4602 = vsel %vm336, %v4407, 0
      %v4605 = vsel %vm336, %v4410, 0
      %v4608 = vsel %vm336, %v4413, 0
      %v4611 = vsel %vm336, %v4416, 0
      %v4614 = vsel %vm336, %v4419, 0
      %v4617 = vsel %vm336, %v4422, 0
      %v4620 = vsel %vm336, %v4425, 0
      %v4623 = vsel %vm336, %v4428, 0
      %v4626 = vsel %vm336, %v4431, 0
      %4628 = vmatpush.bf16.msra.mxu0 %v4551
      %4629 = vmatpush.bf16.msra.mxu0 %v4550
      %4630 = vmatpush.bf16.msra.mxu0 %v4549
      %4631 = vmatpush.bf16.msra.mxu0 %v4548
      %4632 = vmatpush.bf16.msra.mxu0 %v4547
      %4633 = vmatpush.bf16.msra.mxu0 %v4546
      %4634 = vmatpush.bf16.msra.mxu0 %v4545
      %4635 = vmatpush.bf16.msra.mxu0 %v4544
      %4636 = vmatmul.bf16.gmra.mxu0 %v4384
      %v4637 = vpop.f32.mrf.mxu0
      %v4638 = vadd.f32 %v4470, %v4637
      %v4639 = vpop.f32.mrf.mxu0
      %v4640 = vadd.f32 %v4470, %v4639
      %4641 = vmatmul.bf16.gmra.mxu0 %v4387
      %v4642 = vpop.f32.mrf.mxu0
      %v4643 = vadd.f32 %v4470, %v4642
      %v4644 = vpop.f32.mrf.mxu0
      %v4645 = vadd.f32 %v4470, %v4644
      %4646 = vmatmul.bf16.gmra.mxu0 %v4390
      %v4647 = vpop.f32.mrf.mxu0
      %v4648 = vadd.f32 %v4470, %v4647
      %v4649 = vpop.f32.mrf.mxu0
      %v4650 = vadd.f32 %v4470, %v4649
      %4651 = vmatmul.bf16.gmra.mxu0 %v4393
      %v4652 = vpop.f32.mrf.mxu0
      %v4653 = vadd.f32 %v4470, %v4652
      %v4654 = vpop.f32.mrf.mxu0
      %v4655 = vadd.f32 %v4470, %v4654
      %4656 = vmatmul.bf16.gmra.mxu0 %v4396
      %v4657 = vpop.f32.mrf.mxu0
      %v4658 = vadd.f32 %v4470, %v4657
      %v4659 = vpop.f32.mrf.mxu0
      %v4660 = vadd.f32 %v4470, %v4659
      %4661 = vmatmul.bf16.gmra.mxu0 %v4399
      %v4662 = vpop.f32.mrf.mxu0
      %v4663 = vadd.f32 %v4470, %v4662
      %v4664 = vpop.f32.mrf.mxu0
      %v4665 = vadd.f32 %v4470, %v4664
      %4666 = vmatmul.bf16.gmra.mxu0 %v4402
      %v4667 = vpop.f32.mrf.mxu0
      %v4668 = vadd.f32 %v4470, %v4667
      %v4669 = vpop.f32.mrf.mxu0
      %v4670 = vadd.f32 %v4470, %v4669
      %4671 = vmatmul.bf16.gmra.mxu0 %v4405
      %v4672 = vpop.f32.mrf.mxu0
      %v4673 = vadd.f32 %v4470, %v4672
      %v4674 = vpop.f32.mrf.mxu0
      %v4675 = vadd.f32 %v4470, %v4674
      %4676 = vmatmul.bf16.gmra.mxu0 %v4408
      %v4677 = vpop.f32.mrf.mxu0
      %v4678 = vadd.f32 %v4470, %v4677
      %v4679 = vpop.f32.mrf.mxu0
      %v4680 = vadd.f32 %v4470, %v4679
      %4681 = vmatmul.bf16.gmra.mxu0 %v4411
      %v4682 = vpop.f32.mrf.mxu0
      %v4683 = vadd.f32 %v4470, %v4682
      %v4684 = vpop.f32.mrf.mxu0
      %v4685 = vadd.f32 %v4470, %v4684
      %4686 = vmatmul.bf16.gmra.mxu0 %v4414
      %v4687 = vpop.f32.mrf.mxu0
      %v4688 = vadd.f32 %v4470, %v4687
      %v4689 = vpop.f32.mrf.mxu0
      %v4690 = vadd.f32 %v4470, %v4689
      %4691 = vmatmul.bf16.gmra.mxu0 %v4417
      %v4692 = vpop.f32.mrf.mxu0
      %v4693 = vadd.f32 %v4470, %v4692
      %v4694 = vpop.f32.mrf.mxu0
      %v4695 = vadd.f32 %v4470, %v4694
      %4696 = vmatmul.bf16.gmra.mxu0 %v4420
      %v4697 = vpop.f32.mrf.mxu0
      %v4698 = vadd.f32 %v4470, %v4697
      %v4699 = vpop.f32.mrf.mxu0
      %v4700 = vadd.f32 %v4470, %v4699
      %4701 = vmatmul.bf16.gmra.mxu0 %v4423
      %v4702 = vpop.f32.mrf.mxu0
      %v4703 = vadd.f32 %v4470, %v4702
      %v4704 = vpop.f32.mrf.mxu0
      %v4705 = vadd.f32 %v4470, %v4704
      %4706 = vmatmul.bf16.gmra.mxu0 %v4426
      %v4707 = vpop.f32.mrf.mxu0
      %v4708 = vadd.f32 %v4470, %v4707
      %v4709 = vpop.f32.mrf.mxu0
      %v4710 = vadd.f32 %v4470, %v4709
      %4711 = vmatmul.bf16.gmra.mxu0 %v4429
      %v4712 = vpop.f32.mrf.mxu0
      %v4713 = vadd.f32 %v4470, %v4712
      %v4714 = vpop.f32.mrf.mxu0
      %v4715 = vadd.f32 %v4470, %v4714
      %4716 = vdwg.mxu0
      %4717 = vmatpush.bf16.msra.mxu0 %v4559
      %4718 = vmatpush.bf16.msra.mxu0 %v4558
      %4719 = vmatpush.bf16.msra.mxu0 %v4557
      %4720 = vmatpush.bf16.msra.mxu0 %v4556
      %4721 = vmatpush.bf16.msra.mxu0 %v4555
      %4722 = vmatpush.bf16.msra.mxu0 %v4554
      %4723 = vmatpush.bf16.msra.mxu0 %v4553
      %4724 = vmatpush.bf16.msra.mxu0 %v4552
      %4725 = vmatmul.bf16.gmra.mxu0 %v4385
      %v4726 = vpop.f32.mrf.mxu0
      %v4727 = vadd.f32 %v4638, %v4726
      %v4728 = vpop.f32.mrf.mxu0
      %v4729 = vadd.f32 %v4640, %v4728
      %4730 = vmatmul.bf16.gmra.mxu0 %v4388
      %v4731 = vpop.f32.mrf.mxu0
      %v4732 = vadd.f32 %v4643, %v4731
      %v4733 = vpop.f32.mrf.mxu0
      %v4734 = vadd.f32 %v4645, %v4733
      %4735 = vmatmul.bf16.gmra.mxu0 %v4391
      %v4736 = vpop.f32.mrf.mxu0
      %v4737 = vadd.f32 %v4648, %v4736
      %v4738 = vpop.f32.mrf.mxu0
      %v4739 = vadd.f32 %v4650, %v4738
      %4740 = vmatmul.bf16.gmra.mxu0 %v4394
      %v4741 = vpop.f32.mrf.mxu0
      %v4742 = vadd.f32 %v4653, %v4741
      %v4743 = vpop.f32.mrf.mxu0
      %v4744 = vadd.f32 %v4655, %v4743
      %4745 = vmatmul.bf16.gmra.mxu0 %v4397
      %v4746 = vpop.f32.mrf.mxu0
      %v4747 = vadd.f32 %v4658, %v4746
      %v4748 = vpop.f32.mrf.mxu0
      %v4749 = vadd.f32 %v4660, %v4748
      %4750 = vmatmul.bf16.gmra.mxu0 %v4400
      %v4751 = vpop.f32.mrf.mxu0
      %v4752 = vadd.f32 %v4663, %v4751
      %v4753 = vpop.f32.mrf.mxu0
      %v4754 = vadd.f32 %v4665, %v4753
      %4755 = vmatmul.bf16.gmra.mxu0 %v4403
      %v4756 = vpop.f32.mrf.mxu0
      %v4757 = vadd.f32 %v4668, %v4756
      %v4758 = vpop.f32.mrf.mxu0
      %v4759 = vadd.f32 %v4670, %v4758
      %4760 = vmatmul.bf16.gmra.mxu0 %v4406
      %v4761 = vpop.f32.mrf.mxu0
      %v4762 = vadd.f32 %v4673, %v4761
      %v4763 = vpop.f32.mrf.mxu0
      %v4764 = vadd.f32 %v4675, %v4763
      %4765 = vmatmul.bf16.gmra.mxu0 %v4409
      %v4766 = vpop.f32.mrf.mxu0
      %v4767 = vadd.f32 %v4678, %v4766
      %v4768 = vpop.f32.mrf.mxu0
      %v4769 = vadd.f32 %v4680, %v4768
      %4770 = vmatmul.bf16.gmra.mxu0 %v4412
      %v4771 = vpop.f32.mrf.mxu0
      %v4772 = vadd.f32 %v4683, %v4771
      %v4773 = vpop.f32.mrf.mxu0
      %v4774 = vadd.f32 %v4685, %v4773
      %4775 = vmatmul.bf16.gmra.mxu0 %v4415
      %v4776 = vpop.f32.mrf.mxu0
      %v4777 = vadd.f32 %v4688, %v4776
      %v4778 = vpop.f32.mrf.mxu0
      %v4779 = vadd.f32 %v4690, %v4778
      %4780 = vmatmul.bf16.gmra.mxu0 %v4418
      %v4781 = vpop.f32.mrf.mxu0
      %v4782 = vadd.f32 %v4693, %v4781
      %v4783 = vpop.f32.mrf.mxu0
      %v4784 = vadd.f32 %v4695, %v4783
      %4785 = vmatmul.bf16.gmra.mxu0 %v4421
      %v4786 = vpop.f32.mrf.mxu0
      %v4787 = vadd.f32 %v4698, %v4786
      %v4788 = vpop.f32.mrf.mxu0
      %v4789 = vadd.f32 %v4700, %v4788
      %4790 = vmatmul.bf16.gmra.mxu0 %v4424
      %v4791 = vpop.f32.mrf.mxu0
      %v4792 = vadd.f32 %v4703, %v4791
      %v4793 = vpop.f32.mrf.mxu0
      %v4794 = vadd.f32 %v4705, %v4793
      %4795 = vmatmul.bf16.gmra.mxu0 %v4427
      %v4796 = vpop.f32.mrf.mxu0
      %v4797 = vadd.f32 %v4708, %v4796
      %v4798 = vpop.f32.mrf.mxu0
      %v4799 = vadd.f32 %v4710, %v4798
      %4800 = vmatmul.bf16.gmra.mxu0 %v4430
      %v4801 = vpop.f32.mrf.mxu0
      %v4802 = vadd.f32 %v4713, %v4801
      %v4803 = vpop.f32.mrf.mxu0
      %v4804 = vadd.f32 %v4715, %v4803
      %4805 = vdwg.mxu0
      %4806 = vmatpush.bf16.msra.mxu0 0
      %4807 = vmatpush.bf16.msra.mxu0 0
      %4808 = vmatpush.bf16.msra.mxu0 0
      %4809 = vmatpush.bf16.msra.mxu0 0
      %4810 = vmatpush.bf16.msra.mxu0 0
      %4811 = vmatpush.bf16.msra.mxu0 0
      %4812 = vmatpush.bf16.msra.mxu0 %v4561
      %4813 = vmatpush.bf16.msra.mxu0 %v4560
      %4814 = vmatmul.bf16.gmra.mxu0 %v4581
      %v4815 = vpop.f32.mrf.mxu0
      %v4816 = vadd.f32 %v4727, %v4815
      %v4817 = vpop.f32.mrf.mxu0
      %v4818 = vadd.f32 %v4729, %v4817
      %4819 = vmatmul.bf16.gmra.mxu0 %v4584
      %v4820 = vpop.f32.mrf.mxu0
      %v4821 = vadd.f32 %v4732, %v4820
      %v4822 = vpop.f32.mrf.mxu0
      %v4823 = vadd.f32 %v4734, %v4822
      %4824 = vmatmul.bf16.gmra.mxu0 %v4587
      %v4825 = vpop.f32.mrf.mxu0
      %v4826 = vadd.f32 %v4737, %v4825
      %v4827 = vpop.f32.mrf.mxu0
      %v4828 = vadd.f32 %v4739, %v4827
      %4829 = vmatmul.bf16.gmra.mxu0 %v4590
      %v4830 = vpop.f32.mrf.mxu0
      %v4831 = vadd.f32 %v4742, %v4830
      %v4832 = vpop.f32.mrf.mxu0
      %v4833 = vadd.f32 %v4744, %v4832
      %4834 = vmatmul.bf16.gmra.mxu0 %v4593
      %v4835 = vpop.f32.mrf.mxu0
      %v4836 = vadd.f32 %v4747, %v4835
      %v4837 = vpop.f32.mrf.mxu0
      %v4838 = vadd.f32 %v4749, %v4837
      %4839 = vmatmul.bf16.gmra.mxu0 %v4596
      %v4840 = vpop.f32.mrf.mxu0
      %v4841 = vadd.f32 %v4752, %v4840
      %v4842 = vpop.f32.mrf.mxu0
      %v4843 = vadd.f32 %v4754, %v4842
      %4844 = vmatmul.bf16.gmra.mxu0 %v4599
      %v4845 = vpop.f32.mrf.mxu0
      %v4846 = vadd.f32 %v4757, %v4845
      %v4847 = vpop.f32.mrf.mxu0
      %v4848 = vadd.f32 %v4759, %v4847
      %4849 = vmatmul.bf16.gmra.mxu0 %v4602
      %v4850 = vpop.f32.mrf.mxu0
      %v4851 = vadd.f32 %v4762, %v4850
      %v4852 = vpop.f32.mrf.mxu0
      %v4853 = vadd.f32 %v4764, %v4852
      %4854 = vmatmul.bf16.gmra.mxu0 %v4605
      %v4855 = vpop.f32.mrf.mxu0
      %v4856 = vadd.f32 %v4767, %v4855
      %v4857 = vpop.f32.mrf.mxu0
      %v4858 = vadd.f32 %v4769, %v4857
      %4859 = vmatmul.bf16.gmra.mxu0 %v4608
      %v4860 = vpop.f32.mrf.mxu0
      %v4861 = vadd.f32 %v4772, %v4860
      %v4862 = vpop.f32.mrf.mxu0
      %v4863 = vadd.f32 %v4774, %v4862
      %4864 = vmatmul.bf16.gmra.mxu0 %v4611
      %v4865 = vpop.f32.mrf.mxu0
      %v4866 = vadd.f32 %v4777, %v4865
      %v4867 = vpop.f32.mrf.mxu0
      %v4868 = vadd.f32 %v4779, %v4867
      %4869 = vmatmul.bf16.gmra.mxu0 %v4614
      %v4870 = vpop.f32.mrf.mxu0
      %v4871 = vadd.f32 %v4782, %v4870
      %v4872 = vpop.f32.mrf.mxu0
      %v4873 = vadd.f32 %v4784, %v4872
      %4874 = vmatmul.bf16.gmra.mxu0 %v4617
      %v4875 = vpop.f32.mrf.mxu0
      %v4876 = vadd.f32 %v4787, %v4875
      %v4877 = vpop.f32.mrf.mxu0
      %v4878 = vadd.f32 %v4789, %v4877
      %4879 = vmatmul.bf16.gmra.mxu0 %v4620
      %v4880 = vpop.f32.mrf.mxu0
      %v4881 = vadd.f32 %v4792, %v4880
      %v4882 = vpop.f32.mrf.mxu0
      %v4883 = vadd.f32 %v4794, %v4882
      %4884 = vmatmul.bf16.gmra.mxu0 %v4623
      %v4885 = vpop.f32.mrf.mxu0
      %v4886 = vadd.f32 %v4797, %v4885
      %v4887 = vpop.f32.mrf.mxu0
      %v4888 = vadd.f32 %v4799, %v4887
      %4889 = vmatmul.bf16.gmra.mxu0 %v4626
      %v4890 = vpop.f32.mrf.mxu0
      %v4891 = vadd.f32 %v4802, %v4890
      %v4892 = vpop.f32.mrf.mxu0
      %v4893 = vadd.f32 %v4804, %v4892
      %4894 = vdwg.mxu0
      %v4895 = vxor.u32 %v4816, 2147483648
      %v4896 = vxor.u32 %v4818, 2147483648
      %v4897 = vxor.u32 %v4821, 2147483648
      %v4898 = vxor.u32 %v4823, 2147483648
      %v4899 = vxor.u32 %v4826, 2147483648
      %v4900 = vxor.u32 %v4828, 2147483648
      %v4901 = vxor.u32 %v4831, 2147483648
      %v4902 = vxor.u32 %v4833, 2147483648
      %v4903 = vxor.u32 %v4836, 2147483648
      %v4904 = vxor.u32 %v4838, 2147483648
      %v4905 = vxor.u32 %v4841, 2147483648
      %v4906 = vxor.u32 %v4843, 2147483648
      %v4907 = vxor.u32 %v4846, 2147483648
      %v4908 = vxor.u32 %v4848, 2147483648
      %v4909 = vxor.u32 %v4851, 2147483648
      %v4910 = vxor.u32 %v4853, 2147483648
      %v4911 = vxor.u32 %v4856, 2147483648
      %v4912 = vxor.u32 %v4858, 2147483648
      %v4913 = vxor.u32 %v4861, 2147483648
      %v4914 = vxor.u32 %v4863, 2147483648
      %v4915 = vxor.u32 %v4866, 2147483648
      %v4916 = vxor.u32 %v4868, 2147483648
      %v4917 = vxor.u32 %v4871, 2147483648
      %v4918 = vxor.u32 %v4873, 2147483648
      %v4919 = vxor.u32 %v4876, 2147483648
      %v4920 = vxor.u32 %v4878, 2147483648
      %v4921 = vxor.u32 %v4881, 2147483648
      %v4922 = vxor.u32 %v4883, 2147483648
      %v4923 = vxor.u32 %v4886, 2147483648
      %v4924 = vxor.u32 %v4888, 2147483648
      %v4925 = vxor.u32 %v4891, 2147483648
      %v4926 = vxor.u32 %v4893, 2147483648
      %v4927 = vmul.f32 %v4895, 1.442695
      %v4928 = vpow.pop %v4927
      %v4929 = vmul.f32 %v4896, 1.442695
      %v4930 = vpow.pop %v4929
      %v4931 = vmul.f32 %v4897, 1.442695
      %v4932 = vpow.pop %v4931
      %v4933 = vmul.f32 %v4898, 1.442695
      %v4934 = vpow.pop %v4933
      %v4935 = vmul.f32 %v4899, 1.442695
      %v4936 = vpow.pop %v4935
      %v4937 = vmul.f32 %v4900, 1.442695
      %v4938 = vpow.pop %v4937
      %v4939 = vmul.f32 %v4901, 1.442695
      %v4940 = vpow.pop %v4939
      %v4941 = vmul.f32 %v4902, 1.442695
      %v4942 = vpow.pop %v4941
      %v4943 = vmul.f32 %v4903, 1.442695
      %v4944 = vpow.pop %v4943
      %v4945 = vmul.f32 %v4904, 1.442695
      %v4946 = vpow.pop %v4945
      %v4947 = vmul.f32 %v4905, 1.442695
      %v4948 = vpow.pop %v4947
      %v4949 = vmul.f32 %v4906, 1.442695
      %v4950 = vpow.pop %v4949
      %v4951 = vmul.f32 %v4907, 1.442695
      %v4952 = vpow.pop %v4951
      %v4953 = vmul.f32 %v4908, 1.442695
      %v4954 = vpow.pop %v4953
      %v4955 = vmul.f32 %v4909, 1.442695
      %v4956 = vpow.pop %v4955
      %v4957 = vmul.f32 %v4910, 1.442695
      %v4958 = vpow.pop %v4957
      %v4959 = vmul.f32 %v4911, 1.442695
      %v4960 = vpow.pop %v4959
      %v4961 = vmul.f32 %v4912, 1.442695
      %v4962 = vpow.pop %v4961
      %v4963 = vmul.f32 %v4913, 1.442695
      %v4964 = vpow.pop %v4963
      %v4965 = vmul.f32 %v4914, 1.442695
      %v4966 = vpow.pop %v4965
      %v4967 = vmul.f32 %v4915, 1.442695
      %v4968 = vpow.pop %v4967
      %v4969 = vmul.f32 %v4916, 1.442695
      %v4970 = vpow.pop %v4969
      %v4971 = vmul.f32 %v4917, 1.442695
      %v4972 = vpow.pop %v4971
      %v4973 = vmul.f32 %v4918, 1.442695
      %v4974 = vpow.pop %v4973
      %v4975 = vmul.f32 %v4919, 1.442695
      %v4976 = vpow.pop %v4975
      %v4977 = vmul.f32 %v4920, 1.442695
      %v4978 = vpow.pop %v4977
      %v4979 = vmul.f32 %v4921, 1.442695
      %v4980 = vpow.pop %v4979
      %v4981 = vmul.f32 %v4922, 1.442695
      %v4982 = vpow.pop %v4981
      %v4983 = vmul.f32 %v4923, 1.442695
      %v4984 = vpow.pop %v4983
      %v4985 = vmul.f32 %v4924, 1.442695
      %v4986 = vpow.pop %v4985
      %v4987 = vmul.f32 %v4925, 1.442695
      %v4988 = vpow.pop %v4987
      %v4989 = vmul.f32 %v4926, 1.442695
      %v4990 = vpow.pop %v4989
      %v4991 = vadd.f32 %v4928, 1.0
      %v4992 = vadd.f32 %v4930, 1.0
      %v4993 = vadd.f32 %v4932, 1.0
      %v4994 = vadd.f32 %v4934, 1.0
      %v4995 = vadd.f32 %v4936, 1.0
      %v4996 = vadd.f32 %v4938, 1.0
      %v4997 = vadd.f32 %v4940, 1.0
      %v4998 = vadd.f32 %v4942, 1.0
      %v4999 = vadd.f32 %v4944, 1.0
      %v5000 = vadd.f32 %v4946, 1.0
      %v5001 = vadd.f32 %v4948, 1.0
      %v5002 = vadd.f32 %v4950, 1.0
      %v5003 = vadd.f32 %v4952, 1.0
      %v5004 = vadd.f32 %v4954, 1.0
      %v5005 = vadd.f32 %v4956, 1.0
      %v5006 = vadd.f32 %v4958, 1.0
      %v5007 = vadd.f32 %v4960, 1.0
      %v5008 = vadd.f32 %v4962, 1.0
      %v5009 = vadd.f32 %v4964, 1.0
      %v5010 = vadd.f32 %v4966, 1.0
      %v5011 = vadd.f32 %v4968, 1.0
      %v5012 = vadd.f32 %v4970, 1.0
      %v5013 = vadd.f32 %v4972, 1.0
      %v5014 = vadd.f32 %v4974, 1.0
      %v5015 = vadd.f32 %v4976, 1.0
      %v5016 = vadd.f32 %v4978, 1.0
      %v5017 = vadd.f32 %v4980, 1.0
      %v5018 = vadd.f32 %v4982, 1.0
      %v5019 = vadd.f32 %v4984, 1.0
      %v5020 = vadd.f32 %v4986, 1.0
      %v5021 = vadd.f32 %v4988, 1.0
      %v5022 = vadd.f32 %v4990, 1.0
      %v5023 = vrcp.pop %v4991
      %v5024 = vmul.f32 %v4991, %v5023
      %v5025 = vsub.f32 1.0, %v5024
      %v5026 = vmul.f32 %v5023, %v5025
      %v5027 = vadd.f32 %v5023, %v5026
      %vm5028 = vweird.f32 %v4991
      %vm5029 = vweird.f32 %v5023
      %vm5030 = vmor %vm5028, %vm5029
      %v5031 = vsel %vm5030, %v5023, %v5027
      %v5032 = vand.u32 2147483647, %v4991
      %vm5033 = vcmp.eq.f32.partialorder %v5032, 8.507059e+37
      %v5034 = vand.u32 %v4991, 2147483648
      %v5035 = vor.u32 1.1754944e-38, %v5034
      %v5036 = vsel %vm5033, %v5035, %v5031
      %v5037 = vmul.f32 1.0, %v5036
      %v5038 = vrcp.pop %v4992
      %v5039 = vmul.f32 %v4992, %v5038
      %v5040 = vsub.f32 1.0, %v5039
      %v5041 = vmul.f32 %v5038, %v5040
      %v5042 = vadd.f32 %v5038, %v5041
      %vm5043 = vweird.f32 %v4992
      %vm5044 = vweird.f32 %v5038
      %vm5045 = vmor %vm5043, %vm5044
      %v5046 = vsel %vm5045, %v5038, %v5042
      %v5047 = vand.u32 2147483647, %v4992
      %vm5048 = vcmp.eq.f32.partialorder %v5047, 8.507059e+37
      %v5049 = vand.u32 %v4992, 2147483648
      %v5050 = vor.u32 1.1754944e-38, %v5049
      %v5051 = vsel %vm5048, %v5050, %v5046
      %v5052 = vmul.f32 1.0, %v5051
      %v5053 = vrcp.pop %v4993
      %v5054 = vmul.f32 %v4993, %v5053
      %v5055 = vsub.f32 1.0, %v5054
      %v5056 = vmul.f32 %v5053, %v5055
      %v5057 = vadd.f32 %v5053, %v5056
      %vm5058 = vweird.f32 %v4993
      %vm5059 = vweird.f32 %v5053
      %vm5060 = vmor %vm5058, %vm5059
      %v5061 = vsel %vm5060, %v5053, %v5057
      %v5062 = vand.u32 2147483647, %v4993
      %vm5063 = vcmp.eq.f32.partialorder %v5062, 8.507059e+37
      %v5064 = vand.u32 %v4993, 2147483648
      %v5065 = vor.u32 1.1754944e-38, %v5064
      %v5066 = vsel %vm5063, %v5065, %v5061
      %v5067 = vmul.f32 1.0, %v5066
      %v5068 = vrcp.pop %v4994
      %v5069 = vmul.f32 %v4994, %v5068
      %v5070 = vsub.f32 1.0, %v5069
      %v5071 = vmul.f32 %v5068, %v5070
      %v5072 = vadd.f32 %v5068, %v5071
      %vm5073 = vweird.f32 %v4994
      %vm5074 = vweird.f32 %v5068
      %vm5075 = vmor %vm5073, %vm5074
      %v5076 = vsel %vm5075, %v5068, %v5072
      %v5077 = vand.u32 2147483647, %v4994
      %vm5078 = vcmp.eq.f32.partialorder %v5077, 8.507059e+37
      %v5079 = vand.u32 %v4994, 2147483648
      %v5080 = vor.u32 1.1754944e-38, %v5079
      %v5081 = vsel %vm5078, %v5080, %v5076
      %v5082 = vmul.f32 1.0, %v5081
      %v5083 = vrcp.pop %v4995
      %v5084 = vmul.f32 %v4995, %v5083
      %v5085 = vsub.f32 1.0, %v5084
      %v5086 = vmul.f32 %v5083, %v5085
      %v5087 = vadd.f32 %v5083, %v5086
      %vm5088 = vweird.f32 %v4995
      %vm5089 = vweird.f32 %v5083
      %vm5090 = vmor %vm5088, %vm5089
      %v5091 = vsel %vm5090, %v5083, %v5087
      %v5092 = vand.u32 2147483647, %v4995
      %vm5093 = vcmp.eq.f32.partialorder %v5092, 8.507059e+37
      %v5094 = vand.u32 %v4995, 2147483648
      %v5095 = vor.u32 1.1754944e-38, %v5094
      %v5096 = vsel %vm5093, %v5095, %v5091
      %v5097 = vmul.f32 1.0, %v5096
      %v5098 = vrcp.pop %v4996
      %v5099 = vmul.f32 %v4996, %v5098
      %v5100 = vsub.f32 1.0, %v5099
      %v5101 = vmul.f32 %v5098, %v5100
      %v5102 = vadd.f32 %v5098, %v5101
      %vm5103 = vweird.f32 %v4996
      %vm5104 = vweird.f32 %v5098
      %vm5105 = vmor %vm5103, %vm5104
      %v5106 = vsel %vm5105, %v5098, %v5102
      %v5107 = vand.u32 2147483647, %v4996
      %vm5108 = vcmp.eq.f32.partialorder %v5107, 8.507059e+37
      %v5109 = vand.u32 %v4996, 2147483648
      %v5110 = vor.u32 1.1754944e-38, %v5109
      %v5111 = vsel %vm5108, %v5110, %v5106
      %v5112 = vmul.f32 1.0, %v5111
      %v5113 = vrcp.pop %v4997
      %v5114 = vmul.f32 %v4997, %v5113
      %v5115 = vsub.f32 1.0, %v5114
      %v5116 = vmul.f32 %v5113, %v5115
      %v5117 = vadd.f32 %v5113, %v5116
      %vm5118 = vweird.f32 %v4997
      %vm5119 = vweird.f32 %v5113
      %vm5120 = vmor %vm5118, %vm5119
      %v5121 = vsel %vm5120, %v5113, %v5117
      %v5122 = vand.u32 2147483647, %v4997
      %vm5123 = vcmp.eq.f32.partialorder %v5122, 8.507059e+37
      %v5124 = vand.u32 %v4997, 2147483648
      %v5125 = vor.u32 1.1754944e-38, %v5124
      %v5126 = vsel %vm5123, %v5125, %v5121
      %v5127 = vmul.f32 1.0, %v5126
      %v5128 = vrcp.pop %v4998
      %v5129 = vmul.f32 %v4998, %v5128
      %v5130 = vsub.f32 1.0, %v5129
      %v5131 = vmul.f32 %v5128, %v5130
      %v5132 = vadd.f32 %v5128, %v5131
      %vm5133 = vweird.f32 %v4998
      %vm5134 = vweird.f32 %v5128
      %vm5135 = vmor %vm5133, %vm5134
      %v5136 = vsel %vm5135, %v5128, %v5132
      %v5137 = vand.u32 2147483647, %v4998
      %vm5138 = vcmp.eq.f32.partialorder %v5137, 8.507059e+37
      %v5139 = vand.u32 %v4998, 2147483648
      %v5140 = vor.u32 1.1754944e-38, %v5139
      %v5141 = vsel %vm5138, %v5140, %v5136
      %v5142 = vmul.f32 1.0, %v5141
      %v5143 = vrcp.pop %v4999
      %v5144 = vmul.f32 %v4999, %v5143
      %v5145 = vsub.f32 1.0, %v5144
      %v5146 = vmul.f32 %v5143, %v5145
      %v5147 = vadd.f32 %v5143, %v5146
      %vm5148 = vweird.f32 %v4999
      %vm5149 = vweird.f32 %v5143
      %vm5150 = vmor %vm5148, %vm5149
      %v5151 = vsel %vm5150, %v5143, %v5147
      %v5152 = vand.u32 2147483647, %v4999
      %vm5153 = vcmp.eq.f32.partialorder %v5152, 8.507059e+37
      %v5154 = vand.u32 %v4999, 2147483648
      %v5155 = vor.u32 1.1754944e-38, %v5154
      %v5156 = vsel %vm5153, %v5155, %v5151
      %v5157 = vmul.f32 1.0, %v5156
      %v5158 = vrcp.pop %v5000
      %v5159 = vmul.f32 %v5000, %v5158
      %v5160 = vsub.f32 1.0, %v5159
      %v5161 = vmul.f32 %v5158, %v5160
      %v5162 = vadd.f32 %v5158, %v5161
      %vm5163 = vweird.f32 %v5000
      %vm5164 = vweird.f32 %v5158
      %vm5165 = vmor %vm5163, %vm5164
      %v5166 = vsel %vm5165, %v5158, %v5162
      %v5167 = vand.u32 2147483647, %v5000
      %vm5168 = vcmp.eq.f32.partialorder %v5167, 8.507059e+37
      %v5169 = vand.u32 %v5000, 2147483648
      %v5170 = vor.u32 1.1754944e-38, %v5169
      %v5171 = vsel %vm5168, %v5170, %v5166
      %v5172 = vmul.f32 1.0, %v5171
      %v5173 = vrcp.pop %v5001
      %v5174 = vmul.f32 %v5001, %v5173
      %v5175 = vsub.f32 1.0, %v5174
      %v5176 = vmul.f32 %v5173, %v5175
      %v5177 = vadd.f32 %v5173, %v5176
      %vm5178 = vweird.f32 %v5001
      %vm5179 = vweird.f32 %v5173
      %vm5180 = vmor %vm5178, %vm5179
      %v5181 = vsel %vm5180, %v5173, %v5177
      %v5182 = vand.u32 2147483647, %v5001
      %vm5183 = vcmp.eq.f32.partialorder %v5182, 8.507059e+37
      %v5184 = vand.u32 %v5001, 2147483648
      %v5185 = vor.u32 1.1754944e-38, %v5184
      %v5186 = vsel %vm5183, %v5185, %v5181
      %v5187 = vmul.f32 1.0, %v5186
      %v5188 = vrcp.pop %v5002
      %v5189 = vmul.f32 %v5002, %v5188
      %v5190 = vsub.f32 1.0, %v5189
      %v5191 = vmul.f32 %v5188, %v5190
      %v5192 = vadd.f32 %v5188, %v5191
      %vm5193 = vweird.f32 %v5002
      %vm5194 = vweird.f32 %v5188
      %vm5195 = vmor %vm5193, %vm5194
      %v5196 = vsel %vm5195, %v5188, %v5192
      %v5197 = vand.u32 2147483647, %v5002
      %vm5198 = vcmp.eq.f32.partialorder %v5197, 8.507059e+37
      %v5199 = vand.u32 %v5002, 2147483648
      %v5200 = vor.u32 1.1754944e-38, %v5199
      %v5201 = vsel %vm5198, %v5200, %v5196
      %v5202 = vmul.f32 1.0, %v5201
      %v5203 = vrcp.pop %v5003
      %v5204 = vmul.f32 %v5003, %v5203
      %v5205 = vsub.f32 1.0, %v5204
      %v5206 = vmul.f32 %v5203, %v5205
      %v5207 = vadd.f32 %v5203, %v5206
      %vm5208 = vweird.f32 %v5003
      %vm5209 = vweird.f32 %v5203
      %vm5210 = vmor %vm5208, %vm5209
      %v5211 = vsel %vm5210, %v5203, %v5207
      %v5212 = vand.u32 2147483647, %v5003
      %vm5213 = vcmp.eq.f32.partialorder %v5212, 8.507059e+37
      %v5214 = vand.u32 %v5003, 2147483648
      %v5215 = vor.u32 1.1754944e-38, %v5214
      %v5216 = vsel %vm5213, %v5215, %v5211
      %v5217 = vmul.f32 1.0, %v5216
      %v5218 = vrcp.pop %v5004
      %v5219 = vmul.f32 %v5004, %v5218
      %v5220 = vsub.f32 1.0, %v5219
      %v5221 = vmul.f32 %v5218, %v5220
      %v5222 = vadd.f32 %v5218, %v5221
      %vm5223 = vweird.f32 %v5004
      %vm5224 = vweird.f32 %v5218
      %vm5225 = vmor %vm5223, %vm5224
      %v5226 = vsel %vm5225, %v5218, %v5222
      %v5227 = vand.u32 2147483647, %v5004
      %vm5228 = vcmp.eq.f32.partialorder %v5227, 8.507059e+37
      %v5229 = vand.u32 %v5004, 2147483648
      %v5230 = vor.u32 1.1754944e-38, %v5229
      %v5231 = vsel %vm5228, %v5230, %v5226
      %v5232 = vmul.f32 1.0, %v5231
      %v5233 = vrcp.pop %v5005
      %v5234 = vmul.f32 %v5005, %v5233
      %v5235 = vsub.f32 1.0, %v5234
      %v5236 = vmul.f32 %v5233, %v5235
      %v5237 = vadd.f32 %v5233, %v5236
      %vm5238 = vweird.f32 %v5005
      %vm5239 = vweird.f32 %v5233
      %vm5240 = vmor %vm5238, %vm5239
      %v5241 = vsel %vm5240, %v5233, %v5237
      %v5242 = vand.u32 2147483647, %v5005
      %vm5243 = vcmp.eq.f32.partialorder %v5242, 8.507059e+37
      %v5244 = vand.u32 %v5005, 2147483648
      %v5245 = vor.u32 1.1754944e-38, %v5244
      %v5246 = vsel %vm5243, %v5245, %v5241
      %v5247 = vmul.f32 1.0, %v5246
      %v5248 = vrcp.pop %v5006
      %v5249 = vmul.f32 %v5006, %v5248
      %v5250 = vsub.f32 1.0, %v5249
      %v5251 = vmul.f32 %v5248, %v5250
      %v5252 = vadd.f32 %v5248, %v5251
      %vm5253 = vweird.f32 %v5006
      %vm5254 = vweird.f32 %v5248
      %vm5255 = vmor %vm5253, %vm5254
      %v5256 = vsel %vm5255, %v5248, %v5252
      %v5257 = vand.u32 2147483647, %v5006
      %vm5258 = vcmp.eq.f32.partialorder %v5257, 8.507059e+37
      %v5259 = vand.u32 %v5006, 2147483648
      %v5260 = vor.u32 1.1754944e-38, %v5259
      %v5261 = vsel %vm5258, %v5260, %v5256
      %v5262 = vmul.f32 1.0, %v5261
      %v5263 = vrcp.pop %v5007
      %v5264 = vmul.f32 %v5007, %v5263
      %v5265 = vsub.f32 1.0, %v5264
      %v5266 = vmul.f32 %v5263, %v5265
      %v5267 = vadd.f32 %v5263, %v5266
      %vm5268 = vweird.f32 %v5007
      %vm5269 = vweird.f32 %v5263
      %vm5270 = vmor %vm5268, %vm5269
      %v5271 = vsel %vm5270, %v5263, %v5267
      %v5272 = vand.u32 2147483647, %v5007
      %vm5273 = vcmp.eq.f32.partialorder %v5272, 8.507059e+37
      %v5274 = vand.u32 %v5007, 2147483648
      %v5275 = vor.u32 1.1754944e-38, %v5274
      %v5276 = vsel %vm5273, %v5275, %v5271
      %v5277 = vmul.f32 1.0, %v5276
      %v5278 = vrcp.pop %v5008
      %v5279 = vmul.f32 %v5008, %v5278
      %v5280 = vsub.f32 1.0, %v5279
      %v5281 = vmul.f32 %v5278, %v5280
      %v5282 = vadd.f32 %v5278, %v5281
      %vm5283 = vweird.f32 %v5008
      %vm5284 = vweird.f32 %v5278
      %vm5285 = vmor %vm5283, %vm5284
      %v5286 = vsel %vm5285, %v5278, %v5282
      %v5287 = vand.u32 2147483647, %v5008
      %vm5288 = vcmp.eq.f32.partialorder %v5287, 8.507059e+37
      %v5289 = vand.u32 %v5008, 2147483648
      %v5290 = vor.u32 1.1754944e-38, %v5289
      %v5291 = vsel %vm5288, %v5290, %v5286
      %v5292 = vmul.f32 1.0, %v5291
      %v5293 = vrcp.pop %v5009
      %v5294 = vmul.f32 %v5009, %v5293
      %v5295 = vsub.f32 1.0, %v5294
      %v5296 = vmul.f32 %v5293, %v5295
      %v5297 = vadd.f32 %v5293, %v5296
      %vm5298 = vweird.f32 %v5009
      %vm5299 = vweird.f32 %v5293
      %vm5300 = vmor %vm5298, %vm5299
      %v5301 = vsel %vm5300, %v5293, %v5297
      %v5302 = vand.u32 2147483647, %v5009
      %vm5303 = vcmp.eq.f32.partialorder %v5302, 8.507059e+37
      %v5304 = vand.u32 %v5009, 2147483648
      %v5305 = vor.u32 1.1754944e-38, %v5304
      %v5306 = vsel %vm5303, %v5305, %v5301
      %v5307 = vmul.f32 1.0, %v5306
      %v5308 = vrcp.pop %v5010
      %v5309 = vmul.f32 %v5010, %v5308
      %v5310 = vsub.f32 1.0, %v5309
      %v5311 = vmul.f32 %v5308, %v5310
      %v5312 = vadd.f32 %v5308, %v5311
      %vm5313 = vweird.f32 %v5010
      %vm5314 = vweird.f32 %v5308
      %vm5315 = vmor %vm5313, %vm5314
      %v5316 = vsel %vm5315, %v5308, %v5312
      %v5317 = vand.u32 2147483647, %v5010
      %vm5318 = vcmp.eq.f32.partialorder %v5317, 8.507059e+37
      %v5319 = vand.u32 %v5010, 2147483648
      %v5320 = vor.u32 1.1754944e-38, %v5319
      %v5321 = vsel %vm5318, %v5320, %v5316
      %v5322 = vmul.f32 1.0, %v5321
      %v5323 = vrcp.pop %v5011
      %v5324 = vmul.f32 %v5011, %v5323
      %v5325 = vsub.f32 1.0, %v5324
      %v5326 = vmul.f32 %v5323, %v5325
      %v5327 = vadd.f32 %v5323, %v5326
      %vm5328 = vweird.f32 %v5011
      %vm5329 = vweird.f32 %v5323
      %vm5330 = vmor %vm5328, %vm5329
      %v5331 = vsel %vm5330, %v5323, %v5327
      %v5332 = vand.u32 2147483647, %v5011
      %vm5333 = vcmp.eq.f32.partialorder %v5332, 8.507059e+37
      %v5334 = vand.u32 %v5011, 2147483648
      %v5335 = vor.u32 1.1754944e-38, %v5334
      %v5336 = vsel %vm5333, %v5335, %v5331
      %v5337 = vmul.f32 1.0, %v5336
      %v5338 = vrcp.pop %v5012
      %v5339 = vmul.f32 %v5012, %v5338
      %v5340 = vsub.f32 1.0, %v5339
      %v5341 = vmul.f32 %v5338, %v5340
      %v5342 = vadd.f32 %v5338, %v5341
      %vm5343 = vweird.f32 %v5012
      %vm5344 = vweird.f32 %v5338
      %vm5345 = vmor %vm5343, %vm5344
      %v5346 = vsel %vm5345, %v5338, %v5342
      %v5347 = vand.u32 2147483647, %v5012
      %vm5348 = vcmp.eq.f32.partialorder %v5347, 8.507059e+37
      %v5349 = vand.u32 %v5012, 2147483648
      %v5350 = vor.u32 1.1754944e-38, %v5349
      %v5351 = vsel %vm5348, %v5350, %v5346
      %v5352 = vmul.f32 1.0, %v5351
      %v5353 = vrcp.pop %v5013
      %v5354 = vmul.f32 %v5013, %v5353
      %v5355 = vsub.f32 1.0, %v5354
      %v5356 = vmul.f32 %v5353, %v5355
      %v5357 = vadd.f32 %v5353, %v5356
      %vm5358 = vweird.f32 %v5013
      %vm5359 = vweird.f32 %v5353
      %vm5360 = vmor %vm5358, %vm5359
      %v5361 = vsel %vm5360, %v5353, %v5357
      %v5362 = vand.u32 2147483647, %v5013
      %vm5363 = vcmp.eq.f32.partialorder %v5362, 8.507059e+37
      %v5364 = vand.u32 %v5013, 2147483648
      %v5365 = vor.u32 1.1754944e-38, %v5364
      %v5366 = vsel %vm5363, %v5365, %v5361
      %v5367 = vmul.f32 1.0, %v5366
      %v5368 = vrcp.pop %v5014
      %v5369 = vmul.f32 %v5014, %v5368
      %v5370 = vsub.f32 1.0, %v5369
      %v5371 = vmul.f32 %v5368, %v5370
      %v5372 = vadd.f32 %v5368, %v5371
      %vm5373 = vweird.f32 %v5014
      %vm5374 = vweird.f32 %v5368
      %vm5375 = vmor %vm5373, %vm5374
      %v5376 = vsel %vm5375, %v5368, %v5372
      %v5377 = vand.u32 2147483647, %v5014
      %vm5378 = vcmp.eq.f32.partialorder %v5377, 8.507059e+37
      %v5379 = vand.u32 %v5014, 2147483648
      %v5380 = vor.u32 1.1754944e-38, %v5379
      %v5381 = vsel %vm5378, %v5380, %v5376
      %v5382 = vmul.f32 1.0, %v5381
      %v5383 = vrcp.pop %v5015
      %v5384 = vmul.f32 %v5015, %v5383
      %v5385 = vsub.f32 1.0, %v5384
      %v5386 = vmul.f32 %v5383, %v5385
      %v5387 = vadd.f32 %v5383, %v5386
      %vm5388 = vweird.f32 %v5015
      %vm5389 = vweird.f32 %v5383
      %vm5390 = vmor %vm5388, %vm5389
      %v5391 = vsel %vm5390, %v5383, %v5387
      %v5392 = vand.u32 2147483647, %v5015
      %vm5393 = vcmp.eq.f32.partialorder %v5392, 8.507059e+37
      %v5394 = vand.u32 %v5015, 2147483648
      %v5395 = vor.u32 1.1754944e-38, %v5394
      %v5396 = vsel %vm5393, %v5395, %v5391
      %v5397 = vmul.f32 1.0, %v5396
      %v5398 = vrcp.pop %v5016
      %v5399 = vmul.f32 %v5016, %v5398
      %v5400 = vsub.f32 1.0, %v5399
      %v5401 = vmul.f32 %v5398, %v5400
      %v5402 = vadd.f32 %v5398, %v5401
      %vm5403 = vweird.f32 %v5016
      %vm5404 = vweird.f32 %v5398
      %vm5405 = vmor %vm5403, %vm5404
      %v5406 = vsel %vm5405, %v5398, %v5402
      %v5407 = vand.u32 2147483647, %v5016
      %vm5408 = vcmp.eq.f32.partialorder %v5407, 8.507059e+37
      %v5409 = vand.u32 %v5016, 2147483648
      %v5410 = vor.u32 1.1754944e-38, %v5409
      %v5411 = vsel %vm5408, %v5410, %v5406
      %v5412 = vmul.f32 1.0, %v5411
      %v5413 = vrcp.pop %v5017
      %v5414 = vmul.f32 %v5017, %v5413
      %v5415 = vsub.f32 1.0, %v5414
      %v5416 = vmul.f32 %v5413, %v5415
      %v5417 = vadd.f32 %v5413, %v5416
      %vm5418 = vweird.f32 %v5017
      %vm5419 = vweird.f32 %v5413
      %vm5420 = vmor %vm5418, %vm5419
      %v5421 = vsel %vm5420, %v5413, %v5417
      %v5422 = vand.u32 2147483647, %v5017
      %vm5423 = vcmp.eq.f32.partialorder %v5422, 8.507059e+37
      %v5424 = vand.u32 %v5017, 2147483648
      %v5425 = vor.u32 1.1754944e-38, %v5424
      %v5426 = vsel %vm5423, %v5425, %v5421
      %v5427 = vmul.f32 1.0, %v5426
      %v5428 = vrcp.pop %v5018
      %v5429 = vmul.f32 %v5018, %v5428
      %v5430 = vsub.f32 1.0, %v5429
      %v5431 = vmul.f32 %v5428, %v5430
      %v5432 = vadd.f32 %v5428, %v5431
      %vm5433 = vweird.f32 %v5018
      %vm5434 = vweird.f32 %v5428
      %vm5435 = vmor %vm5433, %vm5434
      %v5436 = vsel %vm5435, %v5428, %v5432
      %v5437 = vand.u32 2147483647, %v5018
      %vm5438 = vcmp.eq.f32.partialorder %v5437, 8.507059e+37
      %v5439 = vand.u32 %v5018, 2147483648
      %v5440 = vor.u32 1.1754944e-38, %v5439
      %v5441 = vsel %vm5438, %v5440, %v5436
      %v5442 = vmul.f32 1.0, %v5441
      %v5443 = vrcp.pop %v5019
      %v5444 = vmul.f32 %v5019, %v5443
      %v5445 = vsub.f32 1.0, %v5444
      %v5446 = vmul.f32 %v5443, %v5445
      %v5447 = vadd.f32 %v5443, %v5446
      %vm5448 = vweird.f32 %v5019
      %vm5449 = vweird.f32 %v5443
      %vm5450 = vmor %vm5448, %vm5449
      %v5451 = vsel %vm5450, %v5443, %v5447
      %v5452 = vand.u32 2147483647, %v5019
      %vm5453 = vcmp.eq.f32.partialorder %v5452, 8.507059e+37
      %v5454 = vand.u32 %v5019, 2147483648
      %v5455 = vor.u32 1.1754944e-38, %v5454
      %v5456 = vsel %vm5453, %v5455, %v5451
      %v5457 = vmul.f32 1.0, %v5456
      %v5458 = vrcp.pop %v5020
      %v5459 = vmul.f32 %v5020, %v5458
      %v5460 = vsub.f32 1.0, %v5459
      %v5461 = vmul.f32 %v5458, %v5460
      %v5462 = vadd.f32 %v5458, %v5461
      %vm5463 = vweird.f32 %v5020
      %vm5464 = vweird.f32 %v5458
      %vm5465 = vmor %vm5463, %vm5464
      %v5466 = vsel %vm5465, %v5458, %v5462
      %v5467 = vand.u32 2147483647, %v5020
      %vm5468 = vcmp.eq.f32.partialorder %v5467, 8.507059e+37
      %v5469 = vand.u32 %v5020, 2147483648
      %v5470 = vor.u32 1.1754944e-38, %v5469
      %v5471 = vsel %vm5468, %v5470, %v5466
      %v5472 = vmul.f32 1.0, %v5471
      %v5473 = vrcp.pop %v5021
      %v5474 = vmul.f32 %v5021, %v5473
      %v5475 = vsub.f32 1.0, %v5474
      %v5476 = vmul.f32 %v5473, %v5475
      %v5477 = vadd.f32 %v5473, %v5476
      %vm5478 = vweird.f32 %v5021
      %vm5479 = vweird.f32 %v5473
      %vm5480 = vmor %vm5478, %vm5479
      %v5481 = vsel %vm5480, %v5473, %v5477
      %v5482 = vand.u32 2147483647, %v5021
      %vm5483 = vcmp.eq.f32.partialorder %v5482, 8.507059e+37
      %v5484 = vand.u32 %v5021, 2147483648
      %v5485 = vor.u32 1.1754944e-38, %v5484
      %v5486 = vsel %vm5483, %v5485, %v5481
      %v5487 = vmul.f32 1.0, %v5486
      %v5488 = vrcp.pop %v5022
      %v5489 = vmul.f32 %v5022, %v5488
      %v5490 = vsub.f32 1.0, %v5489
      %v5491 = vmul.f32 %v5488, %v5490
      %v5492 = vadd.f32 %v5488, %v5491
      %vm5493 = vweird.f32 %v5022
      %vm5494 = vweird.f32 %v5488
      %vm5495 = vmor %vm5493, %vm5494
      %v5496 = vsel %vm5495, %v5488, %v5492
      %v5497 = vand.u32 2147483647, %v5022
      %vm5498 = vcmp.eq.f32.partialorder %v5497, 8.507059e+37
      %v5499 = vand.u32 %v5022, 2147483648
      %v5500 = vor.u32 1.1754944e-38, %v5499
      %v5501 = vsel %vm5498, %v5500, %v5496
      %v5502 = vmul.f32 1.0, %v5501
      %5504 = vset.pattern.permute.xlu0 32
      %5505 = vperm.xlu0 %5504, %v5037
      %v5506 = vpop.permute.xlu0 %5505
      %5509 = vset.pattern.permute.xlu0 32
      %5510 = vperm.xlu0 %5509, %v5052
      %v5511 = vpop.permute.xlu0 %5510
      %5514 = vset.pattern.permute.xlu0 32
      %5515 = vperm.xlu0 %5514, %v5067
      %v5516 = vpop.permute.xlu0 %5515
      %5519 = vset.pattern.permute.xlu0 32
      %5520 = vperm.xlu0 %5519, %v5082
      %v5521 = vpop.permute.xlu0 %5520
      %5524 = vset.pattern.permute.xlu0 32
      %5525 = vperm.xlu0 %5524, %v5097
      %v5526 = vpop.permute.xlu0 %5525
      %5529 = vset.pattern.permute.xlu0 32
      %5530 = vperm.xlu0 %5529, %v5112
      %v5531 = vpop.permute.xlu0 %5530
      %5534 = vset.pattern.permute.xlu0 32
      %5535 = vperm.xlu0 %5534, %v5127
      %v5536 = vpop.permute.xlu0 %5535
      %5539 = vset.pattern.permute.xlu0 32
      %5540 = vperm.xlu0 %5539, %v5142
      %v5541 = vpop.permute.xlu0 %5540
      %5544 = vset.pattern.permute.xlu0 32
      %5545 = vperm.xlu0 %5544, %v5157
      %v5546 = vpop.permute.xlu0 %5545
      %5549 = vset.pattern.permute.xlu0 32
      %5550 = vperm.xlu0 %5549, %v5172
      %v5551 = vpop.permute.xlu0 %5550
      %5554 = vset.pattern.permute.xlu0 32
      %5555 = vperm.xlu0 %5554, %v5187
      %v5556 = vpop.permute.xlu0 %5555
      %5559 = vset.pattern.permute.xlu0 32
      %5560 = vperm.xlu0 %5559, %v5202
      %v5561 = vpop.permute.xlu0 %5560
      %5564 = vset.pattern.permute.xlu0 32
      %5565 = vperm.xlu0 %5564, %v5217
      %v5566 = vpop.permute.xlu0 %5565
      %5569 = vset.pattern.permute.xlu0 32
      %5570 = vperm.xlu0 %5569, %v5232
      %v5571 = vpop.permute.xlu0 %5570
      %5574 = vset.pattern.permute.xlu0 32
      %5575 = vperm.xlu0 %5574, %v5247
      %v5576 = vpop.permute.xlu0 %5575
      %5579 = vset.pattern.permute.xlu0 32
      %5580 = vperm.xlu0 %5579, %v5262
      %v5581 = vpop.permute.xlu0 %5580
      %5584 = vset.pattern.permute.xlu0 32
      %5585 = vperm.xlu0 %5584, %v5277
      %v5586 = vpop.permute.xlu0 %5585
      %5589 = vset.pattern.permute.xlu0 32
      %5590 = vperm.xlu0 %5589, %v5292
      %v5591 = vpop.permute.xlu0 %5590
      %5594 = vset.pattern.permute.xlu0 32
      %5595 = vperm.xlu0 %5594, %v5307
      %v5596 = vpop.permute.xlu0 %5595
      %5599 = vset.pattern.permute.xlu0 32
      %5600 = vperm.xlu0 %5599, %v5322
      %v5601 = vpop.permute.xlu0 %5600
      %5604 = vset.pattern.permute.xlu0 32
      %5605 = vperm.xlu0 %5604, %v5337
      %v5606 = vpop.permute.xlu0 %5605
      %5609 = vset.pattern.permute.xlu0 32
      %5610 = vperm.xlu0 %5609, %v5352
      %v5611 = vpop.permute.xlu0 %5610
      %5614 = vset.pattern.permute.xlu0 32
      %5615 = vperm.xlu0 %5614, %v5367
      %v5616 = vpop.permute.xlu0 %5615
      %5619 = vset.pattern.permute.xlu0 32
      %5620 = vperm.xlu0 %5619, %v5382
      %v5621 = vpop.permute.xlu0 %5620
      %5624 = vset.pattern.permute.xlu0 32
      %5625 = vperm.xlu0 %5624, %v5397
      %v5626 = vpop.permute.xlu0 %5625
      %5629 = vset.pattern.permute.xlu0 32
      %5630 = vperm.xlu0 %5629, %v5412
      %v5631 = vpop.permute.xlu0 %5630
      %5634 = vset.pattern.permute.xlu0 32
      %5635 = vperm.xlu0 %5634, %v5427
      %v5636 = vpop.permute.xlu0 %5635
      %5639 = vset.pattern.permute.xlu0 32
      %5640 = vperm.xlu0 %5639, %v5442
      %v5641 = vpop.permute.xlu0 %5640
      %5644 = vset.pattern.permute.xlu0 32
      %5645 = vperm.xlu0 %5644, %v5457
      %v5646 = vpop.permute.xlu0 %5645
      %5649 = vset.pattern.permute.xlu0 32
      %5650 = vperm.xlu0 %5649, %v5472
      %v5651 = vpop.permute.xlu0 %5650
      %5654 = vset.pattern.permute.xlu0 32
      %5655 = vperm.xlu0 %5654, %v5487
      %v5656 = vpop.permute.xlu0 %5655
      %5659 = vset.pattern.permute.xlu0 32
      %5660 = vperm.xlu0 %5659, %v5502
      %v5661 = vpop.permute.xlu0 %5660
      %v5663 = vmul.f32 %v4816, %v5506
      %v5664 = vmul.f32 %v4818, %v5511
      %v5665 = vmul.f32 %v4821, %v5516
      %v5666 = vmul.f32 %v4823, %v5521
      %v5667 = vmul.f32 %v4826, %v5526
      %v5668 = vmul.f32 %v4828, %v5531
      %v5669 = vmul.f32 %v4831, %v5536
      %v5670 = vmul.f32 %v4833, %v5541
      %v5671 = vmul.f32 %v4836, %v5546
      %v5672 = vmul.f32 %v4838, %v5551
      %v5673 = vmul.f32 %v4841, %v5556
      %v5674 = vmul.f32 %v4843, %v5561
      %v5675 = vmul.f32 %v4846, %v5566
      %v5676 = vmul.f32 %v4848, %v5571
      %v5677 = vmul.f32 %v4851, %v5576
      %v5678 = vmul.f32 %v4853, %v5581
      %v5679 = vmul.f32 %v4856, %v5586
      %v5680 = vmul.f32 %v4858, %v5591
      %v5681 = vmul.f32 %v4861, %v5596
      %v5682 = vmul.f32 %v4863, %v5601
      %v5683 = vmul.f32 %v4866, %v5606
      %v5684 = vmul.f32 %v4868, %v5611
      %v5685 = vmul.f32 %v4871, %v5616
      %v5686 = vmul.f32 %v4873, %v5621
      %v5687 = vmul.f32 %v4876, %v5626
      %v5688 = vmul.f32 %v4878, %v5631
      %v5689 = vmul.f32 %v4881, %v5636
      %v5690 = vmul.f32 %v4883, %v5641
      %v5691 = vmul.f32 %v4886, %v5646
      %v5692 = vmul.f32 %v4888, %v5651
      %v5693 = vmul.f32 %v4891, %v5656
      %v5694 = vmul.f32 %v4893, %v5661
      %v5695 = vmax.f32 %v5663, 0.0
      %v5696 = vmax.f32 %v5664, 0.0
      %v5697 = vmax.f32 %v5665, 0.0
      %v5698 = vmax.f32 %v5666, 0.0
      %v5699 = vmax.f32 %v5667, 0.0
      %v5700 = vmax.f32 %v5668, 0.0
      %v5701 = vmax.f32 %v5669, 0.0
      %v5702 = vmax.f32 %v5670, 0.0
      %v5703 = vmax.f32 %v5671, 0.0
      %v5704 = vmax.f32 %v5672, 0.0
      %v5705 = vmax.f32 %v5673, 0.0
      %v5706 = vmax.f32 %v5674, 0.0
      %v5707 = vmax.f32 %v5675, 0.0
      %v5708 = vmax.f32 %v5676, 0.0
      %v5709 = vmax.f32 %v5677, 0.0
      %v5710 = vmax.f32 %v5678, 0.0
      %v5711 = vmax.f32 %v5679, 0.0
      %v5712 = vmax.f32 %v5680, 0.0
      %v5713 = vmax.f32 %v5681, 0.0
      %v5714 = vmax.f32 %v5682, 0.0
      %v5715 = vmax.f32 %v5683, 0.0
      %v5716 = vmax.f32 %v5684, 0.0
      %v5717 = vmax.f32 %v5685, 0.0
      %v5718 = vmax.f32 %v5686, 0.0
      %v5719 = vmax.f32 %v5687, 0.0
      %v5720 = vmax.f32 %v5688, 0.0
      %v5721 = vmax.f32 %v5689, 0.0
      %v5722 = vmax.f32 %v5690, 0.0
      %v5723 = vmax.f32 %v5691, 0.0
      %v5724 = vmax.f32 %v5692, 0.0
      %v5725 = vmax.f32 %v5693, 0.0
      %v5726 = vmax.f32 %v5694, 0.0
      %s5727 = scalar_lea.vmem [#allocation4], 24
      %5728 = vst.msk [vmem:[%s5727 + $0x1] sm:$0xff] %vm336, %v5695
      %5729 = vst.msk [vmem:[%s5727 + $0x9] sm:$0xff] %vm336, %v5696
      %5730 = vst.msk [vmem:[%s5727 + $0x19] sm:$0xff] %vm336, %v5697
      %5731 = vst.msk [vmem:[%s5727 + $0x21] sm:$0xff] %vm336, %v5698
      %5732 = vst.msk [vmem:[%s5727 + $0x31] sm:$0xff] %vm336, %v5699
      %5733 = vst.msk [vmem:[%s5727 + $0x39] sm:$0xff] %vm336, %v5700
      %5734 = vst.msk [vmem:[%s5727 + $0x49] sm:$0xff] %vm336, %v5701
      %5735 = vst.msk [vmem:[%s5727 + $0x51] sm:$0xff] %vm336, %v5702
      %5736 = vst.msk [vmem:[%s5727 + $0x61] sm:$0xff] %vm336, %v5703
      %5737 = vst.msk [vmem:[%s5727 + $0x69] sm:$0xff] %vm336, %v5704
      %5738 = vst.msk [vmem:[%s5727 + $0x79] sm:$0xff] %vm336, %v5705
      %5739 = vst.msk [vmem:[%s5727 + $0x81] sm:$0xff] %vm336, %v5706
      %5740 = vst.msk [vmem:[%s5727 + $0x91] sm:$0xff] %vm336, %v5707
      %5741 = vst.msk [vmem:[%s5727 + $0x99] sm:$0xff] %vm336, %v5708
      %5742 = vst.msk [vmem:[%s5727 + $0xa9] sm:$0xff] %vm336, %v5709
      %5743 = vst.msk [vmem:[%s5727 + $0xb1] sm:$0xff] %vm336, %v5710
      %5744 = vst.msk [vmem:[%s5727 + $0xc1] sm:$0xff] %vm336, %v5711
      %5745 = vst.msk [vmem:[%s5727 + $0xc9] sm:$0xff] %vm336, %v5712
      %5746 = vst.msk [vmem:[%s5727 + $0xd9] sm:$0xff] %vm336, %v5713
      %5747 = vst.msk [vmem:[%s5727 + $0xe1] sm:$0xff] %vm336, %v5714
      %5748 = vst.msk [vmem:[%s5727 + $0xf1] sm:$0xff] %vm336, %v5715
      %5749 = vst.msk [vmem:[%s5727 + $0xf9] sm:$0xff] %vm336, %v5716
      %5750 = vst.msk [vmem:[%s5727 + $0x109] sm:$0xff] %vm336, %v5717
      %5751 = vst.msk [vmem:[%s5727 + $0x111] sm:$0xff] %vm336, %v5718
      %5752 = vst.msk [vmem:[%s5727 + $0x121] sm:$0xff] %vm336, %v5719
      %5753 = vst.msk [vmem:[%s5727 + $0x129] sm:$0xff] %vm336, %v5720
      %5754 = vst.msk [vmem:[%s5727 + $0x139] sm:$0xff] %vm336, %v5721
      %5755 = vst.msk [vmem:[%s5727 + $0x141] sm:$0xff] %vm336, %v5722
      %5756 = vst.msk [vmem:[%s5727 + $0x151] sm:$0xff] %vm336, %v5723
      %5757 = vst.msk [vmem:[%s5727 + $0x159] sm:$0xff] %vm336, %v5724
      %5758 = vst.msk [vmem:[%s5727 + $0x169] sm:$0xff] %vm336, %v5725
      %5759 = vst.msk [vmem:[%s5727 + $0x171] sm:$0xff] %vm336, %v5726
      %v5760 = vld [vmem:[#allocation4] sm:$0xff]
      %v5761 = vld [vmem:[#allocation4 + $0x8] sm:$0xff]
      %v5762 = vld [vmem:[#allocation4 + $0x18] sm:$0xff]
      %v5763 = vld [vmem:[#allocation4 + $0x20] sm:$0xff]
      %v5764 = vld [vmem:[#allocation4 + $0x30] sm:$0xff]
      %v5765 = vld [vmem:[#allocation4 + $0x38] sm:$0xff]
      %v5766 = vld [vmem:[#allocation4 + $0x48] sm:$0xff]
      %v5767 = vld [vmem:[#allocation4 + $0x50] sm:$0xff]
      %v5768 = vld [vmem:[#allocation4 + $0x60] sm:$0xff]
      %v5769 = vld [vmem:[#allocation4 + $0x68] sm:$0xff]
      %v5770 = vld [vmem:[#allocation4 + $0x78] sm:$0xff]
      %v5771 = vld [vmem:[#allocation4 + $0x80] sm:$0xff]
      %v5772 = vld [vmem:[#allocation4 + $0x90] sm:$0xff]
      %v5773 = vld [vmem:[#allocation4 + $0x98] sm:$0xff]
      %v5774 = vld [vmem:[#allocation4 + $0xa8] sm:$0xff]
      %v5775 = vld [vmem:[#allocation4 + $0xb0] sm:$0xff]
      %v5776 = vld [vmem:[#allocation4 + $0xc0] sm:$0xff]
      %v5777 = vld [vmem:[#allocation4 + $0xc8] sm:$0xff]
      %v5778 = vld [vmem:[#allocation4 + $0xd8] sm:$0xff]
      %v5779 = vld [vmem:[#allocation4 + $0xe0] sm:$0xff]
      %v5780 = vld [vmem:[#allocation4 + $0xf0] sm:$0xff]
      %v5781 = vld [vmem:[#allocation4 + $0xf8] sm:$0xff]
      %v5782 = vld [vmem:[#allocation4 + $0x108] sm:$0xff]
      %v5783 = vld [vmem:[#allocation4 + $0x110] sm:$0xff]
      %v5784 = vld [vmem:[#allocation4 + $0x120] sm:$0xff]
      %v5785 = vld [vmem:[#allocation4 + $0x128] sm:$0xff]
      %v5786 = vld [vmem:[#allocation4 + $0x138] sm:$0xff]
      %v5787 = vld [vmem:[#allocation4 + $0x140] sm:$0xff]
      %v5788 = vld [vmem:[#allocation4 + $0x150] sm:$0xff]
      %v5789 = vld [vmem:[#allocation4 + $0x158] sm:$0xff]
      %v5790 = vld [vmem:[#allocation4 + $0x168] sm:$0xff]
      %v5791 = vld [vmem:[#allocation4 + $0x170] sm:$0xff]
      %v5792 = vld [vmem:[#allocation4 + $0x1] sm:$0xff]
      %v5793 = vld [vmem:[#allocation4 + $0x9] sm:$0xff]
      %v5794 = vld [vmem:[#allocation4 + $0x19] sm:$0xff]
      %v5795 = vld [vmem:[#allocation4 + $0x21] sm:$0xff]
      %v5796 = vld [vmem:[#allocation4 + $0x31] sm:$0xff]
      %v5797 = vld [vmem:[#allocation4 + $0x39] sm:$0xff]
      %v5798 = vld [vmem:[#allocation4 + $0x49] sm:$0xff]
      %v5799 = vld [vmem:[#allocation4 + $0x51] sm:$0xff]
      %v5800 = vld [vmem:[#allocation4 + $0x61] sm:$0xff]
      %v5801 = vld [vmem:[#allocation4 + $0x69] sm:$0xff]
      %v5802 = vld [vmem:[#allocation4 + $0x79] sm:$0xff]
      %v5803 = vld [vmem:[#allocation4 + $0x81] sm:$0xff]
      %v5804 = vld [vmem:[#allocation4 + $0x91] sm:$0xff]
      %v5805 = vld [vmem:[#allocation4 + $0x99] sm:$0xff]
      %v5806 = vld [vmem:[#allocation4 + $0xa9] sm:$0xff]
      %v5807 = vld [vmem:[#allocation4 + $0xb1] sm:$0xff]
      %v5808 = vld [vmem:[#allocation4 + $0xc1] sm:$0xff]
      %v5809 = vld [vmem:[#allocation4 + $0xc9] sm:$0xff]
      %v5810 = vld [vmem:[#allocation4 + $0xd9] sm:$0xff]
      %v5811 = vld [vmem:[#allocation4 + $0xe1] sm:$0xff]
      %v5812 = vld [vmem:[#allocation4 + $0xf1] sm:$0xff]
      %v5813 = vld [vmem:[#allocation4 + $0xf9] sm:$0xff]
      %v5814 = vld [vmem:[#allocation4 + $0x109] sm:$0xff]
      %v5815 = vld [vmem:[#allocation4 + $0x111] sm:$0xff]
      %v5816 = vld [vmem:[#allocation4 + $0x121] sm:$0xff]
      %v5817 = vld [vmem:[#allocation4 + $0x129] sm:$0xff]
      %v5818 = vld [vmem:[#allocation4 + $0x139] sm:$0xff]
      %v5819 = vld [vmem:[#allocation4 + $0x141] sm:$0xff]
      %v5820 = vld [vmem:[#allocation4 + $0x151] sm:$0xff]
      %v5821 = vld [vmem:[#allocation4 + $0x159] sm:$0xff]
      %v5822 = vld [vmem:[#allocation4 + $0x169] sm:$0xff]
      %v5823 = vld [vmem:[#allocation4 + $0x171] sm:$0xff]
      %v5824 = vld [vmem:[#allocation4 + $0x2] sm:$0xff]
      %v5825 = vld [vmem:[#allocation4 + $0xa] sm:$0xff]
      %v5826 = vld [vmem:[#allocation4 + $0x1a] sm:$0xff]
      %v5827 = vld [vmem:[#allocation4 + $0x22] sm:$0xff]
      %v5828 = vld [vmem:[#allocation4 + $0x32] sm:$0xff]
      %v5829 = vld [vmem:[#allocation4 + $0x3a] sm:$0xff]
      %v5830 = vld [vmem:[#allocation4 + $0x4a] sm:$0xff]
      %v5831 = vld [vmem:[#allocation4 + $0x52] sm:$0xff]
      %v5832 = vld [vmem:[#allocation4 + $0x62] sm:$0xff]
      %v5833 = vld [vmem:[#allocation4 + $0x6a] sm:$0xff]
      %v5834 = vld [vmem:[#allocation4 + $0x7a] sm:$0xff]
      %v5835 = vld [vmem:[#allocation4 + $0x82] sm:$0xff]
      %v5836 = vld [vmem:[#allocation4 + $0x92] sm:$0xff]
      %v5837 = vld [vmem:[#allocation4 + $0x9a] sm:$0xff]
      %v5838 = vld [vmem:[#allocation4 + $0xaa] sm:$0xff]
      %v5839 = vld [vmem:[#allocation4 + $0xb2] sm:$0xff]
      %v5840 = vld [vmem:[#allocation4 + $0xc2] sm:$0xff]
      %v5841 = vld [vmem:[#allocation4 + $0xca] sm:$0xff]
      %v5842 = vld [vmem:[#allocation4 + $0xda] sm:$0xff]
      %v5843 = vld [vmem:[#allocation4 + $0xe2] sm:$0xff]
      %v5844 = vld [vmem:[#allocation4 + $0xf2] sm:$0xff]
      %v5845 = vld [vmem:[#allocation4 + $0xfa] sm:$0xff]
      %v5846 = vld [vmem:[#allocation4 + $0x10a] sm:$0xff]
      %v5847 = vld [vmem:[#allocation4 + $0x112] sm:$0xff]
      %v5848 = vld [vmem:[#allocation4 + $0x122] sm:$0xff]
      %v5849 = vld [vmem:[#allocation4 + $0x12a] sm:$0xff]
      %v5850 = vld [vmem:[#allocation4 + $0x13a] sm:$0xff]
      %v5851 = vld [vmem:[#allocation4 + $0x142] sm:$0xff]
      %v5852 = vld [vmem:[#allocation4 + $0x152] sm:$0xff]
      %v5853 = vld [vmem:[#allocation4 + $0x15a] sm:$0xff]
      %v5854 = vld [vmem:[#allocation4 + $0x16a] sm:$0xff]
      %v5855 = vld [vmem:[#allocation4 + $0x172] sm:$0xff]
      %v5856 = vld [vmem:[%s5727] sm:$0xff]
      %v5857 = vld [vmem:[%s5727 + $0x8] sm:$0xff]
      %v5858 = vld [vmem:[%s5727 + $0x18] sm:$0xff]
      %v5859 = vld [vmem:[%s5727 + $0x20] sm:$0xff]
      %v5860 = vld [vmem:[%s5727 + $0x30] sm:$0xff]
      %v5861 = vld [vmem:[%s5727 + $0x38] sm:$0xff]
      %v5862 = vld [vmem:[%s5727 + $0x48] sm:$0xff]
      %v5863 = vld [vmem:[%s5727 + $0x50] sm:$0xff]
      %v5864 = vld [vmem:[%s5727 + $0x60] sm:$0xff]
      %v5865 = vld [vmem:[%s5727 + $0x68] sm:$0xff]
      %v5866 = vld [vmem:[%s5727 + $0x78] sm:$0xff]
      %v5867 = vld [vmem:[%s5727 + $0x80] sm:$0xff]
      %v5868 = vld [vmem:[%s5727 + $0x90] sm:$0xff]
      %v5869 = vld [vmem:[%s5727 + $0x98] sm:$0xff]
      %v5870 = vld [vmem:[%s5727 + $0xa8] sm:$0xff]
      %v5871 = vld [vmem:[%s5727 + $0xb0] sm:$0xff]
      %v5872 = vld [vmem:[%s5727 + $0xc0] sm:$0xff]
      %v5873 = vld [vmem:[%s5727 + $0xc8] sm:$0xff]
      %v5874 = vld [vmem:[%s5727 + $0xd8] sm:$0xff]
      %v5875 = vld [vmem:[%s5727 + $0xe0] sm:$0xff]
      %v5876 = vld [vmem:[%s5727 + $0xf0] sm:$0xff]
      %v5877 = vld [vmem:[%s5727 + $0xf8] sm:$0xff]
      %v5878 = vld [vmem:[%s5727 + $0x108] sm:$0xff]
      %v5879 = vld [vmem:[%s5727 + $0x110] sm:$0xff]
      %v5880 = vld [vmem:[%s5727 + $0x120] sm:$0xff]
      %v5881 = vld [vmem:[%s5727 + $0x128] sm:$0xff]
      %v5882 = vld [vmem:[%s5727 + $0x138] sm:$0xff]
      %v5883 = vld [vmem:[%s5727 + $0x140] sm:$0xff]
      %v5884 = vld [vmem:[%s5727 + $0x150] sm:$0xff]
      %v5885 = vld [vmem:[%s5727 + $0x158] sm:$0xff]
      %v5886 = vld [vmem:[%s5727 + $0x168] sm:$0xff]
      %v5887 = vld [vmem:[%s5727 + $0x170] sm:$0xff]
      %v5888 = vld [vmem:[%s5727 + $0x1] sm:$0xff]
      %v5889 = vld [vmem:[%s5727 + $0x9] sm:$0xff]
      %v5890 = vld [vmem:[%s5727 + $0x19] sm:$0xff]
      %v5891 = vld [vmem:[%s5727 + $0x21] sm:$0xff]
      %v5892 = vld [vmem:[%s5727 + $0x31] sm:$0xff]
      %v5893 = vld [vmem:[%s5727 + $0x39] sm:$0xff]
      %v5894 = vld [vmem:[%s5727 + $0x49] sm:$0xff]
      %v5895 = vld [vmem:[%s5727 + $0x51] sm:$0xff]
      %v5896 = vld [vmem:[%s5727 + $0x61] sm:$0xff]
      %v5897 = vld [vmem:[%s5727 + $0x69] sm:$0xff]
      %v5898 = vld [vmem:[%s5727 + $0x79] sm:$0xff]
      %v5899 = vld [vmem:[%s5727 + $0x81] sm:$0xff]
      %v5900 = vld [vmem:[%s5727 + $0x91] sm:$0xff]
      %v5901 = vld [vmem:[%s5727 + $0x99] sm:$0xff]
      %v5902 = vld [vmem:[%s5727 + $0xa9] sm:$0xff]
      %v5903 = vld [vmem:[%s5727 + $0xb1] sm:$0xff]
      %v5904 = vld [vmem:[%s5727 + $0xc1] sm:$0xff]
      %v5905 = vld [vmem:[%s5727 + $0xc9] sm:$0xff]
      %v5906 = vld [vmem:[%s5727 + $0xd9] sm:$0xff]
      %v5907 = vld [vmem:[%s5727 + $0xe1] sm:$0xff]
      %v5908 = vld [vmem:[%s5727 + $0xf1] sm:$0xff]
      %v5909 = vld [vmem:[%s5727 + $0xf9] sm:$0xff]
      %v5910 = vld [vmem:[%s5727 + $0x109] sm:$0xff]
      %v5911 = vld [vmem:[%s5727 + $0x111] sm:$0xff]
      %v5912 = vld [vmem:[%s5727 + $0x121] sm:$0xff]
      %v5913 = vld [vmem:[%s5727 + $0x129] sm:$0xff]
      %v5914 = vld [vmem:[%s5727 + $0x139] sm:$0xff]
      %v5915 = vld [vmem:[%s5727 + $0x141] sm:$0xff]
      %v5916 = vld [vmem:[%s5727 + $0x151] sm:$0xff]
      %v5917 = vld [vmem:[%s5727 + $0x159] sm:$0xff]
      %v5918 = vld [vmem:[%s5727 + $0x169] sm:$0xff]
      %v5919 = vld [vmem:[%s5727 + $0x171] sm:$0xff]
      %v5920 = vld [vmem:[%s5727 + $0x2] sm:$0xff]
      %v5921 = vld [vmem:[%s5727 + $0xa] sm:$0xff]
      %v5922 = vld [vmem:[%s5727 + $0x1a] sm:$0xff]
      %v5923 = vld [vmem:[%s5727 + $0x22] sm:$0xff]
      %v5924 = vld [vmem:[%s5727 + $0x32] sm:$0xff]
      %v5925 = vld [vmem:[%s5727 + $0x3a] sm:$0xff]
      %v5926 = vld [vmem:[%s5727 + $0x4a] sm:$0xff]
      %v5927 = vld [vmem:[%s5727 + $0x52] sm:$0xff]
      %v5928 = vld [vmem:[%s5727 + $0x62] sm:$0xff]
      %v5929 = vld [vmem:[%s5727 + $0x6a] sm:$0xff]
      %v5930 = vld [vmem:[%s5727 + $0x7a] sm:$0xff]
      %v5931 = vld [vmem:[%s5727 + $0x82] sm:$0xff]
      %v5932 = vld [vmem:[%s5727 + $0x92] sm:$0xff]
      %v5933 = vld [vmem:[%s5727 + $0x9a] sm:$0xff]
      %v5934 = vld [vmem:[%s5727 + $0xaa] sm:$0xff]
      %v5935 = vld [vmem:[%s5727 + $0xb2] sm:$0xff]
      %v5936 = vld [vmem:[%s5727 + $0xc2] sm:$0xff]
      %v5937 = vld [vmem:[%s5727 + $0xca] sm:$0xff]
      %v5938 = vld [vmem:[%s5727 + $0xda] sm:$0xff]
      %v5939 = vld [vmem:[%s5727 + $0xe2] sm:$0xff]
      %v5940 = vld [vmem:[%s5727 + $0xf2] sm:$0xff]
      %v5941 = vld [vmem:[%s5727 + $0xfa] sm:$0xff]
      %v5942 = vld [vmem:[%s5727 + $0x10a] sm:$0xff]
      %v5943 = vld [vmem:[%s5727 + $0x112] sm:$0xff]
      %v5944 = vld [vmem:[%s5727 + $0x122] sm:$0xff]
      %v5945 = vld [vmem:[%s5727 + $0x12a] sm:$0xff]
      %v5946 = vld [vmem:[%s5727 + $0x13a] sm:$0xff]
      %v5947 = vld [vmem:[%s5727 + $0x142] sm:$0xff]
      %v5948 = vld [vmem:[%s5727 + $0x152] sm:$0xff]
      %v5949 = vld [vmem:[%s5727 + $0x15a] sm:$0xff]
      %v5950 = vld [vmem:[%s5727 + $0x16a] sm:$0xff]
      %v5951 = vld [vmem:[%s5727 + $0x172] sm:$0xff]
      %s5952 = scalar_lea.vmem [#allocation4], 48
      %v5953 = vld [vmem:[%s5952] sm:$0xff]
      %v5954 = vld [vmem:[%s5952 + $0x8] sm:$0xff]
      %v5955 = vld [vmem:[%s5952 + $0x18] sm:$0xff]
      %v5956 = vld [vmem:[%s5952 + $0x20] sm:$0xff]
      %v5957 = vld [vmem:[%s5952 + $0x30] sm:$0xff]
      %v5958 = vld [vmem:[%s5952 + $0x38] sm:$0xff]
      %v5959 = vld [vmem:[%s5952 + $0x48] sm:$0xff]
      %v5960 = vld [vmem:[%s5952 + $0x50] sm:$0xff]
      %v5961 = vld [vmem:[%s5952 + $0x60] sm:$0xff]
      %v5962 = vld [vmem:[%s5952 + $0x68] sm:$0xff]
      %v5963 = vld [vmem:[%s5952 + $0x78] sm:$0xff]
      %v5964 = vld [vmem:[%s5952 + $0x80] sm:$0xff]
      %v5965 = vld [vmem:[%s5952 + $0x90] sm:$0xff]
      %v5966 = vld [vmem:[%s5952 + $0x98] sm:$0xff]
      %v5967 = vld [vmem:[%s5952 + $0xa8] sm:$0xff]
      %v5968 = vld [vmem:[%s5952 + $0xb0] sm:$0xff]
      %v5969 = vld [vmem:[%s5952 + $0xc0] sm:$0xff]
      %v5970 = vld [vmem:[%s5952 + $0xc8] sm:$0xff]
      %v5971 = vld [vmem:[%s5952 + $0xd8] sm:$0xff]
      %v5972 = vld [vmem:[%s5952 + $0xe0] sm:$0xff]
      %v5973 = vld [vmem:[%s5952 + $0xf0] sm:$0xff]
      %v5974 = vld [vmem:[%s5952 + $0xf8] sm:$0xff]
      %v5975 = vld [vmem:[%s5952 + $0x108] sm:$0xff]
      %v5976 = vld [vmem:[%s5952 + $0x110] sm:$0xff]
      %v5977 = vld [vmem:[%s5952 + $0x120] sm:$0xff]
      %v5978 = vld [vmem:[%s5952 + $0x128] sm:$0xff]
      %v5979 = vld [vmem:[%s5952 + $0x138] sm:$0xff]
      %v5980 = vld [vmem:[%s5952 + $0x140] sm:$0xff]
      %v5981 = vld [vmem:[%s5952 + $0x150] sm:$0xff]
      %v5982 = vld [vmem:[%s5952 + $0x158] sm:$0xff]
      %v5983 = vld [vmem:[%s5952 + $0x168] sm:$0xff]
      %v5984 = vld [vmem:[%s5952 + $0x170] sm:$0xff]
      %v5985 = vld [vmem:[%s5952 + $0x1] sm:$0xff]
      %v5986 = vld [vmem:[%s5952 + $0x9] sm:$0xff]
      %v5987 = vld [vmem:[%s5952 + $0x19] sm:$0xff]
      %v5988 = vld [vmem:[%s5952 + $0x21] sm:$0xff]
      %v5989 = vld [vmem:[%s5952 + $0x31] sm:$0xff]
      %v5990 = vld [vmem:[%s5952 + $0x39] sm:$0xff]
      %v5991 = vld [vmem:[%s5952 + $0x49] sm:$0xff]
      %v5992 = vld [vmem:[%s5952 + $0x51] sm:$0xff]
      %v5993 = vld [vmem:[%s5952 + $0x61] sm:$0xff]
      %v5994 = vld [vmem:[%s5952 + $0x69] sm:$0xff]
      %v5995 = vld [vmem:[%s5952 + $0x79] sm:$0xff]
      %v5996 = vld [vmem:[%s5952 + $0x81] sm:$0xff]
      %v5997 = vld [vmem:[%s5952 + $0x91] sm:$0xff]
      %v5998 = vld [vmem:[%s5952 + $0x99] sm:$0xff]
      %v5999 = vld [vmem:[%s5952 + $0xa9] sm:$0xff]
      %v6000 = vld [vmem:[%s5952 + $0xb1] sm:$0xff]
      %v6001 = vld [vmem:[%s5952 + $0xc1] sm:$0xff]
      %v6002 = vld [vmem:[%s5952 + $0xc9] sm:$0xff]
      %v6003 = vld [vmem:[%s5952 + $0xd9] sm:$0xff]
      %v6004 = vld [vmem:[%s5952 + $0xe1] sm:$0xff]
      %v6005 = vld [vmem:[%s5952 + $0xf1] sm:$0xff]
      %v6006 = vld [vmem:[%s5952 + $0xf9] sm:$0xff]
      %v6007 = vld [vmem:[%s5952 + $0x109] sm:$0xff]
      %v6008 = vld [vmem:[%s5952 + $0x111] sm:$0xff]
      %v6009 = vld [vmem:[%s5952 + $0x121] sm:$0xff]
      %v6010 = vld [vmem:[%s5952 + $0x129] sm:$0xff]
      %v6011 = vld [vmem:[%s5952 + $0x139] sm:$0xff]
      %v6012 = vld [vmem:[%s5952 + $0x141] sm:$0xff]
      %v6013 = vld [vmem:[%s5952 + $0x151] sm:$0xff]
      %v6014 = vld [vmem:[%s5952 + $0x159] sm:$0xff]
      %v6015 = vld [vmem:[%s5952 + $0x169] sm:$0xff]
      %v6016 = vld [vmem:[%s5952 + $0x171] sm:$0xff]
      %v6017 = vld [vmem:[%s5952 + $0x2] sm:$0xff]
      %v6018 = vld [vmem:[%s5952 + $0xa] sm:$0xff]
      %v6019 = vld [vmem:[%s5952 + $0x1a] sm:$0xff]
      %v6020 = vld [vmem:[%s5952 + $0x22] sm:$0xff]
      %v6021 = vld [vmem:[%s5952 + $0x32] sm:$0xff]
      %v6022 = vld [vmem:[%s5952 + $0x3a] sm:$0xff]
      %v6023 = vld [vmem:[%s5952 + $0x4a] sm:$0xff]
      %v6024 = vld [vmem:[%s5952 + $0x52] sm:$0xff]
      %v6025 = vld [vmem:[%s5952 + $0x62] sm:$0xff]
      %v6026 = vld [vmem:[%s5952 + $0x6a] sm:$0xff]
      %v6027 = vld [vmem:[%s5952 + $0x7a] sm:$0xff]
      %v6028 = vld [vmem:[%s5952 + $0x82] sm:$0xff]
      %v6029 = vld [vmem:[%s5952 + $0x92] sm:$0xff]
      %v6030 = vld [vmem:[%s5952 + $0x9a] sm:$0xff]
      %v6031 = vld [vmem:[%s5952 + $0xaa] sm:$0xff]
      %v6032 = vld [vmem:[%s5952 + $0xb2] sm:$0xff]
      %v6033 = vld [vmem:[%s5952 + $0xc2] sm:$0xff]
      %v6034 = vld [vmem:[%s5952 + $0xca] sm:$0xff]
      %v6035 = vld [vmem:[%s5952 + $0xda] sm:$0xff]
      %v6036 = vld [vmem:[%s5952 + $0xe2] sm:$0xff]
      %v6037 = vld [vmem:[%s5952 + $0xf2] sm:$0xff]
      %v6038 = vld [vmem:[%s5952 + $0xfa] sm:$0xff]
      %v6039 = vld [vmem:[%s5952 + $0x10a] sm:$0xff]
      %v6040 = vld [vmem:[%s5952 + $0x112] sm:$0xff]
      %v6041 = vld [vmem:[%s5952 + $0x122] sm:$0xff]
      %v6042 = vld [vmem:[%s5952 + $0x12a] sm:$0xff]
      %v6043 = vld [vmem:[%s5952 + $0x13a] sm:$0xff]
      %v6044 = vld [vmem:[%s5952 + $0x142] sm:$0xff]
      %v6045 = vld [vmem:[%s5952 + $0x152] sm:$0xff]
      %v6046 = vld [vmem:[%s5952 + $0x15a] sm:$0xff]
      %v6047 = vld [vmem:[%s5952 + $0x16a] sm:$0xff]
      %v6048 = vld [vmem:[%s5952 + $0x172] sm:$0xff]
      %6081 = vrot.lane.b32.xlu0 %v5792, 32
      %v6082 = vpop.permute.xlu0 %6081
      %6083 = vrot.lane.b32.xlu0 %v5793, 32
      %v6084 = vpop.permute.xlu0 %6083
      %6085 = vrot.lane.b32.xlu0 %v5794, 32
      %v6086 = vpop.permute.xlu0 %6085
      %6087 = vrot.lane.b32.xlu0 %v5795, 32
      %v6088 = vpop.permute.xlu0 %6087
      %6089 = vrot.lane.b32.xlu0 %v5796, 32
      %v6090 = vpop.permute.xlu0 %6089
      %6091 = vrot.lane.b32.xlu0 %v5797, 32
      %v6092 = vpop.permute.xlu0 %6091
      %6093 = vrot.lane.b32.xlu0 %v5798, 32
      %v6094 = vpop.permute.xlu0 %6093
      %6095 = vrot.lane.b32.xlu0 %v5799, 32
      %v6096 = vpop.permute.xlu0 %6095
      %6097 = vrot.lane.b32.xlu0 %v5800, 32
      %v6098 = vpop.permute.xlu0 %6097
      %6099 = vrot.lane.b32.xlu0 %v5801, 32
      %v6100 = vpop.permute.xlu0 %6099
      %6101 = vrot.lane.b32.xlu0 %v5802, 32
      %v6102 = vpop.permute.xlu0 %6101
      %6103 = vrot.lane.b32.xlu0 %v5803, 32
      %v6104 = vpop.permute.xlu0 %6103
      %6105 = vrot.lane.b32.xlu0 %v5804, 32
      %v6106 = vpop.permute.xlu0 %6105
      %6107 = vrot.lane.b32.xlu0 %v5805, 32
      %v6108 = vpop.permute.xlu0 %6107
      %6109 = vrot.lane.b32.xlu0 %v5806, 32
      %v6110 = vpop.permute.xlu0 %6109
      %6111 = vrot.lane.b32.xlu0 %v5807, 32
      %v6112 = vpop.permute.xlu0 %6111
      %6113 = vrot.lane.b32.xlu0 %v5808, 32
      %v6114 = vpop.permute.xlu0 %6113
      %6115 = vrot.lane.b32.xlu0 %v5809, 32
      %v6116 = vpop.permute.xlu0 %6115
      %6117 = vrot.lane.b32.xlu0 %v5810, 32
      %v6118 = vpop.permute.xlu0 %6117
      %6119 = vrot.lane.b32.xlu0 %v5811, 32
      %v6120 = vpop.permute.xlu0 %6119
      %6121 = vrot.lane.b32.xlu0 %v5812, 32
      %v6122 = vpop.permute.xlu0 %6121
      %6123 = vrot.lane.b32.xlu0 %v5813, 32
      %v6124 = vpop.permute.xlu0 %6123
      %6125 = vrot.lane.b32.xlu0 %v5814, 32
      %v6126 = vpop.permute.xlu0 %6125
      %6127 = vrot.lane.b32.xlu0 %v5815, 32
      %v6128 = vpop.permute.xlu0 %6127
      %6129 = vrot.lane.b32.xlu0 %v5816, 32
      %v6130 = vpop.permute.xlu0 %6129
      %6131 = vrot.lane.b32.xlu0 %v5817, 32
      %v6132 = vpop.permute.xlu0 %6131
      %6133 = vrot.lane.b32.xlu0 %v5818, 32
      %v6134 = vpop.permute.xlu0 %6133
      %6135 = vrot.lane.b32.xlu0 %v5819, 32
      %v6136 = vpop.permute.xlu0 %6135
      %6137 = vrot.lane.b32.xlu0 %v5820, 32
      %v6138 = vpop.permute.xlu0 %6137
      %6139 = vrot.lane.b32.xlu0 %v5821, 32
      %v6140 = vpop.permute.xlu0 %6139
      %6141 = vrot.lane.b32.xlu0 %v5822, 32
      %v6142 = vpop.permute.xlu0 %6141
      %6143 = vrot.lane.b32.xlu0 %v5823, 32
      %v6144 = vpop.permute.xlu0 %6143
      %6209 = vrot.lane.b32.xlu0 %v5824, 64
      %v6210 = vpop.permute.xlu0 %6209
      %6211 = vrot.lane.b32.xlu0 %v5825, 64
      %v6212 = vpop.permute.xlu0 %6211
      %6213 = vrot.lane.b32.xlu0 %v5826, 64
      %v6214 = vpop.permute.xlu0 %6213
      %6215 = vrot.lane.b32.xlu0 %v5827, 64
      %v6216 = vpop.permute.xlu0 %6215
      %6217 = vrot.lane.b32.xlu0 %v5828, 64
      %v6218 = vpop.permute.xlu0 %6217
      %6219 = vrot.lane.b32.xlu0 %v5829, 64
      %v6220 = vpop.permute.xlu0 %6219
      %6221 = vrot.lane.b32.xlu0 %v5830, 64
      %v6222 = vpop.permute.xlu0 %6221
      %6223 = vrot.lane.b32.xlu0 %v5831, 64
      %v6224 = vpop.permute.xlu0 %6223
      %6225 = vrot.lane.b32.xlu0 %v5832, 64
      %v6226 = vpop.permute.xlu0 %6225
      %6227 = vrot.lane.b32.xlu0 %v5833, 64
      %v6228 = vpop.permute.xlu0 %6227
      %6229 = vrot.lane.b32.xlu0 %v5834, 64
      %v6230 = vpop.permute.xlu0 %6229
      %6231 = vrot.lane.b32.xlu0 %v5835, 64
      %v6232 = vpop.permute.xlu0 %6231
      %6233 = vrot.lane.b32.xlu0 %v5836, 64
      %v6234 = vpop.permute.xlu0 %6233
      %6235 = vrot.lane.b32.xlu0 %v5837, 64
      %v6236 = vpop.permute.xlu0 %6235
      %6237 = vrot.lane.b32.xlu0 %v5838, 64
      %v6238 = vpop.permute.xlu0 %6237
      %6239 = vrot.lane.b32.xlu0 %v5839, 64
      %v6240 = vpop.permute.xlu0 %6239
      %6241 = vrot.lane.b32.xlu0 %v5840, 64
      %v6242 = vpop.permute.xlu0 %6241
      %6243 = vrot.lane.b32.xlu0 %v5841, 64
      %v6244 = vpop.permute.xlu0 %6243
      %6245 = vrot.lane.b32.xlu0 %v5842, 64
      %v6246 = vpop.permute.xlu0 %6245
      %6247 = vrot.lane.b32.xlu0 %v5843, 64
      %v6248 = vpop.permute.xlu0 %6247
      %6249 = vrot.lane.b32.xlu0 %v5844, 64
      %v6250 = vpop.permute.xlu0 %6249
      %6251 = vrot.lane.b32.xlu0 %v5845, 64
      %v6252 = vpop.permute.xlu0 %6251
      %6253 = vrot.lane.b32.xlu0 %v5846, 64
      %v6254 = vpop.permute.xlu0 %6253
      %6255 = vrot.lane.b32.xlu0 %v5847, 64
      %v6256 = vpop.permute.xlu0 %6255
      %6257 = vrot.lane.b32.xlu0 %v5848, 64
      %v6258 = vpop.permute.xlu0 %6257
      %6259 = vrot.lane.b32.xlu0 %v5849, 64
      %v6260 = vpop.permute.xlu0 %6259
      %6261 = vrot.lane.b32.xlu0 %v5850, 64
      %v6262 = vpop.permute.xlu0 %6261
      %6263 = vrot.lane.b32.xlu0 %v5851, 64
      %v6264 = vpop.permute.xlu0 %6263
      %6265 = vrot.lane.b32.xlu0 %v5852, 64
      %v6266 = vpop.permute.xlu0 %6265
      %6267 = vrot.lane.b32.xlu0 %v5853, 64
      %v6268 = vpop.permute.xlu0 %6267
      %6269 = vrot.lane.b32.xlu0 %v5854, 64
      %v6270 = vpop.permute.xlu0 %6269
      %6271 = vrot.lane.b32.xlu0 %v5855, 64
      %v6272 = vpop.permute.xlu0 %6271
      %6337 = vrot.lane.b32.xlu0 %v5856, 96
      %v6338 = vpop.permute.xlu0 %6337
      %6339 = vrot.lane.b32.xlu0 %v5857, 96
      %v6340 = vpop.permute.xlu0 %6339
      %6341 = vrot.lane.b32.xlu0 %v5858, 96
      %v6342 = vpop.permute.xlu0 %6341
      %6343 = vrot.lane.b32.xlu0 %v5859, 96
      %v6344 = vpop.permute.xlu0 %6343
      %6345 = vrot.lane.b32.xlu0 %v5860, 96
      %v6346 = vpop.permute.xlu0 %6345
      %6347 = vrot.lane.b32.xlu0 %v5861, 96
      %v6348 = vpop.permute.xlu0 %6347
      %6349 = vrot.lane.b32.xlu0 %v5862, 96
      %v6350 = vpop.permute.xlu0 %6349
      %6351 = vrot.lane.b32.xlu0 %v5863, 96
      %v6352 = vpop.permute.xlu0 %6351
      %6353 = vrot.lane.b32.xlu0 %v5864, 96
      %v6354 = vpop.permute.xlu0 %6353
      %6355 = vrot.lane.b32.xlu0 %v5865, 96
      %v6356 = vpop.permute.xlu0 %6355
      %6357 = vrot.lane.b32.xlu0 %v5866, 96
      %v6358 = vpop.permute.xlu0 %6357
      %6359 = vrot.lane.b32.xlu0 %v5867, 96
      %v6360 = vpop.permute.xlu0 %6359
      %6361 = vrot.lane.b32.xlu0 %v5868, 96
      %v6362 = vpop.permute.xlu0 %6361
      %6363 = vrot.lane.b32.xlu0 %v5869, 96
      %v6364 = vpop.permute.xlu0 %6363
      %6365 = vrot.lane.b32.xlu0 %v5870, 96
      %v6366 = vpop.permute.xlu0 %6365
      %6367 = vrot.lane.b32.xlu0 %v5871, 96
      %v6368 = vpop.permute.xlu0 %6367
      %6369 = vrot.lane.b32.xlu0 %v5872, 96
      %v6370 = vpop.permute.xlu0 %6369
      %6371 = vrot.lane.b32.xlu0 %v5873, 96
      %v6372 = vpop.permute.xlu0 %6371
      %6373 = vrot.lane.b32.xlu0 %v5874, 96
      %v6374 = vpop.permute.xlu0 %6373
      %6375 = vrot.lane.b32.xlu0 %v5875, 96
      %v6376 = vpop.permute.xlu0 %6375
      %6377 = vrot.lane.b32.xlu0 %v5876, 96
      %v6378 = vpop.permute.xlu0 %6377
      %6379 = vrot.lane.b32.xlu0 %v5877, 96
      %v6380 = vpop.permute.xlu0 %6379
      %6381 = vrot.lane.b32.xlu0 %v5878, 96
      %v6382 = vpop.permute.xlu0 %6381
      %6383 = vrot.lane.b32.xlu0 %v5879, 96
      %v6384 = vpop.permute.xlu0 %6383
      %6385 = vrot.lane.b32.xlu0 %v5880, 96
      %v6386 = vpop.permute.xlu0 %6385
      %6387 = vrot.lane.b32.xlu0 %v5881, 96
      %v6388 = vpop.permute.xlu0 %6387
      %6389 = vrot.lane.b32.xlu0 %v5882, 96
      %v6390 = vpop.permute.xlu0 %6389
      %6391 = vrot.lane.b32.xlu0 %v5883, 96
      %v6392 = vpop.permute.xlu0 %6391
      %6393 = vrot.lane.b32.xlu0 %v5884, 96
      %v6394 = vpop.permute.xlu0 %6393
      %6395 = vrot.lane.b32.xlu0 %v5885, 96
      %v6396 = vpop.permute.xlu0 %6395
      %6397 = vrot.lane.b32.xlu0 %v5886, 96
      %v6398 = vpop.permute.xlu0 %6397
      %6399 = vrot.lane.b32.xlu0 %v5887, 96
      %v6400 = vpop.permute.xlu0 %6399
      %6465 = vrot.lane.b32.xlu0 %v5920, 32
      %v6466 = vpop.permute.xlu0 %6465
      %6467 = vrot.lane.b32.xlu0 %v5921, 32
      %v6468 = vpop.permute.xlu0 %6467
      %6469 = vrot.lane.b32.xlu0 %v5922, 32
      %v6470 = vpop.permute.xlu0 %6469
      %6471 = vrot.lane.b32.xlu0 %v5923, 32
      %v6472 = vpop.permute.xlu0 %6471
      %6473 = vrot.lane.b32.xlu0 %v5924, 32
      %v6474 = vpop.permute.xlu0 %6473
      %6475 = vrot.lane.b32.xlu0 %v5925, 32
      %v6476 = vpop.permute.xlu0 %6475
      %6477 = vrot.lane.b32.xlu0 %v5926, 32
      %v6478 = vpop.permute.xlu0 %6477
      %6479 = vrot.lane.b32.xlu0 %v5927, 32
      %v6480 = vpop.permute.xlu0 %6479
      %6481 = vrot.lane.b32.xlu0 %v5928, 32
      %v6482 = vpop.permute.xlu0 %6481
      %6483 = vrot.lane.b32.xlu0 %v5929, 32
      %v6484 = vpop.permute.xlu0 %6483
      %6485 = vrot.lane.b32.xlu0 %v5930, 32
      %v6486 = vpop.permute.xlu0 %6485
      %6487 = vrot.lane.b32.xlu0 %v5931, 32
      %v6488 = vpop.permute.xlu0 %6487
      %6489 = vrot.lane.b32.xlu0 %v5932, 32
      %v6490 = vpop.permute.xlu0 %6489
      %6491 = vrot.lane.b32.xlu0 %v5933, 32
      %v6492 = vpop.permute.xlu0 %6491
      %6493 = vrot.lane.b32.xlu0 %v5934, 32
      %v6494 = vpop.permute.xlu0 %6493
      %6495 = vrot.lane.b32.xlu0 %v5935, 32
      %v6496 = vpop.permute.xlu0 %6495
      %6497 = vrot.lane.b32.xlu0 %v5936, 32
      %v6498 = vpop.permute.xlu0 %6497
      %6499 = vrot.lane.b32.xlu0 %v5937, 32
      %v6500 = vpop.permute.xlu0 %6499
      %6501 = vrot.lane.b32.xlu0 %v5938, 32
      %v6502 = vpop.permute.xlu0 %6501
      %6503 = vrot.lane.b32.xlu0 %v5939, 32
      %v6504 = vpop.permute.xlu0 %6503
      %6505 = vrot.lane.b32.xlu0 %v5940, 32
      %v6506 = vpop.permute.xlu0 %6505
      %6507 = vrot.lane.b32.xlu0 %v5941, 32
      %v6508 = vpop.permute.xlu0 %6507
      %6509 = vrot.lane.b32.xlu0 %v5942, 32
      %v6510 = vpop.permute.xlu0 %6509
      %6511 = vrot.lane.b32.xlu0 %v5943, 32
      %v6512 = vpop.permute.xlu0 %6511
      %6513 = vrot.lane.b32.xlu0 %v5944, 32
      %v6514 = vpop.permute.xlu0 %6513
      %6515 = vrot.lane.b32.xlu0 %v5945, 32
      %v6516 = vpop.permute.xlu0 %6515
      %6517 = vrot.lane.b32.xlu0 %v5946, 32
      %v6518 = vpop.permute.xlu0 %6517
      %6519 = vrot.lane.b32.xlu0 %v5947, 32
      %v6520 = vpop.permute.xlu0 %6519
      %6521 = vrot.lane.b32.xlu0 %v5948, 32
      %v6522 = vpop.permute.xlu0 %6521
      %6523 = vrot.lane.b32.xlu0 %v5949, 32
      %v6524 = vpop.permute.xlu0 %6523
      %6525 = vrot.lane.b32.xlu0 %v5950, 32
      %v6526 = vpop.permute.xlu0 %6525
      %6527 = vrot.lane.b32.xlu0 %v5951, 32
      %v6528 = vpop.permute.xlu0 %6527
      %6593 = vrot.lane.b32.xlu0 %v5953, 64
      %v6594 = vpop.permute.xlu0 %6593
      %6595 = vrot.lane.b32.xlu0 %v5954, 64
      %v6596 = vpop.permute.xlu0 %6595
      %6597 = vrot.lane.b32.xlu0 %v5955, 64
      %v6598 = vpop.permute.xlu0 %6597
      %6599 = vrot.lane.b32.xlu0 %v5956, 64
      %v6600 = vpop.permute.xlu0 %6599
      %6601 = vrot.lane.b32.xlu0 %v5957, 64
      %v6602 = vpop.permute.xlu0 %6601
      %6603 = vrot.lane.b32.xlu0 %v5958, 64
      %v6604 = vpop.permute.xlu0 %6603
      %6605 = vrot.lane.b32.xlu0 %v5959, 64
      %v6606 = vpop.permute.xlu0 %6605
      %6607 = vrot.lane.b32.xlu0 %v5960, 64
      %v6608 = vpop.permute.xlu0 %6607
      %6609 = vrot.lane.b32.xlu0 %v5961, 64
      %v6610 = vpop.permute.xlu0 %6609
      %6611 = vrot.lane.b32.xlu0 %v5962, 64
      %v6612 = vpop.permute.xlu0 %6611
      %6613 = vrot.lane.b32.xlu0 %v5963, 64
      %v6614 = vpop.permute.xlu0 %6613
      %6615 = vrot.lane.b32.xlu0 %v5964, 64
      %v6616 = vpop.permute.xlu0 %6615
      %6617 = vrot.lane.b32.xlu0 %v5965, 64
      %v6618 = vpop.permute.xlu0 %6617
      %6619 = vrot.lane.b32.xlu0 %v5966, 64
      %v6620 = vpop.permute.xlu0 %6619
      %6621 = vrot.lane.b32.xlu0 %v5967, 64
      %v6622 = vpop.permute.xlu0 %6621
      %6623 = vrot.lane.b32.xlu0 %v5968, 64
      %v6624 = vpop.permute.xlu0 %6623
      %6625 = vrot.lane.b32.xlu0 %v5969, 64
      %v6626 = vpop.permute.xlu0 %6625
      %6627 = vrot.lane.b32.xlu0 %v5970, 64
      %v6628 = vpop.permute.xlu0 %6627
      %6629 = vrot.lane.b32.xlu0 %v5971, 64
      %v6630 = vpop.permute.xlu0 %6629
      %6631 = vrot.lane.b32.xlu0 %v5972, 64
      %v6632 = vpop.permute.xlu0 %6631
      %6633 = vrot.lane.b32.xlu0 %v5973, 64
      %v6634 = vpop.permute.xlu0 %6633
      %6635 = vrot.lane.b32.xlu0 %v5974, 64
      %v6636 = vpop.permute.xlu0 %6635
      %6637 = vrot.lane.b32.xlu0 %v5975, 64
      %v6638 = vpop.permute.xlu0 %6637
      %6639 = vrot.lane.b32.xlu0 %v5976, 64
      %v6640 = vpop.permute.xlu0 %6639
      %6641 = vrot.lane.b32.xlu0 %v5977, 64
      %v6642 = vpop.permute.xlu0 %6641
      %6643 = vrot.lane.b32.xlu0 %v5978, 64
      %v6644 = vpop.permute.xlu0 %6643
      %6645 = vrot.lane.b32.xlu0 %v5979, 64
      %v6646 = vpop.permute.xlu0 %6645
      %6647 = vrot.lane.b32.xlu0 %v5980, 64
      %v6648 = vpop.permute.xlu0 %6647
      %6649 = vrot.lane.b32.xlu0 %v5981, 64
      %v6650 = vpop.permute.xlu0 %6649
      %6651 = vrot.lane.b32.xlu0 %v5982, 64
      %v6652 = vpop.permute.xlu0 %6651
      %6653 = vrot.lane.b32.xlu0 %v5983, 64
      %v6654 = vpop.permute.xlu0 %6653
      %6655 = vrot.lane.b32.xlu0 %v5984, 64
      %v6656 = vpop.permute.xlu0 %6655
      %6721 = vrot.lane.b32.xlu0 %v5985, 96
      %v6722 = vpop.permute.xlu0 %6721
      %6723 = vrot.lane.b32.xlu0 %v5986, 96
      %v6724 = vpop.permute.xlu0 %6723
      %6725 = vrot.lane.b32.xlu0 %v5987, 96
      %v6726 = vpop.permute.xlu0 %6725
      %6727 = vrot.lane.b32.xlu0 %v5988, 96
      %v6728 = vpop.permute.xlu0 %6727
      %6729 = vrot.lane.b32.xlu0 %v5989, 96
      %v6730 = vpop.permute.xlu0 %6729
      %6731 = vrot.lane.b32.xlu0 %v5990, 96
      %v6732 = vpop.permute.xlu0 %6731
      %6733 = vrot.lane.b32.xlu0 %v5991, 96
      %v6734 = vpop.permute.xlu0 %6733
      %6735 = vrot.lane.b32.xlu0 %v5992, 96
      %v6736 = vpop.permute.xlu0 %6735
      %6737 = vrot.lane.b32.xlu0 %v5993, 96
      %v6738 = vpop.permute.xlu0 %6737
      %6739 = vrot.lane.b32.xlu0 %v5994, 96
      %v6740 = vpop.permute.xlu0 %6739
      %6741 = vrot.lane.b32.xlu0 %v5995, 96
      %v6742 = vpop.permute.xlu0 %6741
      %6743 = vrot.lane.b32.xlu0 %v5996, 96
      %v6744 = vpop.permute.xlu0 %6743
      %6745 = vrot.lane.b32.xlu0 %v5997, 96
      %v6746 = vpop.permute.xlu0 %6745
      %6747 = vrot.lane.b32.xlu0 %v5998, 96
      %v6748 = vpop.permute.xlu0 %6747
      %6749 = vrot.lane.b32.xlu0 %v5999, 96
      %v6750 = vpop.permute.xlu0 %6749
      %6751 = vrot.lane.b32.xlu0 %v6000, 96
      %v6752 = vpop.permute.xlu0 %6751
      %6753 = vrot.lane.b32.xlu0 %v6001, 96
      %v6754 = vpop.permute.xlu0 %6753
      %6755 = vrot.lane.b32.xlu0 %v6002, 96
      %v6756 = vpop.permute.xlu0 %6755
      %6757 = vrot.lane.b32.xlu0 %v6003, 96
      %v6758 = vpop.permute.xlu0 %6757
      %6759 = vrot.lane.b32.xlu0 %v6004, 96
      %v6760 = vpop.permute.xlu0 %6759
      %6761 = vrot.lane.b32.xlu0 %v6005, 96
      %v6762 = vpop.permute.xlu0 %6761
      %6763 = vrot.lane.b32.xlu0 %v6006, 96
      %v6764 = vpop.permute.xlu0 %6763
      %6765 = vrot.lane.b32.xlu0 %v6007, 96
      %v6766 = vpop.permute.xlu0 %6765
      %6767 = vrot.lane.b32.xlu0 %v6008, 96
      %v6768 = vpop.permute.xlu0 %6767
      %6769 = vrot.lane.b32.xlu0 %v6009, 96
      %v6770 = vpop.permute.xlu0 %6769
      %6771 = vrot.lane.b32.xlu0 %v6010, 96
      %v6772 = vpop.permute.xlu0 %6771
      %6773 = vrot.lane.b32.xlu0 %v6011, 96
      %v6774 = vpop.permute.xlu0 %6773
      %6775 = vrot.lane.b32.xlu0 %v6012, 96
      %v6776 = vpop.permute.xlu0 %6775
      %6777 = vrot.lane.b32.xlu0 %v6013, 96
      %v6778 = vpop.permute.xlu0 %6777
      %6779 = vrot.lane.b32.xlu0 %v6014, 96
      %v6780 = vpop.permute.xlu0 %6779
      %6781 = vrot.lane.b32.xlu0 %v6015, 96
      %v6782 = vpop.permute.xlu0 %6781
      %6783 = vrot.lane.b32.xlu0 %v6016, 96
      %v6784 = vpop.permute.xlu0 %6783
      %v6817 = vsel %vm336, %v5760, %v6082
      %v6818 = vsel %vm336, %v5761, %v6084
      %v6819 = vsel %vm336, %v5762, %v6086
      %v6820 = vsel %vm336, %v5763, %v6088
      %v6821 = vsel %vm336, %v5764, %v6090
      %v6822 = vsel %vm336, %v5765, %v6092
      %v6823 = vsel %vm336, %v5766, %v6094
      %v6824 = vsel %vm336, %v5767, %v6096
      %v6825 = vsel %vm336, %v5768, %v6098
      %v6826 = vsel %vm336, %v5769, %v6100
      %v6827 = vsel %vm336, %v5770, %v6102
      %v6828 = vsel %vm336, %v5771, %v6104
      %v6829 = vsel %vm336, %v5772, %v6106
      %v6830 = vsel %vm336, %v5773, %v6108
      %v6831 = vsel %vm336, %v5774, %v6110
      %v6832 = vsel %vm336, %v5775, %v6112
      %v6833 = vsel %vm336, %v5776, %v6114
      %v6834 = vsel %vm336, %v5777, %v6116
      %v6835 = vsel %vm336, %v5778, %v6118
      %v6836 = vsel %vm336, %v5779, %v6120
      %v6837 = vsel %vm336, %v5780, %v6122
      %v6838 = vsel %vm336, %v5781, %v6124
      %v6839 = vsel %vm336, %v5782, %v6126
      %v6840 = vsel %vm336, %v5783, %v6128
      %v6841 = vsel %vm336, %v5784, %v6130
      %v6842 = vsel %vm336, %v5785, %v6132
      %v6843 = vsel %vm336, %v5786, %v6134
      %v6844 = vsel %vm336, %v5787, %v6136
      %v6845 = vsel %vm336, %v5788, %v6138
      %v6846 = vsel %vm336, %v5789, %v6140
      %v6847 = vsel %vm336, %v5790, %v6142
      %v6848 = vsel %vm336, %v5791, %v6144
      %v6849 = vsel %vm4222, %v6817, %v6210
      %v6850 = vsel %vm4222, %v6818, %v6212
      %v6851 = vsel %vm4222, %v6819, %v6214
      %v6852 = vsel %vm4222, %v6820, %v6216
      %v6853 = vsel %vm4222, %v6821, %v6218
      %v6854 = vsel %vm4222, %v6822, %v6220
      %v6855 = vsel %vm4222, %v6823, %v6222
      %v6856 = vsel %vm4222, %v6824, %v6224
      %v6857 = vsel %vm4222, %v6825, %v6226
      %v6858 = vsel %vm4222, %v6826, %v6228
      %v6859 = vsel %vm4222, %v6827, %v6230
      %v6860 = vsel %vm4222, %v6828, %v6232
      %v6861 = vsel %vm4222, %v6829, %v6234
      %v6862 = vsel %vm4222, %v6830, %v6236
      %v6863 = vsel %vm4222, %v6831, %v6238
      %v6864 = vsel %vm4222, %v6832, %v6240
      %v6865 = vsel %vm4222, %v6833, %v6242
      %v6866 = vsel %vm4222, %v6834, %v6244
      %v6867 = vsel %vm4222, %v6835, %v6246
      %v6868 = vsel %vm4222, %v6836, %v6248
      %v6869 = vsel %vm4222, %v6837, %v6250
      %v6870 = vsel %vm4222, %v6838, %v6252
      %v6871 = vsel %vm4222, %v6839, %v6254
      %v6872 = vsel %vm4222, %v6840, %v6256
      %v6873 = vsel %vm4222, %v6841, %v6258
      %v6874 = vsel %vm4222, %v6842, %v6260
      %v6875 = vsel %vm4222, %v6843, %v6262
      %v6876 = vsel %vm4222, %v6844, %v6264
      %v6877 = vsel %vm4222, %v6845, %v6266
      %v6878 = vsel %vm4222, %v6846, %v6268
      %v6879 = vsel %vm4222, %v6847, %v6270
      %v6880 = vsel %vm4222, %v6848, %v6272
      %v6881 = vsel %vm4255, %v6849, %v6338
      %v6882 = vsel %vm4255, %v6850, %v6340
      %v6883 = vsel %vm4255, %v6851, %v6342
      %v6884 = vsel %vm4255, %v6852, %v6344
      %v6885 = vsel %vm4255, %v6853, %v6346
      %v6886 = vsel %vm4255, %v6854, %v6348
      %v6887 = vsel %vm4255, %v6855, %v6350
      %v6888 = vsel %vm4255, %v6856, %v6352
      %v6889 = vsel %vm4255, %v6857, %v6354
      %v6890 = vsel %vm4255, %v6858, %v6356
      %v6891 = vsel %vm4255, %v6859, %v6358
      %v6892 = vsel %vm4255, %v6860, %v6360
      %v6893 = vsel %vm4255, %v6861, %v6362
      %v6894 = vsel %vm4255, %v6862, %v6364
      %v6895 = vsel %vm4255, %v6863, %v6366
      %v6896 = vsel %vm4255, %v6864, %v6368
      %v6897 = vsel %vm4255, %v6865, %v6370
      %v6898 = vsel %vm4255, %v6866, %v6372
      %v6899 = vsel %vm4255, %v6867, %v6374
      %v6900 = vsel %vm4255, %v6868, %v6376
      %v6901 = vsel %vm4255, %v6869, %v6378
      %v6902 = vsel %vm4255, %v6870, %v6380
      %v6903 = vsel %vm4255, %v6871, %v6382
      %v6904 = vsel %vm4255, %v6872, %v6384
      %v6905 = vsel %vm4255, %v6873, %v6386
      %v6906 = vsel %vm4255, %v6874, %v6388
      %v6907 = vsel %vm4255, %v6875, %v6390
      %v6908 = vsel %vm4255, %v6876, %v6392
      %v6909 = vsel %vm4255, %v6877, %v6394
      %v6910 = vsel %vm4255, %v6878, %v6396
      %v6911 = vsel %vm4255, %v6879, %v6398
      %v6912 = vsel %vm4255, %v6880, %v6400
      %v6913 = vsel %vm336, %v5888, %v6466
      %v6914 = vsel %vm336, %v5889, %v6468
      %v6915 = vsel %vm336, %v5890, %v6470
      %v6916 = vsel %vm336, %v5891, %v6472
      %v6917 = vsel %vm336, %v5892, %v6474
      %v6918 = vsel %vm336, %v5893, %v6476
      %v6919 = vsel %vm336, %v5894, %v6478
      %v6920 = vsel %vm336, %v5895, %v6480
      %v6921 = vsel %vm336, %v5896, %v6482
      %v6922 = vsel %vm336, %v5897, %v6484
      %v6923 = vsel %vm336, %v5898, %v6486
      %v6924 = vsel %vm336, %v5899, %v6488
      %v6925 = vsel %vm336, %v5900, %v6490
      %v6926 = vsel %vm336, %v5901, %v6492
      %v6927 = vsel %vm336, %v5902, %v6494
      %v6928 = vsel %vm336, %v5903, %v6496
      %v6929 = vsel %vm336, %v5904, %v6498
      %v6930 = vsel %vm336, %v5905, %v6500
      %v6931 = vsel %vm336, %v5906, %v6502
      %v6932 = vsel %vm336, %v5907, %v6504
      %v6933 = vsel %vm336, %v5908, %v6506
      %v6934 = vsel %vm336, %v5909, %v6508
      %v6935 = vsel %vm336, %v5910, %v6510
      %v6936 = vsel %vm336, %v5911, %v6512
      %v6937 = vsel %vm336, %v5912, %v6514
      %v6938 = vsel %vm336, %v5913, %v6516
      %v6939 = vsel %vm336, %v5914, %v6518
      %v6940 = vsel %vm336, %v5915, %v6520
      %v6941 = vsel %vm336, %v5916, %v6522
      %v6942 = vsel %vm336, %v5917, %v6524
      %v6943 = vsel %vm336, %v5918, %v6526
      %v6944 = vsel %vm336, %v5919, %v6528
      %v6945 = vsel %vm4222, %v6913, %v6594
      %v6946 = vsel %vm4222, %v6914, %v6596
      %v6947 = vsel %vm4222, %v6915, %v6598
      %v6948 = vsel %vm4222, %v6916, %v6600
      %v6949 = vsel %vm4222, %v6917, %v6602
      %v6950 = vsel %vm4222, %v6918, %v6604
      %v6951 = vsel %vm4222, %v6919, %v6606
      %v6952 = vsel %vm4222, %v6920, %v6608
      %v6953 = vsel %vm4222, %v6921, %v6610
      %v6954 = vsel %vm4222, %v6922, %v6612
      %v6955 = vsel %vm4222, %v6923, %v6614
      %v6956 = vsel %vm4222, %v6924, %v6616
      %v6957 = vsel %vm4222, %v6925, %v6618
      %v6958 = vsel %vm4222, %v6926, %v6620
      %v6959 = vsel %vm4222, %v6927, %v6622
      %v6960 = vsel %vm4222, %v6928, %v6624
      %v6961 = vsel %vm4222, %v6929, %v6626
      %v6962 = vsel %vm4222, %v6930, %v6628
      %v6963 = vsel %vm4222, %v6931, %v6630
      %v6964 = vsel %vm4222, %v6932, %v6632
      %v6965 = vsel %vm4222, %v6933, %v6634
      %v6966 = vsel %vm4222, %v6934, %v6636
      %v6967 = vsel %vm4222, %v6935, %v6638
      %v6968 = vsel %vm4222, %v6936, %v6640
      %v6969 = vsel %vm4222, %v6937, %v6642
      %v6970 = vsel %vm4222, %v6938, %v6644
      %v6971 = vsel %vm4222, %v6939, %v6646
      %v6972 = vsel %vm4222, %v6940, %v6648
      %v6973 = vsel %vm4222, %v6941, %v6650
      %v6974 = vsel %vm4222, %v6942, %v6652
      %v6975 = vsel %vm4222, %v6943, %v6654
      %v6976 = vsel %vm4222, %v6944, %v6656
      %v6977 = vsel %vm4255, %v6945, %v6722
      %v6978 = vsel %vm4255, %v6946, %v6724
      %v6979 = vsel %vm4255, %v6947, %v6726
      %v6980 = vsel %vm4255, %v6948, %v6728
      %v6981 = vsel %vm4255, %v6949, %v6730
      %v6982 = vsel %vm4255, %v6950, %v6732
      %v6983 = vsel %vm4255, %v6951, %v6734
      %v6984 = vsel %vm4255, %v6952, %v6736
      %v6985 = vsel %vm4255, %v6953, %v6738
      %v6986 = vsel %vm4255, %v6954, %v6740
      %v6987 = vsel %vm4255, %v6955, %v6742
      %v6988 = vsel %vm4255, %v6956, %v6744
      %v6989 = vsel %vm4255, %v6957, %v6746
      %v6990 = vsel %vm4255, %v6958, %v6748
      %v6991 = vsel %vm4255, %v6959, %v6750
      %v6992 = vsel %vm4255, %v6960, %v6752
      %v6993 = vsel %vm4255, %v6961, %v6754
      %v6994 = vsel %vm4255, %v6962, %v6756
      %v6995 = vsel %vm4255, %v6963, %v6758
      %v6996 = vsel %vm4255, %v6964, %v6760
      %v6997 = vsel %vm4255, %v6965, %v6762
      %v6998 = vsel %vm4255, %v6966, %v6764
      %v6999 = vsel %vm4255, %v6967, %v6766
      %v7000 = vsel %vm4255, %v6968, %v6768
      %v7001 = vsel %vm4255, %v6969, %v6770
      %v7002 = vsel %vm4255, %v6970, %v6772
      %v7003 = vsel %vm4255, %v6971, %v6774
      %v7004 = vsel %vm4255, %v6972, %v6776
      %v7005 = vsel %vm4255, %v6973, %v6778
      %v7006 = vsel %vm4255, %v6974, %v6780
      %v7007 = vsel %vm4255, %v6975, %v6782
      %v7008 = vsel %vm4255, %v6976, %v6784
      %v7009 = vpack.c.bf16 %v6882, %v6881
      %v7010 = vpack.c.bf16 %v6978, %v6977
      %v7011 = vpack.c.bf16 %v6018, %v6017
      %v7012 = vpack.c.bf16 %v6884, %v6883
      %v7013 = vpack.c.bf16 %v6980, %v6979
      %v7014 = vpack.c.bf16 %v6020, %v6019
      %v7015 = vpack.c.bf16 %v6886, %v6885
      %v7016 = vpack.c.bf16 %v6982, %v6981
      %v7017 = vpack.c.bf16 %v6022, %v6021
      %v7018 = vpack.c.bf16 %v6888, %v6887
      %v7019 = vpack.c.bf16 %v6984, %v6983
      %v7020 = vpack.c.bf16 %v6024, %v6023
      %v7021 = vpack.c.bf16 %v6890, %v6889
      %v7022 = vpack.c.bf16 %v6986, %v6985
      %v7023 = vpack.c.bf16 %v6026, %v6025
      %v7024 = vpack.c.bf16 %v6892, %v6891
      %v7025 = vpack.c.bf16 %v6988, %v6987
      %v7026 = vpack.c.bf16 %v6028, %v6027
      %v7027 = vpack.c.bf16 %v6894, %v6893
      %v7028 = vpack.c.bf16 %v6990, %v6989
      %v7029 = vpack.c.bf16 %v6030, %v6029
      %v7030 = vpack.c.bf16 %v6896, %v6895
      %v7031 = vpack.c.bf16 %v6992, %v6991
      %v7032 = vpack.c.bf16 %v6032, %v6031
      %v7033 = vpack.c.bf16 %v6898, %v6897
      %v7034 = vpack.c.bf16 %v6994, %v6993
      %v7035 = vpack.c.bf16 %v6034, %v6033
      %v7036 = vpack.c.bf16 %v6900, %v6899
      %v7037 = vpack.c.bf16 %v6996, %v6995
      %v7038 = vpack.c.bf16 %v6036, %v6035
      %v7039 = vpack.c.bf16 %v6902, %v6901
      %v7040 = vpack.c.bf16 %v6998, %v6997
      %v7041 = vpack.c.bf16 %v6038, %v6037
      %v7042 = vpack.c.bf16 %v6904, %v6903
      %v7043 = vpack.c.bf16 %v7000, %v6999
      %v7044 = vpack.c.bf16 %v6040, %v6039
      %v7045 = vpack.c.bf16 %v6906, %v6905
      %v7046 = vpack.c.bf16 %v7002, %v7001
      %v7047 = vpack.c.bf16 %v6042, %v6041
      %v7048 = vpack.c.bf16 %v6908, %v6907
      %v7049 = vpack.c.bf16 %v7004, %v7003
      %v7050 = vpack.c.bf16 %v6044, %v6043
      %v7051 = vpack.c.bf16 %v6910, %v6909
      %v7052 = vpack.c.bf16 %v7006, %v7005
      %v7053 = vpack.c.bf16 %v6046, %v6045
      %v7054 = vpack.c.bf16 %v6912, %v6911
      %v7055 = vpack.c.bf16 %v7008, %v7007
      %v7056 = vpack.c.bf16 %v6048, %v6047
      %v7057 = vld [vmem:[%s5] sm:$0xf]
      %v7058 = vld [vmem:[%s5 + $0x4] sm:$0xf]
      %v7059 = vld [vmem:[%s5 + $0x8] sm:$0xf]
      %v7060 = vld [vmem:[%s5 + $0xc] sm:$0xf]
      %v7061 = vld [vmem:[%s5 + $0x10] sm:$0xf]
      %v7062 = vld [vmem:[%s5 + $0x14] sm:$0xf]
      %v7063 = vld [vmem:[%s5 + $0x18] sm:$0xf]
      %v7064 = vld [vmem:[%s5 + $0x1c] sm:$0xf]
      %v7065 = vld [vmem:[%s5 + $0x20] sm:$0xf]
      %v7066 = vld [vmem:[%s5 + $0x24] sm:$0xf]
      %v7067 = vld [vmem:[%s5 + $0x28] sm:$0xf]
      %v7068 = vld [vmem:[%s5 + $0x2c] sm:$0xf]
      %v7069 = vld [vmem:[%s5 + $0x30] sm:$0xf]
      %v7070 = vld [vmem:[%s5 + $0x34] sm:$0xf]
      %v7071 = vld [vmem:[%s5 + $0x38] sm:$0xf]
      %v7072 = vld [vmem:[%s5 + $0x3c] sm:$0xf]
      %v7073 = vld [vmem:[%s5 + $0x40] sm:$0xf]
      %v7074 = vld [vmem:[%s5 + $0x44] sm:$0xf]
      %v7075 = vld [vmem:[%s5 + $0x48] sm:$0xf]
      %v7076 = vld [vmem:[%s5 + $0x4c] sm:$0xf]
      %v7077 = vld [vmem:[%s5 + $0x50] sm:$0xf]
      %v7078 = vld [vmem:[%s5 + $0x54] sm:$0xf]
      %v7079 = vld [vmem:[%s5 + $0x58] sm:$0xf]
      %v7080 = vld [vmem:[%s5 + $0x5c] sm:$0xf]
      %v7081 = vld [vmem:[%s5 + $0x60] sm:$0xf]
      %v7082 = vld [vmem:[%s5 + $0x64] sm:$0xf]
      %v7083 = vld [vmem:[%s5 + $0x68] sm:$0xf]
      %v7084 = vld [vmem:[%s5 + $0x6c] sm:$0xf]
      %v7085 = vld [vmem:[%s5 + $0x70] sm:$0xf]
      %v7086 = vld [vmem:[%s5 + $0x74] sm:$0xf]
      %v7087 = vld [vmem:[%s5 + $0x78] sm:$0xf]
      %v7088 = vld [vmem:[%s5 + $0x7c] sm:$0xf]
      %v7089 = vld [vmem:[%s5 + $0x80] sm:$0xf]
      %v7090 = vld [vmem:[%s5 + $0x84] sm:$0xf]
      %v7091 = vld [vmem:[%s5 + $0x88] sm:$0xf]
      %v7092 = vld [vmem:[%s5 + $0x8c] sm:$0xf]
      %v7093 = vld [vmem:[%s6] sm:$0x1]
      %v7095 = vperm.slane %v7093, 0
      %v7133 = vunpack.c.l.b16 %v7057
      %v7134 = vunpack.c.l.b16 %v7058
      %v7135 = vunpack.c.l.b16 %v7059
      %v7136 = vunpack.c.l.b16 %v7060
      %v7137 = vunpack.c.l.b16 %v7061
      %v7138 = vunpack.c.l.b16 %v7062
      %v7139 = vunpack.c.l.b16 %v7063
      %v7140 = vunpack.c.l.b16 %v7064
      %v7141 = vunpack.c.l.b16 %v7065
      %v7142 = vunpack.c.l.b16 %v7066
      %v7143 = vunpack.c.l.b16 %v7067
      %v7144 = vunpack.c.l.b16 %v7068
      %v7145 = vunpack.c.l.b16 %v7069
      %v7146 = vunpack.c.l.b16 %v7070
      %v7147 = vunpack.c.l.b16 %v7071
      %v7148 = vunpack.c.l.b16 %v7072
      %v7149 = vunpack.c.l.b16 %v7073
      %v7150 = vunpack.c.l.b16 %v7074
      %v7151 = vunpack.c.l.b16 %v7075
      %v7152 = vunpack.c.l.b16 %v7076
      %v7153 = vunpack.c.l.b16 %v7077
      %v7154 = vunpack.c.l.b16 %v7078
      %v7155 = vunpack.c.l.b16 %v7079
      %v7156 = vunpack.c.l.b16 %v7080
      %v7157 = vunpack.c.l.b16 %v7081
      %v7158 = vunpack.c.l.b16 %v7082
      %v7159 = vunpack.c.l.b16 %v7083
      %v7160 = vunpack.c.l.b16 %v7084
      %v7161 = vunpack.c.l.b16 %v7085
      %v7162 = vunpack.c.l.b16 %v7086
      %v7163 = vunpack.c.l.b16 %v7087
      %v7164 = vunpack.c.l.b16 %v7088
      %v7165 = vunpack.c.l.b16 %v7089
      %v7166 = vunpack.c.l.b16 %v7090
      %v7167 = vunpack.c.l.b16 %v7091
      %v7168 = vunpack.c.l.b16 %v7092
      %v7169 = vpack.c.b16 %v7134, %v7133
      %v7170 = vpack.c.b16 %v7136, %v7135
      %v7171 = vpack.c.b16 %v7138, %v7137
      %v7172 = vpack.c.b16 %v7140, %v7139
      %v7173 = vpack.c.b16 %v7142, %v7141
      %v7174 = vpack.c.b16 %v7144, %v7143
      %v7175 = vpack.c.b16 %v7146, %v7145
      %v7176 = vpack.c.b16 %v7148, %v7147
      %v7177 = vpack.c.b16 %v7150, %v7149
      %v7178 = vpack.c.b16 %v7152, %v7151
      %v7179 = vpack.c.b16 %v7154, %v7153
      %v7180 = vpack.c.b16 %v7156, %v7155
      %v7181 = vpack.c.b16 %v7158, %v7157
      %v7182 = vpack.c.b16 %v7160, %v7159
      %v7183 = vpack.c.b16 %v7162, %v7161
      %v7184 = vpack.c.b16 %v7164, %v7163
      %v7185 = vpack.c.b16 %v7166, %v7165
      %v7186 = vpack.c.b16 %v7168, %v7167
      %v7206 = vsel %vm336, %v7011, 0
      %v7209 = vsel %vm336, %v7014, 0
      %v7212 = vsel %vm336, %v7017, 0
      %v7215 = vsel %vm336, %v7020, 0
      %v7218 = vsel %vm336, %v7023, 0
      %v7221 = vsel %vm336, %v7026, 0
      %v7224 = vsel %vm336, %v7029, 0
      %v7227 = vsel %vm336, %v7032, 0
      %v7230 = vsel %vm336, %v7035, 0
      %v7233 = vsel %vm336, %v7038, 0
      %v7236 = vsel %vm336, %v7041, 0
      %v7239 = vsel %vm336, %v7044, 0
      %v7242 = vsel %vm336, %v7047, 0
      %v7245 = vsel %vm336, %v7050, 0
      %v7248 = vsel %vm336, %v7053, 0
      %v7251 = vsel %vm336, %v7056, 0
      %7253 = vmatpush.bf16.msra.mxu0 %v7176
      %7254 = vmatpush.bf16.msra.mxu0 %v7175
      %7255 = vmatpush.bf16.msra.mxu0 %v7174
      %7256 = vmatpush.bf16.msra.mxu0 %v7173
      %7257 = vmatpush.bf16.msra.mxu0 %v7172
      %7258 = vmatpush.bf16.msra.mxu0 %v7171
      %7259 = vmatpush.bf16.msra.mxu0 %v7170
      %7260 = vmatpush.bf16.msra.mxu0 %v7169
      %7261 = vmatmul.bf16.gmra.mxu0 %v7009
      %v7262 = vpop.f32.mrf.mxu0
      %v7263 = vadd.f32 %v7095, %v7262
      %v7264 = vpop.f32.mrf.mxu0
      %v7265 = vadd.f32 %v7095, %v7264
      %7266 = vmatmul.bf16.gmra.mxu0 %v7012
      %v7267 = vpop.f32.mrf.mxu0
      %v7268 = vadd.f32 %v7095, %v7267
      %v7269 = vpop.f32.mrf.mxu0
      %v7270 = vadd.f32 %v7095, %v7269
      %7271 = vmatmul.bf16.gmra.mxu0 %v7015
      %v7272 = vpop.f32.mrf.mxu0
      %v7273 = vadd.f32 %v7095, %v7272
      %v7274 = vpop.f32.mrf.mxu0
      %v7275 = vadd.f32 %v7095, %v7274
      %7276 = vmatmul.bf16.gmra.mxu0 %v7018
      %v7277 = vpop.f32.mrf.mxu0
      %v7278 = vadd.f32 %v7095, %v7277
      %v7279 = vpop.f32.mrf.mxu0
      %v7280 = vadd.f32 %v7095, %v7279
      %7281 = vmatmul.bf16.gmra.mxu0 %v7021
      %v7282 = vpop.f32.mrf.mxu0
      %v7283 = vadd.f32 %v7095, %v7282
      %v7284 = vpop.f32.mrf.mxu0
      %v7285 = vadd.f32 %v7095, %v7284
      %7286 = vmatmul.bf16.gmra.mxu0 %v7024
      %v7287 = vpop.f32.mrf.mxu0
      %v7288 = vadd.f32 %v7095, %v7287
      %v7289 = vpop.f32.mrf.mxu0
      %v7290 = vadd.f32 %v7095, %v7289
      %7291 = vmatmul.bf16.gmra.mxu0 %v7027
      %v7292 = vpop.f32.mrf.mxu0
      %v7293 = vadd.f32 %v7095, %v7292
      %v7294 = vpop.f32.mrf.mxu0
      %v7295 = vadd.f32 %v7095, %v7294
      %7296 = vmatmul.bf16.gmra.mxu0 %v7030
      %v7297 = vpop.f32.mrf.mxu0
      %v7298 = vadd.f32 %v7095, %v7297
      %v7299 = vpop.f32.mrf.mxu0
      %v7300 = vadd.f32 %v7095, %v7299
      %7301 = vmatmul.bf16.gmra.mxu0 %v7033
      %v7302 = vpop.f32.mrf.mxu0
      %v7303 = vadd.f32 %v7095, %v7302
      %v7304 = vpop.f32.mrf.mxu0
      %v7305 = vadd.f32 %v7095, %v7304
      %7306 = vmatmul.bf16.gmra.mxu0 %v7036
      %v7307 = vpop.f32.mrf.mxu0
      %v7308 = vadd.f32 %v7095, %v7307
      %v7309 = vpop.f32.mrf.mxu0
      %v7310 = vadd.f32 %v7095, %v7309
      %7311 = vmatmul.bf16.gmra.mxu0 %v7039
      %v7312 = vpop.f32.mrf.mxu0
      %v7313 = vadd.f32 %v7095, %v7312
      %v7314 = vpop.f32.mrf.mxu0
      %v7315 = vadd.f32 %v7095, %v7314
      %7316 = vmatmul.bf16.gmra.mxu0 %v7042
      %v7317 = vpop.f32.mrf.mxu0
      %v7318 = vadd.f32 %v7095, %v7317
      %v7319 = vpop.f32.mrf.mxu0
      %v7320 = vadd.f32 %v7095, %v7319
      %7321 = vmatmul.bf16.gmra.mxu0 %v7045
      %v7322 = vpop.f32.mrf.mxu0
      %v7323 = vadd.f32 %v7095, %v7322
      %v7324 = vpop.f32.mrf.mxu0
      %v7325 = vadd.f32 %v7095, %v7324
      %7326 = vmatmul.bf16.gmra.mxu0 %v7048
      %v7327 = vpop.f32.mrf.mxu0
      %v7328 = vadd.f32 %v7095, %v7327
      %v7329 = vpop.f32.mrf.mxu0
      %v7330 = vadd.f32 %v7095, %v7329
      %7331 = vmatmul.bf16.gmra.mxu0 %v7051
      %v7332 = vpop.f32.mrf.mxu0
      %v7333 = vadd.f32 %v7095, %v7332
      %v7334 = vpop.f32.mrf.mxu0
      %v7335 = vadd.f32 %v7095, %v7334
      %7336 = vmatmul.bf16.gmra.mxu0 %v7054
      %v7337 = vpop.f32.mrf.mxu0
      %v7338 = vadd.f32 %v7095, %v7337
      %v7339 = vpop.f32.mrf.mxu0
      %v7340 = vadd.f32 %v7095, %v7339
      %7341 = vdwg.mxu0
      %7342 = vmatpush.bf16.msra.mxu0 %v7184
      %7343 = vmatpush.bf16.msra.mxu0 %v7183
      %7344 = vmatpush.bf16.msra.mxu0 %v7182
      %7345 = vmatpush.bf16.msra.mxu0 %v7181
      %7346 = vmatpush.bf16.msra.mxu0 %v7180
      %7347 = vmatpush.bf16.msra.mxu0 %v7179
      %7348 = vmatpush.bf16.msra.mxu0 %v7178
      %7349 = vmatpush.bf16.msra.mxu0 %v7177
      %7350 = vmatmul.bf16.gmra.mxu0 %v7010
      %v7351 = vpop.f32.mrf.mxu0
      %v7352 = vadd.f32 %v7263, %v7351
      %v7353 = vpop.f32.mrf.mxu0
      %v7354 = vadd.f32 %v7265, %v7353
      %7355 = vmatmul.bf16.gmra.mxu0 %v7013
      %v7356 = vpop.f32.mrf.mxu0
      %v7357 = vadd.f32 %v7268, %v7356
      %v7358 = vpop.f32.mrf.mxu0
      %v7359 = vadd.f32 %v7270, %v7358
      %7360 = vmatmul.bf16.gmra.mxu0 %v7016
      %v7361 = vpop.f32.mrf.mxu0
      %v7362 = vadd.f32 %v7273, %v7361
      %v7363 = vpop.f32.mrf.mxu0
      %v7364 = vadd.f32 %v7275, %v7363
      %7365 = vmatmul.bf16.gmra.mxu0 %v7019
      %v7366 = vpop.f32.mrf.mxu0
      %v7367 = vadd.f32 %v7278, %v7366
      %v7368 = vpop.f32.mrf.mxu0
      %v7369 = vadd.f32 %v7280, %v7368
      %7370 = vmatmul.bf16.gmra.mxu0 %v7022
      %v7371 = vpop.f32.mrf.mxu0
      %v7372 = vadd.f32 %v7283, %v7371
      %v7373 = vpop.f32.mrf.mxu0
      %v7374 = vadd.f32 %v7285, %v7373
      %7375 = vmatmul.bf16.gmra.mxu0 %v7025
      %v7376 = vpop.f32.mrf.mxu0
      %v7377 = vadd.f32 %v7288, %v7376
      %v7378 = vpop.f32.mrf.mxu0
      %v7379 = vadd.f32 %v7290, %v7378
      %7380 = vmatmul.bf16.gmra.mxu0 %v7028
      %v7381 = vpop.f32.mrf.mxu0
      %v7382 = vadd.f32 %v7293, %v7381
      %v7383 = vpop.f32.mrf.mxu0
      %v7384 = vadd.f32 %v7295, %v7383
      %7385 = vmatmul.bf16.gmra.mxu0 %v7031
      %v7386 = vpop.f32.mrf.mxu0
      %v7387 = vadd.f32 %v7298, %v7386
      %v7388 = vpop.f32.mrf.mxu0
      %v7389 = vadd.f32 %v7300, %v7388
      %7390 = vmatmul.bf16.gmra.mxu0 %v7034
      %v7391 = vpop.f32.mrf.mxu0
      %v7392 = vadd.f32 %v7303, %v7391
      %v7393 = vpop.f32.mrf.mxu0
      %v7394 = vadd.f32 %v7305, %v7393
      %7395 = vmatmul.bf16.gmra.mxu0 %v7037
      %v7396 = vpop.f32.mrf.mxu0
      %v7397 = vadd.f32 %v7308, %v7396
      %v7398 = vpop.f32.mrf.mxu0
      %v7399 = vadd.f32 %v7310, %v7398
      %7400 = vmatmul.bf16.gmra.mxu0 %v7040
      %v7401 = vpop.f32.mrf.mxu0
      %v7402 = vadd.f32 %v7313, %v7401
      %v7403 = vpop.f32.mrf.mxu0
      %v7404 = vadd.f32 %v7315, %v7403
      %7405 = vmatmul.bf16.gmra.mxu0 %v7043
      %v7406 = vpop.f32.mrf.mxu0
      %v7407 = vadd.f32 %v7318, %v7406
      %v7408 = vpop.f32.mrf.mxu0
      %v7409 = vadd.f32 %v7320, %v7408
      %7410 = vmatmul.bf16.gmra.mxu0 %v7046
      %v7411 = vpop.f32.mrf.mxu0
      %v7412 = vadd.f32 %v7323, %v7411
      %v7413 = vpop.f32.mrf.mxu0
      %v7414 = vadd.f32 %v7325, %v7413
      %7415 = vmatmul.bf16.gmra.mxu0 %v7049
      %v7416 = vpop.f32.mrf.mxu0
      %v7417 = vadd.f32 %v7328, %v7416
      %v7418 = vpop.f32.mrf.mxu0
      %v7419 = vadd.f32 %v7330, %v7418
      %7420 = vmatmul.bf16.gmra.mxu0 %v7052
      %v7421 = vpop.f32.mrf.mxu0
      %v7422 = vadd.f32 %v7333, %v7421
      %v7423 = vpop.f32.mrf.mxu0
      %v7424 = vadd.f32 %v7335, %v7423
      %7425 = vmatmul.bf16.gmra.mxu0 %v7055
      %v7426 = vpop.f32.mrf.mxu0
      %v7427 = vadd.f32 %v7338, %v7426
      %v7428 = vpop.f32.mrf.mxu0
      %v7429 = vadd.f32 %v7340, %v7428
      %7430 = vdwg.mxu0
      %7431 = vmatpush.bf16.msra.mxu0 0
      %7432 = vmatpush.bf16.msra.mxu0 0
      %7433 = vmatpush.bf16.msra.mxu0 0
      %7434 = vmatpush.bf16.msra.mxu0 0
      %7435 = vmatpush.bf16.msra.mxu0 0
      %7436 = vmatpush.bf16.msra.mxu0 0
      %7437 = vmatpush.bf16.msra.mxu0 %v7186
      %7438 = vmatpush.bf16.msra.mxu0 %v7185
      %7439 = vmatmul.bf16.gmra.mxu0 %v7206
      %v7440 = vpop.f32.mrf.mxu0
      %v7441 = vadd.f32 %v7352, %v7440
      %v7442 = vpop.f32.mrf.mxu0
      %v7443 = vadd.f32 %v7354, %v7442
      %7444 = vmatmul.bf16.gmra.mxu0 %v7209
      %v7445 = vpop.f32.mrf.mxu0
      %v7446 = vadd.f32 %v7357, %v7445
      %v7447 = vpop.f32.mrf.mxu0
      %v7448 = vadd.f32 %v7359, %v7447
      %7449 = vmatmul.bf16.gmra.mxu0 %v7212
      %v7450 = vpop.f32.mrf.mxu0
      %v7451 = vadd.f32 %v7362, %v7450
      %v7452 = vpop.f32.mrf.mxu0
      %v7453 = vadd.f32 %v7364, %v7452
      %7454 = vmatmul.bf16.gmra.mxu0 %v7215
      %v7455 = vpop.f32.mrf.mxu0
      %v7456 = vadd.f32 %v7367, %v7455
      %v7457 = vpop.f32.mrf.mxu0
      %v7458 = vadd.f32 %v7369, %v7457
      %7459 = vmatmul.bf16.gmra.mxu0 %v7218
      %v7460 = vpop.f32.mrf.mxu0
      %v7461 = vadd.f32 %v7372, %v7460
      %v7462 = vpop.f32.mrf.mxu0
      %v7463 = vadd.f32 %v7374, %v7462
      %7464 = vmatmul.bf16.gmra.mxu0 %v7221
      %v7465 = vpop.f32.mrf.mxu0
      %v7466 = vadd.f32 %v7377, %v7465
      %v7467 = vpop.f32.mrf.mxu0
      %v7468 = vadd.f32 %v7379, %v7467
      %7469 = vmatmul.bf16.gmra.mxu0 %v7224
      %v7470 = vpop.f32.mrf.mxu0
      %v7471 = vadd.f32 %v7382, %v7470
      %v7472 = vpop.f32.mrf.mxu0
      %v7473 = vadd.f32 %v7384, %v7472
      %7474 = vmatmul.bf16.gmra.mxu0 %v7227
      %v7475 = vpop.f32.mrf.mxu0
      %v7476 = vadd.f32 %v7387, %v7475
      %v7477 = vpop.f32.mrf.mxu0
      %v7478 = vadd.f32 %v7389, %v7477
      %7479 = vmatmul.bf16.gmra.mxu0 %v7230
      %v7480 = vpop.f32.mrf.mxu0
      %v7481 = vadd.f32 %v7392, %v7480
      %v7482 = vpop.f32.mrf.mxu0
      %v7483 = vadd.f32 %v7394, %v7482
      %7484 = vmatmul.bf16.gmra.mxu0 %v7233
      %v7485 = vpop.f32.mrf.mxu0
      %v7486 = vadd.f32 %v7397, %v7485
      %v7487 = vpop.f32.mrf.mxu0
      %v7488 = vadd.f32 %v7399, %v7487
      %7489 = vmatmul.bf16.gmra.mxu0 %v7236
      %v7490 = vpop.f32.mrf.mxu0
      %v7491 = vadd.f32 %v7402, %v7490
      %v7492 = vpop.f32.mrf.mxu0
      %v7493 = vadd.f32 %v7404, %v7492
      %7494 = vmatmul.bf16.gmra.mxu0 %v7239
      %v7495 = vpop.f32.mrf.mxu0
      %v7496 = vadd.f32 %v7407, %v7495
      %v7497 = vpop.f32.mrf.mxu0
      %v7498 = vadd.f32 %v7409, %v7497
      %7499 = vmatmul.bf16.gmra.mxu0 %v7242
      %v7500 = vpop.f32.mrf.mxu0
      %v7501 = vadd.f32 %v7412, %v7500
      %v7502 = vpop.f32.mrf.mxu0
      %v7503 = vadd.f32 %v7414, %v7502
      %7504 = vmatmul.bf16.gmra.mxu0 %v7245
      %v7505 = vpop.f32.mrf.mxu0
      %v7506 = vadd.f32 %v7417, %v7505
      %v7507 = vpop.f32.mrf.mxu0
      %v7508 = vadd.f32 %v7419, %v7507
      %7509 = vmatmul.bf16.gmra.mxu0 %v7248
      %v7510 = vpop.f32.mrf.mxu0
      %v7511 = vadd.f32 %v7422, %v7510
      %v7512 = vpop.f32.mrf.mxu0
      %v7513 = vadd.f32 %v7424, %v7512
      %7514 = vmatmul.bf16.gmra.mxu0 %v7251
      %v7515 = vpop.f32.mrf.mxu0
      %v7516 = vadd.f32 %v7427, %v7515
      %v7517 = vpop.f32.mrf.mxu0
      %v7518 = vadd.f32 %v7429, %v7517
      %7519 = vdwg.mxu0
      %v7520 = vxor.u32 %v7441, 2147483648
      %v7521 = vxor.u32 %v7443, 2147483648
      %v7522 = vxor.u32 %v7446, 2147483648
      %v7523 = vxor.u32 %v7448, 2147483648
      %v7524 = vxor.u32 %v7451, 2147483648
      %v7525 = vxor.u32 %v7453, 2147483648
      %v7526 = vxor.u32 %v7456, 2147483648
      %v7527 = vxor.u32 %v7458, 2147483648
      %v7528 = vxor.u32 %v7461, 2147483648
      %v7529 = vxor.u32 %v7463, 2147483648
      %v7530 = vxor.u32 %v7466, 2147483648
      %v7531 = vxor.u32 %v7468, 2147483648
      %v7532 = vxor.u32 %v7471, 2147483648
      %v7533 = vxor.u32 %v7473, 2147483648
      %v7534 = vxor.u32 %v7476, 2147483648
      %v7535 = vxor.u32 %v7478, 2147483648
      %v7536 = vxor.u32 %v7481, 2147483648
      %v7537 = vxor.u32 %v7483, 2147483648
      %v7538 = vxor.u32 %v7486, 2147483648
      %v7539 = vxor.u32 %v7488, 2147483648
      %v7540 = vxor.u32 %v7491, 2147483648
      %v7541 = vxor.u32 %v7493, 2147483648
      %v7542 = vxor.u32 %v7496, 2147483648
      %v7543 = vxor.u32 %v7498, 2147483648
      %v7544 = vxor.u32 %v7501, 2147483648
      %v7545 = vxor.u32 %v7503, 2147483648
      %v7546 = vxor.u32 %v7506, 2147483648
      %v7547 = vxor.u32 %v7508, 2147483648
      %v7548 = vxor.u32 %v7511, 2147483648
      %v7549 = vxor.u32 %v7513, 2147483648
      %v7550 = vxor.u32 %v7516, 2147483648
      %v7551 = vxor.u32 %v7518, 2147483648
      %v7552 = vmul.f32 %v7520, 1.442695
      %v7553 = vpow.pop %v7552
      %v7554 = vmul.f32 %v7521, 1.442695
      %v7555 = vpow.pop %v7554
      %v7556 = vmul.f32 %v7522, 1.442695
      %v7557 = vpow.pop %v7556
      %v7558 = vmul.f32 %v7523, 1.442695
      %v7559 = vpow.pop %v7558
      %v7560 = vmul.f32 %v7524, 1.442695
      %v7561 = vpow.pop %v7560
      %v7562 = vmul.f32 %v7525, 1.442695
      %v7563 = vpow.pop %v7562
      %v7564 = vmul.f32 %v7526, 1.442695
      %v7565 = vpow.pop %v7564
      %v7566 = vmul.f32 %v7527, 1.442695
      %v7567 = vpow.pop %v7566
      %v7568 = vmul.f32 %v7528, 1.442695
      %v7569 = vpow.pop %v7568
      %v7570 = vmul.f32 %v7529, 1.442695
      %v7571 = vpow.pop %v7570
      %v7572 = vmul.f32 %v7530, 1.442695
      %v7573 = vpow.pop %v7572
      %v7574 = vmul.f32 %v7531, 1.442695
      %v7575 = vpow.pop %v7574
      %v7576 = vmul.f32 %v7532, 1.442695
      %v7577 = vpow.pop %v7576
      %v7578 = vmul.f32 %v7533, 1.442695
      %v7579 = vpow.pop %v7578
      %v7580 = vmul.f32 %v7534, 1.442695
      %v7581 = vpow.pop %v7580
      %v7582 = vmul.f32 %v7535, 1.442695
      %v7583 = vpow.pop %v7582
      %v7584 = vmul.f32 %v7536, 1.442695
      %v7585 = vpow.pop %v7584
      %v7586 = vmul.f32 %v7537, 1.442695
      %v7587 = vpow.pop %v7586
      %v7588 = vmul.f32 %v7538, 1.442695
      %v7589 = vpow.pop %v7588
      %v7590 = vmul.f32 %v7539, 1.442695
      %v7591 = vpow.pop %v7590
      %v7592 = vmul.f32 %v7540, 1.442695
      %v7593 = vpow.pop %v7592
      %v7594 = vmul.f32 %v7541, 1.442695
      %v7595 = vpow.pop %v7594
      %v7596 = vmul.f32 %v7542, 1.442695
      %v7597 = vpow.pop %v7596
      %v7598 = vmul.f32 %v7543, 1.442695
      %v7599 = vpow.pop %v7598
      %v7600 = vmul.f32 %v7544, 1.442695
      %v7601 = vpow.pop %v7600
      %v7602 = vmul.f32 %v7545, 1.442695
      %v7603 = vpow.pop %v7602
      %v7604 = vmul.f32 %v7546, 1.442695
      %v7605 = vpow.pop %v7604
      %v7606 = vmul.f32 %v7547, 1.442695
      %v7607 = vpow.pop %v7606
      %v7608 = vmul.f32 %v7548, 1.442695
      %v7609 = vpow.pop %v7608
      %v7610 = vmul.f32 %v7549, 1.442695
      %v7611 = vpow.pop %v7610
      %v7612 = vmul.f32 %v7550, 1.442695
      %v7613 = vpow.pop %v7612
      %v7614 = vmul.f32 %v7551, 1.442695
      %v7615 = vpow.pop %v7614
      %v7616 = vadd.f32 %v7553, 1.0
      %v7617 = vadd.f32 %v7555, 1.0
      %v7618 = vadd.f32 %v7557, 1.0
      %v7619 = vadd.f32 %v7559, 1.0
      %v7620 = vadd.f32 %v7561, 1.0
      %v7621 = vadd.f32 %v7563, 1.0
      %v7622 = vadd.f32 %v7565, 1.0
      %v7623 = vadd.f32 %v7567, 1.0
      %v7624 = vadd.f32 %v7569, 1.0
      %v7625 = vadd.f32 %v7571, 1.0
      %v7626 = vadd.f32 %v7573, 1.0
      %v7627 = vadd.f32 %v7575, 1.0
      %v7628 = vadd.f32 %v7577, 1.0
      %v7629 = vadd.f32 %v7579, 1.0
      %v7630 = vadd.f32 %v7581, 1.0
      %v7631 = vadd.f32 %v7583, 1.0
      %v7632 = vadd.f32 %v7585, 1.0
      %v7633 = vadd.f32 %v7587, 1.0
      %v7634 = vadd.f32 %v7589, 1.0
      %v7635 = vadd.f32 %v7591, 1.0
      %v7636 = vadd.f32 %v7593, 1.0
      %v7637 = vadd.f32 %v7595, 1.0
      %v7638 = vadd.f32 %v7597, 1.0
      %v7639 = vadd.f32 %v7599, 1.0
      %v7640 = vadd.f32 %v7601, 1.0
      %v7641 = vadd.f32 %v7603, 1.0
      %v7642 = vadd.f32 %v7605, 1.0
      %v7643 = vadd.f32 %v7607, 1.0
      %v7644 = vadd.f32 %v7609, 1.0
      %v7645 = vadd.f32 %v7611, 1.0
      %v7646 = vadd.f32 %v7613, 1.0
      %v7647 = vadd.f32 %v7615, 1.0
      %v7648 = vrcp.pop %v7616
      %v7649 = vmul.f32 %v7616, %v7648
      %v7650 = vsub.f32 1.0, %v7649
      %v7651 = vmul.f32 %v7648, %v7650
      %v7652 = vadd.f32 %v7648, %v7651
      %vm7653 = vweird.f32 %v7616
      %vm7654 = vweird.f32 %v7648
      %vm7655 = vmor %vm7653, %vm7654
      %v7656 = vsel %vm7655, %v7648, %v7652
      %v7657 = vand.u32 2147483647, %v7616
      %vm7658 = vcmp.eq.f32.partialorder %v7657, 8.507059e+37
      %v7659 = vand.u32 %v7616, 2147483648
      %v7660 = vor.u32 1.1754944e-38, %v7659
      %v7661 = vsel %vm7658, %v7660, %v7656
      %v7662 = vmul.f32 1.0, %v7661
      %v7663 = vrcp.pop %v7617
      %v7664 = vmul.f32 %v7617, %v7663
      %v7665 = vsub.f32 1.0, %v7664
      %v7666 = vmul.f32 %v7663, %v7665
      %v7667 = vadd.f32 %v7663, %v7666
      %vm7668 = vweird.f32 %v7617
      %vm7669 = vweird.f32 %v7663
      %vm7670 = vmor %vm7668, %vm7669
      %v7671 = vsel %vm7670, %v7663, %v7667
      %v7672 = vand.u32 2147483647, %v7617
      %vm7673 = vcmp.eq.f32.partialorder %v7672, 8.507059e+37
      %v7674 = vand.u32 %v7617, 2147483648
      %v7675 = vor.u32 1.1754944e-38, %v7674
      %v7676 = vsel %vm7673, %v7675, %v7671
      %v7677 = vmul.f32 1.0, %v7676
      %v7678 = vrcp.pop %v7618
      %v7679 = vmul.f32 %v7618, %v7678
      %v7680 = vsub.f32 1.0, %v7679
      %v7681 = vmul.f32 %v7678, %v7680
      %v7682 = vadd.f32 %v7678, %v7681
      %vm7683 = vweird.f32 %v7618
      %vm7684 = vweird.f32 %v7678
      %vm7685 = vmor %vm7683, %vm7684
      %v7686 = vsel %vm7685, %v7678, %v7682
      %v7687 = vand.u32 2147483647, %v7618
      %vm7688 = vcmp.eq.f32.partialorder %v7687, 8.507059e+37
      %v7689 = vand.u32 %v7618, 2147483648
      %v7690 = vor.u32 1.1754944e-38, %v7689
      %v7691 = vsel %vm7688, %v7690, %v7686
      %v7692 = vmul.f32 1.0, %v7691
      %v7693 = vrcp.pop %v7619
      %v7694 = vmul.f32 %v7619, %v7693
      %v7695 = vsub.f32 1.0, %v7694
      %v7696 = vmul.f32 %v7693, %v7695
      %v7697 = vadd.f32 %v7693, %v7696
      %vm7698 = vweird.f32 %v7619
      %vm7699 = vweird.f32 %v7693
      %vm7700 = vmor %vm7698, %vm7699
      %v7701 = vsel %vm7700, %v7693, %v7697
      %v7702 = vand.u32 2147483647, %v7619
      %vm7703 = vcmp.eq.f32.partialorder %v7702, 8.507059e+37
      %v7704 = vand.u32 %v7619, 2147483648
      %v7705 = vor.u32 1.1754944e-38, %v7704
      %v7706 = vsel %vm7703, %v7705, %v7701
      %v7707 = vmul.f32 1.0, %v7706
      %v7708 = vrcp.pop %v7620
      %v7709 = vmul.f32 %v7620, %v7708
      %v7710 = vsub.f32 1.0, %v7709
      %v7711 = vmul.f32 %v7708, %v7710
      %v7712 = vadd.f32 %v7708, %v7711
      %vm7713 = vweird.f32 %v7620
      %vm7714 = vweird.f32 %v7708
      %vm7715 = vmor %vm7713, %vm7714
      %v7716 = vsel %vm7715, %v7708, %v7712
      %v7717 = vand.u32 2147483647, %v7620
      %vm7718 = vcmp.eq.f32.partialorder %v7717, 8.507059e+37
      %v7719 = vand.u32 %v7620, 2147483648
      %v7720 = vor.u32 1.1754944e-38, %v7719
      %v7721 = vsel %vm7718, %v7720, %v7716
      %v7722 = vmul.f32 1.0, %v7721
      %v7723 = vrcp.pop %v7621
      %v7724 = vmul.f32 %v7621, %v7723
      %v7725 = vsub.f32 1.0, %v7724
      %v7726 = vmul.f32 %v7723, %v7725
      %v7727 = vadd.f32 %v7723, %v7726
      %vm7728 = vweird.f32 %v7621
      %vm7729 = vweird.f32 %v7723
      %vm7730 = vmor %vm7728, %vm7729
      %v7731 = vsel %vm7730, %v7723, %v7727
      %v7732 = vand.u32 2147483647, %v7621
      %vm7733 = vcmp.eq.f32.partialorder %v7732, 8.507059e+37
      %v7734 = vand.u32 %v7621, 2147483648
      %v7735 = vor.u32 1.1754944e-38, %v7734
      %v7736 = vsel %vm7733, %v7735, %v7731
      %v7737 = vmul.f32 1.0, %v7736
      %v7738 = vrcp.pop %v7622
      %v7739 = vmul.f32 %v7622, %v7738
      %v7740 = vsub.f32 1.0, %v7739
      %v7741 = vmul.f32 %v7738, %v7740
      %v7742 = vadd.f32 %v7738, %v7741
      %vm7743 = vweird.f32 %v7622
      %vm7744 = vweird.f32 %v7738
      %vm7745 = vmor %vm7743, %vm7744
      %v7746 = vsel %vm7745, %v7738, %v7742
      %v7747 = vand.u32 2147483647, %v7622
      %vm7748 = vcmp.eq.f32.partialorder %v7747, 8.507059e+37
      %v7749 = vand.u32 %v7622, 2147483648
      %v7750 = vor.u32 1.1754944e-38, %v7749
      %v7751 = vsel %vm7748, %v7750, %v7746
      %v7752 = vmul.f32 1.0, %v7751
      %v7753 = vrcp.pop %v7623
      %v7754 = vmul.f32 %v7623, %v7753
      %v7755 = vsub.f32 1.0, %v7754
      %v7756 = vmul.f32 %v7753, %v7755
      %v7757 = vadd.f32 %v7753, %v7756
      %vm7758 = vweird.f32 %v7623
      %vm7759 = vweird.f32 %v7753
      %vm7760 = vmor %vm7758, %vm7759
      %v7761 = vsel %vm7760, %v7753, %v7757
      %v7762 = vand.u32 2147483647, %v7623
      %vm7763 = vcmp.eq.f32.partialorder %v7762, 8.507059e+37
      %v7764 = vand.u32 %v7623, 2147483648
      %v7765 = vor.u32 1.1754944e-38, %v7764
      %v7766 = vsel %vm7763, %v7765, %v7761
      %v7767 = vmul.f32 1.0, %v7766
      %v7768 = vrcp.pop %v7624
      %v7769 = vmul.f32 %v7624, %v7768
      %v7770 = vsub.f32 1.0, %v7769
      %v7771 = vmul.f32 %v7768, %v7770
      %v7772 = vadd.f32 %v7768, %v7771
      %vm7773 = vweird.f32 %v7624
      %vm7774 = vweird.f32 %v7768
      %vm7775 = vmor %vm7773, %vm7774
      %v7776 = vsel %vm7775, %v7768, %v7772
      %v7777 = vand.u32 2147483647, %v7624
      %vm7778 = vcmp.eq.f32.partialorder %v7777, 8.507059e+37
      %v7779 = vand.u32 %v7624, 2147483648
      %v7780 = vor.u32 1.1754944e-38, %v7779
      %v7781 = vsel %vm7778, %v7780, %v7776
      %v7782 = vmul.f32 1.0, %v7781
      %v7783 = vrcp.pop %v7625
      %v7784 = vmul.f32 %v7625, %v7783
      %v7785 = vsub.f32 1.0, %v7784
      %v7786 = vmul.f32 %v7783, %v7785
      %v7787 = vadd.f32 %v7783, %v7786
      %vm7788 = vweird.f32 %v7625
      %vm7789 = vweird.f32 %v7783
      %vm7790 = vmor %vm7788, %vm7789
      %v7791 = vsel %vm7790, %v7783, %v7787
      %v7792 = vand.u32 2147483647, %v7625
      %vm7793 = vcmp.eq.f32.partialorder %v7792, 8.507059e+37
      %v7794 = vand.u32 %v7625, 2147483648
      %v7795 = vor.u32 1.1754944e-38, %v7794
      %v7796 = vsel %vm7793, %v7795, %v7791
      %v7797 = vmul.f32 1.0, %v7796
      %v7798 = vrcp.pop %v7626
      %v7799 = vmul.f32 %v7626, %v7798
      %v7800 = vsub.f32 1.0, %v7799
      %v7801 = vmul.f32 %v7798, %v7800
      %v7802 = vadd.f32 %v7798, %v7801
      %vm7803 = vweird.f32 %v7626
      %vm7804 = vweird.f32 %v7798
      %vm7805 = vmor %vm7803, %vm7804
      %v7806 = vsel %vm7805, %v7798, %v7802
      %v7807 = vand.u32 2147483647, %v7626
      %vm7808 = vcmp.eq.f32.partialorder %v7807, 8.507059e+37
      %v7809 = vand.u32 %v7626, 2147483648
      %v7810 = vor.u32 1.1754944e-38, %v7809
      %v7811 = vsel %vm7808, %v7810, %v7806
      %v7812 = vmul.f32 1.0, %v7811
      %v7813 = vrcp.pop %v7627
      %v7814 = vmul.f32 %v7627, %v7813
      %v7815 = vsub.f32 1.0, %v7814
      %v7816 = vmul.f32 %v7813, %v7815
      %v7817 = vadd.f32 %v7813, %v7816
      %vm7818 = vweird.f32 %v7627
      %vm7819 = vweird.f32 %v7813
      %vm7820 = vmor %vm7818, %vm7819
      %v7821 = vsel %vm7820, %v7813, %v7817
      %v7822 = vand.u32 2147483647, %v7627
      %vm7823 = vcmp.eq.f32.partialorder %v7822, 8.507059e+37
      %v7824 = vand.u32 %v7627, 2147483648
      %v7825 = vor.u32 1.1754944e-38, %v7824
      %v7826 = vsel %vm7823, %v7825, %v7821
      %v7827 = vmul.f32 1.0, %v7826
      %v7828 = vrcp.pop %v7628
      %v7829 = vmul.f32 %v7628, %v7828
      %v7830 = vsub.f32 1.0, %v7829
      %v7831 = vmul.f32 %v7828, %v7830
      %v7832 = vadd.f32 %v7828, %v7831
      %vm7833 = vweird.f32 %v7628
      %vm7834 = vweird.f32 %v7828
      %vm7835 = vmor %vm7833, %vm7834
      %v7836 = vsel %vm7835, %v7828, %v7832
      %v7837 = vand.u32 2147483647, %v7628
      %vm7838 = vcmp.eq.f32.partialorder %v7837, 8.507059e+37
      %v7839 = vand.u32 %v7628, 2147483648
      %v7840 = vor.u32 1.1754944e-38, %v7839
      %v7841 = vsel %vm7838, %v7840, %v7836
      %v7842 = vmul.f32 1.0, %v7841
      %v7843 = vrcp.pop %v7629
      %v7844 = vmul.f32 %v7629, %v7843
      %v7845 = vsub.f32 1.0, %v7844
      %v7846 = vmul.f32 %v7843, %v7845
      %v7847 = vadd.f32 %v7843, %v7846
      %vm7848 = vweird.f32 %v7629
      %vm7849 = vweird.f32 %v7843
      %vm7850 = vmor %vm7848, %vm7849
      %v7851 = vsel %vm7850, %v7843, %v7847
      %v7852 = vand.u32 2147483647, %v7629
      %vm7853 = vcmp.eq.f32.partialorder %v7852, 8.507059e+37
      %v7854 = vand.u32 %v7629, 2147483648
      %v7855 = vor.u32 1.1754944e-38, %v7854
      %v7856 = vsel %vm7853, %v7855, %v7851
      %v7857 = vmul.f32 1.0, %v7856
      %v7858 = vrcp.pop %v7630
      %v7859 = vmul.f32 %v7630, %v7858
      %v7860 = vsub.f32 1.0, %v7859
      %v7861 = vmul.f32 %v7858, %v7860
      %v7862 = vadd.f32 %v7858, %v7861
      %vm7863 = vweird.f32 %v7630
      %vm7864 = vweird.f32 %v7858
      %vm7865 = vmor %vm7863, %vm7864
      %v7866 = vsel %vm7865, %v7858, %v7862
      %v7867 = vand.u32 2147483647, %v7630
      %vm7868 = vcmp.eq.f32.partialorder %v7867, 8.507059e+37
      %v7869 = vand.u32 %v7630, 2147483648
      %v7870 = vor.u32 1.1754944e-38, %v7869
      %v7871 = vsel %vm7868, %v7870, %v7866
      %v7872 = vmul.f32 1.0, %v7871
      %v7873 = vrcp.pop %v7631
      %v7874 = vmul.f32 %v7631, %v7873
      %v7875 = vsub.f32 1.0, %v7874
      %v7876 = vmul.f32 %v7873, %v7875
      %v7877 = vadd.f32 %v7873, %v7876
      %vm7878 = vweird.f32 %v7631
      %vm7879 = vweird.f32 %v7873
      %vm7880 = vmor %vm7878, %vm7879
      %v7881 = vsel %vm7880, %v7873, %v7877
      %v7882 = vand.u32 2147483647, %v7631
      %vm7883 = vcmp.eq.f32.partialorder %v7882, 8.507059e+37
      %v7884 = vand.u32 %v7631, 2147483648
      %v7885 = vor.u32 1.1754944e-38, %v7884
      %v7886 = vsel %vm7883, %v7885, %v7881
      %v7887 = vmul.f32 1.0, %v7886
      %v7888 = vrcp.pop %v7632
      %v7889 = vmul.f32 %v7632, %v7888
      %v7890 = vsub.f32 1.0, %v7889
      %v7891 = vmul.f32 %v7888, %v7890
      %v7892 = vadd.f32 %v7888, %v7891
      %vm7893 = vweird.f32 %v7632
      %vm7894 = vweird.f32 %v7888
      %vm7895 = vmor %vm7893, %vm7894
      %v7896 = vsel %vm7895, %v7888, %v7892
      %v7897 = vand.u32 2147483647, %v7632
      %vm7898 = vcmp.eq.f32.partialorder %v7897, 8.507059e+37
      %v7899 = vand.u32 %v7632, 2147483648
      %v7900 = vor.u32 1.1754944e-38, %v7899
      %v7901 = vsel %vm7898, %v7900, %v7896
      %v7902 = vmul.f32 1.0, %v7901
      %v7903 = vrcp.pop %v7633
      %v7904 = vmul.f32 %v7633, %v7903
      %v7905 = vsub.f32 1.0, %v7904
      %v7906 = vmul.f32 %v7903, %v7905
      %v7907 = vadd.f32 %v7903, %v7906
      %vm7908 = vweird.f32 %v7633
      %vm7909 = vweird.f32 %v7903
      %vm7910 = vmor %vm7908, %vm7909
      %v7911 = vsel %vm7910, %v7903, %v7907
      %v7912 = vand.u32 2147483647, %v7633
      %vm7913 = vcmp.eq.f32.partialorder %v7912, 8.507059e+37
      %v7914 = vand.u32 %v7633, 2147483648
      %v7915 = vor.u32 1.1754944e-38, %v7914
      %v7916 = vsel %vm7913, %v7915, %v7911
      %v7917 = vmul.f32 1.0, %v7916
      %v7918 = vrcp.pop %v7634
      %v7919 = vmul.f32 %v7634, %v7918
      %v7920 = vsub.f32 1.0, %v7919
      %v7921 = vmul.f32 %v7918, %v7920
      %v7922 = vadd.f32 %v7918, %v7921
      %vm7923 = vweird.f32 %v7634
      %vm7924 = vweird.f32 %v7918
      %vm7925 = vmor %vm7923, %vm7924
      %v7926 = vsel %vm7925, %v7918, %v7922
      %v7927 = vand.u32 2147483647, %v7634
      %vm7928 = vcmp.eq.f32.partialorder %v7927, 8.507059e+37
      %v7929 = vand.u32 %v7634, 2147483648
      %v7930 = vor.u32 1.1754944e-38, %v7929
      %v7931 = vsel %vm7928, %v7930, %v7926
      %v7932 = vmul.f32 1.0, %v7931
      %v7933 = vrcp.pop %v7635
      %v7934 = vmul.f32 %v7635, %v7933
      %v7935 = vsub.f32 1.0, %v7934
      %v7936 = vmul.f32 %v7933, %v7935
      %v7937 = vadd.f32 %v7933, %v7936
      %vm7938 = vweird.f32 %v7635
      %vm7939 = vweird.f32 %v7933
      %vm7940 = vmor %vm7938, %vm7939
      %v7941 = vsel %vm7940, %v7933, %v7937
      %v7942 = vand.u32 2147483647, %v7635
      %vm7943 = vcmp.eq.f32.partialorder %v7942, 8.507059e+37
      %v7944 = vand.u32 %v7635, 2147483648
      %v7945 = vor.u32 1.1754944e-38, %v7944
      %v7946 = vsel %vm7943, %v7945, %v7941
      %v7947 = vmul.f32 1.0, %v7946
      %v7948 = vrcp.pop %v7636
      %v7949 = vmul.f32 %v7636, %v7948
      %v7950 = vsub.f32 1.0, %v7949
      %v7951 = vmul.f32 %v7948, %v7950
      %v7952 = vadd.f32 %v7948, %v7951
      %vm7953 = vweird.f32 %v7636
      %vm7954 = vweird.f32 %v7948
      %vm7955 = vmor %vm7953, %vm7954
      %v7956 = vsel %vm7955, %v7948, %v7952
      %v7957 = vand.u32 2147483647, %v7636
      %vm7958 = vcmp.eq.f32.partialorder %v7957, 8.507059e+37
      %v7959 = vand.u32 %v7636, 2147483648
      %v7960 = vor.u32 1.1754944e-38, %v7959
      %v7961 = vsel %vm7958, %v7960, %v7956
      %v7962 = vmul.f32 1.0, %v7961
      %v7963 = vrcp.pop %v7637
      %v7964 = vmul.f32 %v7637, %v7963
      %v7965 = vsub.f32 1.0, %v7964
      %v7966 = vmul.f32 %v7963, %v7965
      %v7967 = vadd.f32 %v7963, %v7966
      %vm7968 = vweird.f32 %v7637
      %vm7969 = vweird.f32 %v7963
      %vm7970 = vmor %vm7968, %vm7969
      %v7971 = vsel %vm7970, %v7963, %v7967
      %v7972 = vand.u32 2147483647, %v7637
      %vm7973 = vcmp.eq.f32.partialorder %v7972, 8.507059e+37
      %v7974 = vand.u32 %v7637, 2147483648
      %v7975 = vor.u32 1.1754944e-38, %v7974
      %v7976 = vsel %vm7973, %v7975, %v7971
      %v7977 = vmul.f32 1.0, %v7976
      %v7978 = vrcp.pop %v7638
      %v7979 = vmul.f32 %v7638, %v7978
      %v7980 = vsub.f32 1.0, %v7979
      %v7981 = vmul.f32 %v7978, %v7980
      %v7982 = vadd.f32 %v7978, %v7981
      %vm7983 = vweird.f32 %v7638
      %vm7984 = vweird.f32 %v7978
      %vm7985 = vmor %vm7983, %vm7984
      %v7986 = vsel %vm7985, %v7978, %v7982
      %v7987 = vand.u32 2147483647, %v7638
      %vm7988 = vcmp.eq.f32.partialorder %v7987, 8.507059e+37
      %v7989 = vand.u32 %v7638, 2147483648
      %v7990 = vor.u32 1.1754944e-38, %v7989
      %v7991 = vsel %vm7988, %v7990, %v7986
      %v7992 = vmul.f32 1.0, %v7991
      %v7993 = vrcp.pop %v7639
      %v7994 = vmul.f32 %v7639, %v7993
      %v7995 = vsub.f32 1.0, %v7994
      %v7996 = vmul.f32 %v7993, %v7995
      %v7997 = vadd.f32 %v7993, %v7996
      %vm7998 = vweird.f32 %v7639
      %vm7999 = vweird.f32 %v7993
      %vm8000 = vmor %vm7998, %vm7999
      %v8001 = vsel %vm8000, %v7993, %v7997
      %v8002 = vand.u32 2147483647, %v7639
      %vm8003 = vcmp.eq.f32.partialorder %v8002, 8.507059e+37
      %v8004 = vand.u32 %v7639, 2147483648
      %v8005 = vor.u32 1.1754944e-38, %v8004
      %v8006 = vsel %vm8003, %v8005, %v8001
      %v8007 = vmul.f32 1.0, %v8006
      %v8008 = vrcp.pop %v7640
      %v8009 = vmul.f32 %v7640, %v8008
      %v8010 = vsub.f32 1.0, %v8009
      %v8011 = vmul.f32 %v8008, %v8010
      %v8012 = vadd.f32 %v8008, %v8011
      %vm8013 = vweird.f32 %v7640
      %vm8014 = vweird.f32 %v8008
      %vm8015 = vmor %vm8013, %vm8014
      %v8016 = vsel %vm8015, %v8008, %v8012
      %v8017 = vand.u32 2147483647, %v7640
      %vm8018 = vcmp.eq.f32.partialorder %v8017, 8.507059e+37
      %v8019 = vand.u32 %v7640, 2147483648
      %v8020 = vor.u32 1.1754944e-38, %v8019
      %v8021 = vsel %vm8018, %v8020, %v8016
      %v8022 = vmul.f32 1.0, %v8021
      %v8023 = vrcp.pop %v7641
      %v8024 = vmul.f32 %v7641, %v8023
      %v8025 = vsub.f32 1.0, %v8024
      %v8026 = vmul.f32 %v8023, %v8025
      %v8027 = vadd.f32 %v8023, %v8026
      %vm8028 = vweird.f32 %v7641
      %vm8029 = vweird.f32 %v8023
      %vm8030 = vmor %vm8028, %vm8029
      %v8031 = vsel %vm8030, %v8023, %v8027
      %v8032 = vand.u32 2147483647, %v7641
      %vm8033 = vcmp.eq.f32.partialorder %v8032, 8.507059e+37
      %v8034 = vand.u32 %v7641, 2147483648
      %v8035 = vor.u32 1.1754944e-38, %v8034
      %v8036 = vsel %vm8033, %v8035, %v8031
      %v8037 = vmul.f32 1.0, %v8036
      %v8038 = vrcp.pop %v7642
      %v8039 = vmul.f32 %v7642, %v8038
      %v8040 = vsub.f32 1.0, %v8039
      %v8041 = vmul.f32 %v8038, %v8040
      %v8042 = vadd.f32 %v8038, %v8041
      %vm8043 = vweird.f32 %v7642
      %vm8044 = vweird.f32 %v8038
      %vm8045 = vmor %vm8043, %vm8044
      %v8046 = vsel %vm8045, %v8038, %v8042
      %v8047 = vand.u32 2147483647, %v7642
      %vm8048 = vcmp.eq.f32.partialorder %v8047, 8.507059e+37
      %v8049 = vand.u32 %v7642, 2147483648
      %v8050 = vor.u32 1.1754944e-38, %v8049
      %v8051 = vsel %vm8048, %v8050, %v8046
      %v8052 = vmul.f32 1.0, %v8051
      %v8053 = vrcp.pop %v7643
      %v8054 = vmul.f32 %v7643, %v8053
      %v8055 = vsub.f32 1.0, %v8054
      %v8056 = vmul.f32 %v8053, %v8055
      %v8057 = vadd.f32 %v8053, %v8056
      %vm8058 = vweird.f32 %v7643
      %vm8059 = vweird.f32 %v8053
      %vm8060 = vmor %vm8058, %vm8059
      %v8061 = vsel %vm8060, %v8053, %v8057
      %v8062 = vand.u32 2147483647, %v7643
      %vm8063 = vcmp.eq.f32.partialorder %v8062, 8.507059e+37
      %v8064 = vand.u32 %v7643, 2147483648
      %v8065 = vor.u32 1.1754944e-38, %v8064
      %v8066 = vsel %vm8063, %v8065, %v8061
      %v8067 = vmul.f32 1.0, %v8066
      %v8068 = vrcp.pop %v7644
      %v8069 = vmul.f32 %v7644, %v8068
      %v8070 = vsub.f32 1.0, %v8069
      %v8071 = vmul.f32 %v8068, %v8070
      %v8072 = vadd.f32 %v8068, %v8071
      %vm8073 = vweird.f32 %v7644
      %vm8074 = vweird.f32 %v8068
      %vm8075 = vmor %vm8073, %vm8074
      %v8076 = vsel %vm8075, %v8068, %v8072
      %v8077 = vand.u32 2147483647, %v7644
      %vm8078 = vcmp.eq.f32.partialorder %v8077, 8.507059e+37
      %v8079 = vand.u32 %v7644, 2147483648
      %v8080 = vor.u32 1.1754944e-38, %v8079
      %v8081 = vsel %vm8078, %v8080, %v8076
      %v8082 = vmul.f32 1.0, %v8081
      %v8083 = vrcp.pop %v7645
      %v8084 = vmul.f32 %v7645, %v8083
      %v8085 = vsub.f32 1.0, %v8084
      %v8086 = vmul.f32 %v8083, %v8085
      %v8087 = vadd.f32 %v8083, %v8086
      %vm8088 = vweird.f32 %v7645
      %vm8089 = vweird.f32 %v8083
      %vm8090 = vmor %vm8088, %vm8089
      %v8091 = vsel %vm8090, %v8083, %v8087
      %v8092 = vand.u32 2147483647, %v7645
      %vm8093 = vcmp.eq.f32.partialorder %v8092, 8.507059e+37
      %v8094 = vand.u32 %v7645, 2147483648
      %v8095 = vor.u32 1.1754944e-38, %v8094
      %v8096 = vsel %vm8093, %v8095, %v8091
      %v8097 = vmul.f32 1.0, %v8096
      %v8098 = vrcp.pop %v7646
      %v8099 = vmul.f32 %v7646, %v8098
      %v8100 = vsub.f32 1.0, %v8099
      %v8101 = vmul.f32 %v8098, %v8100
      %v8102 = vadd.f32 %v8098, %v8101
      %vm8103 = vweird.f32 %v7646
      %vm8104 = vweird.f32 %v8098
      %vm8105 = vmor %vm8103, %vm8104
      %v8106 = vsel %vm8105, %v8098, %v8102
      %v8107 = vand.u32 2147483647, %v7646
      %vm8108 = vcmp.eq.f32.partialorder %v8107, 8.507059e+37
      %v8109 = vand.u32 %v7646, 2147483648
      %v8110 = vor.u32 1.1754944e-38, %v8109
      %v8111 = vsel %vm8108, %v8110, %v8106
      %v8112 = vmul.f32 1.0, %v8111
      %v8113 = vrcp.pop %v7647
      %v8114 = vmul.f32 %v7647, %v8113
      %v8115 = vsub.f32 1.0, %v8114
      %v8116 = vmul.f32 %v8113, %v8115
      %v8117 = vadd.f32 %v8113, %v8116
      %vm8118 = vweird.f32 %v7647
      %vm8119 = vweird.f32 %v8113
      %vm8120 = vmor %vm8118, %vm8119
      %v8121 = vsel %vm8120, %v8113, %v8117
      %v8122 = vand.u32 2147483647, %v7647
      %vm8123 = vcmp.eq.f32.partialorder %v8122, 8.507059e+37
      %v8124 = vand.u32 %v7647, 2147483648
      %v8125 = vor.u32 1.1754944e-38, %v8124
      %v8126 = vsel %vm8123, %v8125, %v8121
      %v8127 = vmul.f32 1.0, %v8126
      %8129 = vset.pattern.permute.xlu0 8
      %8130 = vperm.xlu0 %8129, %v7662
      %v8131 = vpop.permute.xlu0 %8130
      %8134 = vset.pattern.permute.xlu0 8
      %8135 = vperm.xlu0 %8134, %v7677
      %v8136 = vpop.permute.xlu0 %8135
      %8139 = vset.pattern.permute.xlu0 8
      %8140 = vperm.xlu0 %8139, %v7692
      %v8141 = vpop.permute.xlu0 %8140
      %8144 = vset.pattern.permute.xlu0 8
      %8145 = vperm.xlu0 %8144, %v7707
      %v8146 = vpop.permute.xlu0 %8145
      %8149 = vset.pattern.permute.xlu0 8
      %8150 = vperm.xlu0 %8149, %v7722
      %v8151 = vpop.permute.xlu0 %8150
      %8154 = vset.pattern.permute.xlu0 8
      %8155 = vperm.xlu0 %8154, %v7737
      %v8156 = vpop.permute.xlu0 %8155
      %8159 = vset.pattern.permute.xlu0 8
      %8160 = vperm.xlu0 %8159, %v7752
      %v8161 = vpop.permute.xlu0 %8160
      %8164 = vset.pattern.permute.xlu0 8
      %8165 = vperm.xlu0 %8164, %v7767
      %v8166 = vpop.permute.xlu0 %8165
      %8169 = vset.pattern.permute.xlu0 8
      %8170 = vperm.xlu0 %8169, %v7782
      %v8171 = vpop.permute.xlu0 %8170
      %8174 = vset.pattern.permute.xlu0 8
      %8175 = vperm.xlu0 %8174, %v7797
      %v8176 = vpop.permute.xlu0 %8175
      %8179 = vset.pattern.permute.xlu0 8
      %8180 = vperm.xlu0 %8179, %v7812
      %v8181 = vpop.permute.xlu0 %8180
      %8184 = vset.pattern.permute.xlu0 8
      %8185 = vperm.xlu0 %8184, %v7827
      %v8186 = vpop.permute.xlu0 %8185
      %8189 = vset.pattern.permute.xlu0 8
      %8190 = vperm.xlu0 %8189, %v7842
      %v8191 = vpop.permute.xlu0 %8190
      %8194 = vset.pattern.permute.xlu0 8
      %8195 = vperm.xlu0 %8194, %v7857
      %v8196 = vpop.permute.xlu0 %8195
      %8199 = vset.pattern.permute.xlu0 8
      %8200 = vperm.xlu0 %8199, %v7872
      %v8201 = vpop.permute.xlu0 %8200
      %8204 = vset.pattern.permute.xlu0 8
      %8205 = vperm.xlu0 %8204, %v7887
      %v8206 = vpop.permute.xlu0 %8205
      %8209 = vset.pattern.permute.xlu0 8
      %8210 = vperm.xlu0 %8209, %v7902
      %v8211 = vpop.permute.xlu0 %8210
      %8214 = vset.pattern.permute.xlu0 8
      %8215 = vperm.xlu0 %8214, %v7917
      %v8216 = vpop.permute.xlu0 %8215
      %8219 = vset.pattern.permute.xlu0 8
      %8220 = vperm.xlu0 %8219, %v7932
      %v8221 = vpop.permute.xlu0 %8220
      %8224 = vset.pattern.permute.xlu0 8
      %8225 = vperm.xlu0 %8224, %v7947
      %v8226 = vpop.permute.xlu0 %8225
      %8229 = vset.pattern.permute.xlu0 8
      %8230 = vperm.xlu0 %8229, %v7962
      %v8231 = vpop.permute.xlu0 %8230
      %8234 = vset.pattern.permute.xlu0 8
      %8235 = vperm.xlu0 %8234, %v7977
      %v8236 = vpop.permute.xlu0 %8235
      %8239 = vset.pattern.permute.xlu0 8
      %8240 = vperm.xlu0 %8239, %v7992
      %v8241 = vpop.permute.xlu0 %8240
      %8244 = vset.pattern.permute.xlu0 8
      %8245 = vperm.xlu0 %8244, %v8007
      %v8246 = vpop.permute.xlu0 %8245
      %8249 = vset.pattern.permute.xlu0 8
      %8250 = vperm.xlu0 %8249, %v8022
      %v8251 = vpop.permute.xlu0 %8250
      %8254 = vset.pattern.permute.xlu0 8
      %8255 = vperm.xlu0 %8254, %v8037
      %v8256 = vpop.permute.xlu0 %8255
      %8259 = vset.pattern.permute.xlu0 8
      %8260 = vperm.xlu0 %8259, %v8052
      %v8261 = vpop.permute.xlu0 %8260
      %8264 = vset.pattern.permute.xlu0 8
      %8265 = vperm.xlu0 %8264, %v8067
      %v8266 = vpop.permute.xlu0 %8265
      %8269 = vset.pattern.permute.xlu0 8
      %8270 = vperm.xlu0 %8269, %v8082
      %v8271 = vpop.permute.xlu0 %8270
      %8274 = vset.pattern.permute.xlu0 8
      %8275 = vperm.xlu0 %8274, %v8097
      %v8276 = vpop.permute.xlu0 %8275
      %8279 = vset.pattern.permute.xlu0 8
      %8280 = vperm.xlu0 %8279, %v8112
      %v8281 = vpop.permute.xlu0 %8280
      %8284 = vset.pattern.permute.xlu0 8
      %8285 = vperm.xlu0 %8284, %v8127
      %v8286 = vpop.permute.xlu0 %8285
      %v8288 = vmul.f32 %v7441, %v8131
      %v8289 = vmul.f32 %v7443, %v8136
      %v8290 = vmul.f32 %v7446, %v8141
      %v8291 = vmul.f32 %v7448, %v8146
      %v8292 = vmul.f32 %v7451, %v8151
      %v8293 = vmul.f32 %v7453, %v8156
      %v8294 = vmul.f32 %v7456, %v8161
      %v8295 = vmul.f32 %v7458, %v8166
      %v8296 = vmul.f32 %v7461, %v8171
      %v8297 = vmul.f32 %v7463, %v8176
      %v8298 = vmul.f32 %v7466, %v8181
      %v8299 = vmul.f32 %v7468, %v8186
      %v8300 = vmul.f32 %v7471, %v8191
      %v8301 = vmul.f32 %v7473, %v8196
      %v8302 = vmul.f32 %v7476, %v8201
      %v8303 = vmul.f32 %v7478, %v8206
      %v8304 = vmul.f32 %v7481, %v8211
      %v8305 = vmul.f32 %v7483, %v8216
      %v8306 = vmul.f32 %v7486, %v8221
      %v8307 = vmul.f32 %v7488, %v8226
      %v8308 = vmul.f32 %v7491, %v8231
      %v8309 = vmul.f32 %v7493, %v8236
      %v8310 = vmul.f32 %v7496, %v8241
      %v8311 = vmul.f32 %v7498, %v8246
      %v8312 = vmul.f32 %v7501, %v8251
      %v8313 = vmul.f32 %v7503, %v8256
      %v8314 = vmul.f32 %v7506, %v8261
      %v8315 = vmul.f32 %v7508, %v8266
      %v8316 = vmul.f32 %v7511, %v8271
      %v8317 = vmul.f32 %v7513, %v8276
      %v8318 = vmul.f32 %v7516, %v8281
      %v8319 = vmul.f32 %v7518, %v8286
      %v8320 = vmax.f32 %v8288, 0.0
      %v8321 = vmax.f32 %v8289, 0.0
      %v8322 = vmax.f32 %v8290, 0.0
      %v8323 = vmax.f32 %v8291, 0.0
      %v8324 = vmax.f32 %v8292, 0.0
      %v8325 = vmax.f32 %v8293, 0.0
      %v8326 = vmax.f32 %v8294, 0.0
      %v8327 = vmax.f32 %v8295, 0.0
      %v8328 = vmax.f32 %v8296, 0.0
      %v8329 = vmax.f32 %v8297, 0.0
      %v8330 = vmax.f32 %v8298, 0.0
      %v8331 = vmax.f32 %v8299, 0.0
      %v8332 = vmax.f32 %v8300, 0.0
      %v8333 = vmax.f32 %v8301, 0.0
      %v8334 = vmax.f32 %v8302, 0.0
      %v8335 = vmax.f32 %v8303, 0.0
      %v8336 = vmax.f32 %v8304, 0.0
      %v8337 = vmax.f32 %v8305, 0.0
      %v8338 = vmax.f32 %v8306, 0.0
      %v8339 = vmax.f32 %v8307, 0.0
      %v8340 = vmax.f32 %v8308, 0.0
      %v8341 = vmax.f32 %v8309, 0.0
      %v8342 = vmax.f32 %v8310, 0.0
      %v8343 = vmax.f32 %v8311, 0.0
      %v8344 = vmax.f32 %v8312, 0.0
      %v8345 = vmax.f32 %v8313, 0.0
      %v8346 = vmax.f32 %v8314, 0.0
      %v8347 = vmax.f32 %v8315, 0.0
      %v8348 = vmax.f32 %v8316, 0.0
      %v8349 = vmax.f32 %v8317, 0.0
      %v8350 = vmax.f32 %v8318, 0.0
      %v8351 = vmax.f32 %v8319, 0.0
      %8352 = vst.msk [vmem:[%s278] sm:$0xff] %vm1856, %v8320
      %8353 = vst.msk [vmem:[%s278 + $0x8] sm:$0xff] %vm1856, %v8321
      %8354 = vst.msk [vmem:[%s278 + $0x10] sm:$0xff] %vm1856, %v8322
      %8355 = vst.msk [vmem:[%s278 + $0x18] sm:$0xff] %vm1856, %v8323
      %8356 = vst.msk [vmem:[%s278 + $0x20] sm:$0xff] %vm1856, %v8324
      %8357 = vst.msk [vmem:[%s278 + $0x28] sm:$0xff] %vm1856, %v8325
      %8358 = vst.msk [vmem:[%s278 + $0x30] sm:$0xff] %vm1856, %v8326
      %8359 = vst.msk [vmem:[%s278 + $0x38] sm:$0xff] %vm1856, %v8327
      %8360 = vst.msk [vmem:[%s278 + $0x40] sm:$0xff] %vm1856, %v8328
      %8361 = vst.msk [vmem:[%s278 + $0x48] sm:$0xff] %vm1856, %v8329
      %8362 = vst.msk [vmem:[%s278 + $0x50] sm:$0xff] %vm1856, %v8330
      %8363 = vst.msk [vmem:[%s278 + $0x58] sm:$0xff] %vm1856, %v8331
      %8364 = vst.msk [vmem:[%s278 + $0x60] sm:$0xff] %vm1856, %v8332
      %8365 = vst.msk [vmem:[%s278 + $0x68] sm:$0xff] %vm1856, %v8333
      %8366 = vst.msk [vmem:[%s278 + $0x70] sm:$0xff] %vm1856, %v8334
      %8367 = vst.msk [vmem:[%s278 + $0x78] sm:$0xff] %vm1856, %v8335
      %8368 = vst.msk [vmem:[%s278 + $0x80] sm:$0xff] %vm1856, %v8336
      %8369 = vst.msk [vmem:[%s278 + $0x88] sm:$0xff] %vm1856, %v8337
      %8370 = vst.msk [vmem:[%s278 + $0x90] sm:$0xff] %vm1856, %v8338
      %8371 = vst.msk [vmem:[%s278 + $0x98] sm:$0xff] %vm1856, %v8339
      %8372 = vst.msk [vmem:[%s278 + $0xa0] sm:$0xff] %vm1856, %v8340
      %8373 = vst.msk [vmem:[%s278 + $0xa8] sm:$0xff] %vm1856, %v8341
      %8374 = vst.msk [vmem:[%s278 + $0xb0] sm:$0xff] %vm1856, %v8342
      %8375 = vst.msk [vmem:[%s278 + $0xb8] sm:$0xff] %vm1856, %v8343
      %8376 = vst.msk [vmem:[%s278 + $0xc0] sm:$0xff] %vm1856, %v8344
      %8377 = vst.msk [vmem:[%s278 + $0xc8] sm:$0xff] %vm1856, %v8345
      %8378 = vst.msk [vmem:[%s278 + $0xd0] sm:$0xff] %vm1856, %v8346
      %8379 = vst.msk [vmem:[%s278 + $0xd8] sm:$0xff] %vm1856, %v8347
      %8380 = vst.msk [vmem:[%s278 + $0xe0] sm:$0xff] %vm1856, %v8348
      %8381 = vst.msk [vmem:[%s278 + $0xe8] sm:$0xff] %vm1856, %v8349
      %8382 = vst.msk [vmem:[%s278 + $0xf0] sm:$0xff] %vm1856, %v8350
      %8383 = vst.msk [vmem:[%s278 + $0xf8] sm:$0xff] %vm1856, %v8351
      %p8384 = scmp.lt.s32.totalorder %s18, 1
      %s8385 = scalar_select %p8384, %s18, 1
      %s8386 = smul.addr %s8385, 32
      %s8387 = smul.addr %s8386, 8
      %s8388 = scalar_lea.vmem %s7, %s8387
      // Predicated region
      $region49: #{temporal_feat_extractor_forward.1} parent=47 // pred_check
        %p8389 = pneg %p188
      $region50: #{temporal_feat_extractor_forward.1} parent=47 // pred_check_branch
        %8391 = sbr.rel (%p8389) target = $region52
      $region51: #{temporal_feat_extractor_forward.1} parent=47 // pred_region
        _
      $region52: #{temporal_feat_extractor_forward.1} parent=47 // pred_fallthru
        _
    $region48: #{temporal_feat_extractor_forward.1} parent=5 // pred_fallthru
      _
    %p8392 = scmp.le.s32.totalorder 2, %s13
    // Predicated region
    $region53: #{temporal_feat_extractor_forward.1} parent=5 // pred_check
      %p8393 = pneg %p8392
    $region54: #{temporal_feat_extractor_forward.1} parent=5 // pred_check_branch
      %8395 = sbr.rel (%p8393) target = $region56
    $region55: #{temporal_feat_extractor_forward.1} parent=5 // pred_region
      %s8396 = ssub.s32 %s13, 2
      // Predicated region
      $region57: #{temporal_feat_extractor_forward.1} parent=55 // pred_check
        %p8397 = pneg %p194
      $region58: #{temporal_feat_extractor_forward.1} parent=55 // pred_check_branch
        %8399 = sbr.rel (%p8397) target = $region60
      $region59: #{temporal_feat_extractor_forward.1} parent=55 // pred_region
        %p8400 = scmp.lt.s32.totalorder %s19, 1
        %s8401 = scalar_select %p8400, %s19, 1
        %s8402 = smul.addr %s8401, 32
        %s8403 = smul.addr %s8402, 8
        %s8404 = scalar_lea.vmem %s7, %s8403
      $region60: #{temporal_feat_extractor_forward.1} parent=55 // pred_fallthru
        _
    $region56: #{temporal_feat_extractor_forward.1} parent=5 // pred_fallthru
      _
  $region6: #{temporal_feat_extractor_forward.1} parent=0 // loop_footer
    %s17 = sadd.s32 1, %s13
  $region7: #{temporal_feat_extractor_forward.1} parent=0 // loop_footer_branch
    %12 = sbr.rel target = $region3
  $region8: #{temporal_feat_extractor_forward.1} parent=0 // loop_exit
    _

</llo_original>
